<compile_context>
chip_gen: v5e
topology: v5e:2x2
jax: 0.10.0
libtpu: 0.0.40
codegen_flags: <defaults>
</compile_context>

<pallas_src>
import functools

import numpy as np
import jax
import jax.numpy as jnp
from jax import lax
from jax.experimental import pallas as pl
from jax.experimental.pallas import tpu as pltpu

# ---- config (mirrors DataGenerationConfig) ----
HIDDEN = 32           # config.hidden_dim
MAX_CRACKS = 3        # config.max_cracks
HEADS = 4             # GATConv heads
NEG_SLOPE = 0.2       # GATConv leaky_relu slope (PyG default)
EPS = 1e-5            # BatchNorm1d / LayerNorm eps (PyTorch default)

NODE_DIM = 8
DELTA_DIM = 8
OUT_DIM = MAX_CRACKS * 2

# ---- packed parameter slab layout: one [P_ROWS, 128] f32 array, one resident DMA ----
R_WG = 0      # rows   0.. 31 : GAT value proj, BN1-scale/HEADS folded            [H, 4H]
R_CONV = 32   # rows  32.. 63 : [w1_rel' | w1_root' | w3_rel' | w3_root']          [H, 4H]
R_ENC = 64    # rows  64.. 71 : [w_node | w_delta | 0 | 0]                         [8, 4H]
R_VDST = 72   # rows  72..103 : v_dst = W_k @ att_dst_k in lanes 0..HEADS-1        [H, HEADS]
R_WOUT = 104  # rows 104..199 : W_out_gm / W_out_gx / W_out_d stacked, full-width  [3H, 128]
R_VSRC = 200  # rows 200..203 : v_src^T, head k in row k, lanes 0..H-1             [HEADS, H]
R_VEC = 204   # rows 204..206 : packed bias / LayerNorm vectors, 4x32 lanes per row
R_BOUT = 207  # row  207      : output-head bias in lanes 0..OUT_DIM-1 (lane-dense)
P_ROWS = 208  # multiple of 8 sublanes


def _make_kernel(blocks_per_step: int, g_blk: int, nodes_per_graph: int):
    """Kernel processing `blocks_per_step` blocks of `g_blk` equal-sized graphs."""
    n_blk = g_blk * nodes_per_graph
    H = HIDDEN

    def kernel(x_ref, delta_ref, adj_ref, p_ref, out_ref):
        f32 = jnp.float32

        # Constants shared by every sub-block (diag mask for GAT self-loops, MXU ones
        # column for the softmax denominator).
        rows = lax.broadcasted_iota(jnp.int32, (n_blk, n_blk), 0)
        cols = lax.broadcasted_iota(jnp.int32, (n_blk, n_blk), 1)
        diag = rows == cols
        ones_col = jnp.ones((n_blk, 1), f32)

        # Static unrolled loop over the sub-blocks handled by this grid step
        # (amortizes the ~0.35us per-grid-step overhead).
        for sb in range(blocks_per_step):
            x = x_ref[sb]                                      # [n_blk, NODE_DIM]
            adj = adj_ref[sb].astype(f32)                      # int8 multiplicities -> f32

            # ---- node encoder + ReLU ----
            h = jnp.maximum(
                jnp.dot(x, p_ref[R_ENC:R_ENC + NODE_DIM, 0:H], preferred_element_type=f32)
                + p_ref[R_VEC:R_VEC + 1, 0:H], 0.0)

            # ---- GraphConv #1 (BatchNorm folded) + ReLU; dropout = eval no-op ----
            agg = jnp.dot(adj, h, preferred_element_type=f32)
            h1 = (jnp.dot(agg, p_ref[R_CONV:R_CONV + H, 0:H], preferred_element_type=f32)
                  + jnp.dot(h, p_ref[R_CONV:R_CONV + H, H:2 * H], preferred_element_type=f32)
                  + p_ref[R_VEC:R_VEC + 1, 2 * H:3 * H])
            h1 = jnp.maximum(h1, 0.0)

            # ---- GATConv: 4 heads, concat=False (mean over heads), BN folded, ReLU ----
            # Additive mask hoisted out of the head loop. Self-loops are added like PyG.
            # NOTE: parallel (duplicate) non-self edges are binarized here; PyG would
            # give each edge its own softmax term.
            mask_add = jnp.where((adj > 0.0) | diag, f32(0.0), f32(-1e30))
            # One fused lane-dense value matmul [n, 4H]; BN1 scale / HEADS folded in.
            xh_all = jnp.dot(h1, p_ref[R_WG:R_WG + H, :], preferred_element_type=f32)
            # Attention logits via host-folded vectors.
            a_dst = jnp.dot(h1, p_ref[R_VDST:R_VDST + H, 0:HEADS],
                            preferred_element_type=f32)                  # [n, HEADS]
            a_src_t = lax.dot_general(p_ref[R_VSRC:R_VSRC + HEADS, 0:H], h1,
                                      (((1,), (1,)), ((), ())),
                                      preferred_element_type=f32)        # [HEADS, n]
            acc = jnp.zeros((n_blk, H), f32)
            for k in range(HEADS):
                e = a_dst[:, k:k + 1] + a_src_t[k:k + 1, :]              # [n_dst, n_src]
                e = jnp.maximum(e, NEG_SLOPE * e) + mask_add             # leaky_relu + mask
                e = e - jnp.max(e, axis=-1, keepdims=True)
                pm = jnp.exp(e)              # masked entries underflow to exactly 0
                # Softmax denominator on the MXU (XLU stays free); normalize AFTER
                # the aggregation matmul (inv is a per-row scalar).
                den = jnp.dot(pm, ones_col, preferred_element_type=f32)  # [n, 1]
                inv = pl.reciprocal(den, approx=True)
                acc = acc + jnp.dot(pm, xh_all[:, k * H:(k + 1) * H],
                                    preferred_element_type=f32) * inv
            h2 = jnp.maximum(acc + p_ref[R_VEC:R_VEC + 1, 3 * H:4 * H], 0.0)
            # dropout: no-op in eval mode

            # ---- GraphConv #3 (BN folded) + ReLU ----
            # Re-read adj from VMEM instead of keeping it live across the GAT loop.
            adj3 = adj_ref[sb].astype(f32)
            agg3 = jnp.dot(adj3, h2, preferred_element_type=f32)
            h3 = (jnp.dot(agg3, p_ref[R_CONV:R_CONV + H, 2 * H:3 * H],
                          preferred_element_type=f32)
                  + jnp.dot(h2, p_ref[R_CONV:R_CONV + H, 3 * H:4 * H],
                            preferred_element_type=f32)
                  + p_ref[R_VEC + 1:R_VEC + 2, 0:H])
            h3 = jnp.maximum(h3, 0.0)

            # ---- global mean / max pooling (equal-sized contiguous graphs) ----
            # Layout-free only when nodes_per_graph is a multiple of the sublane tile (8).
            h3g = h3.reshape(g_blk, nodes_per_graph, H)
            gmean = jnp.mean(h3g, axis=1)                                # [g_blk, H]
            gmax = jnp.max(h3g, axis=1)                                  # [g_blk, H]

            # ---- gnn_norm: LayerNorm over the (virtual) concat [gmean | gmax] ----
            two_h = f32(2 * H)
            mu = (jnp.sum(gmean, axis=-1, keepdims=True)
                  + jnp.sum(gmax, axis=-1, keepdims=True)) / two_h
            var = (jnp.sum((gmean - mu) ** 2, axis=-1, keepdims=True)
                   + jnp.sum((gmax - mu) ** 2, axis=-1, keepdims=True)) / two_h
            rstd = lax.rsqrt(var + EPS)
            gm_n = ((gmean - mu) * rstd * p_ref[R_VEC + 1:R_VEC + 2, H:2 * H]
                    + p_ref[R_VEC + 2:R_VEC + 3, 0:H])
            gx_n = ((gmax - mu) * rstd * p_ref[R_VEC + 1:R_VEC + 2, 2 * H:3 * H]
                    + p_ref[R_VEC + 2:R_VEC + 3, H:2 * H])

            # ---- delta branch: Linear + ReLU, LayerNorm ----
            d = jnp.maximum(
                jnp.dot(delta_ref[sb], p_ref[R_ENC:R_ENC + DELTA_DIM, H:2 * H],
                        preferred_element_type=f32)
                + p_ref[R_VEC:R_VEC + 1, H:2 * H], 0.0)
            dmu = jnp.mean(d, axis=-1, keepdims=True)
            dvar = jnp.mean((d - dmu) ** 2, axis=-1, keepdims=True)
            d_n = ((d - dmu) * lax.rsqrt(dvar + EPS) * p_ref[R_VEC + 1:R_VEC + 2, 3 * H:4 * H]
                   + p_ref[R_VEC + 2:R_VEC + 3, 2 * H:3 * H])

            # ---- output head on the virtual concat [gm_n | gx_n | d_n], sigmoid ----
            # Full 128-lane result => unmasked lane-dense store; real coords in lanes 0..5.
            raw = (jnp.dot(gm_n, p_ref[R_WOUT:R_WOUT + H, :], preferred_element_type=f32)
                   + jnp.dot(gx_n, p_ref[R_WOUT + H:R_WOUT + 2 * H, :],
                             preferred_element_type=f32)
                   + jnp.dot(d_n, p_ref[R_WOUT + 2 * H:R_WOUT + 3 * H, :],
                             preferred_element_type=f32)
                   + p_ref[R_BOUT:R_BOUT + 1, :])
            out_ref[sb] = jax.nn.sigmoid(raw)

    return kernel


def pack_params(params):
    """Fold BN/attention into weights and pack everything into one [P_ROWS,128] slab.

    Call ONCE per parameter set (off the hot path) and reuse the returned array.
    """
    H = HIDDEN
    scale = np.asarray(params['bn_scale'], np.float32)   # [3, H] (eval BN -> affine)
    shift = np.asarray(params['bn_shift'], np.float32)
    wg = np.asarray(params['wg_lin'], np.float32)        # [H, HEADS*H]
    att_src = np.asarray(params['att_src'], np.float32)  # [HEADS, H]
    att_dst = np.asarray(params['att_dst'], np.float32)

    slab = np.zeros((P_ROWS, 128), np.float32)

    # GAT value projection with BN1 scale / HEADS folded in (alpha is unaffected).
    head_scale = np.tile(scale[1], HEADS) / float(HEADS)
    slab[R_WG:R_WG + H, :] = wg * head_scale[None, :]

    # GraphConv weights with BN0 / BN2 scales folded.
    slab[R_CONV:R_CONV + H, 0:H] = np.asarray(params['w1_rel'], np.float32) * scale[0][None, :]
    slab[R_CONV:R_CONV + H, H:2 * H] = np.asarray(params['w1_root'], np.float32) * scale[0][None, :]
    slab[R_CONV:R_CONV + H, 2 * H:3 * H] = np.asarray(params['w3_rel'], np.float32) * scale[2][None, :]
    slab[R_CONV:R_CONV + H, 3 * H:4 * H] = np.asarray(params['w3_root'], np.float32) * scale[2][None, :]

    # Encoders.
    slab[R_ENC:R_ENC + NODE_DIM, 0:H] = np.asarray(params['w_node'], np.float32)
    slab[R_ENC:R_ENC + DELTA_DIM, H:2 * H] = np.asarray(params['w_delta'], np.float32)

    # Attention vectors folded through the (unscaled) GAT linear.
    for k in range(HEADS):
        Wk = wg[:, k * H:(k + 1) * H]                     # [H, H]
        slab[R_VDST:R_VDST + H, k] = Wk @ att_dst[k]
        slab[R_VSRC + k, 0:H] = Wk @ att_src[k]

    # Output head, stacked full-width (only lanes 0..OUT_DIM-1 nonzero) for a
    # lane-dense output store.
    w_out = np.asarray(params['w_out'], np.float32)       # [3H, OUT_DIM]
    slab[R_WOUT:R_WOUT + H, 0:OUT_DIM] = w_out[0:H]
    slab[R_WOUT + H:R_WOUT + 2 * H, 0:OUT_DIM] = w_out[H:2 * H]
    slab[R_WOUT + 2 * H:R_WOUT + 3 * H, 0:OUT_DIM] = w_out[2 * H:3 * H]

    # Packed bias / LayerNorm vector rows (4 x 32 lanes per row).
    slab[R_VEC, 0:H] = np.asarray(params['b_node'], np.float32)[0]
    slab[R_VEC, H:2 * H] = np.asarray(params['b_delta'], np.float32)[0]
    slab[R_VEC, 2 * H:3 * H] = np.asarray(params['b1_rel'], np.float32)[0] * scale[0] + shift[0]
    slab[R_VEC, 3 * H:4 * H] = np.asarray(params['bg'], np.float32)[0] * scale[1] + shift[1]
    slab[R_VEC + 1, 0:H] = np.asarray(params['b3_rel'], np.float32)[0] * scale[2] + shift[2]
    slab[R_VEC + 1, H:2 * H] = np.asarray(params['lng_g'], np.float32)[0, 0:H]
    slab[R_VEC + 1, 2 * H:3 * H] = np.asarray(params['lng_g'], np.float32)[0, H:2 * H]
    slab[R_VEC + 1, 3 * H:4 * H] = np.asarray(params['lnd_g'], np.float32)[0]
    slab[R_VEC + 2, 0:H] = np.asarray(params['lng_b'], np.float32)[0, 0:H]
    slab[R_VEC + 2, H:2 * H] = np.asarray(params['lng_b'], np.float32)[0, H:2 * H]
    slab[R_VEC + 2, 2 * H:3 * H] = np.asarray(params['lnd_b'], np.float32)[0]
    slab[R_BOUT, 0:OUT_DIM] = np.asarray(params['b_out'], np.float32)[0]
    return jnp.asarray(slab)


def prepare_batch(x, delta_features, edge_index, batch,
                  graphs_per_block=16, blocks_per_step=2):
    """Host-side blocking + adjacency densification. Do this once per dataset.

    Returns device arrays (x_blocks, delta_blocks, adj_blocks_int8) plus meta.
    On v7x, pick graphs_per_block / blocks_per_step so the resulting number of
    grid steps is a multiple of 2 (two TensorCores share the parallel grid axis).
    """
    x = np.asarray(x, np.float32)
    batch = np.asarray(batch)
    edge_index = np.asarray(edge_index)
    delta = np.asarray(delta_features, np.float32)[:, 0, :]        # .squeeze(1)

    n_nodes = x.shape[0]
    num_graphs = int(batch.max()) + 1
    nodes_per_graph = n_nodes // num_graphs
    # TODO(synk): ragged / non-contiguous batches need a segment-matrix pooling fallback;
    # if nodes_per_graph % 8 != 0, pad each graph to a multiple of 8 rows so the in-kernel
    # pooling reshape stays a free (layout-preserving) sublane reshape.
    assert np.array_equal(batch, np.repeat(np.arange(num_graphs), nodes_per_graph)), \
        "kernel assumes equal-sized, contiguous graphs in `batch`"

    g_blk = min(graphs_per_block, num_graphs)
    num_blocks = -(-num_graphs // g_blk)
    bps = max(1, min(blocks_per_step, num_blocks))
    num_steps = -(-num_blocks // bps)
    tot_blocks = num_steps * bps
    g_pad = tot_blocks * g_blk
    n_blk = g_blk * nodes_per_graph

    # Pad with dummy (empty) graphs / blocks; their outputs are sliced off.
    x_p = np.zeros((g_pad * nodes_per_graph, NODE_DIM), np.float32)
    x_p[:n_nodes] = x
    delta_p = np.zeros((g_pad, DELTA_DIM), np.float32)
    delta_p[:num_graphs] = delta

    # Per-block dense adjacency with edge multiplicities as int8 (4x less HBM traffic):
    # adj[blk, dst, src] += 1.  TODO(synk): int8 saturates above 127 parallel edges.
    src = edge_index[0].astype(np.int64)
    dst = edge_index[1].astype(np.int64)
    adj = np.zeros((tot_blocks, n_blk, n_blk), np.int8)
    np.add.at(adj, (dst // n_blk, dst % n_blk, src % n_blk), 1)

    meta = dict(num_graphs=num_graphs, g_blk=g_blk, nodes_per_graph=nodes_per_graph,
                blocks_per_step=bps, num_steps=num_steps, tot_blocks=tot_blocks)
    return (jnp.asarray(x_p.reshape(tot_blocks, n_blk, NODE_DIM)),
            jnp.asarray(delta_p.reshape(tot_blocks, g_blk, DELTA_DIM)),
            jnp.asarray(adj),
            meta)


@functools.lru_cache(maxsize=None)
def _build_forward(num_steps, blocks_per_step, g_blk, nodes_per_graph):
    """Build & jit the pallas_call for one static block configuration (cached)."""
    n_blk = g_blk * nodes_per_graph
    bps = blocks_per_step
    kernel = _make_kernel(bps, g_blk, nodes_per_graph)
    fwd = pl.pallas_call(
        kernel,
        out_shape=jax.ShapeDtypeStruct((num_steps * bps, g_blk, 128), jnp.float32),
        grid_spec=pltpu.PrefetchScalarGridSpec(
            num_scalar_prefetch=0,
            grid=(num_steps,),
            in_specs=[
                pl.BlockSpec((bps, n_blk, NODE_DIM), lambda i: (i, 0, 0)),
                pl.BlockSpec((bps, g_blk, DELTA_DIM), lambda i: (i, 0, 0)),
                pl.BlockSpec((bps, n_blk, n_blk), lambda i: (i, 0, 0)),   # int8 adjacency
                pl.BlockSpec((P_ROWS, 128), lambda i: (0, 0)),            # weights stay resident
            ],
            out_specs=pl.BlockSpec((bps, g_blk, 128), lambda i: (i, 0, 0)),
        ),
        compiler_params=pltpu.CompilerParams(dimension_semantics=("parallel",)),
    )
    return jax.jit(fwd)


def eit_localization_gnn_forward(x_blocks, delta_blocks, adj_blocks, p_slab, meta):
    """Run the kernel on pre-blocked device inputs; returns [num_graphs, MAX_CRACKS, 2]."""
    fwd = _build_forward(meta['num_steps'], meta['blocks_per_step'],
                         meta['g_blk'], meta['nodes_per_graph'])
    out = fwd(x_blocks, delta_blocks, adj_blocks, p_slab)   # [tot_blocks, g_blk, 128]
    coords = out.reshape(meta['tot_blocks'] * meta['g_blk'], 128)
    coords = coords[:meta['num_graphs'], :OUT_DIM]
    return coords.reshape(meta['num_graphs'], MAX_CRACKS, 2)


def init_params(key):
    ks = jax.random.split(key, 16)

    def linear(k, fin, fout):
        kw, kb = jax.random.split(k)
        bound = 1.0 / np.sqrt(fin)
        w = jax.random.uniform(kw, (fin, fout), jnp.float32, -bound, bound)
        b = jax.random.uniform(kb, (1, fout), jnp.float32, -bound, bound)
        return w, b

    p = {}
    p['w_node'], p['b_node'] = linear(ks[0], NODE_DIM, HIDDEN)
    p['w_delta'], p['b_delta'] = linear(ks[1], DELTA_DIM, HIDDEN)
    # GraphConv 1 / 3: lin_rel (with bias) + lin_root (no bias)
    p['w1_rel'], p['b1_rel'] = linear(ks[2], HIDDEN, HIDDEN)
    p['w1_root'], _ = linear(ks[3], HIDDEN, HIDDEN)
    p['w3_rel'], p['b3_rel'] = linear(ks[4], HIDDEN, HIDDEN)
    p['w3_root'], _ = linear(ks[5], HIDDEN, HIDDEN)
    # GATConv: shared lin (no bias), per-head attention vectors, output bias
    glorot = np.sqrt(6.0 / (HIDDEN + HEADS * HIDDEN))
    p['wg_lin'] = jax.random.uniform(ks[6], (HIDDEN, HEADS * HIDDEN), jnp.float32,
                                     -glorot, glorot)
    ga = np.sqrt(6.0 / (1 + HIDDEN))
    p['att_src'] = jax.random.uniform(ks[7], (HEADS, HIDDEN), jnp.float32, -ga, ga)
    p['att_dst'] = jax.random.uniform(ks[8], (HEADS, HIDDEN), jnp.float32, -ga, ga)
    p['bg'] = jnp.zeros((1, HIDDEN), jnp.float32)
    # BatchNorm1d (eval): fold running stats into per-layer scale/shift
    bn_gamma = 1.0 + 0.1 * jax.random.normal(ks[9], (3, HIDDEN), jnp.float32)
    bn_beta = 0.1 * jax.random.normal(ks[10], (3, HIDDEN), jnp.float32)
    bn_mean = 0.1 * jax.random.normal(ks[11], (3, HIDDEN), jnp.float32)
    bn_var = 1.0 + 0.1 * jax.random.uniform(ks[12], (3, HIDDEN), jnp.float32)
    p['bn_scale'] = bn_gamma / jnp.sqrt(bn_var + EPS)
    p['bn_shift'] = bn_beta - bn_mean * p['bn_scale']
    # LayerNorms (PyTorch default init: weight=1, bias=0)
    p['lng_g'] = jnp.ones((1, 2 * HIDDEN), jnp.float32)
    p['lng_b'] = jnp.zeros((1, 2 * HIDDEN), jnp.float32)
    p['lnd_g'] = jnp.ones((1, HIDDEN), jnp.float32)
    p['lnd_b'] = jnp.zeros((1, HIDDEN), jnp.float32)
    # output head: Linear(3*hidden, max_cracks*2)
    p['w_out'], p['b_out'] = linear(ks[13], 3 * HIDDEN, OUT_DIM)
    return p


if __name__ == "__main__":
    key = jax.random.PRNGKey(0)
    k_x, k_d, k_p = jax.random.split(key, 3)

    NODES_PER_GRAPH = 8
    NUM_GRAPHS = 64           # 4 blocks of 16 graphs; 2 blocks/step -> grid=(2,) (even for v7x)
    n_nodes = NUM_GRAPHS * NODES_PER_GRAPH

    # node features and per-graph delta features
    x = jax.random.normal(k_x, (n_nodes, NODE_DIM), jnp.float32)
    delta_features = jax.random.normal(k_d, (NUM_GRAPHS, 1, DELTA_DIM), jnp.float32)

    # each graph is an 8-node bidirectional ring
    edges = []
    for g in range(NUM_GRAPHS):
        base = g * NODES_PER_GRAPH
        for i in range(NODES_PER_GRAPH):
            j = (i + 1) % NODES_PER_GRAPH
            edges.append((base + i, base + j))
            edges.append((base + j, base + i))
    edge_index = np.array(edges, dtype=np.int32).T            # [2, E], (src, dst)
    batch = np.repeat(np.arange(NUM_GRAPHS, dtype=np.int32), NODES_PER_GRAPH)

    params = init_params(k_p)
    p_slab = pack_params(params)                               # once per parameter set
    x_blk, d_blk, adj_blk, meta = prepare_batch(               # once per dataset/batch
        x, delta_features, edge_index, batch,
        graphs_per_block=16, blocks_per_step=2)

    coords = eit_localization_gnn_forward(x_blk, d_blk, adj_blk, p_slab, meta)
    coords = jax.block_until_ready(coords)
    assert coords.shape == (NUM_GRAPHS, MAX_CRACKS, 2)
    assert bool(jnp.all((coords >= 0.0) & (coords <= 1.0)))
    print("KERNEL_OK")
</pallas_src>

<mosaic_0001>
module attributes {stable_mosaic.version = 11 : i64} {
  func.func @kernel(%arg0: i32, %arg1: memref<2x128x8xf32, #tpu.memory_space<vmem>>, %arg2: memref<2x16x8xf32, #tpu.memory_space<vmem>>, %arg3: memref<2x128x128xi8, #tpu.memory_space<vmem>>, %arg4: memref<208x128xf32, #tpu.memory_space<vmem>>, %arg5: memref<2x16x128xf32, #tpu.memory_space<vmem>>) attributes {dimension_semantics = [#tpu.dimension_semantics<parallel>], iteration_bounds = array<i64: 2>, scalar_prefetch = 0 : i64, scratch_operands = 0 : i64, tpu.core_type = #tpu.core_type<tc>, window_params = [{transform_indices = @transform_0, window_bounds = array<i64: 2, 128, 8>}, {transform_indices = @transform_1, window_bounds = array<i64: 2, 16, 8>}, {transform_indices = @transform_2, window_bounds = array<i64: 2, 128, 128>}, {pipeline_mode = #tpu.pipeline_mode<synchronous>, transform_indices = @transform_3, window_bounds = array<i64: 208, 128>}, {transform_indices = @transform_4, window_bounds = array<i64: 2, 16, 128>}]} {
    %0 = tpu.iota {dimensions = array<i32: 0>} : vector<128x128xi32>
    %1 = tpu.iota {dimensions = array<i32: 1>} : vector<128x128xi32>
    %2 = arith.cmpi eq, %0, %1 : vector<128x128xi32>
    %cst = arith.constant 1.000000e+00 : f32
    %3 = vector.broadcast %cst : f32 to vector<128x1xf32>
    %c0 = arith.constant 0 : index
    %c0_0 = arith.constant 0 : index
    %c0_1 = arith.constant 0 : index
    %4 = vector.load %arg1[%c0, %c0_0, %c0_1] : memref<2x128x8xf32, #tpu.memory_space<vmem>>, vector<1x128x8xf32>
    %5 = vector.shape_cast %4 : vector<1x128x8xf32> to vector<128x8xf32>
    %c0_2 = arith.constant 0 : index
    %c0_3 = arith.constant 0 : index
    %c0_4 = arith.constant 0 : index
    %6 = vector.load %arg3[%c0_2, %c0_3, %c0_4] : memref<2x128x128xi8, #tpu.memory_space<vmem>>, vector<1x128x128xi8>
    %7 = vector.shape_cast %6 : vector<1x128x128xi8> to vector<128x128xi8>
    %8 = arith.sitofp %7 : vector<128x128xi8> to vector<128x128xf32>
    %c64 = arith.constant 64 : index
    %c0_5 = arith.constant 0 : index
    %9 = vector.load %arg4[%c64, %c0_5] : memref<208x128xf32, #tpu.memory_space<vmem>>, vector<8x32xf32>
    %cst_6 = arith.constant dense<0.000000e+00> : vector<128x32xf32>
    %10 = tpu.matmul %5, %9, %cst_6 {dimension_numbers = #tpu.dot_dimension_numbers<[1], [0], [0], [1], [0, 0, 1, 1], [], []>} : vector<128x8xf32>, vector<8x32xf32>, vector<128x32xf32> -> vector<128x32xf32>
    %c204 = arith.constant 204 : index
    %c0_7 = arith.constant 0 : index
    %11 = vector.load %arg4[%c204, %c0_7] : memref<208x128xf32, #tpu.memory_space<vmem>>, vector<1x32xf32>
    %12 = vector.broadcast %11 : vector<1x32xf32> to vector<128x32xf32>
    %13 = arith.addf %10, %12 : vector<128x32xf32>
    %cst_8 = arith.constant 0.000000e+00 : f32
    %14 = vector.broadcast %cst_8 : f32 to vector<128x32xf32>
    %15 = arith.maximumf %13, %14 : vector<128x32xf32>
    %cst_9 = arith.constant dense<0.000000e+00> : vector<128x32xf32>
    %16 = tpu.matmul %8, %15, %cst_9 {dimension_numbers = #tpu.dot_dimension_numbers<[1], [0], [0], [1], [0, 0, 1, 1], [], []>} : vector<128x128xf32>, vector<128x32xf32>, vector<128x32xf32> -> vector<128x32xf32>
    %c32 = arith.constant 32 : index
    %c0_10 = arith.constant 0 : index
    %17 = vector.load %arg4[%c32, %c0_10] : memref<208x128xf32, #tpu.memory_space<vmem>>, vector<32x32xf32>
    %cst_11 = arith.constant dense<0.000000e+00> : vector<128x32xf32>
    %18 = tpu.matmul %16, %17, %cst_11 {dimension_numbers = #tpu.dot_dimension_numbers<[1], [0], [0], [1], [0, 0, 1, 1], [], []>} : vector<128x32xf32>, vector<32x32xf32>, vector<128x32xf32> -> vector<128x32xf32>
    %c32_12 = arith.constant 32 : index
    %c32_13 = arith.constant 32 : index
    %19 = vector.load %arg4[%c32_12, %c32_13] : memref<208x128xf32, #tpu.memory_space<vmem>>, vector<32x32xf32>
    %cst_14 = arith.constant dense<0.000000e+00> : vector<128x32xf32>
    %20 = tpu.matmul %15, %19, %cst_14 {dimension_numbers = #tpu.dot_dimension_numbers<[1], [0], [0], [1], [0, 0, 1, 1], [], []>} : vector<128x32xf32>, vector<32x32xf32>, vector<128x32xf32> -> vector<128x32xf32>
    %21 = arith.addf %18, %20 : vector<128x32xf32>
    %c204_15 = arith.constant 204 : index
    %c64_16 = arith.constant 64 : index
    %22 = vector.load %arg4[%c204_15, %c64_16] : memref<208x128xf32, #tpu.memory_space<vmem>>, vector<1x32xf32>
    %23 = vector.broadcast %22 : vector<1x32xf32> to vector<128x32xf32>
    %24 = arith.addf %21, %23 : vector<128x32xf32>
    %cst_17 = arith.constant 0.000000e+00 : f32
    %25 = vector.broadcast %cst_17 : f32 to vector<128x32xf32>
    %26 = arith.maximumf %24, %25 : vector<128x32xf32>
    %cst_18 = arith.constant 0.000000e+00 : f32
    %27 = vector.broadcast %cst_18 : f32 to vector<128x128xf32>
    %28 = arith.cmpf ogt, %8, %27 : vector<128x128xf32>
    %29 = arith.ori %28, %2 : vector<128x128xi1>
    %cst_19 = arith.constant 0.000000e+00 : f32
    %cst_20 = arith.constant -1.000000e+30 : f32
    %30 = vector.broadcast %cst_19 : f32 to vector<128x128xf32>
    %31 = vector.broadcast %cst_20 : f32 to vector<128x128xf32>
    %32 = arith.select %29, %30, %31 : vector<128x128xi1>, vector<128x128xf32>
    %c0_21 = arith.constant 0 : index
    %c0_22 = arith.constant 0 : index
    %33 = vector.load %arg4[%c0_21, %c0_22] : memref<208x128xf32, #tpu.memory_space<vmem>>, vector<32x128xf32>
    %cst_23 = arith.constant dense<0.000000e+00> : vector<128x128xf32>
    %34 = tpu.matmul %26, %33, %cst_23 {dimension_numbers = #tpu.dot_dimension_numbers<[1], [0], [0], [1], [0, 0, 1, 1], [], []>} : vector<128x32xf32>, vector<32x128xf32>, vector<128x128xf32> -> vector<128x128xf32>
    %c72 = arith.constant 72 : index
    %c0_24 = arith.constant 0 : index
    %35 = vector.load %arg4[%c72, %c0_24] : memref<208x128xf32, #tpu.memory_space<vmem>>, vector<32x4xf32>
    %cst_25 = arith.constant dense<0.000000e+00> : vector<128x4xf32>
    %36 = tpu.matmul %26, %35, %cst_25 {dimension_numbers = #tpu.dot_dimension_numbers<[1], [0], [0], [1], [0, 0, 1, 1], [], []>} : vector<128x32xf32>, vector<32x4xf32>, vector<128x4xf32> -> vector<128x4xf32>
    %c200 = arith.constant 200 : index
    %c0_26 = arith.constant 0 : index
    %37 = vector.load %arg4[%c200, %c0_26] : memref<208x128xf32, #tpu.memory_space<vmem>>, vector<4x32xf32>
    %cst_27 = arith.constant dense<0.000000e+00> : vector<4x128xf32>
    %38 = tpu.matmul %37, %26, %cst_27 {dimension_numbers = #tpu.dot_dimension_numbers<[1], [1], [0], [0], [0, 0, 1, 0], [], []>} : vector<4x32xf32>, vector<128x32xf32>, vector<4x128xf32> -> vector<4x128xf32>
    %cst_28 = arith.constant 0.000000e+00 : f32
    %39 = vector.broadcast %cst_28 : f32 to vector<128x32xf32>
    %40 = vector.extract_strided_slice %36 {offsets = [0, 0], sizes = [128, 1], strides = [1, 1]} : vector<128x4xf32> to vector<128x1xf32>
    %41 = vector.extract_strided_slice %38 {offsets = [0, 0], sizes = [1, 128], strides = [1, 1]} : vector<4x128xf32> to vector<1x128xf32>
    %42 = vector.broadcast %40 : vector<128x1xf32> to vector<128x128xf32>
    %43 = vector.broadcast %41 : vector<1x128xf32> to vector<128x128xf32>
    %44 = arith.addf %42, %43 : vector<128x128xf32>
    %cst_29 = arith.constant 2.000000e-01 : f32
    %45 = vector.broadcast %cst_29 : f32 to vector<128x128xf32>
    %46 = arith.mulf %45, %44 : vector<128x128xf32>
    %47 = arith.maximumf %44, %46 : vector<128x128xf32>
    %48 = arith.addf %47, %32 : vector<128x128xf32>
    %cst_30 = arith.constant dense<0xFF800000> : vector<128xf32>
    %49 = vector.multi_reduction <maximumf>, %48, %cst_30 [1] : vector<128x128xf32> to vector<128xf32>
    %50 = vector.shape_cast %49 : vector<128xf32> to vector<128x1xf32>
    %51 = vector.broadcast %50 : vector<128x1xf32> to vector<128x128xf32>
    %52 = arith.subf %48, %51 : vector<128x128xf32>
    %53 = math.exp %52 : vector<128x128xf32>
    %cst_31 = arith.constant dense<0.000000e+00> : vector<128x1xf32>
    %54 = tpu.matmul %53, %3, %cst_31 {dimension_numbers = #tpu.dot_dimension_numbers<[1], [0], [0], [1], [0, 0, 1, 1], [], []>} : vector<128x128xf32>, vector<128x1xf32>, vector<128x1xf32> -> vector<128x1xf32>
    %55 = tpu.reciprocal %54 {approx = true} : vector<128x1xf32> -> vector<128x1xf32>
    %56 = vector.extract_strided_slice %34 {offsets = [0, 0], sizes = [128, 32], strides = [1, 1]} : vector<128x128xf32> to vector<128x32xf32>
    %cst_32 = arith.constant dense<0.000000e+00> : vector<128x32xf32>
    %57 = tpu.matmul %53, %56, %cst_32 {dimension_numbers = #tpu.dot_dimension_numbers<[1], [0], [0], [1], [0, 0, 1, 1], [], []>} : vector<128x128xf32>, vector<128x32xf32>, vector<128x32xf32> -> vector<128x32xf32>
    %58 = vector.broadcast %55 : vector<128x1xf32> to vector<128x32xf32>
    %59 = arith.mulf %57, %58 : vector<128x32xf32>
    %60 = arith.addf %39, %59 : vector<128x32xf32>
    %61 = vector.extract_strided_slice %36 {offsets = [0, 1], sizes = [128, 1], strides = [1, 1]} : vector<128x4xf32> to vector<128x1xf32>
    %62 = vector.extract_strided_slice %38 {offsets = [1, 0], sizes = [1, 128], strides = [1, 1]} : vector<4x128xf32> to vector<1x128xf32>
    %63 = vector.broadcast %61 : vector<128x1xf32> to vector<128x128xf32>
    %64 = vector.broadcast %62 : vector<1x128xf32> to vector<128x128xf32>
    %65 = arith.addf %63, %64 : vector<128x128xf32>
    %cst_33 = arith.constant 2.000000e-01 : f32
    %66 = vector.broadcast %cst_33 : f32 to vector<128x128xf32>
    %67 = arith.mulf %66, %65 : vector<128x128xf32>
    %68 = arith.maximumf %65, %67 : vector<128x128xf32>
    %69 = arith.addf %68, %32 : vector<128x128xf32>
    %cst_34 = arith.constant dense<0xFF800000> : vector<128xf32>
    %70 = vector.multi_reduction <maximumf>, %69, %cst_34 [1] : vector<128x128xf32> to vector<128xf32>
    %71 = vector.shape_cast %70 : vector<128xf32> to vector<128x1xf32>
    %72 = vector.broadcast %71 : vector<128x1xf32> to vector<128x128xf32>
    %73 = arith.subf %69, %72 : vector<128x128xf32>
    %74 = math.exp %73 : vector<128x128xf32>
    %cst_35 = arith.constant dense<0.000000e+00> : vector<128x1xf32>
    %75 = tpu.matmul %74, %3, %cst_35 {dimension_numbers = #tpu.dot_dimension_numbers<[1], [0], [0], [1], [0, 0, 1, 1], [], []>} : vector<128x128xf32>, vector<128x1xf32>, vector<128x1xf32> -> vector<128x1xf32>
    %76 = tpu.reciprocal %75 {approx = true} : vector<128x1xf32> -> vector<128x1xf32>
    %77 = vector.extract_strided_slice %34 {offsets = [0, 32], sizes = [128, 32], strides = [1, 1]} : vector<128x128xf32> to vector<128x32xf32>
    %cst_36 = arith.constant dense<0.000000e+00> : vector<128x32xf32>
    %78 = tpu.matmul %74, %77, %cst_36 {dimension_numbers = #tpu.dot_dimension_numbers<[1], [0], [0], [1], [0, 0, 1, 1], [], []>} : vector<128x128xf32>, vector<128x32xf32>, vector<128x32xf32> -> vector<128x32xf32>
    %79 = vector.broadcast %76 : vector<128x1xf32> to vector<128x32xf32>
    %80 = arith.mulf %78, %79 : vector<128x32xf32>
    %81 = arith.addf %60, %80 : vector<128x32xf32>
    %82 = vector.extract_strided_slice %36 {offsets = [0, 2], sizes = [128, 1], strides = [1, 1]} : vector<128x4xf32> to vector<128x1xf32>
    %83 = vector.extract_strided_slice %38 {offsets = [2, 0], sizes = [1, 128], strides = [1, 1]} : vector<4x128xf32> to vector<1x128xf32>
    %84 = vector.broadcast %82 : vector<128x1xf32> to vector<128x128xf32>
    %85 = vector.broadcast %83 : vector<1x128xf32> to vector<128x128xf32>
    %86 = arith.addf %84, %85 : vector<128x128xf32>
    %cst_37 = arith.constant 2.000000e-01 : f32
    %87 = vector.broadcast %cst_37 : f32 to vector<128x128xf32>
    %88 = arith.mulf %87, %86 : vector<128x128xf32>
    %89 = arith.maximumf %86, %88 : vector<128x128xf32>
    %90 = arith.addf %89, %32 : vector<128x128xf32>
    %cst_38 = arith.constant dense<0xFF800000> : vector<128xf32>
    %91 = vector.multi_reduction <maximumf>, %90, %cst_38 [1] : vector<128x128xf32> to vector<128xf32>
    %92 = vector.shape_cast %91 : vector<128xf32> to vector<128x1xf32>
    %93 = vector.broadcast %92 : vector<128x1xf32> to vector<128x128xf32>
    %94 = arith.subf %90, %93 : vector<128x128xf32>
    %95 = math.exp %94 : vector<128x128xf32>
    %cst_39 = arith.constant dense<0.000000e+00> : vector<128x1xf32>
    %96 = tpu.matmul %95, %3, %cst_39 {dimension_numbers = #tpu.dot_dimension_numbers<[1], [0], [0], [1], [0, 0, 1, 1], [], []>} : vector<128x128xf32>, vector<128x1xf32>, vector<128x1xf32> -> vector<128x1xf32>
    %97 = tpu.reciprocal %96 {approx = true} : vector<128x1xf32> -> vector<128x1xf32>
    %98 = vector.extract_strided_slice %34 {offsets = [0, 64], sizes = [128, 32], strides = [1, 1]} : vector<128x128xf32> to vector<128x32xf32>
    %cst_40 = arith.constant dense<0.000000e+00> : vector<128x32xf32>
    %99 = tpu.matmul %95, %98, %cst_40 {dimension_numbers = #tpu.dot_dimension_numbers<[1], [0], [0], [1], [0, 0, 1, 1], [], []>} : vector<128x128xf32>, vector<128x32xf32>, vector<128x32xf32> -> vector<128x32xf32>
    %100 = vector.broadcast %97 : vector<128x1xf32> to vector<128x32xf32>
    %101 = arith.mulf %99, %100 : vector<128x32xf32>
    %102 = arith.addf %81, %101 : vector<128x32xf32>
    %103 = vector.extract_strided_slice %36 {offsets = [0, 3], sizes = [128, 1], strides = [1, 1]} : vector<128x4xf32> to vector<128x1xf32>
    %104 = vector.extract_strided_slice %38 {offsets = [3, 0], sizes = [1, 128], strides = [1, 1]} : vector<4x128xf32> to vector<1x128xf32>
    %105 = vector.broadcast %103 : vector<128x1xf32> to vector<128x128xf32>
    %106 = vector.broadcast %104 : vector<1x128xf32> to vector<128x128xf32>
    %107 = arith.addf %105, %106 : vector<128x128xf32>
    %cst_41 = arith.constant 2.000000e-01 : f32
    %108 = vector.broadcast %cst_41 : f32 to vector<128x128xf32>
    %109 = arith.mulf %108, %107 : vector<128x128xf32>
    %110 = arith.maximumf %107, %109 : vector<128x128xf32>
    %111 = arith.addf %110, %32 : vector<128x128xf32>
    %cst_42 = arith.constant dense<0xFF800000> : vector<128xf32>
    %112 = vector.multi_reduction <maximumf>, %111, %cst_42 [1] : vector<128x128xf32> to vector<128xf32>
    %113 = vector.shape_cast %112 : vector<128xf32> to vector<128x1xf32>
    %114 = vector.broadcast %113 : vector<128x1xf32> to vector<128x128xf32>
    %115 = arith.subf %111, %114 : vector<128x128xf32>
    %116 = math.exp %115 : vector<128x128xf32>
    %cst_43 = arith.constant dense<0.000000e+00> : vector<128x1xf32>
    %117 = tpu.matmul %116, %3, %cst_43 {dimension_numbers = #tpu.dot_dimension_numbers<[1], [0], [0], [1], [0, 0, 1, 1], [], []>} : vector<128x128xf32>, vector<128x1xf32>, vector<128x1xf32> -> vector<128x1xf32>
    %118 = tpu.reciprocal %117 {approx = true} : vector<128x1xf32> -> vector<128x1xf32>
    %119 = vector.extract_strided_slice %34 {offsets = [0, 96], sizes = [128, 32], strides = [1, 1]} : vector<128x128xf32> to vector<128x32xf32>
    %cst_44 = arith.constant dense<0.000000e+00> : vector<128x32xf32>
    %120 = tpu.matmul %116, %119, %cst_44 {dimension_numbers = #tpu.dot_dimension_numbers<[1], [0], [0], [1], [0, 0, 1, 1], [], []>} : vector<128x128xf32>, vector<128x32xf32>, vector<128x32xf32> -> vector<128x32xf32>
    %121 = vector.broadcast %118 : vector<128x1xf32> to vector<128x32xf32>
    %122 = arith.mulf %120, %121 : vector<128x32xf32>
    %123 = arith.addf %102, %122 : vector<128x32xf32>
    %c204_45 = arith.constant 204 : index
    %c96 = arith.constant 96 : index
    %124 = vector.load %arg4[%c204_45, %c96] : memref<208x128xf32, #tpu.memory_space<vmem>>, vector<1x32xf32>
    %125 = vector.broadcast %124 : vector<1x32xf32> to vector<128x32xf32>
    %126 = arith.addf %123, %125 : vector<128x32xf32>
    %cst_46 = arith.constant 0.000000e+00 : f32
    %127 = vector.broadcast %cst_46 : f32 to vector<128x32xf32>
    %128 = arith.maximumf %126, %127 : vector<128x32xf32>
    %c0_47 = arith.constant 0 : index
    %c0_48 = arith.constant 0 : index
    %c0_49 = arith.constant 0 : index
    %129 = vector.load %arg3[%c0_47, %c0_48, %c0_49] : memref<2x128x128xi8, #tpu.memory_space<vmem>>, vector<1x128x128xi8>
    %130 = vector.shape_cast %129 : vector<1x128x128xi8> to vector<128x128xi8>
    %131 = arith.sitofp %130 : vector<128x128xi8> to vector<128x128xf32>
    %cst_50 = arith.constant dense<0.000000e+00> : vector<128x32xf32>
    %132 = tpu.matmul %131, %128, %cst_50 {dimension_numbers = #tpu.dot_dimension_numbers<[1], [0], [0], [1], [0, 0, 1, 1], [], []>} : vector<128x128xf32>, vector<128x32xf32>, vector<128x32xf32> -> vector<128x32xf32>
    %c32_51 = arith.constant 32 : index
    %c64_52 = arith.constant 64 : index
    %133 = vector.load %arg4[%c32_51, %c64_52] : memref<208x128xf32, #tpu.memory_space<vmem>>, vector<32x32xf32>
    %cst_53 = arith.constant dense<0.000000e+00> : vector<128x32xf32>
    %134 = tpu.matmul %132, %133, %cst_53 {dimension_numbers = #tpu.dot_dimension_numbers<[1], [0], [0], [1], [0, 0, 1, 1], [], []>} : vector<128x32xf32>, vector<32x32xf32>, vector<128x32xf32> -> vector<128x32xf32>
    %c32_54 = arith.constant 32 : index
    %c96_55 = arith.constant 96 : index
    %135 = vector.load %arg4[%c32_54, %c96_55] : memref<208x128xf32, #tpu.memory_space<vmem>>, vector<32x32xf32>
    %cst_56 = arith.constant dense<0.000000e+00> : vector<128x32xf32>
    %136 = tpu.matmul %128, %135, %cst_56 {dimension_numbers = #tpu.dot_dimension_numbers<[1], [0], [0], [1], [0, 0, 1, 1], [], []>} : vector<128x32xf32>, vector<32x32xf32>, vector<128x32xf32> -> vector<128x32xf32>
    %137 = arith.addf %134, %136 : vector<128x32xf32>
    %c205 = arith.constant 205 : index
    %c0_57 = arith.constant 0 : index
    %138 = vector.load %arg4[%c205, %c0_57] : memref<208x128xf32, #tpu.memory_space<vmem>>, vector<1x32xf32>
    %139 = vector.broadcast %138 : vector<1x32xf32> to vector<128x32xf32>
    %140 = arith.addf %137, %139 : vector<128x32xf32>
    %cst_58 = arith.constant 0.000000e+00 : f32
    %141 = vector.broadcast %cst_58 : f32 to vector<128x32xf32>
    %142 = arith.maximumf %140, %141 : vector<128x32xf32>
    %143 = vector.shape_cast %142 : vector<128x32xf32> to vector<16x8x32xf32>
    %cst_59 = arith.constant dense<0.000000e+00> : vector<16x32xf32>
    %144 = vector.multi_reduction <add>, %143, %cst_59 [1] : vector<16x8x32xf32> to vector<16x32xf32>
    %cst_60 = arith.constant 8.000000e+00 : f32
    %145 = vector.broadcast %cst_60 : f32 to vector<16x32xf32>
    %146 = arith.divf %144, %145 : vector<16x32xf32>
    %cst_61 = arith.constant dense<0xFF800000> : vector<16x32xf32>
    %147 = vector.multi_reduction <maximumf>, %143, %cst_61 [1] : vector<16x8x32xf32> to vector<16x32xf32>
    %cst_62 = arith.constant dense<0.000000e+00> : vector<16xf32>
    %148 = vector.multi_reduction <add>, %146, %cst_62 [1] : vector<16x32xf32> to vector<16xf32>
    %149 = vector.shape_cast %148 : vector<16xf32> to vector<16x1xf32>
    %cst_63 = arith.constant dense<0.000000e+00> : vector<16xf32>
    %150 = vector.multi_reduction <add>, %147, %cst_63 [1] : vector<16x32xf32> to vector<16xf32>
    %151 = vector.shape_cast %150 : vector<16xf32> to vector<16x1xf32>
    %152 = arith.addf %149, %151 : vector<16x1xf32>
    %cst_64 = arith.constant 6.400000e+01 : f32
    %153 = vector.broadcast %cst_64 : f32 to vector<16x1xf32>
    %154 = arith.divf %152, %153 : vector<16x1xf32>
    %155 = vector.broadcast %154 : vector<16x1xf32> to vector<16x32xf32>
    %156 = arith.subf %146, %155 : vector<16x32xf32>
    %157 = arith.mulf %156, %156 : vector<16x32xf32>
    %cst_65 = arith.constant dense<0.000000e+00> : vector<16xf32>
    %158 = vector.multi_reduction <add>, %157, %cst_65 [1] : vector<16x32xf32> to vector<16xf32>
    %159 = vector.shape_cast %158 : vector<16xf32> to vector<16x1xf32>
    %160 = vector.broadcast %154 : vector<16x1xf32> to vector<16x32xf32>
    %161 = arith.subf %147, %160 : vector<16x32xf32>
    %162 = arith.mulf %161, %161 : vector<16x32xf32>
    %cst_66 = arith.constant dense<0.000000e+00> : vector<16xf32>
    %163 = vector.multi_reduction <add>, %162, %cst_66 [1] : vector<16x32xf32> to vector<16xf32>
    %164 = vector.shape_cast %163 : vector<16xf32> to vector<16x1xf32>
    %165 = arith.addf %159, %164 : vector<16x1xf32>
    %cst_67 = arith.constant 6.400000e+01 : f32
    %166 = vector.broadcast %cst_67 : f32 to vector<16x1xf32>
    %167 = arith.divf %165, %166 : vector<16x1xf32>
    %cst_68 = arith.constant 9.99999974E-6 : f32
    %168 = vector.broadcast %cst_68 : f32 to vector<16x1xf32>
    %169 = arith.addf %167, %168 : vector<16x1xf32>
    %170 = math.rsqrt %169 : vector<16x1xf32>
    %171 = vector.broadcast %154 : vector<16x1xf32> to vector<16x32xf32>
    %172 = arith.subf %146, %171 : vector<16x32xf32>
    %173 = vector.broadcast %170 : vector<16x1xf32> to vector<16x32xf32>
    %174 = arith.mulf %172, %173 : vector<16x32xf32>
    %c205_69 = arith.constant 205 : index
    %c32_70 = arith.constant 32 : index
    %175 = vector.load %arg4[%c205_69, %c32_70] : memref<208x128xf32, #tpu.memory_space<vmem>>, vector<1x32xf32>
    %176 = vector.broadcast %175 : vector<1x32xf32> to vector<16x32xf32>
    %177 = arith.mulf %174, %176 : vector<16x32xf32>
    %c206 = arith.constant 206 : index
    %c0_71 = arith.constant 0 : index
    %178 = vector.load %arg4[%c206, %c0_71] : memref<208x128xf32, #tpu.memory_space<vmem>>, vector<1x32xf32>
    %179 = vector.broadcast %178 : vector<1x32xf32> to vector<16x32xf32>
    %180 = arith.addf %177, %179 : vector<16x32xf32>
    %181 = vector.broadcast %154 : vector<16x1xf32> to vector<16x32xf32>
    %182 = arith.subf %147, %181 : vector<16x32xf32>
    %183 = vector.broadcast %170 : vector<16x1xf32> to vector<16x32xf32>
    %184 = arith.mulf %182, %183 : vector<16x32xf32>
    %c205_72 = arith.constant 205 : index
    %c64_73 = arith.constant 64 : index
    %185 = vector.load %arg4[%c205_72, %c64_73] : memref<208x128xf32, #tpu.memory_space<vmem>>, vector<1x32xf32>
    %186 = vector.broadcast %185 : vector<1x32xf32> to vector<16x32xf32>
    %187 = arith.mulf %184, %186 : vector<16x32xf32>
    %c206_74 = arith.constant 206 : index
    %c32_75 = arith.constant 32 : index
    %188 = vector.load %arg4[%c206_74, %c32_75] : memref<208x128xf32, #tpu.memory_space<vmem>>, vector<1x32xf32>
    %189 = vector.broadcast %188 : vector<1x32xf32> to vector<16x32xf32>
    %190 = arith.addf %187, %189 : vector<16x32xf32>
    %c0_76 = arith.constant 0 : index
    %c0_77 = arith.constant 0 : index
    %c0_78 = arith.constant 0 : index
    %191 = vector.load %arg2[%c0_76, %c0_77, %c0_78] : memref<2x16x8xf32, #tpu.memory_space<vmem>>, vector<1x16x8xf32>
    %192 = vector.shape_cast %191 : vector<1x16x8xf32> to vector<16x8xf32>
    %c64_79 = arith.constant 64 : index
    %c32_80 = arith.constant 32 : index
    %193 = vector.load %arg4[%c64_79, %c32_80] : memref<208x128xf32, #tpu.memory_space<vmem>>, vector<8x32xf32>
    %cst_81 = arith.constant dense<0.000000e+00> : vector<16x32xf32>
    %194 = tpu.matmul %192, %193, %cst_81 {dimension_numbers = #tpu.dot_dimension_numbers<[1], [0], [0], [1], [0, 0, 1, 1], [], []>} : vector<16x8xf32>, vector<8x32xf32>, vector<16x32xf32> -> vector<16x32xf32>
    %c204_82 = arith.constant 204 : index
    %c32_83 = arith.constant 32 : index
    %195 = vector.load %arg4[%c204_82, %c32_83] : memref<208x128xf32, #tpu.memory_space<vmem>>, vector<1x32xf32>
    %196 = vector.broadcast %195 : vector<1x32xf32> to vector<16x32xf32>
    %197 = arith.addf %194, %196 : vector<16x32xf32>
    %cst_84 = arith.constant 0.000000e+00 : f32
    %198 = vector.broadcast %cst_84 : f32 to vector<16x32xf32>
    %199 = arith.maximumf %197, %198 : vector<16x32xf32>
    %cst_85 = arith.constant dense<0.000000e+00> : vector<16xf32>
    %200 = vector.multi_reduction <add>, %199, %cst_85 [1] : vector<16x32xf32> to vector<16xf32>
    %201 = vector.shape_cast %200 : vector<16xf32> to vector<16x1xf32>
    %cst_86 = arith.constant 3.200000e+01 : f32
    %202 = vector.broadcast %cst_86 : f32 to vector<16x1xf32>
    %203 = arith.divf %201, %202 : vector<16x1xf32>
    %204 = vector.broadcast %203 : vector<16x1xf32> to vector<16x32xf32>
    %205 = arith.subf %199, %204 : vector<16x32xf32>
    %206 = arith.mulf %205, %205 : vector<16x32xf32>
    %cst_87 = arith.constant dense<0.000000e+00> : vector<16xf32>
    %207 = vector.multi_reduction <add>, %206, %cst_87 [1] : vector<16x32xf32> to vector<16xf32>
    %208 = vector.shape_cast %207 : vector<16xf32> to vector<16x1xf32>
    %cst_88 = arith.constant 3.200000e+01 : f32
    %209 = vector.broadcast %cst_88 : f32 to vector<16x1xf32>
    %210 = arith.divf %208, %209 : vector<16x1xf32>
    %211 = vector.broadcast %203 : vector<16x1xf32> to vector<16x32xf32>
    %212 = arith.subf %199, %211 : vector<16x32xf32>
    %cst_89 = arith.constant 9.99999974E-6 : f32
    %213 = vector.broadcast %cst_89 : f32 to vector<16x1xf32>
    %214 = arith.addf %210, %213 : vector<16x1xf32>
    %215 = math.rsqrt %214 : vector<16x1xf32>
    %216 = vector.broadcast %215 : vector<16x1xf32> to vector<16x32xf32>
    %217 = arith.mulf %212, %216 : vector<16x32xf32>
    %c205_90 = arith.constant 205 : index
    %c96_91 = arith.constant 96 : index
    %218 = vector.load %arg4[%c205_90, %c96_91] : memref<208x128xf32, #tpu.memory_space<vmem>>, vector<1x32xf32>
    %219 = vector.broadcast %218 : vector<1x32xf32> to vector<16x32xf32>
    %220 = arith.mulf %217, %219 : vector<16x32xf32>
    %c206_92 = arith.constant 206 : index
    %c64_93 = arith.constant 64 : index
    %221 = vector.load %arg4[%c206_92, %c64_93] : memref<208x128xf32, #tpu.memory_space<vmem>>, vector<1x32xf32>
    %222 = vector.broadcast %221 : vector<1x32xf32> to vector<16x32xf32>
    %223 = arith.addf %220, %222 : vector<16x32xf32>
    %c104 = arith.constant 104 : index
    %c0_94 = arith.constant 0 : index
    %224 = vector.load %arg4[%c104, %c0_94] : memref<208x128xf32, #tpu.memory_space<vmem>>, vector<32x128xf32>
    %cst_95 = arith.constant dense<0.000000e+00> : vector<16x128xf32>
    %225 = tpu.matmul %180, %224, %cst_95 {dimension_numbers = #tpu.dot_dimension_numbers<[1], [0], [0], [1], [0, 0, 1, 1], [], []>} : vector<16x32xf32>, vector<32x128xf32>, vector<16x128xf32> -> vector<16x128xf32>
    %c136 = arith.constant 136 : index
    %c0_96 = arith.constant 0 : index
    %226 = vector.load %arg4[%c136, %c0_96] : memref<208x128xf32, #tpu.memory_space<vmem>>, vector<32x128xf32>
    %cst_97 = arith.constant dense<0.000000e+00> : vector<16x128xf32>
    %227 = tpu.matmul %190, %226, %cst_97 {dimension_numbers = #tpu.dot_dimension_numbers<[1], [0], [0], [1], [0, 0, 1, 1], [], []>} : vector<16x32xf32>, vector<32x128xf32>, vector<16x128xf32> -> vector<16x128xf32>
    %228 = arith.addf %225, %227 : vector<16x128xf32>
    %c168 = arith.constant 168 : index
    %c0_98 = arith.constant 0 : index
    %229 = vector.load %arg4[%c168, %c0_98] : memref<208x128xf32, #tpu.memory_space<vmem>>, vector<32x128xf32>
    %cst_99 = arith.constant dense<0.000000e+00> : vector<16x128xf32>
    %230 = tpu.matmul %223, %229, %cst_99 {dimension_numbers = #tpu.dot_dimension_numbers<[1], [0], [0], [1], [0, 0, 1, 1], [], []>} : vector<16x32xf32>, vector<32x128xf32>, vector<16x128xf32> -> vector<16x128xf32>
    %231 = arith.addf %228, %230 : vector<16x128xf32>
    %c207 = arith.constant 207 : index
    %c0_100 = arith.constant 0 : index
    %232 = vector.load %arg4[%c207, %c0_100] : memref<208x128xf32, #tpu.memory_space<vmem>>, vector<1x128xf32>
    %233 = vector.broadcast %232 : vector<1x128xf32> to vector<16x128xf32>
    %234 = arith.addf %231, %233 : vector<16x128xf32>
    %235 = arith.negf %234 : vector<16x128xf32>
    %236 = math.exp %235 : vector<16x128xf32>
    %cst_101 = arith.constant 1.000000e+00 : f32
    %237 = vector.broadcast %cst_101 : f32 to vector<16x128xf32>
    %238 = arith.addf %237, %236 : vector<16x128xf32>
    %239 = arith.divf %237, %238 : vector<16x128xf32>
    %c0_102 = arith.constant 0 : index
    %c0_103 = arith.constant 0 : index
    %c0_104 = arith.constant 0 : index
    %240 = vector.load %arg5[%c0_102, %c0_103, %c0_104] : memref<2x16x128xf32, #tpu.memory_space<vmem>>, vector<1x16x128xf32>
    %241 = vector.shape_cast %240 : vector<1x16x128xf32> to vector<16x128xf32>
    %242 = vector.shape_cast %239 : vector<16x128xf32> to vector<1x16x128xf32>
    tpu.vector_store %arg5[%c0_102, %c0_103, %c0_104], %242 {strides = array<i32>} : memref<2x16x128xf32, #tpu.memory_space<vmem>>, vector<1x16x128xf32>,
    %c1 = arith.constant 1 : index
    %c0_105 = arith.constant 0 : index
    %c0_106 = arith.constant 0 : index
    %243 = vector.load %arg1[%c1, %c0_105, %c0_106] : memref<2x128x8xf32, #tpu.memory_space<vmem>>, vector<1x128x8xf32>
    %244 = vector.shape_cast %243 : vector<1x128x8xf32> to vector<128x8xf32>
    %c1_107 = arith.constant 1 : index
    %c0_108 = arith.constant 0 : index
    %c0_109 = arith.constant 0 : index
    %245 = vector.load %arg3[%c1_107, %c0_108, %c0_109] : memref<2x128x128xi8, #tpu.memory_space<vmem>>, vector<1x128x128xi8>
    %246 = vector.shape_cast %245 : vector<1x128x128xi8> to vector<128x128xi8>
    %247 = arith.sitofp %246 : vector<128x128xi8> to vector<128x128xf32>
    %c64_110 = arith.constant 64 : index
    %c0_111 = arith.constant 0 : index
    %248 = vector.load %arg4[%c64_110, %c0_111] : memref<208x128xf32, #tpu.memory_space<vmem>>, vector<8x32xf32>
    %cst_112 = arith.constant dense<0.000000e+00> : vector<128x32xf32>
    %249 = tpu.matmul %244, %248, %cst_112 {dimension_numbers = #tpu.dot_dimension_numbers<[1], [0], [0], [1], [0, 0, 1, 1], [], []>} : vector<128x8xf32>, vector<8x32xf32>, vector<128x32xf32> -> vector<128x32xf32>
    %c204_113 = arith.constant 204 : index
    %c0_114 = arith.constant 0 : index
    %250 = vector.load %arg4[%c204_113, %c0_114] : memref<208x128xf32, #tpu.memory_space<vmem>>, vector<1x32xf32>
    %251 = vector.broadcast %250 : vector<1x32xf32> to vector<128x32xf32>
    %252 = arith.addf %249, %251 : vector<128x32xf32>
    %cst_115 = arith.constant 0.000000e+00 : f32
    %253 = vector.broadcast %cst_115 : f32 to vector<128x32xf32>
    %254 = arith.maximumf %252, %253 : vector<128x32xf32>
    %cst_116 = arith.constant dense<0.000000e+00> : vector<128x32xf32>
    %255 = tpu.matmul %247, %254, %cst_116 {dimension_numbers = #tpu.dot_dimension_numbers<[1], [0], [0], [1], [0, 0, 1, 1], [], []>} : vector<128x128xf32>, vector<128x32xf32>, vector<128x32xf32> -> vector<128x32xf32>
    %c32_117 = arith.constant 32 : index
    %c0_118 = arith.constant 0 : index
    %256 = vector.load %arg4[%c32_117, %c0_118] : memref<208x128xf32, #tpu.memory_space<vmem>>, vector<32x32xf32>
    %cst_119 = arith.constant dense<0.000000e+00> : vector<128x32xf32>
    %257 = tpu.matmul %255, %256, %cst_119 {dimension_numbers = #tpu.dot_dimension_numbers<[1], [0], [0], [1], [0, 0, 1, 1], [], []>} : vector<128x32xf32>, vector<32x32xf32>, vector<128x32xf32> -> vector<128x32xf32>
    %c32_120 = arith.constant 32 : index
    %c32_121 = arith.constant 32 : index
    %258 = vector.load %arg4[%c32_120, %c32_121] : memref<208x128xf32, #tpu.memory_space<vmem>>, vector<32x32xf32>
    %cst_122 = arith.constant dense<0.000000e+00> : vector<128x32xf32>
    %259 = tpu.matmul %254, %258, %cst_122 {dimension_numbers = #tpu.dot_dimension_numbers<[1], [0], [0], [1], [0, 0, 1, 1], [], []>} : vector<128x32xf32>, vector<32x32xf32>, vector<128x32xf32> -> vector<128x32xf32>
    %260 = arith.addf %257, %259 : vector<128x32xf32>
    %c204_123 = arith.constant 204 : index
    %c64_124 = arith.constant 64 : index
    %261 = vector.load %arg4[%c204_123, %c64_124] : memref<208x128xf32, #tpu.memory_space<vmem>>, vector<1x32xf32>
    %262 = vector.broadcast %261 : vector<1x32xf32> to vector<128x32xf32>
    %263 = arith.addf %260, %262 : vector<128x32xf32>
    %cst_125 = arith.constant 0.000000e+00 : f32
    %264 = vector.broadcast %cst_125 : f32 to vector<128x32xf32>
    %265 = arith.maximumf %263, %264 : vector<128x32xf32>
    %cst_126 = arith.constant 0.000000e+00 : f32
    %266 = vector.broadcast %cst_126 : f32 to vector<128x128xf32>
    %267 = arith.cmpf ogt, %247, %266 : vector<128x128xf32>
    %268 = arith.ori %267, %2 : vector<128x128xi1>
    %cst_127 = arith.constant 0.000000e+00 : f32
    %cst_128 = arith.constant -1.000000e+30 : f32
    %269 = vector.broadcast %cst_127 : f32 to vector<128x128xf32>
    %270 = vector.broadcast %cst_128 : f32 to vector<128x128xf32>
    %271 = arith.select %268, %269, %270 : vector<128x128xi1>, vector<128x128xf32>
    %c0_129 = arith.constant 0 : index
    %c0_130 = arith.constant 0 : index
    %272 = vector.load %arg4[%c0_129, %c0_130] : memref<208x128xf32, #tpu.memory_space<vmem>>, vector<32x128xf32>
    %cst_131 = arith.constant dense<0.000000e+00> : vector<128x128xf32>
    %273 = tpu.matmul %265, %272, %cst_131 {dimension_numbers = #tpu.dot_dimension_numbers<[1], [0], [0], [1], [0, 0, 1, 1], [], []>} : vector<128x32xf32>, vector<32x128xf32>, vector<128x128xf32> -> vector<128x128xf32>
    %c72_132 = arith.constant 72 : index
    %c0_133 = arith.constant 0 : index
    %274 = vector.load %arg4[%c72_132, %c0_133] : memref<208x128xf32, #tpu.memory_space<vmem>>, vector<32x4xf32>
    %cst_134 = arith.constant dense<0.000000e+00> : vector<128x4xf32>
    %275 = tpu.matmul %265, %274, %cst_134 {dimension_numbers = #tpu.dot_dimension_numbers<[1], [0], [0], [1], [0, 0, 1, 1], [], []>} : vector<128x32xf32>, vector<32x4xf32>, vector<128x4xf32> -> vector<128x4xf32>
    %c200_135 = arith.constant 200 : index
    %c0_136 = arith.constant 0 : index
    %276 = vector.load %arg4[%c200_135, %c0_136] : memref<208x128xf32, #tpu.memory_space<vmem>>, vector<4x32xf32>
    %cst_137 = arith.constant dense<0.000000e+00> : vector<4x128xf32>
    %277 = tpu.matmul %276, %265, %cst_137 {dimension_numbers = #tpu.dot_dimension_numbers<[1], [1], [0], [0], [0, 0, 1, 0], [], []>} : vector<4x32xf32>, vector<128x32xf32>, vector<4x128xf32> -> vector<4x128xf32>
    %cst_138 = arith.constant 0.000000e+00 : f32
    %278 = vector.broadcast %cst_138 : f32 to vector<128x32xf32>
    %279 = vector.extract_strided_slice %275 {offsets = [0, 0], sizes = [128, 1], strides = [1, 1]} : vector<128x4xf32> to vector<128x1xf32>
    %280 = vector.extract_strided_slice %277 {offsets = [0, 0], sizes = [1, 128], strides = [1, 1]} : vector<4x128xf32> to vector<1x128xf32>
    %281 = vector.broadcast %279 : vector<128x1xf32> to vector<128x128xf32>
    %282 = vector.broadcast %280 : vector<1x128xf32> to vector<128x128xf32>
    %283 = arith.addf %281, %282 : vector<128x128xf32>
    %cst_139 = arith.constant 2.000000e-01 : f32
    %284 = vector.broadcast %cst_139 : f32 to vector<128x128xf32>
    %285 = arith.mulf %284, %283 : vector<128x128xf32>
    %286 = arith.maximumf %283, %285 : vector<128x128xf32>
    %287 = arith.addf %286, %271 : vector<128x128xf32>
    %cst_140 = arith.constant dense<0xFF800000> : vector<128xf32>
    %288 = vector.multi_reduction <maximumf>, %287, %cst_140 [1] : vector<128x128xf32> to vector<128xf32>
    %289 = vector.shape_cast %288 : vector<128xf32> to vector<128x1xf32>
    %290 = vector.broadcast %289 : vector<128x1xf32> to vector<128x128xf32>
    %291 = arith.subf %287, %290 : vector<128x128xf32>
    %292 = math.exp %291 : vector<128x128xf32>
    %cst_141 = arith.constant dense<0.000000e+00> : vector<128x1xf32>
    %293 = tpu.matmul %292, %3, %cst_141 {dimension_numbers = #tpu.dot_dimension_numbers<[1], [0], [0], [1], [0, 0, 1, 1], [], []>} : vector<128x128xf32>, vector<128x1xf32>, vector<128x1xf32> -> vector<128x1xf32>
    %294 = tpu.reciprocal %293 {approx = true} : vector<128x1xf32> -> vector<128x1xf32>
    %295 = vector.extract_strided_slice %273 {offsets = [0, 0], sizes = [128, 32], strides = [1, 1]} : vector<128x128xf32> to vector<128x32xf32>
    %cst_142 = arith.constant dense<0.000000e+00> : vector<128x32xf32>
    %296 = tpu.matmul %292, %295, %cst_142 {dimension_numbers = #tpu.dot_dimension_numbers<[1], [0], [0], [1], [0, 0, 1, 1], [], []>} : vector<128x128xf32>, vector<128x32xf32>, vector<128x32xf32> -> vector<128x32xf32>
    %297 = vector.broadcast %294 : vector<128x1xf32> to vector<128x32xf32>
    %298 = arith.mulf %296, %297 : vector<128x32xf32>
    %299 = arith.addf %278, %298 : vector<128x32xf32>
    %300 = vector.extract_strided_slice %275 {offsets = [0, 1], sizes = [128, 1], strides = [1, 1]} : vector<128x4xf32> to vector<128x1xf32>
    %301 = vector.extract_strided_slice %277 {offsets = [1, 0], sizes = [1, 128], strides = [1, 1]} : vector<4x128xf32> to vector<1x128xf32>
    %302 = vector.broadcast %300 : vector<128x1xf32> to vector<128x128xf32>
    %303 = vector.broadcast %301 : vector<1x128xf32> to vector<128x128xf32>
    %304 = arith.addf %302, %303 : vector<128x128xf32>
    %cst_143 = arith.constant 2.000000e-01 : f32
    %305 = vector.broadcast %cst_143 : f32 to vector<128x128xf32>
    %306 = arith.mulf %305, %304 : vector<128x128xf32>
    %307 = arith.maximumf %304, %306 : vector<128x128xf32>
    %308 = arith.addf %307, %271 : vector<128x128xf32>
    %cst_144 = arith.constant dense<0xFF800000> : vector<128xf32>
    %309 = vector.multi_reduction <maximumf>, %308, %cst_144 [1] : vector<128x128xf32> to vector<128xf32>
    %310 = vector.shape_cast %309 : vector<128xf32> to vector<128x1xf32>
    %311 = vector.broadcast %310 : vector<128x1xf32> to vector<128x128xf32>
    %312 = arith.subf %308, %311 : vector<128x128xf32>
    %313 = math.exp %312 : vector<128x128xf32>
    %cst_145 = arith.constant dense<0.000000e+00> : vector<128x1xf32>
    %314 = tpu.matmul %313, %3, %cst_145 {dimension_numbers = #tpu.dot_dimension_numbers<[1], [0], [0], [1], [0, 0, 1, 1], [], []>} : vector<128x128xf32>, vector<128x1xf32>, vector<128x1xf32> -> vector<128x1xf32>
    %315 = tpu.reciprocal %314 {approx = true} : vector<128x1xf32> -> vector<128x1xf32>
    %316 = vector.extract_strided_slice %273 {offsets = [0, 32], sizes = [128, 32], strides = [1, 1]} : vector<128x128xf32> to vector<128x32xf32>
    %cst_146 = arith.constant dense<0.000000e+00> : vector<128x32xf32>
    %317 = tpu.matmul %313, %316, %cst_146 {dimension_numbers = #tpu.dot_dimension_numbers<[1], [0], [0], [1], [0, 0, 1, 1], [], []>} : vector<128x128xf32>, vector<128x32xf32>, vector<128x32xf32> -> vector<128x32xf32>
    %318 = vector.broadcast %315 : vector<128x1xf32> to vector<128x32xf32>
    %319 = arith.mulf %317, %318 : vector<128x32xf32>
    %320 = arith.addf %299, %319 : vector<128x32xf32>
    %321 = vector.extract_strided_slice %275 {offsets = [0, 2], sizes = [128, 1], strides = [1, 1]} : vector<128x4xf32> to vector<128x1xf32>
    %322 = vector.extract_strided_slice %277 {offsets = [2, 0], sizes = [1, 128], strides = [1, 1]} : vector<4x128xf32> to vector<1x128xf32>
    %323 = vector.broadcast %321 : vector<128x1xf32> to vector<128x128xf32>
    %324 = vector.broadcast %322 : vector<1x128xf32> to vector<128x128xf32>
    %325 = arith.addf %323, %324 : vector<128x128xf32>
    %cst_147 = arith.constant 2.000000e-01 : f32
    %326 = vector.broadcast %cst_147 : f32 to vector<128x128xf32>
    %327 = arith.mulf %326, %325 : vector<128x128xf32>
    %328 = arith.maximumf %325, %327 : vector<128x128xf32>
    %329 = arith.addf %328, %271 : vector<128x128xf32>
    %cst_148 = arith.constant dense<0xFF800000> : vector<128xf32>
    %330 = vector.multi_reduction <maximumf>, %329, %cst_148 [1] : vector<128x128xf32> to vector<128xf32>
    %331 = vector.shape_cast %330 : vector<128xf32> to vector<128x1xf32>
    %332 = vector.broadcast %331 : vector<128x1xf32> to vector<128x128xf32>
    %333 = arith.subf %329, %332 : vector<128x128xf32>
    %334 = math.exp %333 : vector<128x128xf32>
    %cst_149 = arith.constant dense<0.000000e+00> : vector<128x1xf32>
    %335 = tpu.matmul %334, %3, %cst_149 {dimension_numbers = #tpu.dot_dimension_numbers<[1], [0], [0], [1], [0, 0, 1, 1], [], []>} : vector<128x128xf32>, vector<128x1xf32>, vector<128x1xf32> -> vector<128x1xf32>
    %336 = tpu.reciprocal %335 {approx = true} : vector<128x1xf32> -> vector<128x1xf32>
    %337 = vector.extract_strided_slice %273 {offsets = [0, 64], sizes = [128, 32], strides = [1, 1]} : vector<128x128xf32> to vector<128x32xf32>
    %cst_150 = arith.constant dense<0.000000e+00> : vector<128x32xf32>
    %338 = tpu.matmul %334, %337, %cst_150 {dimension_numbers = #tpu.dot_dimension_numbers<[1], [0], [0], [1], [0, 0, 1, 1], [], []>} : vector<128x128xf32>, vector<128x32xf32>, vector<128x32xf32> -> vector<128x32xf32>
    %339 = vector.broadcast %336 : vector<128x1xf32> to vector<128x32xf32>
    %340 = arith.mulf %338, %339 : vector<128x32xf32>
    %341 = arith.addf %320, %340 : vector<128x32xf32>
    %342 = vector.extract_strided_slice %275 {offsets = [0, 3], sizes = [128, 1], strides = [1, 1]} : vector<128x4xf32> to vector<128x1xf32>
    %343 = vector.extract_strided_slice %277 {offsets = [3, 0], sizes = [1, 128], strides = [1, 1]} : vector<4x128xf32> to vector<1x128xf32>
    %344 = vector.broadcast %342 : vector<128x1xf32> to vector<128x128xf32>
    %345 = vector.broadcast %343 : vector<1x128xf32> to vector<128x128xf32>
    %346 = arith.addf %344, %345 : vector<128x128xf32>
    %cst_151 = arith.constant 2.000000e-01 : f32
    %347 = vector.broadcast %cst_151 : f32 to vector<128x128xf32>
    %348 = arith.mulf %347, %346 : vector<128x128xf32>
    %349 = arith.maximumf %346, %348 : vector<128x128xf32>
    %350 = arith.addf %349, %271 : vector<128x128xf32>
    %cst_152 = arith.constant dense<0xFF800000> : vector<128xf32>
    %351 = vector.multi_reduction <maximumf>, %350, %cst_152 [1] : vector<128x128xf32> to vector<128xf32>
    %352 = vector.shape_cast %351 : vector<128xf32> to vector<128x1xf32>
    %353 = vector.broadcast %352 : vector<128x1xf32> to vector<128x128xf32>
    %354 = arith.subf %350, %353 : vector<128x128xf32>
    %355 = math.exp %354 : vector<128x128xf32>
    %cst_153 = arith.constant dense<0.000000e+00> : vector<128x1xf32>
    %356 = tpu.matmul %355, %3, %cst_153 {dimension_numbers = #tpu.dot_dimension_numbers<[1], [0], [0], [1], [0, 0, 1, 1], [], []>} : vector<128x128xf32>, vector<128x1xf32>, vector<128x1xf32> -> vector<128x1xf32>
    %357 = tpu.reciprocal %356 {approx = true} : vector<128x1xf32> -> vector<128x1xf32>
    %358 = vector.extract_strided_slice %273 {offsets = [0, 96], sizes = [128, 32], strides = [1, 1]} : vector<128x128xf32> to vector<128x32xf32>
    %cst_154 = arith.constant dense<0.000000e+00> : vector<128x32xf32>
    %359 = tpu.matmul %355, %358, %cst_154 {dimension_numbers = #tpu.dot_dimension_numbers<[1], [0], [0], [1], [0, 0, 1, 1], [], []>} : vector<128x128xf32>, vector<128x32xf32>, vector<128x32xf32> -> vector<128x32xf32>
    %360 = vector.broadcast %357 : vector<128x1xf32> to vector<128x32xf32>
    %361 = arith.mulf %359, %360 : vector<128x32xf32>
    %362 = arith.addf %341, %361 : vector<128x32xf32>
    %c204_155 = arith.constant 204 : index
    %c96_156 = arith.constant 96 : index
    %363 = vector.load %arg4[%c204_155, %c96_156] : memref<208x128xf32, #tpu.memory_space<vmem>>, vector<1x32xf32>
    %364 = vector.broadcast %363 : vector<1x32xf32> to vector<128x32xf32>
    %365 = arith.addf %362, %364 : vector<128x32xf32>
    %cst_157 = arith.constant 0.000000e+00 : f32
    %366 = vector.broadcast %cst_157 : f32 to vector<128x32xf32>
    %367 = arith.maximumf %365, %366 : vector<128x32xf32>
    %c1_158 = arith.constant 1 : index
    %c0_159 = arith.constant 0 : index
    %c0_160 = arith.constant 0 : index
    %368 = vector.load %arg3[%c1_158, %c0_159, %c0_160] : memref<2x128x128xi8, #tpu.memory_space<vmem>>, vector<1x128x128xi8>
    %369 = vector.shape_cast %368 : vector<1x128x128xi8> to vector<128x128xi8>
    %370 = arith.sitofp %369 : vector<128x128xi8> to vector<128x128xf32>
    %cst_161 = arith.constant dense<0.000000e+00> : vector<128x32xf32>
    %371 = tpu.matmul %370, %367, %cst_161 {dimension_numbers = #tpu.dot_dimension_numbers<[1], [0], [0], [1], [0, 0, 1, 1], [], []>} : vector<128x128xf32>, vector<128x32xf32>, vector<128x32xf32> -> vector<128x32xf32>
    %c32_162 = arith.constant 32 : index
    %c64_163 = arith.constant 64 : index
    %372 = vector.load %arg4[%c32_162, %c64_163] : memref<208x128xf32, #tpu.memory_space<vmem>>, vector<32x32xf32>
    %cst_164 = arith.constant dense<0.000000e+00> : vector<128x32xf32>
    %373 = tpu.matmul %371, %372, %cst_164 {dimension_numbers = #tpu.dot_dimension_numbers<[1], [0], [0], [1], [0, 0, 1, 1], [], []>} : vector<128x32xf32>, vector<32x32xf32>, vector<128x32xf32> -> vector<128x32xf32>
    %c32_165 = arith.constant 32 : index
    %c96_166 = arith.constant 96 : index
    %374 = vector.load %arg4[%c32_165, %c96_166] : memref<208x128xf32, #tpu.memory_space<vmem>>, vector<32x32xf32>
    %cst_167 = arith.constant dense<0.000000e+00> : vector<128x32xf32>
    %375 = tpu.matmul %367, %374, %cst_167 {dimension_numbers = #tpu.dot_dimension_numbers<[1], [0], [0], [1], [0, 0, 1, 1], [], []>} : vector<128x32xf32>, vector<32x32xf32>, vector<128x32xf32> -> vector<128x32xf32>
    %376 = arith.addf %373, %375 : vector<128x32xf32>
    %c205_168 = arith.constant 205 : index
    %c0_169 = arith.constant 0 : index
    %377 = vector.load %arg4[%c205_168, %c0_169] : memref<208x128xf32, #tpu.memory_space<vmem>>, vector<1x32xf32>
    %378 = vector.broadcast %377 : vector<1x32xf32> to vector<128x32xf32>
    %379 = arith.addf %376, %378 : vector<128x32xf32>
    %cst_170 = arith.constant 0.000000e+00 : f32
    %380 = vector.broadcast %cst_170 : f32 to vector<128x32xf32>
    %381 = arith.maximumf %379, %380 : vector<128x32xf32>
    %382 = vector.shape_cast %381 : vector<128x32xf32> to vector<16x8x32xf32>
    %cst_171 = arith.constant dense<0.000000e+00> : vector<16x32xf32>
    %383 = vector.multi_reduction <add>, %382, %cst_171 [1] : vector<16x8x32xf32> to vector<16x32xf32>
    %cst_172 = arith.constant 8.000000e+00 : f32
    %384 = vector.broadcast %cst_172 : f32 to vector<16x32xf32>
    %385 = arith.divf %383, %384 : vector<16x32xf32>
    %cst_173 = arith.constant dense<0xFF800000> : vector<16x32xf32>
    %386 = vector.multi_reduction <maximumf>, %382, %cst_173 [1] : vector<16x8x32xf32> to vector<16x32xf32>
    %cst_174 = arith.constant dense<0.000000e+00> : vector<16xf32>
    %387 = vector.multi_reduction <add>, %385, %cst_174 [1] : vector<16x32xf32> to vector<16xf32>
    %388 = vector.shape_cast %387 : vector<16xf32> to vector<16x1xf32>
    %cst_175 = arith.constant dense<0.000000e+00> : vector<16xf32>
    %389 = vector.multi_reduction <add>, %386, %cst_175 [1] : vector<16x32xf32> to vector<16xf32>
    %390 = vector.shape_cast %389 : vector<16xf32> to vector<16x1xf32>
    %391 = arith.addf %388, %390 : vector<16x1xf32>
    %cst_176 = arith.constant 6.400000e+01 : f32
    %392 = vector.broadcast %cst_176 : f32 to vector<16x1xf32>
    %393 = arith.divf %391, %392 : vector<16x1xf32>
    %394 = vector.broadcast %393 : vector<16x1xf32> to vector<16x32xf32>
    %395 = arith.subf %385, %394 : vector<16x32xf32>
    %396 = arith.mulf %395, %395 : vector<16x32xf32>
    %cst_177 = arith.constant dense<0.000000e+00> : vector<16xf32>
    %397 = vector.multi_reduction <add>, %396, %cst_177 [1] : vector<16x32xf32> to vector<16xf32>
    %398 = vector.shape_cast %397 : vector<16xf32> to vector<16x1xf32>
    %399 = vector.broadcast %393 : vector<16x1xf32> to vector<16x32xf32>
    %400 = arith.subf %386, %399 : vector<16x32xf32>
    %401 = arith.mulf %400, %400 : vector<16x32xf32>
    %cst_178 = arith.constant dense<0.000000e+00> : vector<16xf32>
    %402 = vector.multi_reduction <add>, %401, %cst_178 [1] : vector<16x32xf32> to vector<16xf32>
    %403 = vector.shape_cast %402 : vector<16xf32> to vector<16x1xf32>
    %404 = arith.addf %398, %403 : vector<16x1xf32>
    %cst_179 = arith.constant 6.400000e+01 : f32
    %405 = vector.broadcast %cst_179 : f32 to vector<16x1xf32>
    %406 = arith.divf %404, %405 : vector<16x1xf32>
    %cst_180 = arith.constant 9.99999974E-6 : f32
    %407 = vector.broadcast %cst_180 : f32 to vector<16x1xf32>
    %408 = arith.addf %406, %407 : vector<16x1xf32>
    %409 = math.rsqrt %408 : vector<16x1xf32>
    %410 = vector.broadcast %393 : vector<16x1xf32> to vector<16x32xf32>
    %411 = arith.subf %385, %410 : vector<16x32xf32>
    %412 = vector.broadcast %409 : vector<16x1xf32> to vector<16x32xf32>
    %413 = arith.mulf %411, %412 : vector<16x32xf32>
    %c205_181 = arith.constant 205 : index
    %c32_182 = arith.constant 32 : index
    %414 = vector.load %arg4[%c205_181, %c32_182] : memref<208x128xf32, #tpu.memory_space<vmem>>, vector<1x32xf32>
    %415 = vector.broadcast %414 : vector<1x32xf32> to vector<16x32xf32>
    %416 = arith.mulf %413, %415 : vector<16x32xf32>
    %c206_183 = arith.constant 206 : index
    %c0_184 = arith.constant 0 : index
    %417 = vector.load %arg4[%c206_183, %c0_184] : memref<208x128xf32, #tpu.memory_space<vmem>>, vector<1x32xf32>
    %418 = vector.broadcast %417 : vector<1x32xf32> to vector<16x32xf32>
    %419 = arith.addf %416, %418 : vector<16x32xf32>
    %420 = vector.broadcast %393 : vector<16x1xf32> to vector<16x32xf32>
    %421 = arith.subf %386, %420 : vector<16x32xf32>
    %422 = vector.broadcast %409 : vector<16x1xf32> to vector<16x32xf32>
    %423 = arith.mulf %421, %422 : vector<16x32xf32>
    %c205_185 = arith.constant 205 : index
    %c64_186 = arith.constant 64 : index
    %424 = vector.load %arg4[%c205_185, %c64_186] : memref<208x128xf32, #tpu.memory_space<vmem>>, vector<1x32xf32>
    %425 = vector.broadcast %424 : vector<1x32xf32> to vector<16x32xf32>
    %426 = arith.mulf %423, %425 : vector<16x32xf32>
    %c206_187 = arith.constant 206 : index
    %c32_188 = arith.constant 32 : index
    %427 = vector.load %arg4[%c206_187, %c32_188] : memref<208x128xf32, #tpu.memory_space<vmem>>, vector<1x32xf32>
    %428 = vector.broadcast %427 : vector<1x32xf32> to vector<16x32xf32>
    %429 = arith.addf %426, %428 : vector<16x32xf32>
    %c1_189 = arith.constant 1 : index
    %c0_190 = arith.constant 0 : index
    %c0_191 = arith.constant 0 : index
    %430 = vector.load %arg2[%c1_189, %c0_190, %c0_191] : memref<2x16x8xf32, #tpu.memory_space<vmem>>, vector<1x16x8xf32>
    %431 = vector.shape_cast %430 : vector<1x16x8xf32> to vector<16x8xf32>
    %c64_192 = arith.constant 64 : index
    %c32_193 = arith.constant 32 : index
    %432 = vector.load %arg4[%c64_192, %c32_193] : memref<208x128xf32, #tpu.memory_space<vmem>>, vector<8x32xf32>
    %cst_194 = arith.constant dense<0.000000e+00> : vector<16x32xf32>
    %433 = tpu.matmul %431, %432, %cst_194 {dimension_numbers = #tpu.dot_dimension_numbers<[1], [0], [0], [1], [0, 0, 1, 1], [], []>} : vector<16x8xf32>, vector<8x32xf32>, vector<16x32xf32> -> vector<16x32xf32>
    %c204_195 = arith.constant 204 : index
    %c32_196 = arith.constant 32 : index
    %434 = vector.load %arg4[%c204_195, %c32_196] : memref<208x128xf32, #tpu.memory_space<vmem>>, vector<1x32xf32>
    %435 = vector.broadcast %434 : vector<1x32xf32> to vector<16x32xf32>
    %436 = arith.addf %433, %435 : vector<16x32xf32>
    %cst_197 = arith.constant 0.000000e+00 : f32
    %437 = vector.broadcast %cst_197 : f32 to vector<16x32xf32>
    %438 = arith.maximumf %436, %437 : vector<16x32xf32>
    %cst_198 = arith.constant dense<0.000000e+00> : vector<16xf32>
    %439 = vector.multi_reduction <add>, %438, %cst_198 [1] : vector<16x32xf32> to vector<16xf32>
    %440 = vector.shape_cast %439 : vector<16xf32> to vector<16x1xf32>
    %cst_199 = arith.constant 3.200000e+01 : f32
    %441 = vector.broadcast %cst_199 : f32 to vector<16x1xf32>
    %442 = arith.divf %440, %441 : vector<16x1xf32>
    %443 = vector.broadcast %442 : vector<16x1xf32> to vector<16x32xf32>
    %444 = arith.subf %438, %443 : vector<16x32xf32>
    %445 = arith.mulf %444, %444 : vector<16x32xf32>
    %cst_200 = arith.constant dense<0.000000e+00> : vector<16xf32>
    %446 = vector.multi_reduction <add>, %445, %cst_200 [1] : vector<16x32xf32> to vector<16xf32>
    %447 = vector.shape_cast %446 : vector<16xf32> to vector<16x1xf32>
    %cst_201 = arith.constant 3.200000e+01 : f32
    %448 = vector.broadcast %cst_201 : f32 to vector<16x1xf32>
    %449 = arith.divf %447, %448 : vector<16x1xf32>
    %450 = vector.broadcast %442 : vector<16x1xf32> to vector<16x32xf32>
    %451 = arith.subf %438, %450 : vector<16x32xf32>
    %cst_202 = arith.constant 9.99999974E-6 : f32
    %452 = vector.broadcast %cst_202 : f32 to vector<16x1xf32>
    %453 = arith.addf %449, %452 : vector<16x1xf32>
    %454 = math.rsqrt %453 : vector<16x1xf32>
    %455 = vector.broadcast %454 : vector<16x1xf32> to vector<16x32xf32>
    %456 = arith.mulf %451, %455 : vector<16x32xf32>
    %c205_203 = arith.constant 205 : index
    %c96_204 = arith.constant 96 : index
    %457 = vector.load %arg4[%c205_203, %c96_204] : memref<208x128xf32, #tpu.memory_space<vmem>>, vector<1x32xf32>
    %458 = vector.broadcast %457 : vector<1x32xf32> to vector<16x32xf32>
    %459 = arith.mulf %456, %458 : vector<16x32xf32>
    %c206_205 = arith.constant 206 : index
    %c64_206 = arith.constant 64 : index
    %460 = vector.load %arg4[%c206_205, %c64_206] : memref<208x128xf32, #tpu.memory_space<vmem>>, vector<1x32xf32>
    %461 = vector.broadcast %460 : vector<1x32xf32> to vector<16x32xf32>
    %462 = arith.addf %459, %461 : vector<16x32xf32>
    %c104_207 = arith.constant 104 : index
    %c0_208 = arith.constant 0 : index
    %463 = vector.load %arg4[%c104_207, %c0_208] : memref<208x128xf32, #tpu.memory_space<vmem>>, vector<32x128xf32>
    %cst_209 = arith.constant dense<0.000000e+00> : vector<16x128xf32>
    %464 = tpu.matmul %419, %463, %cst_209 {dimension_numbers = #tpu.dot_dimension_numbers<[1], [0], [0], [1], [0, 0, 1, 1], [], []>} : vector<16x32xf32>, vector<32x128xf32>, vector<16x128xf32> -> vector<16x128xf32>
    %c136_210 = arith.constant 136 : index
    %c0_211 = arith.constant 0 : index
    %465 = vector.load %arg4[%c136_210, %c0_211] : memref<208x128xf32, #tpu.memory_space<vmem>>, vector<32x128xf32>
    %cst_212 = arith.constant dense<0.000000e+00> : vector<16x128xf32>
    %466 = tpu.matmul %429, %465, %cst_212 {dimension_numbers = #tpu.dot_dimension_numbers<[1], [0], [0], [1], [0, 0, 1, 1], [], []>} : vector<16x32xf32>, vector<32x128xf32>, vector<16x128xf32> -> vector<16x128xf32>
    %467 = arith.addf %464, %466 : vector<16x128xf32>
    %c168_213 = arith.constant 168 : index
    %c0_214 = arith.constant 0 : index
    %468 = vector.load %arg4[%c168_213, %c0_214] : memref<208x128xf32, #tpu.memory_space<vmem>>, vector<32x128xf32>
    %cst_215 = arith.constant dense<0.000000e+00> : vector<16x128xf32>
    %469 = tpu.matmul %462, %468, %cst_215 {dimension_numbers = #tpu.dot_dimension_numbers<[1], [0], [0], [1], [0, 0, 1, 1], [], []>} : vector<16x32xf32>, vector<32x128xf32>, vector<16x128xf32> -> vector<16x128xf32>
    %470 = arith.addf %467, %469 : vector<16x128xf32>
    %c207_216 = arith.constant 207 : index
    %c0_217 = arith.constant 0 : index
    %471 = vector.load %arg4[%c207_216, %c0_217] : memref<208x128xf32, #tpu.memory_space<vmem>>, vector<1x128xf32>
    %472 = vector.broadcast %471 : vector<1x128xf32> to vector<16x128xf32>
    %473 = arith.addf %470, %472 : vector<16x128xf32>
    %474 = arith.negf %473 : vector<16x128xf32>
    %475 = math.exp %474 : vector<16x128xf32>
    %cst_218 = arith.constant 1.000000e+00 : f32
    %476 = vector.broadcast %cst_218 : f32 to vector<16x128xf32>
    %477 = arith.addf %476, %475 : vector<16x128xf32>
    %478 = arith.divf %476, %477 : vector<16x128xf32>
    %c1_219 = arith.constant 1 : index
    %c0_220 = arith.constant 0 : index
    %c0_221 = arith.constant 0 : index
    %479 = vector.load %arg5[%c1_219, %c0_220, %c0_221] : memref<2x16x128xf32, #tpu.memory_space<vmem>>, vector<1x16x128xf32>
    %480 = vector.shape_cast %479 : vector<1x16x128xf32> to vector<16x128xf32>
    %481 = vector.shape_cast %478 : vector<16x128xf32> to vector<1x16x128xf32>
    tpu.vector_store %arg5[%c1_219, %c0_220, %c0_221], %481 {strides = array<i32>} : memref<2x16x128xf32, #tpu.memory_space<vmem>>, vector<1x16x128xf32>,
    return
  }
  func.func @transform_0(%arg0: i32) -> (i32, i32, i32) {
    %c0_i32 = arith.constant 0 : i32
    %c0_i32_0 = arith.constant 0 : i32
    %c0_i32_1 = arith.constant 0 : i32
    return %arg0, %c0_i32, %c0_i32_0 : i32, i32, i32
  }
  func.func @transform_1(%arg0: i32) -> (i32, i32, i32) {
    %c0_i32 = arith.constant 0 : i32
    %c0_i32_0 = arith.constant 0 : i32
    %c0_i32_1 = arith.constant 0 : i32
    return %arg0, %c0_i32, %c0_i32_0 : i32, i32, i32
  }
  func.func @transform_2(%arg0: i32) -> (i32, i32, i32) {
    %c0_i32 = arith.constant 0 : i32
    %c0_i32_0 = arith.constant 0 : i32
    %c0_i32_1 = arith.constant 0 : i32
    return %arg0, %c0_i32, %c0_i32_0 : i32, i32, i32
  }
  func.func @transform_3(%arg0: i32) -> (i32, i32) {
    %c0_i32 = arith.constant 0 : i32
    %c0_i32_0 = arith.constant 0 : i32
    %c0_i32_1 = arith.constant 0 : i32
    return %c0_i32, %c0_i32_0 : i32, i32
  }
  func.func @transform_4(%arg0: i32) -> (i32, i32, i32) {
    %c0_i32 = arith.constant 0 : i32
    %c0_i32_0 = arith.constant 0 : i32
    %c0_i32_1 = arith.constant 0 : i32
    return %arg0, %c0_i32, %c0_i32_0 : i32, i32, i32
  }
}

</mosaic_0001>

<llo_original>
// kernel: tpu_custom_call.1
$region0: #{tpu_custom_call.1}
  #allocation0 [shape = 'u32[]', space=smem, size = 0x4, offset = 0x4, fixed_abs, tag = 'smem constant byte address 0x4 - core index']
  #allocation1 [shape = 'u32[72,128]{1,0:T(1,128)}', space=vmem, size = 0x9000, scoped, tag = 'internal scratch']
  %s0 = inlined_call_operand.vmem [shape: f32[4,128,8], index: 0, kind: input, shape index: {}]
  %s1 = inlined_call_operand.vmem [shape: f32[4,16,8], index: 1, kind: input, shape index: {}]
  %s2 = inlined_call_operand.vmem [shape: s8[4,128,128], index: 2, kind: input, shape index: {}]
  %s3 = inlined_call_operand.vmem [shape: f32[208,128], index: 3, kind: input, shape index: {}]
  %s4 = inlined_call_operand.hbm [shape: f32[4,16,128], index: 4, kind: output, shape index: {}]
  %s5 = sld [smem:[#allocation0]]
  $region49: #{tpu_custom_call.1} parent=0
    _
  %s7 = ssub.s32 1, %s5
  %s8 = scalar_select 0, %s7, %s5
  $region1: #{tpu_custom_call.1} parent=0
    #allocation2 [shape = 'u8[32768]{0}', space=vmem, size = 0x8000, scoped, tag = 'output window, operand 0']
    #allocation3 [shape = 's32[2]{0}', space=sflag, size = 0x8, scoped, tag = 'scoped memory for tpu_custom_call.1']
    %9 = vsyncpa [#allocation3], 0
    %s10 = scalar_lea.sflag [#allocation3], 1
    %11 = vsyncpa %s10, 0
    loop: start=0, step=1, limit=4
    $region2: #{tpu_custom_call.1} parent=1 // loop_pre_header
      _
    $region3: #{tpu_custom_call.1} parent=1 // loop_header
      %s13 = sphi 0, %s17
      %p14 = scmp.ge.s32.totalorder %s13, 4
      %s23 = sphi 0, %s25
      %s26 = sphi 0, %s23
      %s27 = sphi 0, %s26
      %s43 = sphi 0, %s27
      %s49 = sphi 0, %s51
      %s52 = sphi 0, %s49
      %s53 = sphi 0, %s52
      %s69 = sphi 0, %s53
      %s75 = sphi 0, %s77
      %s78 = sphi 0, %s75
      %s79 = sphi 0, %s78
      %s95 = sphi 0, %s79
      %s99 = sphi 0, %s99
      %s101 = sphi 0, %s99
      %s102 = sphi 0, %s101
      %s116 = sphi 0, %s102
      %s122 = sphi 0, %s124
      %s125 = sphi 0, %s122
      %s126 = sphi 0, %s125
      %s142 = sphi 0, %s126
    $region4: #{tpu_custom_call.1} parent=1 // loop_header_branch
      %16 = sbr.rel (%p14) target = $region8
    $region5: #{tpu_custom_call.1} parent=1 // loop_body
      %s18 = ssub.s32 %s13, 1
      %s19 = ssub.s32 %s13, 2
      %s20 = sadd.s32 %s13, 1
      %s21 = ssub.s32 %s13, %s20
      %p22 = scmp.eq.s32.totalorder %s21, 0
      %s24 = sadd.s32 %s23, 1
      %s25 = scalar_select %p22, %s23, %s24
      %p28 = pneg %p22
      %p29 = scmp.eq.s32.totalorder %s13, 1
      %p30 = por %p28, %p29
      %p31 = scmp.ne.s32.totalorder %s23, %s26
      %p32 = scmp.eq.s32.totalorder %s13, 0
      %p33 = por %p31, %p32
      %p34 = scmp.ne.s32.totalorder %s23, %s26
      %p35 = scmp.eq.s32.totalorder %s18, 1
      %p36 = por %p34, %p35
      %p37 = scmp.ne.s32.totalorder %s26, %s27
      %p38 = scmp.eq.s32.totalorder %s18, 0
      %p39 = por %p37, %p38
      %p40 = scmp.ne.s32.totalorder %s26, %s27
      %p41 = scmp.eq.s32.totalorder %s19, 1
      %p42 = por %p40, %p41
      %p44 = scmp.ne.s32.totalorder %s27, %s43
      %p45 = scmp.eq.s32.totalorder %s19, 0
      %p46 = por %p44, %p45
      %s47 = ssub.s32 %s13, %s20
      %p48 = scmp.eq.s32.totalorder %s47, 0
      %s50 = sadd.s32 %s49, 1
      %s51 = scalar_select %p48, %s49, %s50
      %p54 = pneg %p48
      %p55 = scmp.eq.s32.totalorder %s13, 1
      %p56 = por %p54, %p55
      %p57 = scmp.ne.s32.totalorder %s49, %s52
      %p58 = scmp.eq.s32.totalorder %s13, 0
      %p59 = por %p57, %p58
      %p60 = scmp.ne.s32.totalorder %s49, %s52
      %p61 = scmp.eq.s32.totalorder %s18, 1
      %p62 = por %p60, %p61
      %p63 = scmp.ne.s32.totalorder %s52, %s53
      %p64 = scmp.eq.s32.totalorder %s18, 0
      %p65 = por %p63, %p64
      %p66 = scmp.ne.s32.totalorder %s52, %s53
      %p67 = scmp.eq.s32.totalorder %s19, 1
      %p68 = por %p66, %p67
      %p70 = scmp.ne.s32.totalorder %s53, %s69
      %p71 = scmp.eq.s32.totalorder %s19, 0
      %p72 = por %p70, %p71
      %s73 = ssub.s32 %s13, %s20
      %p74 = scmp.eq.s32.totalorder %s73, 0
      %s76 = sadd.s32 %s75, 1
      %s77 = scalar_select %p74, %s75, %s76
      %p80 = pneg %p74
      %p81 = scmp.eq.s32.totalorder %s13, 1
      %p82 = por %p80, %p81
      %p83 = scmp.ne.s32.totalorder %s75, %s78
      %p84 = scmp.eq.s32.totalorder %s13, 0
      %p85 = por %p83, %p84
      %p86 = scmp.ne.s32.totalorder %s75, %s78
      %p87 = scmp.eq.s32.totalorder %s18, 1
      %p88 = por %p86, %p87
      %p89 = scmp.ne.s32.totalorder %s78, %s79
      %p90 = scmp.eq.s32.totalorder %s18, 0
      %p91 = por %p89, %p90
      %p92 = scmp.ne.s32.totalorder %s78, %s79
      %p93 = scmp.eq.s32.totalorder %s19, 1
      %p94 = por %p92, %p93
      %p96 = scmp.ne.s32.totalorder %s79, %s95
      %p97 = scmp.eq.s32.totalorder %s19, 0
      %p98 = por %p96, %p97
      %s100 = sadd.s32 %s99, 1
      %p103 = scmp.eq.s32.totalorder %s13, 1
      %p104 = scmp.ne.s32.totalorder %s99, %s101
      %p105 = scmp.eq.s32.totalorder %s13, 0
      %p106 = por %p104, %p105
      %p107 = scmp.ne.s32.totalorder %s99, %s101
      %p108 = scmp.eq.s32.totalorder %s18, 1
      %p109 = por %p107, %p108
      %p110 = scmp.ne.s32.totalorder %s101, %s102
      %p111 = scmp.eq.s32.totalorder %s18, 0
      %p112 = por %p110, %p111
      %p113 = scmp.ne.s32.totalorder %s101, %s102
      %p114 = scmp.eq.s32.totalorder %s19, 1
      %p115 = por %p113, %p114
      %p117 = scmp.ne.s32.totalorder %s102, %s116
      %p118 = scmp.eq.s32.totalorder %s19, 0
      %p119 = por %p117, %p118
      %s120 = ssub.s32 %s13, %s20
      %p121 = scmp.eq.s32.totalorder %s120, 0
      %s123 = sadd.s32 %s122, 1
      %s124 = scalar_select %p121, %s122, %s123
      %p127 = pneg %p121
      %p128 = scmp.eq.s32.totalorder %s13, 1
      %p129 = por %p127, %p128
      %p130 = scmp.ne.s32.totalorder %s122, %s125
      %p131 = scmp.eq.s32.totalorder %s13, 0
      %p132 = por %p130, %p131
      %p133 = scmp.ne.s32.totalorder %s122, %s125
      %p134 = scmp.eq.s32.totalorder %s18, 1
      %p135 = por %p133, %p134
      %p136 = scmp.ne.s32.totalorder %s125, %s126
      %p137 = scmp.eq.s32.totalorder %s18, 0
      %p138 = por %p136, %p137
      %p139 = scmp.ne.s32.totalorder %s125, %s126
      %p140 = scmp.eq.s32.totalorder %s19, 1
      %p141 = por %p139, %p140
      %p143 = scmp.ne.s32.totalorder %s126, %s142
      %p144 = scmp.eq.s32.totalorder %s19, 0
      %p145 = por %p143, %p144
      %p146 = scmp.le.s32.totalorder 1, %s13
      %p147 = scmp.lt.s32.totalorder %s13, 3
      %p148 = pnand %p146, %p147
      %p149 = pneg %p148
      // Predicated region
      $region9: #{tpu_custom_call.1} parent=5 // pred_check
        _
      $region10: #{tpu_custom_call.1} parent=5 // pred_check_branch
        %151 = sbr.rel (%p148) target = $region12
      $region11: #{tpu_custom_call.1} parent=5 // pred_region
        %s152 = ssub.s32 %s13, 1
        // Predicated region
        $region13: #{tpu_custom_call.1} parent=11 // pred_check
          %p153 = pneg %p112
        $region14: #{tpu_custom_call.1} parent=11 // pred_check_branch
          %155 = sbr.rel (%p153) target = $region16
        $region15: #{tpu_custom_call.1} parent=11 // pred_region
          _
        $region16: #{tpu_custom_call.1} parent=11 // pred_fallthru
          _
      $region12: #{tpu_custom_call.1} parent=5 // pred_fallthru
        _
      %p156 = scmp.lt.s32.totalorder %s13, 2
      // Predicated region
      $region17: #{tpu_custom_call.1} parent=5 // pred_check
        %p157 = pneg %p156
      $region18: #{tpu_custom_call.1} parent=5 // pred_check_branch
        %159 = sbr.rel (%p157) target = $region20
      $region19: #{tpu_custom_call.1} parent=5 // pred_region
        // Predicated region
        $region21: #{tpu_custom_call.1} parent=19 // pred_check
          %p160 = pneg %p33
        $region22: #{tpu_custom_call.1} parent=19 // pred_check_branch
          %162 = sbr.rel (%p160) target = $region24
        $region23: #{tpu_custom_call.1} parent=19 // pred_region
          %s163 = smul.u32 2, %s13
          %p164 = scmp.lt.s32.totalorder %s163, 3
          %s165 = scalar_select %p164, %s163, 3
          %s166 = smul.addr %s165, 16
          %s167 = smul.addr %s166, 8
          %s168 = scalar_lea.vmem %s0, %s167
          %s169 = smul.u32 2, %s13
        $region24: #{tpu_custom_call.1} parent=19 // pred_fallthru
          _
        // Predicated region
        $region25: #{tpu_custom_call.1} parent=19 // pred_check
          %p170 = pneg %p59
        $region26: #{tpu_custom_call.1} parent=19 // pred_check_branch
          %172 = sbr.rel (%p170) target = $region28
        $region27: #{tpu_custom_call.1} parent=19 // pred_region
          %s173 = smul.u32 2, %s13
          %p174 = scmp.lt.s32.totalorder %s173, 3
          %s175 = scalar_select %p174, %s173, 3
          %s176 = smul.addr %s175, 2
          %s177 = smul.addr %s176, 8
          %s178 = scalar_lea.vmem %s1, %s177
          %s179 = smul.u32 2, %s13
        $region28: #{tpu_custom_call.1} parent=19 // pred_fallthru
          _
        // Predicated region
        $region29: #{tpu_custom_call.1} parent=19 // pred_check
          %p180 = pneg %p85
        $region30: #{tpu_custom_call.1} parent=19 // pred_check_branch
          %182 = sbr.rel (%p180) target = $region32
        $region31: #{tpu_custom_call.1} parent=19 // pred_region
          %s183 = smul.u32 2, %s13
          %p184 = scmp.lt.s32.totalorder %s183, 3
          %s185 = scalar_select %p184, %s183, 3
          %s186 = smul.addr %s185, 4
          %s187 = smul.addr %s186, 8
          %s188 = scalar_lea.vmem %s2, %s187
          %s189 = smul.u32 2, %s13
        $region32: #{tpu_custom_call.1} parent=19 // pred_fallthru
          _
      $region20: #{tpu_custom_call.1} parent=5 // pred_fallthru
        _
      %p190 = scmp.le.s32.totalorder 1, %s13
      %p191 = scmp.lt.s32.totalorder %s13, 3
      %p192 = pnand %p190, %p191
      %p193 = pneg %p192
      // Predicated region
      $region33: #{tpu_custom_call.1} parent=5 // pred_check
        _
      $region34: #{tpu_custom_call.1} parent=5 // pred_check_branch
        %195 = sbr.rel (%p192) target = $region36
      $region35: #{tpu_custom_call.1} parent=5 // pred_region
        %s196 = ssub.s32 %s13, 1
        %s197 = smul.u32 2, %s18
        %p198 = scmp.lt.s32.totalorder %s197, 3
        %s199 = scalar_select %p198, %s197, 3
        %s200 = smul.addr %s199, 16
        %s201 = smul.addr %s200, 8
        %s202 = scalar_lea.vmem %s0, %s201
        %p203 = pneg %p39
        %p204 = pneg %p36
        %s205 = smul.u32 2, %s18
        %p206 = scmp.lt.s32.totalorder %s205, 3
        %s207 = scalar_select %p206, %s205, 3
        %s208 = smul.addr %s207, 2
        %s209 = smul.addr %s208, 8
        %s210 = scalar_lea.vmem %s1, %s209
        %p211 = pneg %p65
        %p212 = pneg %p62
        %s213 = smul.u32 2, %s18
        %p214 = scmp.lt.s32.totalorder %s213, 3
        %s215 = scalar_select %p214, %s213, 3
        %s216 = smul.addr %s215, 4
        %s217 = smul.addr %s216, 8
        %s218 = scalar_lea.vmem %s2, %s217
        %p219 = pneg %p91
        %p220 = pneg %p88
        %p221 = pneg %p112
        %p222 = pneg %p109
        %p223 = pneg %p138
        %p224 = pneg %p135
        %s225 = sand.u32 %s125, 1
        %s226 = scalar_lea.sflag [#allocation3], %s225
        %s227 = sand.u32 %s125, 1
        %s228 = smul.addr %s227, 32
        %s229 = scalar_lea.vmem [#allocation2], %s228
        %s230 = smul.u32 2, %s18
        %p231 = scmp.lt.s32.totalorder %s230, 3
        %s232 = scalar_select %p231, %s230, 3
        %s233 = smul.addr %s232, 16
        %s234 = smul.addr %s233, 8
        %s235 = scalar_lea.vmem %s0, %s234
        %s236 = smul.u32 2, %s18
        %s237 = smul.u32 2, %s18
        %p238 = scmp.lt.s32.totalorder %s237, 3
        %s239 = scalar_select %p238, %s237, 3
        %s240 = smul.addr %s239, 2
        %s241 = smul.addr %s240, 8
        %s242 = scalar_lea.vmem %s1, %s241
        %s243 = smul.u32 2, %s18
        %s244 = smul.u32 2, %s18
        %p245 = scmp.lt.s32.totalorder %s244, 3
        %s246 = scalar_select %p245, %s244, 3
        %s247 = smul.addr %s246, 4
        %s248 = smul.addr %s247, 8
        %s249 = scalar_lea.vmem %s2, %s248
        %s250 = smul.u32 2, %s18
        %s251 = smul.u32 2, %s18
        %v252 = vlaneseq
        %v253 = vshrl.u32 %v252, 7
        %v254 = vadd.s32 %v253, 8
        %v255 = vadd.s32 %v253, 16
        %v256 = vadd.s32 %v253, 24
        %v257 = vadd.s32 %v253, 32
        %v258 = vadd.s32 %v253, 40
        %v259 = vadd.s32 %v253, 48
        %v260 = vadd.s32 %v253, 56
        %v261 = vadd.s32 %v253, 64
        %v262 = vadd.s32 %v253, 72
        %v263 = vadd.s32 %v253, 80
        %v264 = vadd.s32 %v253, 88
        %v265 = vadd.s32 %v253, 96
        %v266 = vadd.s32 %v253, 104
        %v267 = vadd.s32 %v253, 112
        %v268 = vadd.s32 %v253, 120
        %v269 = vlaneseq
        %v270 = vand.u32 %v269, 127
        %vm271 = vcmp.eq.s32.totalorder %v253, %v270
        %vm272 = vcmp.eq.s32.totalorder %v254, %v270
        %vm273 = vcmp.eq.s32.totalorder %v255, %v270
        %vm274 = vcmp.eq.s32.totalorder %v256, %v270
        %vm275 = vcmp.eq.s32.totalorder %v257, %v270
        %vm276 = vcmp.eq.s32.totalorder %v258, %v270
        %vm277 = vcmp.eq.s32.totalorder %v259, %v270
        %vm278 = vcmp.eq.s32.totalorder %v260, %v270
        %vm279 = vcmp.eq.s32.totalorder %v261, %v270
        %vm280 = vcmp.eq.s32.totalorder %v262, %v270
        %vm281 = vcmp.eq.s32.totalorder %v263, %v270
        %vm282 = vcmp.eq.s32.totalorder %v264, %v270
        %vm283 = vcmp.eq.s32.totalorder %v265, %v270
        %vm284 = vcmp.eq.s32.totalorder %v266, %v270
        %vm285 = vcmp.eq.s32.totalorder %v267, %v270
        %vm286 = vcmp.eq.s32.totalorder %v268, %v270
        %v287 = vld [vmem:[%s235] sm:$0xff]
        %v288 = vld [vmem:[%s235 + $0x8] sm:$0xff]
        %v289 = vld [vmem:[%s235 + $0x10] sm:$0xff]
        %v290 = vld [vmem:[%s235 + $0x18] sm:$0xff]
        %v291 = vld [vmem:[%s235 + $0x20] sm:$0xff]
        %v292 = vld [vmem:[%s235 + $0x28] sm:$0xff]
        %v293 = vld [vmem:[%s235 + $0x30] sm:$0xff]
        %v294 = vld [vmem:[%s235 + $0x38] sm:$0xff]
        %v295 = vld [vmem:[%s235 + $0x40] sm:$0xff]
        %v296 = vld [vmem:[%s235 + $0x48] sm:$0xff]
        %v297 = vld [vmem:[%s235 + $0x50] sm:$0xff]
        %v298 = vld [vmem:[%s235 + $0x58] sm:$0xff]
        %v299 = vld [vmem:[%s235 + $0x60] sm:$0xff]
        %v300 = vld [vmem:[%s235 + $0x68] sm:$0xff]
        %v301 = vld [vmem:[%s235 + $0x70] sm:$0xff]
        %v302 = vld [vmem:[%s235 + $0x78] sm:$0xff]
        %v303 = vld [vmem:[%s249] sm:$0xff]
        %v304 = vld [vmem:[%s249 + $0x8] sm:$0xff]
        %v305 = vld [vmem:[%s249 + $0x10] sm:$0xff]
        %v306 = vld [vmem:[%s249 + $0x18] sm:$0xff]
        %v307 = vunpack.c.0.s8 %v303
        %v308 = vunpack.c.1.s8 %v303
        %v309 = vunpack.c.2.s8 %v303
        %v310 = vunpack.c.3.s8 %v303
        %v311 = vunpack.c.0.s8 %v304
        %v312 = vunpack.c.1.s8 %v304
        %v313 = vunpack.c.2.s8 %v304
        %v314 = vunpack.c.3.s8 %v304
        %v315 = vunpack.c.0.s8 %v305
        %v316 = vunpack.c.1.s8 %v305
        %v317 = vunpack.c.2.s8 %v305
        %v318 = vunpack.c.3.s8 %v305
        %v319 = vunpack.c.0.s8 %v306
        %v320 = vunpack.c.1.s8 %v306
        %v321 = vunpack.c.2.s8 %v306
        %v322 = vunpack.c.3.s8 %v306
        %v323 = vcvt.s32.f32 %v307
        %v324 = vcvt.s32.f32 %v308
        %v325 = vcvt.s32.f32 %v309
        %v326 = vcvt.s32.f32 %v310
        %v327 = vcvt.s32.f32 %v311
        %v328 = vcvt.s32.f32 %v312
        %v329 = vcvt.s32.f32 %v313
        %v330 = vcvt.s32.f32 %v314
        %v331 = vcvt.s32.f32 %v315
        %v332 = vcvt.s32.f32 %v316
        %v333 = vcvt.s32.f32 %v317
        %v334 = vcvt.s32.f32 %v318
        %v335 = vcvt.s32.f32 %v319
        %v336 = vcvt.s32.f32 %v320
        %v337 = vcvt.s32.f32 %v321
        %v338 = vcvt.s32.f32 %v322
        %v339 = vld [vmem:[%s3 + $0x40] sm:$0xff]
        %v340 = vld [vmem:[%s3 + $0xcc] sm:$0x1]
        %v341 = vperm.slane %v340, 0
        %vm342 = vcmask 64512
        %v344 = vsel %vm342, %v287, 0
        %v347 = vsel %vm342, %v288, 0
        %v350 = vsel %vm342, %v289, 0
        %v353 = vsel %vm342, %v290, 0
        %v356 = vsel %vm342, %v291, 0
        %v359 = vsel %vm342, %v292, 0
        %v362 = vsel %vm342, %v293, 0
        %v365 = vsel %vm342, %v294, 0
        %v368 = vsel %vm342, %v295, 0
        %v371 = vsel %vm342, %v296, 0
        %v374 = vsel %vm342, %v297, 0
        %v377 = vsel %vm342, %v298, 0
        %v380 = vsel %vm342, %v299, 0
        %v383 = vsel %vm342, %v300, 0
        %v386 = vsel %vm342, %v301, 0
        %v389 = vsel %vm342, %v302, 0
        %391 = vmatpush.msra.mxu0 0.0
        %392 = vmatpush.msra.mxu0 0.0
        %393 = vmatpush.msra.mxu0 0.0
        %394 = vmatpush.msra.mxu0 0.0
        %395 = vmatpush.msra.mxu0 0.0
        %396 = vmatpush.msra.mxu0 0.0
        %397 = vmatpush.msra.mxu0 0.0
        %398 = vmatpush.msra.mxu0 0.0
        %399 = vmatpush.msra.mxu0 0.0
        %400 = vmatpush.msra.mxu0 0.0
        %401 = vmatpush.msra.mxu0 0.0
        %402 = vmatpush.msra.mxu0 0.0
        %403 = vmatpush.msra.mxu0 0.0
        %404 = vmatpush.msra.mxu0 0.0
        %405 = vmatpush.msra.mxu0 0.0
        %406 = vmatpush.msra.mxu0 %v339
        %407 = vmatmul.f32.gmra.mxu0 %v344
        %v408 = vpop.f32.mrf.mxu0
        %v409 = vadd.f32 %v341, %v408
        %410 = vmatmul.f32.gmra.mxu0 %v347
        %v411 = vpop.f32.mrf.mxu0
        %v412 = vadd.f32 %v341, %v411
        %413 = vmatmul.f32.gmra.mxu0 %v350
        %v414 = vpop.f32.mrf.mxu0
        %v415 = vadd.f32 %v341, %v414
        %416 = vmatmul.f32.gmra.mxu0 %v353
        %v417 = vpop.f32.mrf.mxu0
        %v418 = vadd.f32 %v341, %v417
        %419 = vmatmul.f32.gmra.mxu0 %v356
        %v420 = vpop.f32.mrf.mxu0
        %v421 = vadd.f32 %v341, %v420
        %422 = vmatmul.f32.gmra.mxu0 %v359
        %v423 = vpop.f32.mrf.mxu0
        %v424 = vadd.f32 %v341, %v423
        %425 = vmatmul.f32.gmra.mxu0 %v362
        %v426 = vpop.f32.mrf.mxu0
        %v427 = vadd.f32 %v341, %v426
        %428 = vmatmul.f32.gmra.mxu0 %v365
        %v429 = vpop.f32.mrf.mxu0
        %v430 = vadd.f32 %v341, %v429
        %431 = vmatmul.f32.gmra.mxu0 %v368
        %v432 = vpop.f32.mrf.mxu0
        %v433 = vadd.f32 %v341, %v432
        %434 = vmatmul.f32.gmra.mxu0 %v371
        %v435 = vpop.f32.mrf.mxu0
        %v436 = vadd.f32 %v341, %v435
        %437 = vmatmul.f32.gmra.mxu0 %v374
        %v438 = vpop.f32.mrf.mxu0
        %v439 = vadd.f32 %v341, %v438
        %440 = vmatmul.f32.gmra.mxu0 %v377
        %v441 = vpop.f32.mrf.mxu0
        %v442 = vadd.f32 %v341, %v441
        %443 = vmatmul.f32.gmra.mxu0 %v380
        %v444 = vpop.f32.mrf.mxu0
        %v445 = vadd.f32 %v341, %v444
        %446 = vmatmul.f32.gmra.mxu0 %v383
        %v447 = vpop.f32.mrf.mxu0
        %v448 = vadd.f32 %v341, %v447
        %449 = vmatmul.f32.gmra.mxu0 %v386
        %v450 = vpop.f32.mrf.mxu0
        %v451 = vadd.f32 %v341, %v450
        %452 = vmatmul.f32.gmra.mxu0 %v389
        %v453 = vpop.f32.mrf.mxu0
        %v454 = vadd.f32 %v341, %v453
        %455 = vdwg.mxu0
        %v456 = vmax.f32 %v409, 0.0
        %v457 = vmax.f32 %v412, 0.0
        %v458 = vmax.f32 %v415, 0.0
        %v459 = vmax.f32 %v418, 0.0
        %v460 = vmax.f32 %v421, 0.0
        %v461 = vmax.f32 %v424, 0.0
        %v462 = vmax.f32 %v427, 0.0
        %v463 = vmax.f32 %v430, 0.0
        %v464 = vmax.f32 %v433, 0.0
        %v465 = vmax.f32 %v436, 0.0
        %v466 = vmax.f32 %v439, 0.0
        %v467 = vmax.f32 %v442, 0.0
        %v468 = vmax.f32 %v445, 0.0
        %v469 = vmax.f32 %v448, 0.0
        %v470 = vmax.f32 %v451, 0.0
        %v471 = vmax.f32 %v454, 0.0
        %472 = vmatpush.msra.mxu0 %v471
        %473 = vmatpush.msra.mxu0 %v470
        %474 = vmatpush.msra.mxu0 %v469
        %475 = vmatpush.msra.mxu0 %v468
        %476 = vmatpush.msra.mxu0 %v467
        %477 = vmatpush.msra.mxu0 %v466
        %478 = vmatpush.msra.mxu0 %v465
        %479 = vmatpush.msra.mxu0 %v464
        %480 = vmatpush.msra.mxu0 %v463
        %481 = vmatpush.msra.mxu0 %v462
        %482 = vmatpush.msra.mxu0 %v461
        %483 = vmatpush.msra.mxu0 %v460
        %484 = vmatpush.msra.mxu0 %v459
        %485 = vmatpush.msra.mxu0 %v458
        %486 = vmatpush.msra.mxu0 %v457
        %487 = vmatpush.msra.mxu0 %v456
        %488 = vmatmul.f32.gmra.mxu0 %v323
        %v489 = vpop.f32.mrf.mxu0
        %v490 = vadd.f32 0.0, %v489
        %491 = vmatmul.f32.gmra.mxu0 %v324
        %v492 = vpop.f32.mrf.mxu0
        %v493 = vadd.f32 0.0, %v492
        %494 = vmatmul.f32.gmra.mxu0 %v325
        %v495 = vpop.f32.mrf.mxu0
        %v496 = vadd.f32 0.0, %v495
        %497 = vmatmul.f32.gmra.mxu0 %v326
        %v498 = vpop.f32.mrf.mxu0
        %v499 = vadd.f32 0.0, %v498
        %500 = vmatmul.f32.gmra.mxu0 %v327
        %v501 = vpop.f32.mrf.mxu0
        %v502 = vadd.f32 0.0, %v501
        %503 = vmatmul.f32.gmra.mxu0 %v328
        %v504 = vpop.f32.mrf.mxu0
        %v505 = vadd.f32 0.0, %v504
        %506 = vmatmul.f32.gmra.mxu0 %v329
        %v507 = vpop.f32.mrf.mxu0
        %v508 = vadd.f32 0.0, %v507
        %509 = vmatmul.f32.gmra.mxu0 %v330
        %v510 = vpop.f32.mrf.mxu0
        %v511 = vadd.f32 0.0, %v510
        %512 = vmatmul.f32.gmra.mxu0 %v331
        %v513 = vpop.f32.mrf.mxu0
        %v514 = vadd.f32 0.0, %v513
        %515 = vmatmul.f32.gmra.mxu0 %v332
        %v516 = vpop.f32.mrf.mxu0
        %v517 = vadd.f32 0.0, %v516
        %518 = vmatmul.f32.gmra.mxu0 %v333
        %v519 = vpop.f32.mrf.mxu0
        %v520 = vadd.f32 0.0, %v519
        %521 = vmatmul.f32.gmra.mxu0 %v334
        %v522 = vpop.f32.mrf.mxu0
        %v523 = vadd.f32 0.0, %v522
        %524 = vmatmul.f32.gmra.mxu0 %v335
        %v525 = vpop.f32.mrf.mxu0
        %v526 = vadd.f32 0.0, %v525
        %527 = vmatmul.f32.gmra.mxu0 %v336
        %v528 = vpop.f32.mrf.mxu0
        %v529 = vadd.f32 0.0, %v528
        %530 = vmatmul.f32.gmra.mxu0 %v337
        %v531 = vpop.f32.mrf.mxu0
        %v532 = vadd.f32 0.0, %v531
        %533 = vmatmul.f32.gmra.mxu0 %v338
        %v534 = vpop.f32.mrf.mxu0
        %v535 = vadd.f32 0.0, %v534
        %536 = vdwg.mxu0
        %v537 = vld [vmem:[%s3 + $0x20] sm:$0xff]
        %v538 = vld [vmem:[%s3 + $0x28] sm:$0xff]
        %v539 = vld [vmem:[%s3 + $0x30] sm:$0xff]
        %v540 = vld [vmem:[%s3 + $0x38] sm:$0xff]
        %545 = vrot.lane.b32.xlu0 %v537, 96
        %v546 = vpop.permute.xlu0 %545
        %547 = vrot.lane.b32.xlu0 %v538, 96
        %v548 = vpop.permute.xlu0 %547
        %549 = vrot.lane.b32.xlu0 %v539, 96
        %v550 = vpop.permute.xlu0 %549
        %551 = vrot.lane.b32.xlu0 %v540, 96
        %v552 = vpop.permute.xlu0 %551
        %vm557 = vcmask 261120
        %v559 = vsel %vm557, %v456, 0
        %v562 = vsel %vm557, %v457, 0
        %v565 = vsel %vm557, %v458, 0
        %v568 = vsel %vm557, %v459, 0
        %v571 = vsel %vm557, %v460, 0
        %v574 = vsel %vm557, %v461, 0
        %v577 = vsel %vm557, %v462, 0
        %v580 = vsel %vm557, %v463, 0
        %v583 = vsel %vm557, %v464, 0
        %v586 = vsel %vm557, %v465, 0
        %v589 = vsel %vm557, %v466, 0
        %v592 = vsel %vm557, %v467, 0
        %v595 = vsel %vm557, %v468, 0
        %v598 = vsel %vm557, %v469, 0
        %v601 = vsel %vm557, %v470, 0
        %v604 = vsel %vm557, %v471, 0
        %606 = vmatpush.msra.mxu0 0.0
        %607 = vmatpush.msra.mxu0 0.0
        %608 = vmatpush.msra.mxu0 0.0
        %609 = vmatpush.msra.mxu0 0.0
        %610 = vmatpush.msra.mxu0 0.0
        %611 = vmatpush.msra.mxu0 0.0
        %612 = vmatpush.msra.mxu0 0.0
        %613 = vmatpush.msra.mxu0 0.0
        %614 = vmatpush.msra.mxu0 0.0
        %615 = vmatpush.msra.mxu0 0.0
        %616 = vmatpush.msra.mxu0 0.0
        %617 = vmatpush.msra.mxu0 0.0
        %618 = vmatpush.msra.mxu0 %v552
        %619 = vmatpush.msra.mxu0 %v550
        %620 = vmatpush.msra.mxu0 %v548
        %621 = vmatpush.msra.mxu0 %v546
        %622 = vmatmul.f32.gmra.mxu0 %v559
        %v623 = vpop.f32.mrf.mxu0
        %v624 = vadd.f32 0.0, %v623
        %625 = vmatmul.f32.gmra.mxu0 %v562
        %v626 = vpop.f32.mrf.mxu0
        %v627 = vadd.f32 0.0, %v626
        %628 = vmatmul.f32.gmra.mxu0 %v565
        %v629 = vpop.f32.mrf.mxu0
        %v630 = vadd.f32 0.0, %v629
        %631 = vmatmul.f32.gmra.mxu0 %v568
        %v632 = vpop.f32.mrf.mxu0
        %v633 = vadd.f32 0.0, %v632
        %634 = vmatmul.f32.gmra.mxu0 %v571
        %v635 = vpop.f32.mrf.mxu0
        %v636 = vadd.f32 0.0, %v635
        %637 = vmatmul.f32.gmra.mxu0 %v574
        %v638 = vpop.f32.mrf.mxu0
        %v639 = vadd.f32 0.0, %v638
        %640 = vmatmul.f32.gmra.mxu0 %v577
        %v641 = vpop.f32.mrf.mxu0
        %v642 = vadd.f32 0.0, %v641
        %643 = vmatmul.f32.gmra.mxu0 %v580
        %v644 = vpop.f32.mrf.mxu0
        %v645 = vadd.f32 0.0, %v644
        %646 = vmatmul.f32.gmra.mxu0 %v583
        %v647 = vpop.f32.mrf.mxu0
        %v648 = vadd.f32 0.0, %v647
        %649 = vmatmul.f32.gmra.mxu0 %v586
        %v650 = vpop.f32.mrf.mxu0
        %v651 = vadd.f32 0.0, %v650
        %652 = vmatmul.f32.gmra.mxu0 %v589
        %v653 = vpop.f32.mrf.mxu0
        %v654 = vadd.f32 0.0, %v653
        %655 = vmatmul.f32.gmra.mxu0 %v592
        %v656 = vpop.f32.mrf.mxu0
        %v657 = vadd.f32 0.0, %v656
        %658 = vmatmul.f32.gmra.mxu0 %v595
        %v659 = vpop.f32.mrf.mxu0
        %v660 = vadd.f32 0.0, %v659
        %661 = vmatmul.f32.gmra.mxu0 %v598
        %v662 = vpop.f32.mrf.mxu0
        %v663 = vadd.f32 0.0, %v662
        %664 = vmatmul.f32.gmra.mxu0 %v601
        %v665 = vpop.f32.mrf.mxu0
        %v666 = vadd.f32 0.0, %v665
        %667 = vmatmul.f32.gmra.mxu0 %v604
        %v668 = vpop.f32.mrf.mxu0
        %v669 = vadd.f32 0.0, %v668
        %670 = vdwg.mxu0
        %v672 = vsel %vm557, %v490, 0
        %v675 = vsel %vm557, %v493, 0
        %v678 = vsel %vm557, %v496, 0
        %v681 = vsel %vm557, %v499, 0
        %v684 = vsel %vm557, %v502, 0
        %v687 = vsel %vm557, %v505, 0
        %v690 = vsel %vm557, %v508, 0
        %v693 = vsel %vm557, %v511, 0
        %v696 = vsel %vm557, %v514, 0
        %v699 = vsel %vm557, %v517, 0
        %v702 = vsel %vm557, %v520, 0
        %v705 = vsel %vm557, %v523, 0
        %v708 = vsel %vm557, %v526, 0
        %v711 = vsel %vm557, %v529, 0
        %v714 = vsel %vm557, %v532, 0
        %v717 = vsel %vm557, %v535, 0
        %719 = vmatpush.msra.mxu0 0.0
        %720 = vmatpush.msra.mxu0 0.0
        %721 = vmatpush.msra.mxu0 0.0
        %722 = vmatpush.msra.mxu0 0.0
        %723 = vmatpush.msra.mxu0 0.0
        %724 = vmatpush.msra.mxu0 0.0
        %725 = vmatpush.msra.mxu0 0.0
        %726 = vmatpush.msra.mxu0 0.0
        %727 = vmatpush.msra.mxu0 0.0
        %728 = vmatpush.msra.mxu0 0.0
        %729 = vmatpush.msra.mxu0 0.0
        %730 = vmatpush.msra.mxu0 0.0
        %731 = vmatpush.msra.mxu0 %v540
        %732 = vmatpush.msra.mxu0 %v539
        %733 = vmatpush.msra.mxu0 %v538
        %734 = vmatpush.msra.mxu0 %v537
        %735 = vmatmul.f32.gmra.mxu0 %v672
        %v736 = vpop.f32.mrf.mxu0
        %v737 = vadd.f32 %v624, %v736
        %738 = vmatmul.f32.gmra.mxu0 %v675
        %v739 = vpop.f32.mrf.mxu0
        %v740 = vadd.f32 %v627, %v739
        %741 = vmatmul.f32.gmra.mxu0 %v678
        %v742 = vpop.f32.mrf.mxu0
        %v743 = vadd.f32 %v630, %v742
        %744 = vmatmul.f32.gmra.mxu0 %v681
        %v745 = vpop.f32.mrf.mxu0
        %v746 = vadd.f32 %v633, %v745
        %747 = vmatmul.f32.gmra.mxu0 %v684
        %v748 = vpop.f32.mrf.mxu0
        %v749 = vadd.f32 %v636, %v748
        %750 = vmatmul.f32.gmra.mxu0 %v687
        %v751 = vpop.f32.mrf.mxu0
        %v752 = vadd.f32 %v639, %v751
        %753 = vmatmul.f32.gmra.mxu0 %v690
        %v754 = vpop.f32.mrf.mxu0
        %v755 = vadd.f32 %v642, %v754
        %756 = vmatmul.f32.gmra.mxu0 %v693
        %v757 = vpop.f32.mrf.mxu0
        %v758 = vadd.f32 %v645, %v757
        %759 = vmatmul.f32.gmra.mxu0 %v696
        %v760 = vpop.f32.mrf.mxu0
        %v761 = vadd.f32 %v648, %v760
        %762 = vmatmul.f32.gmra.mxu0 %v699
        %v763 = vpop.f32.mrf.mxu0
        %v764 = vadd.f32 %v651, %v763
        %765 = vmatmul.f32.gmra.mxu0 %v702
        %v766 = vpop.f32.mrf.mxu0
        %v767 = vadd.f32 %v654, %v766
        %768 = vmatmul.f32.gmra.mxu0 %v705
        %v769 = vpop.f32.mrf.mxu0
        %v770 = vadd.f32 %v657, %v769
        %771 = vmatmul.f32.gmra.mxu0 %v708
        %v772 = vpop.f32.mrf.mxu0
        %v773 = vadd.f32 %v660, %v772
        %774 = vmatmul.f32.gmra.mxu0 %v711
        %v775 = vpop.f32.mrf.mxu0
        %v776 = vadd.f32 %v663, %v775
        %777 = vmatmul.f32.gmra.mxu0 %v714
        %v778 = vpop.f32.mrf.mxu0
        %v779 = vadd.f32 %v666, %v778
        %780 = vmatmul.f32.gmra.mxu0 %v717
        %v781 = vpop.f32.mrf.mxu0
        %v782 = vadd.f32 %v669, %v781
        %783 = vdwg.mxu0
        %785 = vrot.lane.b32.xlu0 %v341, 64
        %v786 = vpop.permute.xlu0 %785
        %v788 = vadd.f32 %v737, %v786
        %v789 = vadd.f32 %v740, %v786
        %v790 = vadd.f32 %v743, %v786
        %v791 = vadd.f32 %v746, %v786
        %v792 = vadd.f32 %v749, %v786
        %v793 = vadd.f32 %v752, %v786
        %v794 = vadd.f32 %v755, %v786
        %v795 = vadd.f32 %v758, %v786
        %v796 = vadd.f32 %v761, %v786
        %v797 = vadd.f32 %v764, %v786
        %v798 = vadd.f32 %v767, %v786
        %v799 = vadd.f32 %v770, %v786
        %v800 = vadd.f32 %v773, %v786
        %v801 = vadd.f32 %v776, %v786
        %v802 = vadd.f32 %v779, %v786
        %v803 = vadd.f32 %v782, %v786
        %v804 = vmax.f32 %v788, 0.0
        %v805 = vmax.f32 %v789, 0.0
        %v806 = vmax.f32 %v790, 0.0
        %v807 = vmax.f32 %v791, 0.0
        %v808 = vmax.f32 %v792, 0.0
        %v809 = vmax.f32 %v793, 0.0
        %v810 = vmax.f32 %v794, 0.0
        %v811 = vmax.f32 %v795, 0.0
        %v812 = vmax.f32 %v796, 0.0
        %v813 = vmax.f32 %v797, 0.0
        %v814 = vmax.f32 %v798, 0.0
        %v815 = vmax.f32 %v799, 0.0
        %v816 = vmax.f32 %v800, 0.0
        %v817 = vmax.f32 %v801, 0.0
        %v818 = vmax.f32 %v802, 0.0
        %v819 = vmax.f32 %v803, 0.0
        %vm820 = vcmp.gt.f32.partialorder %v323, 0.0
        %vm821 = vcmp.gt.f32.partialorder %v324, 0.0
        %vm822 = vcmp.gt.f32.partialorder %v325, 0.0
        %vm823 = vcmp.gt.f32.partialorder %v326, 0.0
        %vm824 = vcmp.gt.f32.partialorder %v327, 0.0
        %vm825 = vcmp.gt.f32.partialorder %v328, 0.0
        %vm826 = vcmp.gt.f32.partialorder %v329, 0.0
        %vm827 = vcmp.gt.f32.partialorder %v330, 0.0
        %vm828 = vcmp.gt.f32.partialorder %v331, 0.0
        %vm829 = vcmp.gt.f32.partialorder %v332, 0.0
        %vm830 = vcmp.gt.f32.partialorder %v333, 0.0
        %vm831 = vcmp.gt.f32.partialorder %v334, 0.0
        %vm832 = vcmp.gt.f32.partialorder %v335, 0.0
        %vm833 = vcmp.gt.f32.partialorder %v336, 0.0
        %vm834 = vcmp.gt.f32.partialorder %v337, 0.0
        %vm835 = vcmp.gt.f32.partialorder %v338, 0.0
        %vm836 = vmor %vm820, %vm271
        %vm837 = vmor %vm821, %vm272
        %vm838 = vmor %vm822, %vm273
        %vm839 = vmor %vm823, %vm274
        %vm840 = vmor %vm824, %vm275
        %vm841 = vmor %vm825, %vm276
        %vm842 = vmor %vm826, %vm277
        %vm843 = vmor %vm827, %vm278
        %vm844 = vmor %vm828, %vm279
        %vm845 = vmor %vm829, %vm280
        %vm846 = vmor %vm830, %vm281
        %vm847 = vmor %vm831, %vm282
        %vm848 = vmor %vm832, %vm283
        %vm849 = vmor %vm833, %vm284
        %vm850 = vmor %vm834, %vm285
        %vm851 = vmor %vm835, %vm286
        %v852 = vsel %vm836, 0.0, -1e+30
        %v853 = vsel %vm837, 0.0, -1e+30
        %v854 = vsel %vm838, 0.0, -1e+30
        %v855 = vsel %vm839, 0.0, -1e+30
        %v856 = vsel %vm840, 0.0, -1e+30
        %v857 = vsel %vm841, 0.0, -1e+30
        %v858 = vsel %vm842, 0.0, -1e+30
        %v859 = vsel %vm843, 0.0, -1e+30
        %v860 = vsel %vm844, 0.0, -1e+30
        %v861 = vsel %vm845, 0.0, -1e+30
        %v862 = vsel %vm846, 0.0, -1e+30
        %v863 = vsel %vm847, 0.0, -1e+30
        %v864 = vsel %vm848, 0.0, -1e+30
        %v865 = vsel %vm849, 0.0, -1e+30
        %v866 = vsel %vm850, 0.0, -1e+30
        %v867 = vsel %vm851, 0.0, -1e+30
        %v868 = vld [vmem:[%s3] sm:$0xff]
        %v869 = vld [vmem:[%s3 + $0x8] sm:$0xff]
        %v870 = vld [vmem:[%s3 + $0x10] sm:$0xff]
        %v871 = vld [vmem:[%s3 + $0x18] sm:$0xff]
        %v873 = vsel %vm557, %v804, 0
        %v876 = vsel %vm557, %v805, 0
        %v879 = vsel %vm557, %v806, 0
        %v882 = vsel %vm557, %v807, 0
        %v885 = vsel %vm557, %v808, 0
        %v888 = vsel %vm557, %v809, 0
        %v891 = vsel %vm557, %v810, 0
        %v894 = vsel %vm557, %v811, 0
        %v897 = vsel %vm557, %v812, 0
        %v900 = vsel %vm557, %v813, 0
        %v903 = vsel %vm557, %v814, 0
        %v906 = vsel %vm557, %v815, 0
        %v909 = vsel %vm557, %v816, 0
        %v912 = vsel %vm557, %v817, 0
        %v915 = vsel %vm557, %v818, 0
        %v918 = vsel %vm557, %v819, 0
        %920 = vmatpush.msra.mxu0 0.0
        %921 = vmatpush.msra.mxu0 0.0
        %922 = vmatpush.msra.mxu0 0.0
        %923 = vmatpush.msra.mxu0 0.0
        %924 = vmatpush.msra.mxu0 0.0
        %925 = vmatpush.msra.mxu0 0.0
        %926 = vmatpush.msra.mxu0 0.0
        %927 = vmatpush.msra.mxu0 0.0
        %928 = vmatpush.msra.mxu0 0.0
        %929 = vmatpush.msra.mxu0 0.0
        %930 = vmatpush.msra.mxu0 0.0
        %931 = vmatpush.msra.mxu0 0.0
        %932 = vmatpush.msra.mxu0 %v871
        %933 = vmatpush.msra.mxu0 %v870
        %934 = vmatpush.msra.mxu0 %v869
        %935 = vmatpush.msra.mxu0 %v868
        %936 = vmatmul.f32.gmra.mxu0 %v873
        %v937 = vpop.f32.mrf.mxu0
        %v938 = vadd.f32 0.0, %v937
        %939 = vmatmul.f32.gmra.mxu0 %v876
        %v940 = vpop.f32.mrf.mxu0
        %v941 = vadd.f32 0.0, %v940
        %942 = vmatmul.f32.gmra.mxu0 %v879
        %v943 = vpop.f32.mrf.mxu0
        %v944 = vadd.f32 0.0, %v943
        %945 = vmatmul.f32.gmra.mxu0 %v882
        %v946 = vpop.f32.mrf.mxu0
        %v947 = vadd.f32 0.0, %v946
        %948 = vmatmul.f32.gmra.mxu0 %v885
        %v949 = vpop.f32.mrf.mxu0
        %v950 = vadd.f32 0.0, %v949
        %951 = vmatmul.f32.gmra.mxu0 %v888
        %v952 = vpop.f32.mrf.mxu0
        %v953 = vadd.f32 0.0, %v952
        %954 = vmatmul.f32.gmra.mxu0 %v891
        %v955 = vpop.f32.mrf.mxu0
        %v956 = vadd.f32 0.0, %v955
        %957 = vmatmul.f32.gmra.mxu0 %v894
        %v958 = vpop.f32.mrf.mxu0
        %v959 = vadd.f32 0.0, %v958
        %960 = vmatmul.f32.gmra.mxu0 %v897
        %v961 = vpop.f32.mrf.mxu0
        %v962 = vadd.f32 0.0, %v961
        %963 = vmatmul.f32.gmra.mxu0 %v900
        %v964 = vpop.f32.mrf.mxu0
        %v965 = vadd.f32 0.0, %v964
        %966 = vmatmul.f32.gmra.mxu0 %v903
        %v967 = vpop.f32.mrf.mxu0
        %v968 = vadd.f32 0.0, %v967
        %969 = vmatmul.f32.gmra.mxu0 %v906
        %v970 = vpop.f32.mrf.mxu0
        %v971 = vadd.f32 0.0, %v970
        %972 = vmatmul.f32.gmra.mxu0 %v909
        %v973 = vpop.f32.mrf.mxu0
        %v974 = vadd.f32 0.0, %v973
        %975 = vmatmul.f32.gmra.mxu0 %v912
        %v976 = vpop.f32.mrf.mxu0
        %v977 = vadd.f32 0.0, %v976
        %978 = vmatmul.f32.gmra.mxu0 %v915
        %v979 = vpop.f32.mrf.mxu0
        %v980 = vadd.f32 0.0, %v979
        %981 = vmatmul.f32.gmra.mxu0 %v918
        %v982 = vpop.f32.mrf.mxu0
        %v983 = vadd.f32 0.0, %v982
        %984 = vdwg.mxu0
        %v985 = vld [vmem:[%s3 + $0x48] sm:$0xff]
        %v986 = vld [vmem:[%s3 + $0x50] sm:$0xff]
        %v987 = vld [vmem:[%s3 + $0x58] sm:$0xff]
        %v988 = vld [vmem:[%s3 + $0x60] sm:$0xff]
        %989 = vmatpush.msra.mxu0 0.0
        %990 = vmatpush.msra.mxu0 0.0
        %991 = vmatpush.msra.mxu0 0.0
        %992 = vmatpush.msra.mxu0 0.0
        %993 = vmatpush.msra.mxu0 0.0
        %994 = vmatpush.msra.mxu0 0.0
        %995 = vmatpush.msra.mxu0 0.0
        %996 = vmatpush.msra.mxu0 0.0
        %997 = vmatpush.msra.mxu0 0.0
        %998 = vmatpush.msra.mxu0 0.0
        %999 = vmatpush.msra.mxu0 0.0
        %1000 = vmatpush.msra.mxu0 0.0
        %1001 = vmatpush.msra.mxu0 %v988
        %1002 = vmatpush.msra.mxu0 %v987
        %1003 = vmatpush.msra.mxu0 %v986
        %1004 = vmatpush.msra.mxu0 %v985
        %1005 = vmatmul.f32.gmra.mxu0 %v873
        %v1006 = vpop.f32.mrf.mxu0
        %v1007 = vadd.f32 0.0, %v1006
        %1008 = vmatmul.f32.gmra.mxu0 %v876
        %v1009 = vpop.f32.mrf.mxu0
        %v1010 = vadd.f32 0.0, %v1009
        %1011 = vmatmul.f32.gmra.mxu0 %v879
        %v1012 = vpop.f32.mrf.mxu0
        %v1013 = vadd.f32 0.0, %v1012
        %1014 = vmatmul.f32.gmra.mxu0 %v882
        %v1015 = vpop.f32.mrf.mxu0
        %v1016 = vadd.f32 0.0, %v1015
        %1017 = vmatmul.f32.gmra.mxu0 %v885
        %v1018 = vpop.f32.mrf.mxu0
        %v1019 = vadd.f32 0.0, %v1018
        %1020 = vmatmul.f32.gmra.mxu0 %v888
        %v1021 = vpop.f32.mrf.mxu0
        %v1022 = vadd.f32 0.0, %v1021
        %1023 = vmatmul.f32.gmra.mxu0 %v891
        %v1024 = vpop.f32.mrf.mxu0
        %v1025 = vadd.f32 0.0, %v1024
        %1026 = vmatmul.f32.gmra.mxu0 %v894
        %v1027 = vpop.f32.mrf.mxu0
        %v1028 = vadd.f32 0.0, %v1027
        %1029 = vmatmul.f32.gmra.mxu0 %v897
        %v1030 = vpop.f32.mrf.mxu0
        %v1031 = vadd.f32 0.0, %v1030
        %1032 = vmatmul.f32.gmra.mxu0 %v900
        %v1033 = vpop.f32.mrf.mxu0
        %v1034 = vadd.f32 0.0, %v1033
        %1035 = vmatmul.f32.gmra.mxu0 %v903
        %v1036 = vpop.f32.mrf.mxu0
        %v1037 = vadd.f32 0.0, %v1036
        %1038 = vmatmul.f32.gmra.mxu0 %v906
        %v1039 = vpop.f32.mrf.mxu0
        %v1040 = vadd.f32 0.0, %v1039
        %1041 = vmatmul.f32.gmra.mxu0 %v909
        %v1042 = vpop.f32.mrf.mxu0
        %v1043 = vadd.f32 0.0, %v1042
        %1044 = vmatmul.f32.gmra.mxu0 %v912
        %v1045 = vpop.f32.mrf.mxu0
        %v1046 = vadd.f32 0.0, %v1045
        %1047 = vmatmul.f32.gmra.mxu0 %v915
        %v1048 = vpop.f32.mrf.mxu0
        %v1049 = vadd.f32 0.0, %v1048
        %1050 = vmatmul.f32.gmra.mxu0 %v918
        %v1051 = vpop.f32.mrf.mxu0
        %v1052 = vadd.f32 0.0, %v1051
        %1053 = vdwg.mxu0
        %v1054 = vld [vmem:[%s3 + $0xc8] sm:$0xf]
        %v1056 = vsel %vm557, %v1054, 0
        %1058 = vmatpush.xpose.msra.mxu0 %v918
        %1059 = vmatpush.xpose.msra.mxu0 %v915
        %1060 = vmatpush.xpose.msra.mxu0 %v912
        %1061 = vmatpush.xpose.msra.mxu0 %v909
        %1062 = vmatpush.xpose.msra.mxu0 %v906
        %1063 = vmatpush.xpose.msra.mxu0 %v903
        %1064 = vmatpush.xpose.msra.mxu0 %v900
        %1065 = vmatpush.xpose.msra.mxu0 %v897
        %1066 = vmatpush.xpose.msra.mxu0 %v894
        %1067 = vmatpush.xpose.msra.mxu0 %v891
        %1068 = vmatpush.xpose.msra.mxu0 %v888
        %1069 = vmatpush.xpose.msra.mxu0 %v885
        %1070 = vmatpush.xpose.msra.mxu0 %v882
        %1071 = vmatpush.xpose.msra.mxu0 %v879
        %1072 = vmatpush.xpose.msra.mxu0 %v876
        %1073 = vmatpush.xpose.msra.mxu0 %v873
        %1074 = vmatmul.f32.gmra.mxu0 %v1056
        %v1075 = vpop.f32.mrf.mxu0
        %v1076 = vadd.f32 0.0, %v1075
        %1077 = vdwg.mxu0
        %1079 = vset.pattern.permute.xlu0 0
        %1080 = vperm.xlu0 %1079, %v1007
        %v1081 = vpop.permute.xlu0 %1080
        %1084 = vset.pattern.permute.xlu0 0
        %1085 = vperm.xlu0 %1084, %v1010
        %v1086 = vpop.permute.xlu0 %1085
        %1089 = vset.pattern.permute.xlu0 0
        %1090 = vperm.xlu0 %1089, %v1013
        %v1091 = vpop.permute.xlu0 %1090
        %1094 = vset.pattern.permute.xlu0 0
        %1095 = vperm.xlu0 %1094, %v1016
        %v1096 = vpop.permute.xlu0 %1095
        %1099 = vset.pattern.permute.xlu0 0
        %1100 = vperm.xlu0 %1099, %v1019
        %v1101 = vpop.permute.xlu0 %1100
        %1104 = vset.pattern.permute.xlu0 0
        %1105 = vperm.xlu0 %1104, %v1022
        %v1106 = vpop.permute.xlu0 %1105
        %1109 = vset.pattern.permute.xlu0 0
        %1110 = vperm.xlu0 %1109, %v1025
        %v1111 = vpop.permute.xlu0 %1110
        %1114 = vset.pattern.permute.xlu0 0
        %1115 = vperm.xlu0 %1114, %v1028
        %v1116 = vpop.permute.xlu0 %1115
        %1119 = vset.pattern.permute.xlu0 0
        %1120 = vperm.xlu0 %1119, %v1031
        %v1121 = vpop.permute.xlu0 %1120
        %1124 = vset.pattern.permute.xlu0 0
        %1125 = vperm.xlu0 %1124, %v1034
        %v1126 = vpop.permute.xlu0 %1125
        %1129 = vset.pattern.permute.xlu0 0
        %1130 = vperm.xlu0 %1129, %v1037
        %v1131 = vpop.permute.xlu0 %1130
        %1134 = vset.pattern.permute.xlu0 0
        %1135 = vperm.xlu0 %1134, %v1040
        %v1136 = vpop.permute.xlu0 %1135
        %1139 = vset.pattern.permute.xlu0 0
        %1140 = vperm.xlu0 %1139, %v1043
        %v1141 = vpop.permute.xlu0 %1140
        %1144 = vset.pattern.permute.xlu0 0
        %1145 = vperm.xlu0 %1144, %v1046
        %v1146 = vpop.permute.xlu0 %1145
        %1149 = vset.pattern.permute.xlu0 0
        %1150 = vperm.xlu0 %1149, %v1049
        %v1151 = vpop.permute.xlu0 %1150
        %1154 = vset.pattern.permute.xlu0 0
        %1155 = vperm.xlu0 %1154, %v1052
        %v1156 = vpop.permute.xlu0 %1155
        %v1158 = vperm.slane %v1076, 0
        %v1159 = vadd.f32 %v1081, %v1158
        %v1160 = vadd.f32 %v1086, %v1158
        %v1161 = vadd.f32 %v1091, %v1158
        %v1162 = vadd.f32 %v1096, %v1158
        %v1163 = vadd.f32 %v1101, %v1158
        %v1164 = vadd.f32 %v1106, %v1158
        %v1165 = vadd.f32 %v1111, %v1158
        %v1166 = vadd.f32 %v1116, %v1158
        %v1167 = vadd.f32 %v1121, %v1158
        %v1168 = vadd.f32 %v1126, %v1158
        %v1169 = vadd.f32 %v1131, %v1158
        %v1170 = vadd.f32 %v1136, %v1158
        %v1171 = vadd.f32 %v1141, %v1158
        %v1172 = vadd.f32 %v1146, %v1158
        %v1173 = vadd.f32 %v1151, %v1158
        %v1174 = vadd.f32 %v1156, %v1158
        %v1175 = vmul.f32 %v1159, 0.2
        %v1176 = vmul.f32 %v1160, 0.2
        %v1177 = vmul.f32 %v1161, 0.2
        %v1178 = vmul.f32 %v1162, 0.2
        %v1179 = vmul.f32 %v1163, 0.2
        %v1180 = vmul.f32 %v1164, 0.2
        %v1181 = vmul.f32 %v1165, 0.2
        %v1182 = vmul.f32 %v1166, 0.2
        %v1183 = vmul.f32 %v1167, 0.2
        %v1184 = vmul.f32 %v1168, 0.2
        %v1185 = vmul.f32 %v1169, 0.2
        %v1186 = vmul.f32 %v1170, 0.2
        %v1187 = vmul.f32 %v1171, 0.2
        %v1188 = vmul.f32 %v1172, 0.2
        %v1189 = vmul.f32 %v1173, 0.2
        %v1190 = vmul.f32 %v1174, 0.2
        %v1191 = vmax.f32 %v1159, %v1175
        %v1192 = vmax.f32 %v1160, %v1176
        %v1193 = vmax.f32 %v1161, %v1177
        %v1194 = vmax.f32 %v1162, %v1178
        %v1195 = vmax.f32 %v1163, %v1179
        %v1196 = vmax.f32 %v1164, %v1180
        %v1197 = vmax.f32 %v1165, %v1181
        %v1198 = vmax.f32 %v1166, %v1182
        %v1199 = vmax.f32 %v1167, %v1183
        %v1200 = vmax.f32 %v1168, %v1184
        %v1201 = vmax.f32 %v1169, %v1185
        %v1202 = vmax.f32 %v1170, %v1186
        %v1203 = vmax.f32 %v1171, %v1187
        %v1204 = vmax.f32 %v1172, %v1188
        %v1205 = vmax.f32 %v1173, %v1189
        %v1206 = vmax.f32 %v1174, %v1190
        %v1207 = vadd.f32 %v1191, %v852
        %v1208 = vadd.f32 %v1192, %v853
        %v1209 = vadd.f32 %v1193, %v854
        %v1210 = vadd.f32 %v1194, %v855
        %v1211 = vadd.f32 %v1195, %v856
        %v1212 = vadd.f32 %v1196, %v857
        %v1213 = vadd.f32 %v1197, %v858
        %v1214 = vadd.f32 %v1198, %v859
        %v1215 = vadd.f32 %v1199, %v860
        %v1216 = vadd.f32 %v1200, %v861
        %v1217 = vadd.f32 %v1201, %v862
        %v1218 = vadd.f32 %v1202, %v863
        %v1219 = vadd.f32 %v1203, %v864
        %v1220 = vadd.f32 %v1204, %v865
        %v1221 = vadd.f32 %v1205, %v866
        %v1222 = vadd.f32 %v1206, %v867
        %1223 = vmax.xlane.f32.xlu0 %v1207
        %v1224 = vpop.xlane.xlu0 %1223
        %1225 = vmax.xlane.f32.xlu0 %v1208
        %v1226 = vpop.xlane.xlu0 %1225
        %1227 = vmax.xlane.f32.xlu0 %v1209
        %v1228 = vpop.xlane.xlu0 %1227
        %1229 = vmax.xlane.f32.xlu0 %v1210
        %v1230 = vpop.xlane.xlu0 %1229
        %1231 = vmax.xlane.f32.xlu0 %v1211
        %v1232 = vpop.xlane.xlu0 %1231
        %1233 = vmax.xlane.f32.xlu0 %v1212
        %v1234 = vpop.xlane.xlu0 %1233
        %1235 = vmax.xlane.f32.xlu0 %v1213
        %v1236 = vpop.xlane.xlu0 %1235
        %1237 = vmax.xlane.f32.xlu0 %v1214
        %v1238 = vpop.xlane.xlu0 %1237
        %1239 = vmax.xlane.f32.xlu0 %v1215
        %v1240 = vpop.xlane.xlu0 %1239
        %1241 = vmax.xlane.f32.xlu0 %v1216
        %v1242 = vpop.xlane.xlu0 %1241
        %1243 = vmax.xlane.f32.xlu0 %v1217
        %v1244 = vpop.xlane.xlu0 %1243
        %1245 = vmax.xlane.f32.xlu0 %v1218
        %v1246 = vpop.xlane.xlu0 %1245
        %1247 = vmax.xlane.f32.xlu0 %v1219
        %v1248 = vpop.xlane.xlu0 %1247
        %1249 = vmax.xlane.f32.xlu0 %v1220
        %v1250 = vpop.xlane.xlu0 %1249
        %1251 = vmax.xlane.f32.xlu0 %v1221
        %v1252 = vpop.xlane.xlu0 %1251
        %1253 = vmax.xlane.f32.xlu0 %v1222
        %v1254 = vpop.xlane.xlu0 %1253
        %v1255 = vsub.f32 %v1207, %v1224
        %v1256 = vsub.f32 %v1208, %v1226
        %v1257 = vsub.f32 %v1209, %v1228
        %v1258 = vsub.f32 %v1210, %v1230
        %v1259 = vsub.f32 %v1211, %v1232
        %v1260 = vsub.f32 %v1212, %v1234
        %v1261 = vsub.f32 %v1213, %v1236
        %v1262 = vsub.f32 %v1214, %v1238
        %v1263 = vsub.f32 %v1215, %v1240
        %v1264 = vsub.f32 %v1216, %v1242
        %v1265 = vsub.f32 %v1217, %v1244
        %v1266 = vsub.f32 %v1218, %v1246
        %v1267 = vsub.f32 %v1219, %v1248
        %v1268 = vsub.f32 %v1220, %v1250
        %v1269 = vsub.f32 %v1221, %v1252
        %v1270 = vsub.f32 %v1222, %v1254
        %v1271 = vmul.f32 %v1255, 1.442695
        %v1272 = vpow.pop %v1271
        %v1273 = vmul.f32 %v1256, 1.442695
        %v1274 = vpow.pop %v1273
        %v1275 = vmul.f32 %v1257, 1.442695
        %v1276 = vpow.pop %v1275
        %v1277 = vmul.f32 %v1258, 1.442695
        %v1278 = vpow.pop %v1277
        %v1279 = vmul.f32 %v1259, 1.442695
        %v1280 = vpow.pop %v1279
        %v1281 = vmul.f32 %v1260, 1.442695
        %v1282 = vpow.pop %v1281
        %v1283 = vmul.f32 %v1261, 1.442695
        %v1284 = vpow.pop %v1283
        %v1285 = vmul.f32 %v1262, 1.442695
        %v1286 = vpow.pop %v1285
        %v1287 = vmul.f32 %v1263, 1.442695
        %v1288 = vpow.pop %v1287
        %v1289 = vmul.f32 %v1264, 1.442695
        %v1290 = vpow.pop %v1289
        %v1291 = vmul.f32 %v1265, 1.442695
        %v1292 = vpow.pop %v1291
        %v1293 = vmul.f32 %v1266, 1.442695
        %v1294 = vpow.pop %v1293
        %v1295 = vmul.f32 %v1267, 1.442695
        %v1296 = vpow.pop %v1295
        %v1297 = vmul.f32 %v1268, 1.442695
        %v1298 = vpow.pop %v1297
        %v1299 = vmul.f32 %v1269, 1.442695
        %v1300 = vpow.pop %v1299
        %v1301 = vmul.f32 %v1270, 1.442695
        %v1302 = vpow.pop %v1301
        %1303 = vmatpush.msra.mxu0 1.0
        %1304 = vmatpush.msra.mxu0 1.0
        %1305 = vmatpush.msra.mxu0 1.0
        %1306 = vmatpush.msra.mxu0 1.0
        %1307 = vmatpush.msra.mxu0 1.0
        %1308 = vmatpush.msra.mxu0 1.0
        %1309 = vmatpush.msra.mxu0 1.0
        %1310 = vmatpush.msra.mxu0 1.0
        %1311 = vmatpush.msra.mxu0 1.0
        %1312 = vmatpush.msra.mxu0 1.0
        %1313 = vmatpush.msra.mxu0 1.0
        %1314 = vmatpush.msra.mxu0 1.0
        %1315 = vmatpush.msra.mxu0 1.0
        %1316 = vmatpush.msra.mxu0 1.0
        %1317 = vmatpush.msra.mxu0 1.0
        %1318 = vmatpush.msra.mxu0 1.0
        %1319 = vmatmul.f32.gmra.mxu0 %v1272
        %v1320 = vpop.f32.mrf.mxu0
        %v1321 = vadd.f32 0.0, %v1320
        %1322 = vmatmul.f32.gmra.mxu0 %v1274
        %v1323 = vpop.f32.mrf.mxu0
        %v1324 = vadd.f32 0.0, %v1323
        %1325 = vmatmul.f32.gmra.mxu0 %v1276
        %v1326 = vpop.f32.mrf.mxu0
        %v1327 = vadd.f32 0.0, %v1326
        %1328 = vmatmul.f32.gmra.mxu0 %v1278
        %v1329 = vpop.f32.mrf.mxu0
        %v1330 = vadd.f32 0.0, %v1329
        %1331 = vmatmul.f32.gmra.mxu0 %v1280
        %v1332 = vpop.f32.mrf.mxu0
        %v1333 = vadd.f32 0.0, %v1332
        %1334 = vmatmul.f32.gmra.mxu0 %v1282
        %v1335 = vpop.f32.mrf.mxu0
        %v1336 = vadd.f32 0.0, %v1335
        %1337 = vmatmul.f32.gmra.mxu0 %v1284
        %v1338 = vpop.f32.mrf.mxu0
        %v1339 = vadd.f32 0.0, %v1338
        %1340 = vmatmul.f32.gmra.mxu0 %v1286
        %v1341 = vpop.f32.mrf.mxu0
        %v1342 = vadd.f32 0.0, %v1341
        %1343 = vmatmul.f32.gmra.mxu0 %v1288
        %v1344 = vpop.f32.mrf.mxu0
        %v1345 = vadd.f32 0.0, %v1344
        %1346 = vmatmul.f32.gmra.mxu0 %v1290
        %v1347 = vpop.f32.mrf.mxu0
        %v1348 = vadd.f32 0.0, %v1347
        %1349 = vmatmul.f32.gmra.mxu0 %v1292
        %v1350 = vpop.f32.mrf.mxu0
        %v1351 = vadd.f32 0.0, %v1350
        %1352 = vmatmul.f32.gmra.mxu0 %v1294
        %v1353 = vpop.f32.mrf.mxu0
        %v1354 = vadd.f32 0.0, %v1353
        %1355 = vmatmul.f32.gmra.mxu0 %v1296
        %v1356 = vpop.f32.mrf.mxu0
        %v1357 = vadd.f32 0.0, %v1356
        %1358 = vmatmul.f32.gmra.mxu0 %v1298
        %v1359 = vpop.f32.mrf.mxu0
        %v1360 = vadd.f32 0.0, %v1359
        %1361 = vmatmul.f32.gmra.mxu0 %v1300
        %v1362 = vpop.f32.mrf.mxu0
        %v1363 = vadd.f32 0.0, %v1362
        %1364 = vmatmul.f32.gmra.mxu0 %v1302
        %v1365 = vpop.f32.mrf.mxu0
        %v1366 = vadd.f32 0.0, %v1365
        %1367 = vdwg.mxu0
        %v1368 = vrcp.pop %v1321
        %v1369 = vrcp.pop %v1324
        %v1370 = vrcp.pop %v1327
        %v1371 = vrcp.pop %v1330
        %v1372 = vrcp.pop %v1333
        %v1373 = vrcp.pop %v1336
        %v1374 = vrcp.pop %v1339
        %v1375 = vrcp.pop %v1342
        %v1376 = vrcp.pop %v1345
        %v1377 = vrcp.pop %v1348
        %v1378 = vrcp.pop %v1351
        %v1379 = vrcp.pop %v1354
        %v1380 = vrcp.pop %v1357
        %v1381 = vrcp.pop %v1360
        %v1382 = vrcp.pop %v1363
        %v1383 = vrcp.pop %v1366
        %1384 = vmatpush.msra.mxu0 %v983
        %1385 = vmatpush.msra.mxu0 %v980
        %1386 = vmatpush.msra.mxu0 %v977
        %1387 = vmatpush.msra.mxu0 %v974
        %1388 = vmatpush.msra.mxu0 %v971
        %1389 = vmatpush.msra.mxu0 %v968
        %1390 = vmatpush.msra.mxu0 %v965
        %1391 = vmatpush.msra.mxu0 %v962
        %1392 = vmatpush.msra.mxu0 %v959
        %1393 = vmatpush.msra.mxu0 %v956
        %1394 = vmatpush.msra.mxu0 %v953
        %1395 = vmatpush.msra.mxu0 %v950
        %1396 = vmatpush.msra.mxu0 %v947
        %1397 = vmatpush.msra.mxu0 %v944
        %1398 = vmatpush.msra.mxu0 %v941
        %1399 = vmatpush.msra.mxu0 %v938
        %1400 = vmatmul.f32.gmra.mxu0 %v1272
        %v1401 = vpop.f32.mrf.mxu0
        %v1402 = vadd.f32 0.0, %v1401
        %1403 = vmatmul.f32.gmra.mxu0 %v1274
        %v1404 = vpop.f32.mrf.mxu0
        %v1405 = vadd.f32 0.0, %v1404
        %1406 = vmatmul.f32.gmra.mxu0 %v1276
        %v1407 = vpop.f32.mrf.mxu0
        %v1408 = vadd.f32 0.0, %v1407
        %1409 = vmatmul.f32.gmra.mxu0 %v1278
        %v1410 = vpop.f32.mrf.mxu0
        %v1411 = vadd.f32 0.0, %v1410
        %1412 = vmatmul.f32.gmra.mxu0 %v1280
        %v1413 = vpop.f32.mrf.mxu0
        %v1414 = vadd.f32 0.0, %v1413
        %1415 = vmatmul.f32.gmra.mxu0 %v1282
        %v1416 = vpop.f32.mrf.mxu0
        %v1417 = vadd.f32 0.0, %v1416
        %1418 = vmatmul.f32.gmra.mxu0 %v1284
        %v1419 = vpop.f32.mrf.mxu0
        %v1420 = vadd.f32 0.0, %v1419
        %1421 = vmatmul.f32.gmra.mxu0 %v1286
        %v1422 = vpop.f32.mrf.mxu0
        %v1423 = vadd.f32 0.0, %v1422
        %1424 = vmatmul.f32.gmra.mxu0 %v1288
        %v1425 = vpop.f32.mrf.mxu0
        %v1426 = vadd.f32 0.0, %v1425
        %1427 = vmatmul.f32.gmra.mxu0 %v1290
        %v1428 = vpop.f32.mrf.mxu0
        %v1429 = vadd.f32 0.0, %v1428
        %1430 = vmatmul.f32.gmra.mxu0 %v1292
        %v1431 = vpop.f32.mrf.mxu0
        %v1432 = vadd.f32 0.0, %v1431
        %1433 = vmatmul.f32.gmra.mxu0 %v1294
        %v1434 = vpop.f32.mrf.mxu0
        %v1435 = vadd.f32 0.0, %v1434
        %1436 = vmatmul.f32.gmra.mxu0 %v1296
        %v1437 = vpop.f32.mrf.mxu0
        %v1438 = vadd.f32 0.0, %v1437
        %1439 = vmatmul.f32.gmra.mxu0 %v1298
        %v1440 = vpop.f32.mrf.mxu0
        %v1441 = vadd.f32 0.0, %v1440
        %1442 = vmatmul.f32.gmra.mxu0 %v1300
        %v1443 = vpop.f32.mrf.mxu0
        %v1444 = vadd.f32 0.0, %v1443
        %1445 = vmatmul.f32.gmra.mxu0 %v1302
        %v1446 = vpop.f32.mrf.mxu0
        %v1447 = vadd.f32 0.0, %v1446
        %1448 = vdwg.mxu0
        %1450 = vset.pattern.permute.xlu0 0
        %1451 = vperm.xlu0 %1450, %v1368
        %v1452 = vpop.permute.xlu0 %1451
        %1455 = vset.pattern.permute.xlu0 0
        %1456 = vperm.xlu0 %1455, %v1369
        %v1457 = vpop.permute.xlu0 %1456
        %1460 = vset.pattern.permute.xlu0 0
        %1461 = vperm.xlu0 %1460, %v1370
        %v1462 = vpop.permute.xlu0 %1461
        %1465 = vset.pattern.permute.xlu0 0
        %1466 = vperm.xlu0 %1465, %v1371
        %v1467 = vpop.permute.xlu0 %1466
        %1470 = vset.pattern.permute.xlu0 0
        %1471 = vperm.xlu0 %1470, %v1372
        %v1472 = vpop.permute.xlu0 %1471
        %1475 = vset.pattern.permute.xlu0 0
        %1476 = vperm.xlu0 %1475, %v1373
        %v1477 = vpop.permute.xlu0 %1476
        %1480 = vset.pattern.permute.xlu0 0
        %1481 = vperm.xlu0 %1480, %v1374
        %v1482 = vpop.permute.xlu0 %1481
        %1485 = vset.pattern.permute.xlu0 0
        %1486 = vperm.xlu0 %1485, %v1375
        %v1487 = vpop.permute.xlu0 %1486
        %1490 = vset.pattern.permute.xlu0 0
        %1491 = vperm.xlu0 %1490, %v1376
        %v1492 = vpop.permute.xlu0 %1491
        %1495 = vset.pattern.permute.xlu0 0
        %1496 = vperm.xlu0 %1495, %v1377
        %v1497 = vpop.permute.xlu0 %1496
        %1500 = vset.pattern.permute.xlu0 0
        %1501 = vperm.xlu0 %1500, %v1378
        %v1502 = vpop.permute.xlu0 %1501
        %1505 = vset.pattern.permute.xlu0 0
        %1506 = vperm.xlu0 %1505, %v1379
        %v1507 = vpop.permute.xlu0 %1506
        %1510 = vset.pattern.permute.xlu0 0
        %1511 = vperm.xlu0 %1510, %v1380
        %v1512 = vpop.permute.xlu0 %1511
        %1515 = vset.pattern.permute.xlu0 0
        %1516 = vperm.xlu0 %1515, %v1381
        %v1517 = vpop.permute.xlu0 %1516
        %1520 = vset.pattern.permute.xlu0 0
        %1521 = vperm.xlu0 %1520, %v1382
        %v1522 = vpop.permute.xlu0 %1521
        %1525 = vset.pattern.permute.xlu0 0
        %1526 = vperm.xlu0 %1525, %v1383
        %v1527 = vpop.permute.xlu0 %1526
        %v1529 = vmul.f32 %v1402, %v1452
        %v1530 = vmul.f32 %v1405, %v1457
        %v1531 = vmul.f32 %v1408, %v1462
        %v1532 = vmul.f32 %v1411, %v1467
        %v1533 = vmul.f32 %v1414, %v1472
        %v1534 = vmul.f32 %v1417, %v1477
        %v1535 = vmul.f32 %v1420, %v1482
        %v1536 = vmul.f32 %v1423, %v1487
        %v1537 = vmul.f32 %v1426, %v1492
        %v1538 = vmul.f32 %v1429, %v1497
        %v1539 = vmul.f32 %v1432, %v1502
        %v1540 = vmul.f32 %v1435, %v1507
        %v1541 = vmul.f32 %v1438, %v1512
        %v1542 = vmul.f32 %v1441, %v1517
        %v1543 = vmul.f32 %v1444, %v1522
        %v1544 = vmul.f32 %v1447, %v1527
        %v1545 = vadd.f32 %v1529, 0.0
        %v1546 = vadd.f32 %v1530, 0.0
        %v1547 = vadd.f32 %v1531, 0.0
        %v1548 = vadd.f32 %v1532, 0.0
        %v1549 = vadd.f32 %v1533, 0.0
        %v1550 = vadd.f32 %v1534, 0.0
        %v1551 = vadd.f32 %v1535, 0.0
        %v1552 = vadd.f32 %v1536, 0.0
        %v1553 = vadd.f32 %v1537, 0.0
        %v1554 = vadd.f32 %v1538, 0.0
        %v1555 = vadd.f32 %v1539, 0.0
        %v1556 = vadd.f32 %v1540, 0.0
        %v1557 = vadd.f32 %v1541, 0.0
        %v1558 = vadd.f32 %v1542, 0.0
        %v1559 = vadd.f32 %v1543, 0.0
        %v1560 = vadd.f32 %v1544, 0.0
        %1561 = vset.pattern.permute.xlu0 1
        %1562 = vperm.xlu0 %1561, %v1007
        %v1563 = vpop.permute.xlu0 %1562
        %1565 = vset.pattern.permute.xlu0 1
        %1566 = vperm.xlu0 %1565, %v1010
        %v1567 = vpop.permute.xlu0 %1566
        %1569 = vset.pattern.permute.xlu0 1
        %1570 = vperm.xlu0 %1569, %v1013
        %v1571 = vpop.permute.xlu0 %1570
        %1573 = vset.pattern.permute.xlu0 1
        %1574 = vperm.xlu0 %1573, %v1016
        %v1575 = vpop.permute.xlu0 %1574
        %1577 = vset.pattern.permute.xlu0 1
        %1578 = vperm.xlu0 %1577, %v1019
        %v1579 = vpop.permute.xlu0 %1578
        %1581 = vset.pattern.permute.xlu0 1
        %1582 = vperm.xlu0 %1581, %v1022
        %v1583 = vpop.permute.xlu0 %1582
        %1585 = vset.pattern.permute.xlu0 1
        %1586 = vperm.xlu0 %1585, %v1025
        %v1587 = vpop.permute.xlu0 %1586
        %1589 = vset.pattern.permute.xlu0 1
        %1590 = vperm.xlu0 %1589, %v1028
        %v1591 = vpop.permute.xlu0 %1590
        %1593 = vset.pattern.permute.xlu0 1
        %1594 = vperm.xlu0 %1593, %v1031
        %v1595 = vpop.permute.xlu0 %1594
        %1597 = vset.pattern.permute.xlu0 1
        %1598 = vperm.xlu0 %1597, %v1034
        %v1599 = vpop.permute.xlu0 %1598
        %1601 = vset.pattern.permute.xlu0 1
        %1602 = vperm.xlu0 %1601, %v1037
        %v1603 = vpop.permute.xlu0 %1602
        %1605 = vset.pattern.permute.xlu0 1
        %1606 = vperm.xlu0 %1605, %v1040
        %v1607 = vpop.permute.xlu0 %1606
        %1609 = vset.pattern.permute.xlu0 1
        %1610 = vperm.xlu0 %1609, %v1043
        %v1611 = vpop.permute.xlu0 %1610
        %1613 = vset.pattern.permute.xlu0 1
        %1614 = vperm.xlu0 %1613, %v1046
        %v1615 = vpop.permute.xlu0 %1614
        %1617 = vset.pattern.permute.xlu0 1
        %1618 = vperm.xlu0 %1617, %v1049
        %v1619 = vpop.permute.xlu0 %1618
        %1621 = vset.pattern.permute.xlu0 1
        %1622 = vperm.xlu0 %1621, %v1052
        %v1623 = vpop.permute.xlu0 %1622
        %v1625 = vperm.slane %v1076, 1
        %v1626 = vadd.f32 %v1563, %v1625
        %v1627 = vadd.f32 %v1567, %v1625
        %v1628 = vadd.f32 %v1571, %v1625
        %v1629 = vadd.f32 %v1575, %v1625
        %v1630 = vadd.f32 %v1579, %v1625
        %v1631 = vadd.f32 %v1583, %v1625
        %v1632 = vadd.f32 %v1587, %v1625
        %v1633 = vadd.f32 %v1591, %v1625
        %v1634 = vadd.f32 %v1595, %v1625
        %v1635 = vadd.f32 %v1599, %v1625
        %v1636 = vadd.f32 %v1603, %v1625
        %v1637 = vadd.f32 %v1607, %v1625
        %v1638 = vadd.f32 %v1611, %v1625
        %v1639 = vadd.f32 %v1615, %v1625
        %v1640 = vadd.f32 %v1619, %v1625
        %v1641 = vadd.f32 %v1623, %v1625
        %v1642 = vmul.f32 %v1626, 0.2
        %v1643 = vmul.f32 %v1627, 0.2
        %v1644 = vmul.f32 %v1628, 0.2
        %v1645 = vmul.f32 %v1629, 0.2
        %v1646 = vmul.f32 %v1630, 0.2
        %v1647 = vmul.f32 %v1631, 0.2
        %v1648 = vmul.f32 %v1632, 0.2
        %v1649 = vmul.f32 %v1633, 0.2
        %v1650 = vmul.f32 %v1634, 0.2
        %v1651 = vmul.f32 %v1635, 0.2
        %v1652 = vmul.f32 %v1636, 0.2
        %v1653 = vmul.f32 %v1637, 0.2
        %v1654 = vmul.f32 %v1638, 0.2
        %v1655 = vmul.f32 %v1639, 0.2
        %v1656 = vmul.f32 %v1640, 0.2
        %v1657 = vmul.f32 %v1641, 0.2
        %v1658 = vmax.f32 %v1626, %v1642
        %v1659 = vmax.f32 %v1627, %v1643
        %v1660 = vmax.f32 %v1628, %v1644
        %v1661 = vmax.f32 %v1629, %v1645
        %v1662 = vmax.f32 %v1630, %v1646
        %v1663 = vmax.f32 %v1631, %v1647
        %v1664 = vmax.f32 %v1632, %v1648
        %v1665 = vmax.f32 %v1633, %v1649
        %v1666 = vmax.f32 %v1634, %v1650
        %v1667 = vmax.f32 %v1635, %v1651
        %v1668 = vmax.f32 %v1636, %v1652
        %v1669 = vmax.f32 %v1637, %v1653
        %v1670 = vmax.f32 %v1638, %v1654
        %v1671 = vmax.f32 %v1639, %v1655
        %v1672 = vmax.f32 %v1640, %v1656
        %v1673 = vmax.f32 %v1641, %v1657
        %v1674 = vadd.f32 %v1658, %v852
        %v1675 = vadd.f32 %v1659, %v853
        %v1676 = vadd.f32 %v1660, %v854
        %v1677 = vadd.f32 %v1661, %v855
        %v1678 = vadd.f32 %v1662, %v856
        %v1679 = vadd.f32 %v1663, %v857
        %v1680 = vadd.f32 %v1664, %v858
        %v1681 = vadd.f32 %v1665, %v859
        %v1682 = vadd.f32 %v1666, %v860
        %v1683 = vadd.f32 %v1667, %v861
        %v1684 = vadd.f32 %v1668, %v862
        %v1685 = vadd.f32 %v1669, %v863
        %v1686 = vadd.f32 %v1670, %v864
        %v1687 = vadd.f32 %v1671, %v865
        %v1688 = vadd.f32 %v1672, %v866
        %v1689 = vadd.f32 %v1673, %v867
        %1690 = vmax.xlane.f32.xlu0 %v1674
        %v1691 = vpop.xlane.xlu0 %1690
        %1692 = vmax.xlane.f32.xlu0 %v1675
        %v1693 = vpop.xlane.xlu0 %1692
        %1694 = vmax.xlane.f32.xlu0 %v1676
        %v1695 = vpop.xlane.xlu0 %1694
        %1696 = vmax.xlane.f32.xlu0 %v1677
        %v1697 = vpop.xlane.xlu0 %1696
        %1698 = vmax.xlane.f32.xlu0 %v1678
        %v1699 = vpop.xlane.xlu0 %1698
        %1700 = vmax.xlane.f32.xlu0 %v1679
        %v1701 = vpop.xlane.xlu0 %1700
        %1702 = vmax.xlane.f32.xlu0 %v1680
        %v1703 = vpop.xlane.xlu0 %1702
        %1704 = vmax.xlane.f32.xlu0 %v1681
        %v1705 = vpop.xlane.xlu0 %1704
        %1706 = vmax.xlane.f32.xlu0 %v1682
        %v1707 = vpop.xlane.xlu0 %1706
        %1708 = vmax.xlane.f32.xlu0 %v1683
        %v1709 = vpop.xlane.xlu0 %1708
        %1710 = vmax.xlane.f32.xlu0 %v1684
        %v1711 = vpop.xlane.xlu0 %1710
        %1712 = vmax.xlane.f32.xlu0 %v1685
        %v1713 = vpop.xlane.xlu0 %1712
        %1714 = vmax.xlane.f32.xlu0 %v1686
        %v1715 = vpop.xlane.xlu0 %1714
        %1716 = vmax.xlane.f32.xlu0 %v1687
        %v1717 = vpop.xlane.xlu0 %1716
        %1718 = vmax.xlane.f32.xlu0 %v1688
        %v1719 = vpop.xlane.xlu0 %1718
        %1720 = vmax.xlane.f32.xlu0 %v1689
        %v1721 = vpop.xlane.xlu0 %1720
        %v1722 = vsub.f32 %v1674, %v1691
        %v1723 = vsub.f32 %v1675, %v1693
        %v1724 = vsub.f32 %v1676, %v1695
        %v1725 = vsub.f32 %v1677, %v1697
        %v1726 = vsub.f32 %v1678, %v1699
        %v1727 = vsub.f32 %v1679, %v1701
        %v1728 = vsub.f32 %v1680, %v1703
        %v1729 = vsub.f32 %v1681, %v1705
        %v1730 = vsub.f32 %v1682, %v1707
        %v1731 = vsub.f32 %v1683, %v1709
        %v1732 = vsub.f32 %v1684, %v1711
        %v1733 = vsub.f32 %v1685, %v1713
        %v1734 = vsub.f32 %v1686, %v1715
        %v1735 = vsub.f32 %v1687, %v1717
        %v1736 = vsub.f32 %v1688, %v1719
        %v1737 = vsub.f32 %v1689, %v1721
        %v1738 = vmul.f32 %v1722, 1.442695
        %v1739 = vpow.pop %v1738
        %v1740 = vmul.f32 %v1723, 1.442695
        %v1741 = vpow.pop %v1740
        %v1742 = vmul.f32 %v1724, 1.442695
        %v1743 = vpow.pop %v1742
        %v1744 = vmul.f32 %v1725, 1.442695
        %v1745 = vpow.pop %v1744
        %v1746 = vmul.f32 %v1726, 1.442695
        %v1747 = vpow.pop %v1746
        %v1748 = vmul.f32 %v1727, 1.442695
        %v1749 = vpow.pop %v1748
        %v1750 = vmul.f32 %v1728, 1.442695
        %v1751 = vpow.pop %v1750
        %v1752 = vmul.f32 %v1729, 1.442695
        %v1753 = vpow.pop %v1752
        %v1754 = vmul.f32 %v1730, 1.442695
        %v1755 = vpow.pop %v1754
        %v1756 = vmul.f32 %v1731, 1.442695
        %v1757 = vpow.pop %v1756
        %v1758 = vmul.f32 %v1732, 1.442695
        %v1759 = vpow.pop %v1758
        %v1760 = vmul.f32 %v1733, 1.442695
        %v1761 = vpow.pop %v1760
        %v1762 = vmul.f32 %v1734, 1.442695
        %v1763 = vpow.pop %v1762
        %v1764 = vmul.f32 %v1735, 1.442695
        %v1765 = vpow.pop %v1764
        %v1766 = vmul.f32 %v1736, 1.442695
        %v1767 = vpow.pop %v1766
        %v1768 = vmul.f32 %v1737, 1.442695
        %v1769 = vpow.pop %v1768
        %1770 = vmatpush.msra.mxu0 1.0
        %1771 = vmatpush.msra.mxu0 1.0
        %1772 = vmatpush.msra.mxu0 1.0
        %1773 = vmatpush.msra.mxu0 1.0
        %1774 = vmatpush.msra.mxu0 1.0
        %1775 = vmatpush.msra.mxu0 1.0
        %1776 = vmatpush.msra.mxu0 1.0
        %1777 = vmatpush.msra.mxu0 1.0
        %1778 = vmatpush.msra.mxu0 1.0
        %1779 = vmatpush.msra.mxu0 1.0
        %1780 = vmatpush.msra.mxu0 1.0
        %1781 = vmatpush.msra.mxu0 1.0
        %1782 = vmatpush.msra.mxu0 1.0
        %1783 = vmatpush.msra.mxu0 1.0
        %1784 = vmatpush.msra.mxu0 1.0
        %1785 = vmatpush.msra.mxu0 1.0
        %1786 = vmatmul.f32.gmra.mxu0 %v1739
        %v1787 = vpop.f32.mrf.mxu0
        %v1788 = vadd.f32 0.0, %v1787
        %1789 = vmatmul.f32.gmra.mxu0 %v1741
        %v1790 = vpop.f32.mrf.mxu0
        %v1791 = vadd.f32 0.0, %v1790
        %1792 = vmatmul.f32.gmra.mxu0 %v1743
        %v1793 = vpop.f32.mrf.mxu0
        %v1794 = vadd.f32 0.0, %v1793
        %1795 = vmatmul.f32.gmra.mxu0 %v1745
        %v1796 = vpop.f32.mrf.mxu0
        %v1797 = vadd.f32 0.0, %v1796
        %1798 = vmatmul.f32.gmra.mxu0 %v1747
        %v1799 = vpop.f32.mrf.mxu0
        %v1800 = vadd.f32 0.0, %v1799
        %1801 = vmatmul.f32.gmra.mxu0 %v1749
        %v1802 = vpop.f32.mrf.mxu0
        %v1803 = vadd.f32 0.0, %v1802
        %1804 = vmatmul.f32.gmra.mxu0 %v1751
        %v1805 = vpop.f32.mrf.mxu0
        %v1806 = vadd.f32 0.0, %v1805
        %1807 = vmatmul.f32.gmra.mxu0 %v1753
        %v1808 = vpop.f32.mrf.mxu0
        %v1809 = vadd.f32 0.0, %v1808
        %1810 = vmatmul.f32.gmra.mxu0 %v1755
        %v1811 = vpop.f32.mrf.mxu0
        %v1812 = vadd.f32 0.0, %v1811
        %1813 = vmatmul.f32.gmra.mxu0 %v1757
        %v1814 = vpop.f32.mrf.mxu0
        %v1815 = vadd.f32 0.0, %v1814
        %1816 = vmatmul.f32.gmra.mxu0 %v1759
        %v1817 = vpop.f32.mrf.mxu0
        %v1818 = vadd.f32 0.0, %v1817
        %1819 = vmatmul.f32.gmra.mxu0 %v1761
        %v1820 = vpop.f32.mrf.mxu0
        %v1821 = vadd.f32 0.0, %v1820
        %1822 = vmatmul.f32.gmra.mxu0 %v1763
        %v1823 = vpop.f32.mrf.mxu0
        %v1824 = vadd.f32 0.0, %v1823
        %1825 = vmatmul.f32.gmra.mxu0 %v1765
        %v1826 = vpop.f32.mrf.mxu0
        %v1827 = vadd.f32 0.0, %v1826
        %1828 = vmatmul.f32.gmra.mxu0 %v1767
        %v1829 = vpop.f32.mrf.mxu0
        %v1830 = vadd.f32 0.0, %v1829
        %1831 = vmatmul.f32.gmra.mxu0 %v1769
        %v1832 = vpop.f32.mrf.mxu0
        %v1833 = vadd.f32 0.0, %v1832
        %1834 = vdwg.mxu0
        %v1835 = vrcp.pop %v1788
        %v1836 = vrcp.pop %v1791
        %v1837 = vrcp.pop %v1794
        %v1838 = vrcp.pop %v1797
        %v1839 = vrcp.pop %v1800
        %v1840 = vrcp.pop %v1803
        %v1841 = vrcp.pop %v1806
        %v1842 = vrcp.pop %v1809
        %v1843 = vrcp.pop %v1812
        %v1844 = vrcp.pop %v1815
        %v1845 = vrcp.pop %v1818
        %v1846 = vrcp.pop %v1821
        %v1847 = vrcp.pop %v1824
        %v1848 = vrcp.pop %v1827
        %v1849 = vrcp.pop %v1830
        %v1850 = vrcp.pop %v1833
        %1867 = vrot.lane.b32.xlu0 %v938, 96
        %v1868 = vpop.permute.xlu0 %1867
        %1869 = vrot.lane.b32.xlu0 %v941, 96
        %v1870 = vpop.permute.xlu0 %1869
        %1871 = vrot.lane.b32.xlu0 %v944, 96
        %v1872 = vpop.permute.xlu0 %1871
        %1873 = vrot.lane.b32.xlu0 %v947, 96
        %v1874 = vpop.permute.xlu0 %1873
        %1875 = vrot.lane.b32.xlu0 %v950, 96
        %v1876 = vpop.permute.xlu0 %1875
        %1877 = vrot.lane.b32.xlu0 %v953, 96
        %v1878 = vpop.permute.xlu0 %1877
        %1879 = vrot.lane.b32.xlu0 %v956, 96
        %v1880 = vpop.permute.xlu0 %1879
        %1881 = vrot.lane.b32.xlu0 %v959, 96
        %v1882 = vpop.permute.xlu0 %1881
        %1883 = vrot.lane.b32.xlu0 %v962, 96
        %v1884 = vpop.permute.xlu0 %1883
        %1885 = vrot.lane.b32.xlu0 %v965, 96
        %v1886 = vpop.permute.xlu0 %1885
        %1887 = vrot.lane.b32.xlu0 %v968, 96
        %v1888 = vpop.permute.xlu0 %1887
        %1889 = vrot.lane.b32.xlu0 %v971, 96
        %v1890 = vpop.permute.xlu0 %1889
        %1891 = vrot.lane.b32.xlu0 %v974, 96
        %v1892 = vpop.permute.xlu0 %1891
        %1893 = vrot.lane.b32.xlu0 %v977, 96
        %v1894 = vpop.permute.xlu0 %1893
        %1895 = vrot.lane.b32.xlu0 %v980, 96
        %v1896 = vpop.permute.xlu0 %1895
        %1897 = vrot.lane.b32.xlu0 %v983, 96
        %v1898 = vpop.permute.xlu0 %1897
        %1915 = vmatpush.msra.mxu0 %v1898
        %1916 = vmatpush.msra.mxu0 %v1896
        %1917 = vmatpush.msra.mxu0 %v1894
        %1918 = vmatpush.msra.mxu0 %v1892
        %1919 = vmatpush.msra.mxu0 %v1890
        %1920 = vmatpush.msra.mxu0 %v1888
        %1921 = vmatpush.msra.mxu0 %v1886
        %1922 = vmatpush.msra.mxu0 %v1884
        %1923 = vmatpush.msra.mxu0 %v1882
        %1924 = vmatpush.msra.mxu0 %v1880
        %1925 = vmatpush.msra.mxu0 %v1878
        %1926 = vmatpush.msra.mxu0 %v1876
        %1927 = vmatpush.msra.mxu0 %v1874
        %1928 = vmatpush.msra.mxu0 %v1872
        %1929 = vmatpush.msra.mxu0 %v1870
        %1930 = vmatpush.msra.mxu0 %v1868
        %1931 = vmatmul.f32.gmra.mxu0 %v1739
        %v1932 = vpop.f32.mrf.mxu0
        %v1933 = vadd.f32 0.0, %v1932
        %1934 = vmatmul.f32.gmra.mxu0 %v1741
        %v1935 = vpop.f32.mrf.mxu0
        %v1936 = vadd.f32 0.0, %v1935
        %1937 = vmatmul.f32.gmra.mxu0 %v1743
        %v1938 = vpop.f32.mrf.mxu0
        %v1939 = vadd.f32 0.0, %v1938
        %1940 = vmatmul.f32.gmra.mxu0 %v1745
        %v1941 = vpop.f32.mrf.mxu0
        %v1942 = vadd.f32 0.0, %v1941
        %1943 = vmatmul.f32.gmra.mxu0 %v1747
        %v1944 = vpop.f32.mrf.mxu0
        %v1945 = vadd.f32 0.0, %v1944
        %1946 = vmatmul.f32.gmra.mxu0 %v1749
        %v1947 = vpop.f32.mrf.mxu0
        %v1948 = vadd.f32 0.0, %v1947
        %1949 = vmatmul.f32.gmra.mxu0 %v1751
        %v1950 = vpop.f32.mrf.mxu0
        %v1951 = vadd.f32 0.0, %v1950
        %1952 = vmatmul.f32.gmra.mxu0 %v1753
        %v1953 = vpop.f32.mrf.mxu0
        %v1954 = vadd.f32 0.0, %v1953
        %1955 = vmatmul.f32.gmra.mxu0 %v1755
        %v1956 = vpop.f32.mrf.mxu0
        %v1957 = vadd.f32 0.0, %v1956
        %1958 = vmatmul.f32.gmra.mxu0 %v1757
        %v1959 = vpop.f32.mrf.mxu0
        %v1960 = vadd.f32 0.0, %v1959
        %1961 = vmatmul.f32.gmra.mxu0 %v1759
        %v1962 = vpop.f32.mrf.mxu0
        %v1963 = vadd.f32 0.0, %v1962
        %1964 = vmatmul.f32.gmra.mxu0 %v1761
        %v1965 = vpop.f32.mrf.mxu0
        %v1966 = vadd.f32 0.0, %v1965
        %1967 = vmatmul.f32.gmra.mxu0 %v1763
        %v1968 = vpop.f32.mrf.mxu0
        %v1969 = vadd.f32 0.0, %v1968
        %1970 = vmatmul.f32.gmra.mxu0 %v1765
        %v1971 = vpop.f32.mrf.mxu0
        %v1972 = vadd.f32 0.0, %v1971
        %1973 = vmatmul.f32.gmra.mxu0 %v1767
        %v1974 = vpop.f32.mrf.mxu0
        %v1975 = vadd.f32 0.0, %v1974
        %1976 = vmatmul.f32.gmra.mxu0 %v1769
        %v1977 = vpop.f32.mrf.mxu0
        %v1978 = vadd.f32 0.0, %v1977
        %1979 = vdwg.mxu0
        %1981 = vset.pattern.permute.xlu0 0
        %1982 = vperm.xlu0 %1981, %v1835
        %v1983 = vpop.permute.xlu0 %1982
        %1986 = vset.pattern.permute.xlu0 0
        %1987 = vperm.xlu0 %1986, %v1836
        %v1988 = vpop.permute.xlu0 %1987
        %1991 = vset.pattern.permute.xlu0 0
        %1992 = vperm.xlu0 %1991, %v1837
        %v1993 = vpop.permute.xlu0 %1992
        %1996 = vset.pattern.permute.xlu0 0
        %1997 = vperm.xlu0 %1996, %v1838
        %v1998 = vpop.permute.xlu0 %1997
        %2001 = vset.pattern.permute.xlu0 0
        %2002 = vperm.xlu0 %2001, %v1839
        %v2003 = vpop.permute.xlu0 %2002
        %2006 = vset.pattern.permute.xlu0 0
        %2007 = vperm.xlu0 %2006, %v1840
        %v2008 = vpop.permute.xlu0 %2007
        %2011 = vset.pattern.permute.xlu0 0
        %2012 = vperm.xlu0 %2011, %v1841
        %v2013 = vpop.permute.xlu0 %2012
        %2016 = vset.pattern.permute.xlu0 0
        %2017 = vperm.xlu0 %2016, %v1842
        %v2018 = vpop.permute.xlu0 %2017
        %2021 = vset.pattern.permute.xlu0 0
        %2022 = vperm.xlu0 %2021, %v1843
        %v2023 = vpop.permute.xlu0 %2022
        %2026 = vset.pattern.permute.xlu0 0
        %2027 = vperm.xlu0 %2026, %v1844
        %v2028 = vpop.permute.xlu0 %2027
        %2031 = vset.pattern.permute.xlu0 0
        %2032 = vperm.xlu0 %2031, %v1845
        %v2033 = vpop.permute.xlu0 %2032
        %2036 = vset.pattern.permute.xlu0 0
        %2037 = vperm.xlu0 %2036, %v1846
        %v2038 = vpop.permute.xlu0 %2037
        %2041 = vset.pattern.permute.xlu0 0
        %2042 = vperm.xlu0 %2041, %v1847
        %v2043 = vpop.permute.xlu0 %2042
        %2046 = vset.pattern.permute.xlu0 0
        %2047 = vperm.xlu0 %2046, %v1848
        %v2048 = vpop.permute.xlu0 %2047
        %2051 = vset.pattern.permute.xlu0 0
        %2052 = vperm.xlu0 %2051, %v1849
        %v2053 = vpop.permute.xlu0 %2052
        %2056 = vset.pattern.permute.xlu0 0
        %2057 = vperm.xlu0 %2056, %v1850
        %v2058 = vpop.permute.xlu0 %2057
        %v2060 = vmul.f32 %v1933, %v1983
        %v2061 = vmul.f32 %v1936, %v1988
        %v2062 = vmul.f32 %v1939, %v1993
        %v2063 = vmul.f32 %v1942, %v1998
        %v2064 = vmul.f32 %v1945, %v2003
        %v2065 = vmul.f32 %v1948, %v2008
        %v2066 = vmul.f32 %v1951, %v2013
        %v2067 = vmul.f32 %v1954, %v2018
        %v2068 = vmul.f32 %v1957, %v2023
        %v2069 = vmul.f32 %v1960, %v2028
        %v2070 = vmul.f32 %v1963, %v2033
        %v2071 = vmul.f32 %v1966, %v2038
        %v2072 = vmul.f32 %v1969, %v2043
        %v2073 = vmul.f32 %v1972, %v2048
        %v2074 = vmul.f32 %v1975, %v2053
        %v2075 = vmul.f32 %v1978, %v2058
        %v2076 = vadd.f32 %v1545, %v2060
        %v2077 = vadd.f32 %v1546, %v2061
        %v2078 = vadd.f32 %v1547, %v2062
        %v2079 = vadd.f32 %v1548, %v2063
        %v2080 = vadd.f32 %v1549, %v2064
        %v2081 = vadd.f32 %v1550, %v2065
        %v2082 = vadd.f32 %v1551, %v2066
        %v2083 = vadd.f32 %v1552, %v2067
        %v2084 = vadd.f32 %v1553, %v2068
        %v2085 = vadd.f32 %v1554, %v2069
        %v2086 = vadd.f32 %v1555, %v2070
        %v2087 = vadd.f32 %v1556, %v2071
        %v2088 = vadd.f32 %v1557, %v2072
        %v2089 = vadd.f32 %v1558, %v2073
        %v2090 = vadd.f32 %v1559, %v2074
        %v2091 = vadd.f32 %v1560, %v2075
        %2092 = vset.pattern.permute.xlu0 2
        %2093 = vperm.xlu0 %2092, %v1007
        %v2094 = vpop.permute.xlu0 %2093
        %2096 = vset.pattern.permute.xlu0 2
        %2097 = vperm.xlu0 %2096, %v1010
        %v2098 = vpop.permute.xlu0 %2097
        %2100 = vset.pattern.permute.xlu0 2
        %2101 = vperm.xlu0 %2100, %v1013
        %v2102 = vpop.permute.xlu0 %2101
        %2104 = vset.pattern.permute.xlu0 2
        %2105 = vperm.xlu0 %2104, %v1016
        %v2106 = vpop.permute.xlu0 %2105
        %2108 = vset.pattern.permute.xlu0 2
        %2109 = vperm.xlu0 %2108, %v1019
        %v2110 = vpop.permute.xlu0 %2109
        %2112 = vset.pattern.permute.xlu0 2
        %2113 = vperm.xlu0 %2112, %v1022
        %v2114 = vpop.permute.xlu0 %2113
        %2116 = vset.pattern.permute.xlu0 2
        %2117 = vperm.xlu0 %2116, %v1025
        %v2118 = vpop.permute.xlu0 %2117
        %2120 = vset.pattern.permute.xlu0 2
        %2121 = vperm.xlu0 %2120, %v1028
        %v2122 = vpop.permute.xlu0 %2121
        %2124 = vset.pattern.permute.xlu0 2
        %2125 = vperm.xlu0 %2124, %v1031
        %v2126 = vpop.permute.xlu0 %2125
        %2128 = vset.pattern.permute.xlu0 2
        %2129 = vperm.xlu0 %2128, %v1034
        %v2130 = vpop.permute.xlu0 %2129
        %2132 = vset.pattern.permute.xlu0 2
        %2133 = vperm.xlu0 %2132, %v1037
        %v2134 = vpop.permute.xlu0 %2133
        %2136 = vset.pattern.permute.xlu0 2
        %2137 = vperm.xlu0 %2136, %v1040
        %v2138 = vpop.permute.xlu0 %2137
        %2140 = vset.pattern.permute.xlu0 2
        %2141 = vperm.xlu0 %2140, %v1043
        %v2142 = vpop.permute.xlu0 %2141
        %2144 = vset.pattern.permute.xlu0 2
        %2145 = vperm.xlu0 %2144, %v1046
        %v2146 = vpop.permute.xlu0 %2145
        %2148 = vset.pattern.permute.xlu0 2
        %2149 = vperm.xlu0 %2148, %v1049
        %v2150 = vpop.permute.xlu0 %2149
        %2152 = vset.pattern.permute.xlu0 2
        %2153 = vperm.xlu0 %2152, %v1052
        %v2154 = vpop.permute.xlu0 %2153
        %v2156 = vperm.slane %v1076, 2
        %v2157 = vadd.f32 %v2094, %v2156
        %v2158 = vadd.f32 %v2098, %v2156
        %v2159 = vadd.f32 %v2102, %v2156
        %v2160 = vadd.f32 %v2106, %v2156
        %v2161 = vadd.f32 %v2110, %v2156
        %v2162 = vadd.f32 %v2114, %v2156
        %v2163 = vadd.f32 %v2118, %v2156
        %v2164 = vadd.f32 %v2122, %v2156
        %v2165 = vadd.f32 %v2126, %v2156
        %v2166 = vadd.f32 %v2130, %v2156
        %v2167 = vadd.f32 %v2134, %v2156
        %v2168 = vadd.f32 %v2138, %v2156
        %v2169 = vadd.f32 %v2142, %v2156
        %v2170 = vadd.f32 %v2146, %v2156
        %v2171 = vadd.f32 %v2150, %v2156
        %v2172 = vadd.f32 %v2154, %v2156
        %v2173 = vmul.f32 %v2157, 0.2
        %v2174 = vmul.f32 %v2158, 0.2
        %v2175 = vmul.f32 %v2159, 0.2
        %v2176 = vmul.f32 %v2160, 0.2
        %v2177 = vmul.f32 %v2161, 0.2
        %v2178 = vmul.f32 %v2162, 0.2
        %v2179 = vmul.f32 %v2163, 0.2
        %v2180 = vmul.f32 %v2164, 0.2
        %v2181 = vmul.f32 %v2165, 0.2
        %v2182 = vmul.f32 %v2166, 0.2
        %v2183 = vmul.f32 %v2167, 0.2
        %v2184 = vmul.f32 %v2168, 0.2
        %v2185 = vmul.f32 %v2169, 0.2
        %v2186 = vmul.f32 %v2170, 0.2
        %v2187 = vmul.f32 %v2171, 0.2
        %v2188 = vmul.f32 %v2172, 0.2
        %v2189 = vmax.f32 %v2157, %v2173
        %v2190 = vmax.f32 %v2158, %v2174
        %v2191 = vmax.f32 %v2159, %v2175
        %v2192 = vmax.f32 %v2160, %v2176
        %v2193 = vmax.f32 %v2161, %v2177
        %v2194 = vmax.f32 %v2162, %v2178
        %v2195 = vmax.f32 %v2163, %v2179
        %v2196 = vmax.f32 %v2164, %v2180
        %v2197 = vmax.f32 %v2165, %v2181
        %v2198 = vmax.f32 %v2166, %v2182
        %v2199 = vmax.f32 %v2167, %v2183
        %v2200 = vmax.f32 %v2168, %v2184
        %v2201 = vmax.f32 %v2169, %v2185
        %v2202 = vmax.f32 %v2170, %v2186
        %v2203 = vmax.f32 %v2171, %v2187
        %v2204 = vmax.f32 %v2172, %v2188
        %v2205 = vadd.f32 %v2189, %v852
        %v2206 = vadd.f32 %v2190, %v853
        %v2207 = vadd.f32 %v2191, %v854
        %v2208 = vadd.f32 %v2192, %v855
        %v2209 = vadd.f32 %v2193, %v856
        %v2210 = vadd.f32 %v2194, %v857
        %v2211 = vadd.f32 %v2195, %v858
        %v2212 = vadd.f32 %v2196, %v859
        %v2213 = vadd.f32 %v2197, %v860
        %v2214 = vadd.f32 %v2198, %v861
        %v2215 = vadd.f32 %v2199, %v862
        %v2216 = vadd.f32 %v2200, %v863
        %v2217 = vadd.f32 %v2201, %v864
        %v2218 = vadd.f32 %v2202, %v865
        %v2219 = vadd.f32 %v2203, %v866
        %v2220 = vadd.f32 %v2204, %v867
        %2221 = vmax.xlane.f32.xlu0 %v2205
        %v2222 = vpop.xlane.xlu0 %2221
        %2223 = vmax.xlane.f32.xlu0 %v2206
        %v2224 = vpop.xlane.xlu0 %2223
        %2225 = vmax.xlane.f32.xlu0 %v2207
        %v2226 = vpop.xlane.xlu0 %2225
        %2227 = vmax.xlane.f32.xlu0 %v2208
        %v2228 = vpop.xlane.xlu0 %2227
        %2229 = vmax.xlane.f32.xlu0 %v2209
        %v2230 = vpop.xlane.xlu0 %2229
        %2231 = vmax.xlane.f32.xlu0 %v2210
        %v2232 = vpop.xlane.xlu0 %2231
        %2233 = vmax.xlane.f32.xlu0 %v2211
        %v2234 = vpop.xlane.xlu0 %2233
        %2235 = vmax.xlane.f32.xlu0 %v2212
        %v2236 = vpop.xlane.xlu0 %2235
        %2237 = vmax.xlane.f32.xlu0 %v2213
        %v2238 = vpop.xlane.xlu0 %2237
        %2239 = vmax.xlane.f32.xlu0 %v2214
        %v2240 = vpop.xlane.xlu0 %2239
        %2241 = vmax.xlane.f32.xlu0 %v2215
        %v2242 = vpop.xlane.xlu0 %2241
        %2243 = vmax.xlane.f32.xlu0 %v2216
        %v2244 = vpop.xlane.xlu0 %2243
        %2245 = vmax.xlane.f32.xlu0 %v2217
        %v2246 = vpop.xlane.xlu0 %2245
        %2247 = vmax.xlane.f32.xlu0 %v2218
        %v2248 = vpop.xlane.xlu0 %2247
        %2249 = vmax.xlane.f32.xlu0 %v2219
        %v2250 = vpop.xlane.xlu0 %2249
        %2251 = vmax.xlane.f32.xlu0 %v2220
        %v2252 = vpop.xlane.xlu0 %2251
        %v2253 = vsub.f32 %v2205, %v2222
        %v2254 = vsub.f32 %v2206, %v2224
        %v2255 = vsub.f32 %v2207, %v2226
        %v2256 = vsub.f32 %v2208, %v2228
        %v2257 = vsub.f32 %v2209, %v2230
        %v2258 = vsub.f32 %v2210, %v2232
        %v2259 = vsub.f32 %v2211, %v2234
        %v2260 = vsub.f32 %v2212, %v2236
        %v2261 = vsub.f32 %v2213, %v2238
        %v2262 = vsub.f32 %v2214, %v2240
        %v2263 = vsub.f32 %v2215, %v2242
        %v2264 = vsub.f32 %v2216, %v2244
        %v2265 = vsub.f32 %v2217, %v2246
        %v2266 = vsub.f32 %v2218, %v2248
        %v2267 = vsub.f32 %v2219, %v2250
        %v2268 = vsub.f32 %v2220, %v2252
        %v2269 = vmul.f32 %v2253, 1.442695
        %v2270 = vpow.pop %v2269
        %v2271 = vmul.f32 %v2254, 1.442695
        %v2272 = vpow.pop %v2271
        %v2273 = vmul.f32 %v2255, 1.442695
        %v2274 = vpow.pop %v2273
        %v2275 = vmul.f32 %v2256, 1.442695
        %v2276 = vpow.pop %v2275
        %v2277 = vmul.f32 %v2257, 1.442695
        %v2278 = vpow.pop %v2277
        %v2279 = vmul.f32 %v2258, 1.442695
        %v2280 = vpow.pop %v2279
        %v2281 = vmul.f32 %v2259, 1.442695
        %v2282 = vpow.pop %v2281
        %v2283 = vmul.f32 %v2260, 1.442695
        %v2284 = vpow.pop %v2283
        %v2285 = vmul.f32 %v2261, 1.442695
        %v2286 = vpow.pop %v2285
        %v2287 = vmul.f32 %v2262, 1.442695
        %v2288 = vpow.pop %v2287
        %v2289 = vmul.f32 %v2263, 1.442695
        %v2290 = vpow.pop %v2289
        %v2291 = vmul.f32 %v2264, 1.442695
        %v2292 = vpow.pop %v2291
        %v2293 = vmul.f32 %v2265, 1.442695
        %v2294 = vpow.pop %v2293
        %v2295 = vmul.f32 %v2266, 1.442695
        %v2296 = vpow.pop %v2295
        %v2297 = vmul.f32 %v2267, 1.442695
        %v2298 = vpow.pop %v2297
        %v2299 = vmul.f32 %v2268, 1.442695
        %v2300 = vpow.pop %v2299
        %2301 = vmatpush.msra.mxu0 1.0
        %2302 = vmatpush.msra.mxu0 1.0
        %2303 = vmatpush.msra.mxu0 1.0
        %2304 = vmatpush.msra.mxu0 1.0
        %2305 = vmatpush.msra.mxu0 1.0
        %2306 = vmatpush.msra.mxu0 1.0
        %2307 = vmatpush.msra.mxu0 1.0
        %2308 = vmatpush.msra.mxu0 1.0
        %2309 = vmatpush.msra.mxu0 1.0
        %2310 = vmatpush.msra.mxu0 1.0
        %2311 = vmatpush.msra.mxu0 1.0
        %2312 = vmatpush.msra.mxu0 1.0
        %2313 = vmatpush.msra.mxu0 1.0
        %2314 = vmatpush.msra.mxu0 1.0
        %2315 = vmatpush.msra.mxu0 1.0
        %2316 = vmatpush.msra.mxu0 1.0
        %2317 = vmatmul.f32.gmra.mxu0 %v2270
        %v2318 = vpop.f32.mrf.mxu0
        %v2319 = vadd.f32 0.0, %v2318
        %2320 = vmatmul.f32.gmra.mxu0 %v2272
        %v2321 = vpop.f32.mrf.mxu0
        %v2322 = vadd.f32 0.0, %v2321
        %2323 = vmatmul.f32.gmra.mxu0 %v2274
        %v2324 = vpop.f32.mrf.mxu0
        %v2325 = vadd.f32 0.0, %v2324
        %2326 = vmatmul.f32.gmra.mxu0 %v2276
        %v2327 = vpop.f32.mrf.mxu0
        %v2328 = vadd.f32 0.0, %v2327
        %2329 = vmatmul.f32.gmra.mxu0 %v2278
        %v2330 = vpop.f32.mrf.mxu0
        %v2331 = vadd.f32 0.0, %v2330
        %2332 = vmatmul.f32.gmra.mxu0 %v2280
        %v2333 = vpop.f32.mrf.mxu0
        %v2334 = vadd.f32 0.0, %v2333
        %2335 = vmatmul.f32.gmra.mxu0 %v2282
        %v2336 = vpop.f32.mrf.mxu0
        %v2337 = vadd.f32 0.0, %v2336
        %2338 = vmatmul.f32.gmra.mxu0 %v2284
        %v2339 = vpop.f32.mrf.mxu0
        %v2340 = vadd.f32 0.0, %v2339
        %2341 = vmatmul.f32.gmra.mxu0 %v2286
        %v2342 = vpop.f32.mrf.mxu0
        %v2343 = vadd.f32 0.0, %v2342
        %2344 = vmatmul.f32.gmra.mxu0 %v2288
        %v2345 = vpop.f32.mrf.mxu0
        %v2346 = vadd.f32 0.0, %v2345
        %2347 = vmatmul.f32.gmra.mxu0 %v2290
        %v2348 = vpop.f32.mrf.mxu0
        %v2349 = vadd.f32 0.0, %v2348
        %2350 = vmatmul.f32.gmra.mxu0 %v2292
        %v2351 = vpop.f32.mrf.mxu0
        %v2352 = vadd.f32 0.0, %v2351
        %2353 = vmatmul.f32.gmra.mxu0 %v2294
        %v2354 = vpop.f32.mrf.mxu0
        %v2355 = vadd.f32 0.0, %v2354
        %2356 = vmatmul.f32.gmra.mxu0 %v2296
        %v2357 = vpop.f32.mrf.mxu0
        %v2358 = vadd.f32 0.0, %v2357
        %2359 = vmatmul.f32.gmra.mxu0 %v2298
        %v2360 = vpop.f32.mrf.mxu0
        %v2361 = vadd.f32 0.0, %v2360
        %2362 = vmatmul.f32.gmra.mxu0 %v2300
        %v2363 = vpop.f32.mrf.mxu0
        %v2364 = vadd.f32 0.0, %v2363
        %2365 = vdwg.mxu0
        %v2366 = vrcp.pop %v2319
        %v2367 = vrcp.pop %v2322
        %v2368 = vrcp.pop %v2325
        %v2369 = vrcp.pop %v2328
        %v2370 = vrcp.pop %v2331
        %v2371 = vrcp.pop %v2334
        %v2372 = vrcp.pop %v2337
        %v2373 = vrcp.pop %v2340
        %v2374 = vrcp.pop %v2343
        %v2375 = vrcp.pop %v2346
        %v2376 = vrcp.pop %v2349
        %v2377 = vrcp.pop %v2352
        %v2378 = vrcp.pop %v2355
        %v2379 = vrcp.pop %v2358
        %v2380 = vrcp.pop %v2361
        %v2381 = vrcp.pop %v2364
        %2382 = vrot.lane.b32.xlu0 %v938, 64
        %v2383 = vpop.permute.xlu0 %2382
        %2384 = vrot.lane.b32.xlu0 %v941, 64
        %v2385 = vpop.permute.xlu0 %2384
        %2386 = vrot.lane.b32.xlu0 %v944, 64
        %v2387 = vpop.permute.xlu0 %2386
        %2388 = vrot.lane.b32.xlu0 %v947, 64
        %v2389 = vpop.permute.xlu0 %2388
        %2390 = vrot.lane.b32.xlu0 %v950, 64
        %v2391 = vpop.permute.xlu0 %2390
        %2392 = vrot.lane.b32.xlu0 %v953, 64
        %v2393 = vpop.permute.xlu0 %2392
        %2394 = vrot.lane.b32.xlu0 %v956, 64
        %v2395 = vpop.permute.xlu0 %2394
        %2396 = vrot.lane.b32.xlu0 %v959, 64
        %v2397 = vpop.permute.xlu0 %2396
        %2398 = vrot.lane.b32.xlu0 %v962, 64
        %v2399 = vpop.permute.xlu0 %2398
        %2400 = vrot.lane.b32.xlu0 %v965, 64
        %v2401 = vpop.permute.xlu0 %2400
        %2402 = vrot.lane.b32.xlu0 %v968, 64
        %v2403 = vpop.permute.xlu0 %2402
        %2404 = vrot.lane.b32.xlu0 %v971, 64
        %v2405 = vpop.permute.xlu0 %2404
        %2406 = vrot.lane.b32.xlu0 %v974, 64
        %v2407 = vpop.permute.xlu0 %2406
        %2408 = vrot.lane.b32.xlu0 %v977, 64
        %v2409 = vpop.permute.xlu0 %2408
        %2410 = vrot.lane.b32.xlu0 %v980, 64
        %v2411 = vpop.permute.xlu0 %2410
        %2412 = vrot.lane.b32.xlu0 %v983, 64
        %v2413 = vpop.permute.xlu0 %2412
        %2430 = vmatpush.msra.mxu0 %v2413
        %2431 = vmatpush.msra.mxu0 %v2411
        %2432 = vmatpush.msra.mxu0 %v2409
        %2433 = vmatpush.msra.mxu0 %v2407
        %2434 = vmatpush.msra.mxu0 %v2405
        %2435 = vmatpush.msra.mxu0 %v2403
        %2436 = vmatpush.msra.mxu0 %v2401
        %2437 = vmatpush.msra.mxu0 %v2399
        %2438 = vmatpush.msra.mxu0 %v2397
        %2439 = vmatpush.msra.mxu0 %v2395
        %2440 = vmatpush.msra.mxu0 %v2393
        %2441 = vmatpush.msra.mxu0 %v2391
        %2442 = vmatpush.msra.mxu0 %v2389
        %2443 = vmatpush.msra.mxu0 %v2387
        %2444 = vmatpush.msra.mxu0 %v2385
        %2445 = vmatpush.msra.mxu0 %v2383
        %2446 = vmatmul.f32.gmra.mxu0 %v2270
        %v2447 = vpop.f32.mrf.mxu0
        %v2448 = vadd.f32 0.0, %v2447
        %2449 = vmatmul.f32.gmra.mxu0 %v2272
        %v2450 = vpop.f32.mrf.mxu0
        %v2451 = vadd.f32 0.0, %v2450
        %2452 = vmatmul.f32.gmra.mxu0 %v2274
        %v2453 = vpop.f32.mrf.mxu0
        %v2454 = vadd.f32 0.0, %v2453
        %2455 = vmatmul.f32.gmra.mxu0 %v2276
        %v2456 = vpop.f32.mrf.mxu0
        %v2457 = vadd.f32 0.0, %v2456
        %2458 = vmatmul.f32.gmra.mxu0 %v2278
        %v2459 = vpop.f32.mrf.mxu0
        %v2460 = vadd.f32 0.0, %v2459
        %2461 = vmatmul.f32.gmra.mxu0 %v2280
        %v2462 = vpop.f32.mrf.mxu0
        %v2463 = vadd.f32 0.0, %v2462
        %2464 = vmatmul.f32.gmra.mxu0 %v2282
        %v2465 = vpop.f32.mrf.mxu0
        %v2466 = vadd.f32 0.0, %v2465
        %2467 = vmatmul.f32.gmra.mxu0 %v2284
        %v2468 = vpop.f32.mrf.mxu0
        %v2469 = vadd.f32 0.0, %v2468
        %2470 = vmatmul.f32.gmra.mxu0 %v2286
        %v2471 = vpop.f32.mrf.mxu0
        %v2472 = vadd.f32 0.0, %v2471
        %2473 = vmatmul.f32.gmra.mxu0 %v2288
        %v2474 = vpop.f32.mrf.mxu0
        %v2475 = vadd.f32 0.0, %v2474
        %2476 = vmatmul.f32.gmra.mxu0 %v2290
        %v2477 = vpop.f32.mrf.mxu0
        %v2478 = vadd.f32 0.0, %v2477
        %2479 = vmatmul.f32.gmra.mxu0 %v2292
        %v2480 = vpop.f32.mrf.mxu0
        %v2481 = vadd.f32 0.0, %v2480
        %2482 = vmatmul.f32.gmra.mxu0 %v2294
        %v2483 = vpop.f32.mrf.mxu0
        %v2484 = vadd.f32 0.0, %v2483
        %2485 = vmatmul.f32.gmra.mxu0 %v2296
        %v2486 = vpop.f32.mrf.mxu0
        %v2487 = vadd.f32 0.0, %v2486
        %2488 = vmatmul.f32.gmra.mxu0 %v2298
        %v2489 = vpop.f32.mrf.mxu0
        %v2490 = vadd.f32 0.0, %v2489
        %2491 = vmatmul.f32.gmra.mxu0 %v2300
        %v2492 = vpop.f32.mrf.mxu0
        %v2493 = vadd.f32 0.0, %v2492
        %2494 = vdwg.mxu0
        %2496 = vset.pattern.permute.xlu0 0
        %2497 = vperm.xlu0 %2496, %v2366
        %v2498 = vpop.permute.xlu0 %2497
        %2501 = vset.pattern.permute.xlu0 0
        %2502 = vperm.xlu0 %2501, %v2367
        %v2503 = vpop.permute.xlu0 %2502
        %2506 = vset.pattern.permute.xlu0 0
        %2507 = vperm.xlu0 %2506, %v2368
        %v2508 = vpop.permute.xlu0 %2507
        %2511 = vset.pattern.permute.xlu0 0
        %2512 = vperm.xlu0 %2511, %v2369
        %v2513 = vpop.permute.xlu0 %2512
        %2516 = vset.pattern.permute.xlu0 0
        %2517 = vperm.xlu0 %2516, %v2370
        %v2518 = vpop.permute.xlu0 %2517
        %2521 = vset.pattern.permute.xlu0 0
        %2522 = vperm.xlu0 %2521, %v2371
        %v2523 = vpop.permute.xlu0 %2522
        %2526 = vset.pattern.permute.xlu0 0
        %2527 = vperm.xlu0 %2526, %v2372
        %v2528 = vpop.permute.xlu0 %2527
        %2531 = vset.pattern.permute.xlu0 0
        %2532 = vperm.xlu0 %2531, %v2373
        %v2533 = vpop.permute.xlu0 %2532
        %2536 = vset.pattern.permute.xlu0 0
        %2537 = vperm.xlu0 %2536, %v2374
        %v2538 = vpop.permute.xlu0 %2537
        %2541 = vset.pattern.permute.xlu0 0
        %2542 = vperm.xlu0 %2541, %v2375
        %v2543 = vpop.permute.xlu0 %2542
        %2546 = vset.pattern.permute.xlu0 0
        %2547 = vperm.xlu0 %2546, %v2376
        %v2548 = vpop.permute.xlu0 %2547
        %2551 = vset.pattern.permute.xlu0 0
        %2552 = vperm.xlu0 %2551, %v2377
        %v2553 = vpop.permute.xlu0 %2552
        %2556 = vset.pattern.permute.xlu0 0
        %2557 = vperm.xlu0 %2556, %v2378
        %v2558 = vpop.permute.xlu0 %2557
        %2561 = vset.pattern.permute.xlu0 0
        %2562 = vperm.xlu0 %2561, %v2379
        %v2563 = vpop.permute.xlu0 %2562
        %2566 = vset.pattern.permute.xlu0 0
        %2567 = vperm.xlu0 %2566, %v2380
        %v2568 = vpop.permute.xlu0 %2567
        %2571 = vset.pattern.permute.xlu0 0
        %2572 = vperm.xlu0 %2571, %v2381
        %v2573 = vpop.permute.xlu0 %2572
        %v2575 = vmul.f32 %v2448, %v2498
        %v2576 = vmul.f32 %v2451, %v2503
        %v2577 = vmul.f32 %v2454, %v2508
        %v2578 = vmul.f32 %v2457, %v2513
        %v2579 = vmul.f32 %v2460, %v2518
        %v2580 = vmul.f32 %v2463, %v2523
        %v2581 = vmul.f32 %v2466, %v2528
        %v2582 = vmul.f32 %v2469, %v2533
        %v2583 = vmul.f32 %v2472, %v2538
        %v2584 = vmul.f32 %v2475, %v2543
        %v2585 = vmul.f32 %v2478, %v2548
        %v2586 = vmul.f32 %v2481, %v2553
        %v2587 = vmul.f32 %v2484, %v2558
        %v2588 = vmul.f32 %v2487, %v2563
        %v2589 = vmul.f32 %v2490, %v2568
        %v2590 = vmul.f32 %v2493, %v2573
        %v2591 = vadd.f32 %v2076, %v2575
        %v2592 = vadd.f32 %v2077, %v2576
        %v2593 = vadd.f32 %v2078, %v2577
        %v2594 = vadd.f32 %v2079, %v2578
        %v2595 = vadd.f32 %v2080, %v2579
        %v2596 = vadd.f32 %v2081, %v2580
        %v2597 = vadd.f32 %v2082, %v2581
        %v2598 = vadd.f32 %v2083, %v2582
        %v2599 = vadd.f32 %v2084, %v2583
        %v2600 = vadd.f32 %v2085, %v2584
        %v2601 = vadd.f32 %v2086, %v2585
        %v2602 = vadd.f32 %v2087, %v2586
        %v2603 = vadd.f32 %v2088, %v2587
        %v2604 = vadd.f32 %v2089, %v2588
        %v2605 = vadd.f32 %v2090, %v2589
        %v2606 = vadd.f32 %v2091, %v2590
        %2607 = vset.pattern.permute.xlu0 3
        %2608 = vperm.xlu0 %2607, %v1007
        %v2609 = vpop.permute.xlu0 %2608
        %2611 = vset.pattern.permute.xlu0 3
        %2612 = vperm.xlu0 %2611, %v1010
        %v2613 = vpop.permute.xlu0 %2612
        %2615 = vset.pattern.permute.xlu0 3
        %2616 = vperm.xlu0 %2615, %v1013
        %v2617 = vpop.permute.xlu0 %2616
        %2619 = vset.pattern.permute.xlu0 3
        %2620 = vperm.xlu0 %2619, %v1016
        %v2621 = vpop.permute.xlu0 %2620
        %2623 = vset.pattern.permute.xlu0 3
        %2624 = vperm.xlu0 %2623, %v1019
        %v2625 = vpop.permute.xlu0 %2624
        %2627 = vset.pattern.permute.xlu0 3
        %2628 = vperm.xlu0 %2627, %v1022
        %v2629 = vpop.permute.xlu0 %2628
        %2631 = vset.pattern.permute.xlu0 3
        %2632 = vperm.xlu0 %2631, %v1025
        %v2633 = vpop.permute.xlu0 %2632
        %2635 = vset.pattern.permute.xlu0 3
        %2636 = vperm.xlu0 %2635, %v1028
        %v2637 = vpop.permute.xlu0 %2636
        %2639 = vset.pattern.permute.xlu0 3
        %2640 = vperm.xlu0 %2639, %v1031
        %v2641 = vpop.permute.xlu0 %2640
        %2643 = vset.pattern.permute.xlu0 3
        %2644 = vperm.xlu0 %2643, %v1034
        %v2645 = vpop.permute.xlu0 %2644
        %2647 = vset.pattern.permute.xlu0 3
        %2648 = vperm.xlu0 %2647, %v1037
        %v2649 = vpop.permute.xlu0 %2648
        %2651 = vset.pattern.permute.xlu0 3
        %2652 = vperm.xlu0 %2651, %v1040
        %v2653 = vpop.permute.xlu0 %2652
        %2655 = vset.pattern.permute.xlu0 3
        %2656 = vperm.xlu0 %2655, %v1043
        %v2657 = vpop.permute.xlu0 %2656
        %2659 = vset.pattern.permute.xlu0 3
        %2660 = vperm.xlu0 %2659, %v1046
        %v2661 = vpop.permute.xlu0 %2660
        %2663 = vset.pattern.permute.xlu0 3
        %2664 = vperm.xlu0 %2663, %v1049
        %v2665 = vpop.permute.xlu0 %2664
        %2667 = vset.pattern.permute.xlu0 3
        %2668 = vperm.xlu0 %2667, %v1052
        %v2669 = vpop.permute.xlu0 %2668
        %v2671 = vperm.slane %v1076, 3
        %v2672 = vadd.f32 %v2609, %v2671
        %v2673 = vadd.f32 %v2613, %v2671
        %v2674 = vadd.f32 %v2617, %v2671
        %v2675 = vadd.f32 %v2621, %v2671
        %v2676 = vadd.f32 %v2625, %v2671
        %v2677 = vadd.f32 %v2629, %v2671
        %v2678 = vadd.f32 %v2633, %v2671
        %v2679 = vadd.f32 %v2637, %v2671
        %v2680 = vadd.f32 %v2641, %v2671
        %v2681 = vadd.f32 %v2645, %v2671
        %v2682 = vadd.f32 %v2649, %v2671
        %v2683 = vadd.f32 %v2653, %v2671
        %v2684 = vadd.f32 %v2657, %v2671
        %v2685 = vadd.f32 %v2661, %v2671
        %v2686 = vadd.f32 %v2665, %v2671
        %v2687 = vadd.f32 %v2669, %v2671
        %v2688 = vmul.f32 %v2672, 0.2
        %v2689 = vmul.f32 %v2673, 0.2
        %v2690 = vmul.f32 %v2674, 0.2
        %v2691 = vmul.f32 %v2675, 0.2
        %v2692 = vmul.f32 %v2676, 0.2
        %v2693 = vmul.f32 %v2677, 0.2
        %v2694 = vmul.f32 %v2678, 0.2
        %v2695 = vmul.f32 %v2679, 0.2
        %v2696 = vmul.f32 %v2680, 0.2
        %v2697 = vmul.f32 %v2681, 0.2
        %v2698 = vmul.f32 %v2682, 0.2
        %v2699 = vmul.f32 %v2683, 0.2
        %v2700 = vmul.f32 %v2684, 0.2
        %v2701 = vmul.f32 %v2685, 0.2
        %v2702 = vmul.f32 %v2686, 0.2
        %v2703 = vmul.f32 %v2687, 0.2
        %v2704 = vmax.f32 %v2672, %v2688
        %v2705 = vmax.f32 %v2673, %v2689
        %v2706 = vmax.f32 %v2674, %v2690
        %v2707 = vmax.f32 %v2675, %v2691
        %v2708 = vmax.f32 %v2676, %v2692
        %v2709 = vmax.f32 %v2677, %v2693
        %v2710 = vmax.f32 %v2678, %v2694
        %v2711 = vmax.f32 %v2679, %v2695
        %v2712 = vmax.f32 %v2680, %v2696
        %v2713 = vmax.f32 %v2681, %v2697
        %v2714 = vmax.f32 %v2682, %v2698
        %v2715 = vmax.f32 %v2683, %v2699
        %v2716 = vmax.f32 %v2684, %v2700
        %v2717 = vmax.f32 %v2685, %v2701
        %v2718 = vmax.f32 %v2686, %v2702
        %v2719 = vmax.f32 %v2687, %v2703
        %v2720 = vadd.f32 %v2704, %v852
        %v2721 = vadd.f32 %v2705, %v853
        %v2722 = vadd.f32 %v2706, %v854
        %v2723 = vadd.f32 %v2707, %v855
        %v2724 = vadd.f32 %v2708, %v856
        %v2725 = vadd.f32 %v2709, %v857
        %v2726 = vadd.f32 %v2710, %v858
        %v2727 = vadd.f32 %v2711, %v859
        %v2728 = vadd.f32 %v2712, %v860
        %v2729 = vadd.f32 %v2713, %v861
        %v2730 = vadd.f32 %v2714, %v862
        %v2731 = vadd.f32 %v2715, %v863
        %v2732 = vadd.f32 %v2716, %v864
        %v2733 = vadd.f32 %v2717, %v865
        %v2734 = vadd.f32 %v2718, %v866
        %v2735 = vadd.f32 %v2719, %v867
        %2736 = vmax.xlane.f32.xlu0 %v2720
        %v2737 = vpop.xlane.xlu0 %2736
        %2738 = vmax.xlane.f32.xlu0 %v2721
        %v2739 = vpop.xlane.xlu0 %2738
        %2740 = vmax.xlane.f32.xlu0 %v2722
        %v2741 = vpop.xlane.xlu0 %2740
        %2742 = vmax.xlane.f32.xlu0 %v2723
        %v2743 = vpop.xlane.xlu0 %2742
        %2744 = vmax.xlane.f32.xlu0 %v2724
        %v2745 = vpop.xlane.xlu0 %2744
        %2746 = vmax.xlane.f32.xlu0 %v2725
        %v2747 = vpop.xlane.xlu0 %2746
        %2748 = vmax.xlane.f32.xlu0 %v2726
        %v2749 = vpop.xlane.xlu0 %2748
        %2750 = vmax.xlane.f32.xlu0 %v2727
        %v2751 = vpop.xlane.xlu0 %2750
        %2752 = vmax.xlane.f32.xlu0 %v2728
        %v2753 = vpop.xlane.xlu0 %2752
        %2754 = vmax.xlane.f32.xlu0 %v2729
        %v2755 = vpop.xlane.xlu0 %2754
        %2756 = vmax.xlane.f32.xlu0 %v2730
        %v2757 = vpop.xlane.xlu0 %2756
        %2758 = vmax.xlane.f32.xlu0 %v2731
        %v2759 = vpop.xlane.xlu0 %2758
        %2760 = vmax.xlane.f32.xlu0 %v2732
        %v2761 = vpop.xlane.xlu0 %2760
        %2762 = vmax.xlane.f32.xlu0 %v2733
        %v2763 = vpop.xlane.xlu0 %2762
        %2764 = vmax.xlane.f32.xlu0 %v2734
        %v2765 = vpop.xlane.xlu0 %2764
        %2766 = vmax.xlane.f32.xlu0 %v2735
        %v2767 = vpop.xlane.xlu0 %2766
        %v2768 = vsub.f32 %v2720, %v2737
        %v2769 = vsub.f32 %v2721, %v2739
        %v2770 = vsub.f32 %v2722, %v2741
        %v2771 = vsub.f32 %v2723, %v2743
        %v2772 = vsub.f32 %v2724, %v2745
        %v2773 = vsub.f32 %v2725, %v2747
        %v2774 = vsub.f32 %v2726, %v2749
        %v2775 = vsub.f32 %v2727, %v2751
        %v2776 = vsub.f32 %v2728, %v2753
        %v2777 = vsub.f32 %v2729, %v2755
        %v2778 = vsub.f32 %v2730, %v2757
        %v2779 = vsub.f32 %v2731, %v2759
        %v2780 = vsub.f32 %v2732, %v2761
        %v2781 = vsub.f32 %v2733, %v2763
        %v2782 = vsub.f32 %v2734, %v2765
        %v2783 = vsub.f32 %v2735, %v2767
        %v2784 = vmul.f32 %v2768, 1.442695
        %v2785 = vpow.pop %v2784
        %v2786 = vmul.f32 %v2769, 1.442695
        %v2787 = vpow.pop %v2786
        %v2788 = vmul.f32 %v2770, 1.442695
        %v2789 = vpow.pop %v2788
        %v2790 = vmul.f32 %v2771, 1.442695
        %v2791 = vpow.pop %v2790
        %v2792 = vmul.f32 %v2772, 1.442695
        %v2793 = vpow.pop %v2792
        %v2794 = vmul.f32 %v2773, 1.442695
        %v2795 = vpow.pop %v2794
        %v2796 = vmul.f32 %v2774, 1.442695
        %v2797 = vpow.pop %v2796
        %v2798 = vmul.f32 %v2775, 1.442695
        %v2799 = vpow.pop %v2798
        %v2800 = vmul.f32 %v2776, 1.442695
        %v2801 = vpow.pop %v2800
        %v2802 = vmul.f32 %v2777, 1.442695
        %v2803 = vpow.pop %v2802
        %v2804 = vmul.f32 %v2778, 1.442695
        %v2805 = vpow.pop %v2804
        %v2806 = vmul.f32 %v2779, 1.442695
        %v2807 = vpow.pop %v2806
        %v2808 = vmul.f32 %v2780, 1.442695
        %v2809 = vpow.pop %v2808
        %v2810 = vmul.f32 %v2781, 1.442695
        %v2811 = vpow.pop %v2810
        %v2812 = vmul.f32 %v2782, 1.442695
        %v2813 = vpow.pop %v2812
        %v2814 = vmul.f32 %v2783, 1.442695
        %v2815 = vpow.pop %v2814
        %2816 = vmatpush.msra.mxu0 1.0
        %2817 = vmatpush.msra.mxu0 1.0
        %2818 = vmatpush.msra.mxu0 1.0
        %2819 = vmatpush.msra.mxu0 1.0
        %2820 = vmatpush.msra.mxu0 1.0
        %2821 = vmatpush.msra.mxu0 1.0
        %2822 = vmatpush.msra.mxu0 1.0
        %2823 = vmatpush.msra.mxu0 1.0
        %2824 = vmatpush.msra.mxu0 1.0
        %2825 = vmatpush.msra.mxu0 1.0
        %2826 = vmatpush.msra.mxu0 1.0
        %2827 = vmatpush.msra.mxu0 1.0
        %2828 = vmatpush.msra.mxu0 1.0
        %2829 = vmatpush.msra.mxu0 1.0
        %2830 = vmatpush.msra.mxu0 1.0
        %2831 = vmatpush.msra.mxu0 1.0
        %2832 = vmatmul.f32.gmra.mxu0 %v2785
        %v2833 = vpop.f32.mrf.mxu0
        %v2834 = vadd.f32 0.0, %v2833
        %2835 = vmatmul.f32.gmra.mxu0 %v2787
        %v2836 = vpop.f32.mrf.mxu0
        %v2837 = vadd.f32 0.0, %v2836
        %2838 = vmatmul.f32.gmra.mxu0 %v2789
        %v2839 = vpop.f32.mrf.mxu0
        %v2840 = vadd.f32 0.0, %v2839
        %2841 = vmatmul.f32.gmra.mxu0 %v2791
        %v2842 = vpop.f32.mrf.mxu0
        %v2843 = vadd.f32 0.0, %v2842
        %2844 = vmatmul.f32.gmra.mxu0 %v2793
        %v2845 = vpop.f32.mrf.mxu0
        %v2846 = vadd.f32 0.0, %v2845
        %2847 = vmatmul.f32.gmra.mxu0 %v2795
        %v2848 = vpop.f32.mrf.mxu0
        %v2849 = vadd.f32 0.0, %v2848
        %2850 = vmatmul.f32.gmra.mxu0 %v2797
        %v2851 = vpop.f32.mrf.mxu0
        %v2852 = vadd.f32 0.0, %v2851
        %2853 = vmatmul.f32.gmra.mxu0 %v2799
        %v2854 = vpop.f32.mrf.mxu0
        %v2855 = vadd.f32 0.0, %v2854
        %2856 = vmatmul.f32.gmra.mxu0 %v2801
        %v2857 = vpop.f32.mrf.mxu0
        %v2858 = vadd.f32 0.0, %v2857
        %2859 = vmatmul.f32.gmra.mxu0 %v2803
        %v2860 = vpop.f32.mrf.mxu0
        %v2861 = vadd.f32 0.0, %v2860
        %2862 = vmatmul.f32.gmra.mxu0 %v2805
        %v2863 = vpop.f32.mrf.mxu0
        %v2864 = vadd.f32 0.0, %v2863
        %2865 = vmatmul.f32.gmra.mxu0 %v2807
        %v2866 = vpop.f32.mrf.mxu0
        %v2867 = vadd.f32 0.0, %v2866
        %2868 = vmatmul.f32.gmra.mxu0 %v2809
        %v2869 = vpop.f32.mrf.mxu0
        %v2870 = vadd.f32 0.0, %v2869
        %2871 = vmatmul.f32.gmra.mxu0 %v2811
        %v2872 = vpop.f32.mrf.mxu0
        %v2873 = vadd.f32 0.0, %v2872
        %2874 = vmatmul.f32.gmra.mxu0 %v2813
        %v2875 = vpop.f32.mrf.mxu0
        %v2876 = vadd.f32 0.0, %v2875
        %2877 = vmatmul.f32.gmra.mxu0 %v2815
        %v2878 = vpop.f32.mrf.mxu0
        %v2879 = vadd.f32 0.0, %v2878
        %2880 = vdwg.mxu0
        %v2881 = vrcp.pop %v2834
        %v2882 = vrcp.pop %v2837
        %v2883 = vrcp.pop %v2840
        %v2884 = vrcp.pop %v2843
        %v2885 = vrcp.pop %v2846
        %v2886 = vrcp.pop %v2849
        %v2887 = vrcp.pop %v2852
        %v2888 = vrcp.pop %v2855
        %v2889 = vrcp.pop %v2858
        %v2890 = vrcp.pop %v2861
        %v2891 = vrcp.pop %v2864
        %v2892 = vrcp.pop %v2867
        %v2893 = vrcp.pop %v2870
        %v2894 = vrcp.pop %v2873
        %v2895 = vrcp.pop %v2876
        %v2896 = vrcp.pop %v2879
        %2897 = vrot.lane.b32.xlu0 %v938, 32
        %v2898 = vpop.permute.xlu0 %2897
        %2899 = vrot.lane.b32.xlu0 %v941, 32
        %v2900 = vpop.permute.xlu0 %2899
        %2901 = vrot.lane.b32.xlu0 %v944, 32
        %v2902 = vpop.permute.xlu0 %2901
        %2903 = vrot.lane.b32.xlu0 %v947, 32
        %v2904 = vpop.permute.xlu0 %2903
        %2905 = vrot.lane.b32.xlu0 %v950, 32
        %v2906 = vpop.permute.xlu0 %2905
        %2907 = vrot.lane.b32.xlu0 %v953, 32
        %v2908 = vpop.permute.xlu0 %2907
        %2909 = vrot.lane.b32.xlu0 %v956, 32
        %v2910 = vpop.permute.xlu0 %2909
        %2911 = vrot.lane.b32.xlu0 %v959, 32
        %v2912 = vpop.permute.xlu0 %2911
        %2913 = vrot.lane.b32.xlu0 %v962, 32
        %v2914 = vpop.permute.xlu0 %2913
        %2915 = vrot.lane.b32.xlu0 %v965, 32
        %v2916 = vpop.permute.xlu0 %2915
        %2917 = vrot.lane.b32.xlu0 %v968, 32
        %v2918 = vpop.permute.xlu0 %2917
        %2919 = vrot.lane.b32.xlu0 %v971, 32
        %v2920 = vpop.permute.xlu0 %2919
        %2921 = vrot.lane.b32.xlu0 %v974, 32
        %v2922 = vpop.permute.xlu0 %2921
        %2923 = vrot.lane.b32.xlu0 %v977, 32
        %v2924 = vpop.permute.xlu0 %2923
        %2925 = vrot.lane.b32.xlu0 %v980, 32
        %v2926 = vpop.permute.xlu0 %2925
        %2927 = vrot.lane.b32.xlu0 %v983, 32
        %v2928 = vpop.permute.xlu0 %2927
        %2945 = vmatpush.msra.mxu0 %v2928
        %2946 = vmatpush.msra.mxu0 %v2926
        %2947 = vmatpush.msra.mxu0 %v2924
        %2948 = vmatpush.msra.mxu0 %v2922
        %2949 = vmatpush.msra.mxu0 %v2920
        %2950 = vmatpush.msra.mxu0 %v2918
        %2951 = vmatpush.msra.mxu0 %v2916
        %2952 = vmatpush.msra.mxu0 %v2914
        %2953 = vmatpush.msra.mxu0 %v2912
        %2954 = vmatpush.msra.mxu0 %v2910
        %2955 = vmatpush.msra.mxu0 %v2908
        %2956 = vmatpush.msra.mxu0 %v2906
        %2957 = vmatpush.msra.mxu0 %v2904
        %2958 = vmatpush.msra.mxu0 %v2902
        %2959 = vmatpush.msra.mxu0 %v2900
        %2960 = vmatpush.msra.mxu0 %v2898
        %2961 = vmatmul.f32.gmra.mxu0 %v2785
        %v2962 = vpop.f32.mrf.mxu0
        %v2963 = vadd.f32 0.0, %v2962
        %2964 = vmatmul.f32.gmra.mxu0 %v2787
        %v2965 = vpop.f32.mrf.mxu0
        %v2966 = vadd.f32 0.0, %v2965
        %2967 = vmatmul.f32.gmra.mxu0 %v2789
        %v2968 = vpop.f32.mrf.mxu0
        %v2969 = vadd.f32 0.0, %v2968
        %2970 = vmatmul.f32.gmra.mxu0 %v2791
        %v2971 = vpop.f32.mrf.mxu0
        %v2972 = vadd.f32 0.0, %v2971
        %2973 = vmatmul.f32.gmra.mxu0 %v2793
        %v2974 = vpop.f32.mrf.mxu0
        %v2975 = vadd.f32 0.0, %v2974
        %2976 = vmatmul.f32.gmra.mxu0 %v2795
        %v2977 = vpop.f32.mrf.mxu0
        %v2978 = vadd.f32 0.0, %v2977
        %2979 = vmatmul.f32.gmra.mxu0 %v2797
        %v2980 = vpop.f32.mrf.mxu0
        %v2981 = vadd.f32 0.0, %v2980
        %2982 = vmatmul.f32.gmra.mxu0 %v2799
        %v2983 = vpop.f32.mrf.mxu0
        %v2984 = vadd.f32 0.0, %v2983
        %2985 = vmatmul.f32.gmra.mxu0 %v2801
        %v2986 = vpop.f32.mrf.mxu0
        %v2987 = vadd.f32 0.0, %v2986
        %2988 = vmatmul.f32.gmra.mxu0 %v2803
        %v2989 = vpop.f32.mrf.mxu0
        %v2990 = vadd.f32 0.0, %v2989
        %2991 = vmatmul.f32.gmra.mxu0 %v2805
        %v2992 = vpop.f32.mrf.mxu0
        %v2993 = vadd.f32 0.0, %v2992
        %2994 = vmatmul.f32.gmra.mxu0 %v2807
        %v2995 = vpop.f32.mrf.mxu0
        %v2996 = vadd.f32 0.0, %v2995
        %2997 = vmatmul.f32.gmra.mxu0 %v2809
        %v2998 = vpop.f32.mrf.mxu0
        %v2999 = vadd.f32 0.0, %v2998
        %3000 = vmatmul.f32.gmra.mxu0 %v2811
        %v3001 = vpop.f32.mrf.mxu0
        %v3002 = vadd.f32 0.0, %v3001
        %3003 = vmatmul.f32.gmra.mxu0 %v2813
        %v3004 = vpop.f32.mrf.mxu0
        %v3005 = vadd.f32 0.0, %v3004
        %3006 = vmatmul.f32.gmra.mxu0 %v2815
        %v3007 = vpop.f32.mrf.mxu0
        %v3008 = vadd.f32 0.0, %v3007
        %3009 = vdwg.mxu0
        %3011 = vset.pattern.permute.xlu0 0
        %3012 = vperm.xlu0 %3011, %v2881
        %v3013 = vpop.permute.xlu0 %3012
        %3016 = vset.pattern.permute.xlu0 0
        %3017 = vperm.xlu0 %3016, %v2882
        %v3018 = vpop.permute.xlu0 %3017
        %3021 = vset.pattern.permute.xlu0 0
        %3022 = vperm.xlu0 %3021, %v2883
        %v3023 = vpop.permute.xlu0 %3022
        %3026 = vset.pattern.permute.xlu0 0
        %3027 = vperm.xlu0 %3026, %v2884
        %v3028 = vpop.permute.xlu0 %3027
        %3031 = vset.pattern.permute.xlu0 0
        %3032 = vperm.xlu0 %3031, %v2885
        %v3033 = vpop.permute.xlu0 %3032
        %3036 = vset.pattern.permute.xlu0 0
        %3037 = vperm.xlu0 %3036, %v2886
        %v3038 = vpop.permute.xlu0 %3037
        %3041 = vset.pattern.permute.xlu0 0
        %3042 = vperm.xlu0 %3041, %v2887
        %v3043 = vpop.permute.xlu0 %3042
        %3046 = vset.pattern.permute.xlu0 0
        %3047 = vperm.xlu0 %3046, %v2888
        %v3048 = vpop.permute.xlu0 %3047
        %3051 = vset.pattern.permute.xlu0 0
        %3052 = vperm.xlu0 %3051, %v2889
        %v3053 = vpop.permute.xlu0 %3052
        %3056 = vset.pattern.permute.xlu0 0
        %3057 = vperm.xlu0 %3056, %v2890
        %v3058 = vpop.permute.xlu0 %3057
        %3061 = vset.pattern.permute.xlu0 0
        %3062 = vperm.xlu0 %3061, %v2891
        %v3063 = vpop.permute.xlu0 %3062
        %3066 = vset.pattern.permute.xlu0 0
        %3067 = vperm.xlu0 %3066, %v2892
        %v3068 = vpop.permute.xlu0 %3067
        %3071 = vset.pattern.permute.xlu0 0
        %3072 = vperm.xlu0 %3071, %v2893
        %v3073 = vpop.permute.xlu0 %3072
        %3076 = vset.pattern.permute.xlu0 0
        %3077 = vperm.xlu0 %3076, %v2894
        %v3078 = vpop.permute.xlu0 %3077
        %3081 = vset.pattern.permute.xlu0 0
        %3082 = vperm.xlu0 %3081, %v2895
        %v3083 = vpop.permute.xlu0 %3082
        %3086 = vset.pattern.permute.xlu0 0
        %3087 = vperm.xlu0 %3086, %v2896
        %v3088 = vpop.permute.xlu0 %3087
        %v3090 = vmul.f32 %v2963, %v3013
        %v3091 = vmul.f32 %v2966, %v3018
        %v3092 = vmul.f32 %v2969, %v3023
        %v3093 = vmul.f32 %v2972, %v3028
        %v3094 = vmul.f32 %v2975, %v3033
        %v3095 = vmul.f32 %v2978, %v3038
        %v3096 = vmul.f32 %v2981, %v3043
        %v3097 = vmul.f32 %v2984, %v3048
        %v3098 = vmul.f32 %v2987, %v3053
        %v3099 = vmul.f32 %v2990, %v3058
        %v3100 = vmul.f32 %v2993, %v3063
        %v3101 = vmul.f32 %v2996, %v3068
        %v3102 = vmul.f32 %v2999, %v3073
        %v3103 = vmul.f32 %v3002, %v3078
        %v3104 = vmul.f32 %v3005, %v3083
        %v3105 = vmul.f32 %v3008, %v3088
        %v3106 = vadd.f32 %v2591, %v3090
        %v3107 = vadd.f32 %v2592, %v3091
        %v3108 = vadd.f32 %v2593, %v3092
        %v3109 = vadd.f32 %v2594, %v3093
        %v3110 = vadd.f32 %v2595, %v3094
        %v3111 = vadd.f32 %v2596, %v3095
        %v3112 = vadd.f32 %v2597, %v3096
        %v3113 = vadd.f32 %v2598, %v3097
        %v3114 = vadd.f32 %v2599, %v3098
        %v3115 = vadd.f32 %v2600, %v3099
        %v3116 = vadd.f32 %v2601, %v3100
        %v3117 = vadd.f32 %v2602, %v3101
        %v3118 = vadd.f32 %v2603, %v3102
        %v3119 = vadd.f32 %v2604, %v3103
        %v3120 = vadd.f32 %v2605, %v3104
        %v3121 = vadd.f32 %v2606, %v3105
        %3122 = vrot.lane.b32.xlu0 %v341, 32
        %v3123 = vpop.permute.xlu0 %3122
        %v3125 = vadd.f32 %v3106, %v3123
        %v3126 = vadd.f32 %v3107, %v3123
        %v3127 = vadd.f32 %v3108, %v3123
        %v3128 = vadd.f32 %v3109, %v3123
        %v3129 = vadd.f32 %v3110, %v3123
        %v3130 = vadd.f32 %v3111, %v3123
        %v3131 = vadd.f32 %v3112, %v3123
        %v3132 = vadd.f32 %v3113, %v3123
        %v3133 = vadd.f32 %v3114, %v3123
        %v3134 = vadd.f32 %v3115, %v3123
        %v3135 = vadd.f32 %v3116, %v3123
        %v3136 = vadd.f32 %v3117, %v3123
        %v3137 = vadd.f32 %v3118, %v3123
        %v3138 = vadd.f32 %v3119, %v3123
        %v3139 = vadd.f32 %v3120, %v3123
        %v3140 = vadd.f32 %v3121, %v3123
        %v3141 = vmax.f32 %v3125, 0.0
        %v3142 = vmax.f32 %v3126, 0.0
        %v3143 = vmax.f32 %v3127, 0.0
        %v3144 = vmax.f32 %v3128, 0.0
        %v3145 = vmax.f32 %v3129, 0.0
        %v3146 = vmax.f32 %v3130, 0.0
        %v3147 = vmax.f32 %v3131, 0.0
        %v3148 = vmax.f32 %v3132, 0.0
        %v3149 = vmax.f32 %v3133, 0.0
        %v3150 = vmax.f32 %v3134, 0.0
        %v3151 = vmax.f32 %v3135, 0.0
        %v3152 = vmax.f32 %v3136, 0.0
        %v3153 = vmax.f32 %v3137, 0.0
        %v3154 = vmax.f32 %v3138, 0.0
        %v3155 = vmax.f32 %v3139, 0.0
        %v3156 = vmax.f32 %v3140, 0.0
        %3157 = vmatpush.msra.mxu0 %v3156
        %3158 = vmatpush.msra.mxu0 %v3155
        %3159 = vmatpush.msra.mxu0 %v3154
        %3160 = vmatpush.msra.mxu0 %v3153
        %3161 = vmatpush.msra.mxu0 %v3152
        %3162 = vmatpush.msra.mxu0 %v3151
        %3163 = vmatpush.msra.mxu0 %v3150
        %3164 = vmatpush.msra.mxu0 %v3149
        %3165 = vmatpush.msra.mxu0 %v3148
        %3166 = vmatpush.msra.mxu0 %v3147
        %3167 = vmatpush.msra.mxu0 %v3146
        %3168 = vmatpush.msra.mxu0 %v3145
        %3169 = vmatpush.msra.mxu0 %v3144
        %3170 = vmatpush.msra.mxu0 %v3143
        %3171 = vmatpush.msra.mxu0 %v3142
        %3172 = vmatpush.msra.mxu0 %v3141
        %3173 = vmatmul.f32.gmra.mxu0 %v323
        %v3174 = vpop.f32.mrf.mxu0
        %v3175 = vadd.f32 0.0, %v3174
        %3176 = vmatmul.f32.gmra.mxu0 %v324
        %v3177 = vpop.f32.mrf.mxu0
        %v3178 = vadd.f32 0.0, %v3177
        %3179 = vmatmul.f32.gmra.mxu0 %v325
        %v3180 = vpop.f32.mrf.mxu0
        %v3181 = vadd.f32 0.0, %v3180
        %3182 = vmatmul.f32.gmra.mxu0 %v326
        %v3183 = vpop.f32.mrf.mxu0
        %v3184 = vadd.f32 0.0, %v3183
        %3185 = vmatmul.f32.gmra.mxu0 %v327
        %v3186 = vpop.f32.mrf.mxu0
        %v3187 = vadd.f32 0.0, %v3186
        %3188 = vmatmul.f32.gmra.mxu0 %v328
        %v3189 = vpop.f32.mrf.mxu0
        %v3190 = vadd.f32 0.0, %v3189
        %3191 = vmatmul.f32.gmra.mxu0 %v329
        %v3192 = vpop.f32.mrf.mxu0
        %v3193 = vadd.f32 0.0, %v3192
        %3194 = vmatmul.f32.gmra.mxu0 %v330
        %v3195 = vpop.f32.mrf.mxu0
        %v3196 = vadd.f32 0.0, %v3195
        %3197 = vmatmul.f32.gmra.mxu0 %v331
        %v3198 = vpop.f32.mrf.mxu0
        %v3199 = vadd.f32 0.0, %v3198
        %3200 = vmatmul.f32.gmra.mxu0 %v332
        %v3201 = vpop.f32.mrf.mxu0
        %v3202 = vadd.f32 0.0, %v3201
        %3203 = vmatmul.f32.gmra.mxu0 %v333
        %v3204 = vpop.f32.mrf.mxu0
        %v3205 = vadd.f32 0.0, %v3204
        %3206 = vmatmul.f32.gmra.mxu0 %v334
        %v3207 = vpop.f32.mrf.mxu0
        %v3208 = vadd.f32 0.0, %v3207
        %3209 = vmatmul.f32.gmra.mxu0 %v335
        %v3210 = vpop.f32.mrf.mxu0
        %v3211 = vadd.f32 0.0, %v3210
        %3212 = vmatmul.f32.gmra.mxu0 %v336
        %v3213 = vpop.f32.mrf.mxu0
        %v3214 = vadd.f32 0.0, %v3213
        %3215 = vmatmul.f32.gmra.mxu0 %v337
        %v3216 = vpop.f32.mrf.mxu0
        %v3217 = vadd.f32 0.0, %v3216
        %3218 = vmatmul.f32.gmra.mxu0 %v338
        %v3219 = vpop.f32.mrf.mxu0
        %v3220 = vadd.f32 0.0, %v3219
        %3221 = vdwg.mxu0
        %3222 = vrot.lane.b32.xlu0 %v537, 32
        %v3223 = vpop.permute.xlu0 %3222
        %3224 = vrot.lane.b32.xlu0 %v538, 32
        %v3225 = vpop.permute.xlu0 %3224
        %3226 = vrot.lane.b32.xlu0 %v539, 32
        %v3227 = vpop.permute.xlu0 %3226
        %3228 = vrot.lane.b32.xlu0 %v540, 32
        %v3229 = vpop.permute.xlu0 %3228
        %v3235 = vsel %vm557, %v3141, 0
        %v3238 = vsel %vm557, %v3142, 0
        %v3241 = vsel %vm557, %v3143, 0
        %v3244 = vsel %vm557, %v3144, 0
        %v3247 = vsel %vm557, %v3145, 0
        %v3250 = vsel %vm557, %v3146, 0
        %v3253 = vsel %vm557, %v3147, 0
        %v3256 = vsel %vm557, %v3148, 0
        %v3259 = vsel %vm557, %v3149, 0
        %v3262 = vsel %vm557, %v3150, 0
        %v3265 = vsel %vm557, %v3151, 0
        %v3268 = vsel %vm557, %v3152, 0
        %v3271 = vsel %vm557, %v3153, 0
        %v3274 = vsel %vm557, %v3154, 0
        %v3277 = vsel %vm557, %v3155, 0
        %v3280 = vsel %vm557, %v3156, 0
        %3282 = vmatpush.msra.mxu0 0.0
        %3283 = vmatpush.msra.mxu0 0.0
        %3284 = vmatpush.msra.mxu0 0.0
        %3285 = vmatpush.msra.mxu0 0.0
        %3286 = vmatpush.msra.mxu0 0.0
        %3287 = vmatpush.msra.mxu0 0.0
        %3288 = vmatpush.msra.mxu0 0.0
        %3289 = vmatpush.msra.mxu0 0.0
        %3290 = vmatpush.msra.mxu0 0.0
        %3291 = vmatpush.msra.mxu0 0.0
        %3292 = vmatpush.msra.mxu0 0.0
        %3293 = vmatpush.msra.mxu0 0.0
        %3294 = vmatpush.msra.mxu0 %v3229
        %3295 = vmatpush.msra.mxu0 %v3227
        %3296 = vmatpush.msra.mxu0 %v3225
        %3297 = vmatpush.msra.mxu0 %v3223
        %3298 = vmatmul.f32.gmra.mxu0 %v3235
        %v3299 = vpop.f32.mrf.mxu0
        %v3300 = vadd.f32 0.0, %v3299
        %3301 = vmatmul.f32.gmra.mxu0 %v3238
        %v3302 = vpop.f32.mrf.mxu0
        %v3303 = vadd.f32 0.0, %v3302
        %3304 = vmatmul.f32.gmra.mxu0 %v3241
        %v3305 = vpop.f32.mrf.mxu0
        %v3306 = vadd.f32 0.0, %v3305
        %3307 = vmatmul.f32.gmra.mxu0 %v3244
        %v3308 = vpop.f32.mrf.mxu0
        %v3309 = vadd.f32 0.0, %v3308
        %3310 = vmatmul.f32.gmra.mxu0 %v3247
        %v3311 = vpop.f32.mrf.mxu0
        %v3312 = vadd.f32 0.0, %v3311
        %3313 = vmatmul.f32.gmra.mxu0 %v3250
        %v3314 = vpop.f32.mrf.mxu0
        %v3315 = vadd.f32 0.0, %v3314
        %3316 = vmatmul.f32.gmra.mxu0 %v3253
        %v3317 = vpop.f32.mrf.mxu0
        %v3318 = vadd.f32 0.0, %v3317
        %3319 = vmatmul.f32.gmra.mxu0 %v3256
        %v3320 = vpop.f32.mrf.mxu0
        %v3321 = vadd.f32 0.0, %v3320
        %3322 = vmatmul.f32.gmra.mxu0 %v3259
        %v3323 = vpop.f32.mrf.mxu0
        %v3324 = vadd.f32 0.0, %v3323
        %3325 = vmatmul.f32.gmra.mxu0 %v3262
        %v3326 = vpop.f32.mrf.mxu0
        %v3327 = vadd.f32 0.0, %v3326
        %3328 = vmatmul.f32.gmra.mxu0 %v3265
        %v3329 = vpop.f32.mrf.mxu0
        %v3330 = vadd.f32 0.0, %v3329
        %3331 = vmatmul.f32.gmra.mxu0 %v3268
        %v3332 = vpop.f32.mrf.mxu0
        %v3333 = vadd.f32 0.0, %v3332
        %3334 = vmatmul.f32.gmra.mxu0 %v3271
        %v3335 = vpop.f32.mrf.mxu0
        %v3336 = vadd.f32 0.0, %v3335
        %3337 = vmatmul.f32.gmra.mxu0 %v3274
        %v3338 = vpop.f32.mrf.mxu0
        %v3339 = vadd.f32 0.0, %v3338
        %3340 = vmatmul.f32.gmra.mxu0 %v3277
        %v3341 = vpop.f32.mrf.mxu0
        %v3342 = vadd.f32 0.0, %v3341
        %3343 = vmatmul.f32.gmra.mxu0 %v3280
        %v3344 = vpop.f32.mrf.mxu0
        %v3345 = vadd.f32 0.0, %v3344
        %3346 = vdwg.mxu0
        %3347 = vrot.lane.b32.xlu0 %v537, 64
        %v3348 = vpop.permute.xlu0 %3347
        %3349 = vrot.lane.b32.xlu0 %v538, 64
        %v3350 = vpop.permute.xlu0 %3349
        %3351 = vrot.lane.b32.xlu0 %v539, 64
        %v3352 = vpop.permute.xlu0 %3351
        %3353 = vrot.lane.b32.xlu0 %v540, 64
        %v3354 = vpop.permute.xlu0 %3353
        %v3360 = vsel %vm557, %v3175, 0
        %v3363 = vsel %vm557, %v3178, 0
        %v3366 = vsel %vm557, %v3181, 0
        %v3369 = vsel %vm557, %v3184, 0
        %v3372 = vsel %vm557, %v3187, 0
        %v3375 = vsel %vm557, %v3190, 0
        %v3378 = vsel %vm557, %v3193, 0
        %v3381 = vsel %vm557, %v3196, 0
        %v3384 = vsel %vm557, %v3199, 0
        %v3387 = vsel %vm557, %v3202, 0
        %v3390 = vsel %vm557, %v3205, 0
        %v3393 = vsel %vm557, %v3208, 0
        %v3396 = vsel %vm557, %v3211, 0
        %v3399 = vsel %vm557, %v3214, 0
        %v3402 = vsel %vm557, %v3217, 0
        %v3405 = vsel %vm557, %v3220, 0
        %3407 = vmatpush.msra.mxu0 0.0
        %3408 = vmatpush.msra.mxu0 0.0
        %3409 = vmatpush.msra.mxu0 0.0
        %3410 = vmatpush.msra.mxu0 0.0
        %3411 = vmatpush.msra.mxu0 0.0
        %3412 = vmatpush.msra.mxu0 0.0
        %3413 = vmatpush.msra.mxu0 0.0
        %3414 = vmatpush.msra.mxu0 0.0
        %3415 = vmatpush.msra.mxu0 0.0
        %3416 = vmatpush.msra.mxu0 0.0
        %3417 = vmatpush.msra.mxu0 0.0
        %3418 = vmatpush.msra.mxu0 0.0
        %3419 = vmatpush.msra.mxu0 %v3354
        %3420 = vmatpush.msra.mxu0 %v3352
        %3421 = vmatpush.msra.mxu0 %v3350
        %3422 = vmatpush.msra.mxu0 %v3348
        %3423 = vmatmul.f32.gmra.mxu0 %v3360
        %v3424 = vpop.f32.mrf.mxu0
        %v3425 = vadd.f32 %v3300, %v3424
        %3426 = vmatmul.f32.gmra.mxu0 %v3363
        %v3427 = vpop.f32.mrf.mxu0
        %v3428 = vadd.f32 %v3303, %v3427
        %3429 = vmatmul.f32.gmra.mxu0 %v3366
        %v3430 = vpop.f32.mrf.mxu0
        %v3431 = vadd.f32 %v3306, %v3430
        %3432 = vmatmul.f32.gmra.mxu0 %v3369
        %v3433 = vpop.f32.mrf.mxu0
        %v3434 = vadd.f32 %v3309, %v3433
        %3435 = vmatmul.f32.gmra.mxu0 %v3372
        %v3436 = vpop.f32.mrf.mxu0
        %v3437 = vadd.f32 %v3312, %v3436
        %3438 = vmatmul.f32.gmra.mxu0 %v3375
        %v3439 = vpop.f32.mrf.mxu0
        %v3440 = vadd.f32 %v3315, %v3439
        %3441 = vmatmul.f32.gmra.mxu0 %v3378
        %v3442 = vpop.f32.mrf.mxu0
        %v3443 = vadd.f32 %v3318, %v3442
        %3444 = vmatmul.f32.gmra.mxu0 %v3381
        %v3445 = vpop.f32.mrf.mxu0
        %v3446 = vadd.f32 %v3321, %v3445
        %3447 = vmatmul.f32.gmra.mxu0 %v3384
        %v3448 = vpop.f32.mrf.mxu0
        %v3449 = vadd.f32 %v3324, %v3448
        %3450 = vmatmul.f32.gmra.mxu0 %v3387
        %v3451 = vpop.f32.mrf.mxu0
        %v3452 = vadd.f32 %v3327, %v3451
        %3453 = vmatmul.f32.gmra.mxu0 %v3390
        %v3454 = vpop.f32.mrf.mxu0
        %v3455 = vadd.f32 %v3330, %v3454
        %3456 = vmatmul.f32.gmra.mxu0 %v3393
        %v3457 = vpop.f32.mrf.mxu0
        %v3458 = vadd.f32 %v3333, %v3457
        %3459 = vmatmul.f32.gmra.mxu0 %v3396
        %v3460 = vpop.f32.mrf.mxu0
        %v3461 = vadd.f32 %v3336, %v3460
        %3462 = vmatmul.f32.gmra.mxu0 %v3399
        %v3463 = vpop.f32.mrf.mxu0
        %v3464 = vadd.f32 %v3339, %v3463
        %3465 = vmatmul.f32.gmra.mxu0 %v3402
        %v3466 = vpop.f32.mrf.mxu0
        %v3467 = vadd.f32 %v3342, %v3466
        %3468 = vmatmul.f32.gmra.mxu0 %v3405
        %v3469 = vpop.f32.mrf.mxu0
        %v3470 = vadd.f32 %v3345, %v3469
        %3471 = vdwg.mxu0
        %v3472 = vld [vmem:[%s3 + $0xcd] sm:$0x1]
        %v3473 = vperm.slane %v3472, 0
        %v3474 = vadd.f32 %v3425, %v3473
        %v3475 = vadd.f32 %v3428, %v3473
        %v3476 = vadd.f32 %v3431, %v3473
        %v3477 = vadd.f32 %v3434, %v3473
        %v3478 = vadd.f32 %v3437, %v3473
        %v3479 = vadd.f32 %v3440, %v3473
        %v3480 = vadd.f32 %v3443, %v3473
        %v3481 = vadd.f32 %v3446, %v3473
        %v3482 = vadd.f32 %v3449, %v3473
        %v3483 = vadd.f32 %v3452, %v3473
        %v3484 = vadd.f32 %v3455, %v3473
        %v3485 = vadd.f32 %v3458, %v3473
        %v3486 = vadd.f32 %v3461, %v3473
        %v3487 = vadd.f32 %v3464, %v3473
        %v3488 = vadd.f32 %v3467, %v3473
        %v3489 = vadd.f32 %v3470, %v3473
        %v3490 = vmax.f32 %v3474, 0.0
        %v3491 = vmax.f32 %v3475, 0.0
        %v3492 = vmax.f32 %v3476, 0.0
        %v3493 = vmax.f32 %v3477, 0.0
        %v3494 = vmax.f32 %v3478, 0.0
        %v3495 = vmax.f32 %v3479, 0.0
        %v3496 = vmax.f32 %v3480, 0.0
        %v3497 = vmax.f32 %v3481, 0.0
        %v3498 = vmax.f32 %v3482, 0.0
        %v3499 = vmax.f32 %v3483, 0.0
        %v3500 = vmax.f32 %v3484, 0.0
        %v3501 = vmax.f32 %v3485, 0.0
        %v3502 = vmax.f32 %v3486, 0.0
        %v3503 = vmax.f32 %v3487, 0.0
        %v3504 = vmax.f32 %v3488, 0.0
        %v3505 = vmax.f32 %v3489, 0.0
        %v3506 = vsel %vm557, %v3490, 0.0
        %v3507 = vrot.slane %v3506, 4
        %v3508 = vadd.f32 %v3506, %v3507
        %v3509 = vrot.slane %v3508, 2
        %v3510 = vadd.f32 %v3508, %v3509
        %v3511 = vrot.slane %v3510, 1
        %v3512 = vadd.f32 %v3510, %v3511
        %v3513 = vsel %vm557, %v3491, 0.0
        %v3514 = vrot.slane %v3513, 4
        %v3515 = vadd.f32 %v3513, %v3514
        %v3516 = vrot.slane %v3515, 2
        %v3517 = vadd.f32 %v3515, %v3516
        %v3518 = vrot.slane %v3517, 1
        %v3519 = vadd.f32 %v3517, %v3518
        %v3520 = vsel %vm557, %v3492, 0.0
        %v3521 = vrot.slane %v3520, 4
        %v3522 = vadd.f32 %v3520, %v3521
        %v3523 = vrot.slane %v3522, 2
        %v3524 = vadd.f32 %v3522, %v3523
        %v3525 = vrot.slane %v3524, 1
        %v3526 = vadd.f32 %v3524, %v3525
        %v3527 = vsel %vm557, %v3493, 0.0
        %v3528 = vrot.slane %v3527, 4
        %v3529 = vadd.f32 %v3527, %v3528
        %v3530 = vrot.slane %v3529, 2
        %v3531 = vadd.f32 %v3529, %v3530
        %v3532 = vrot.slane %v3531, 1
        %v3533 = vadd.f32 %v3531, %v3532
        %v3534 = vsel %vm557, %v3494, 0.0
        %v3535 = vrot.slane %v3534, 4
        %v3536 = vadd.f32 %v3534, %v3535
        %v3537 = vrot.slane %v3536, 2
        %v3538 = vadd.f32 %v3536, %v3537
        %v3539 = vrot.slane %v3538, 1
        %v3540 = vadd.f32 %v3538, %v3539
        %v3541 = vsel %vm557, %v3495, 0.0
        %v3542 = vrot.slane %v3541, 4
        %v3543 = vadd.f32 %v3541, %v3542
        %v3544 = vrot.slane %v3543, 2
        %v3545 = vadd.f32 %v3543, %v3544
        %v3546 = vrot.slane %v3545, 1
        %v3547 = vadd.f32 %v3545, %v3546
        %v3548 = vsel %vm557, %v3496, 0.0
        %v3549 = vrot.slane %v3548, 4
        %v3550 = vadd.f32 %v3548, %v3549
        %v3551 = vrot.slane %v3550, 2
        %v3552 = vadd.f32 %v3550, %v3551
        %v3553 = vrot.slane %v3552, 1
        %v3554 = vadd.f32 %v3552, %v3553
        %v3555 = vsel %vm557, %v3497, 0.0
        %v3556 = vrot.slane %v3555, 4
        %v3557 = vadd.f32 %v3555, %v3556
        %v3558 = vrot.slane %v3557, 2
        %v3559 = vadd.f32 %v3557, %v3558
        %v3560 = vrot.slane %v3559, 1
        %v3561 = vadd.f32 %v3559, %v3560
        %v3562 = vsel %vm557, %v3498, 0.0
        %v3563 = vrot.slane %v3562, 4
        %v3564 = vadd.f32 %v3562, %v3563
        %v3565 = vrot.slane %v3564, 2
        %v3566 = vadd.f32 %v3564, %v3565
        %v3567 = vrot.slane %v3566, 1
        %v3568 = vadd.f32 %v3566, %v3567
        %v3569 = vsel %vm557, %v3499, 0.0
        %v3570 = vrot.slane %v3569, 4
        %v3571 = vadd.f32 %v3569, %v3570
        %v3572 = vrot.slane %v3571, 2
        %v3573 = vadd.f32 %v3571, %v3572
        %v3574 = vrot.slane %v3573, 1
        %v3575 = vadd.f32 %v3573, %v3574
        %v3576 = vsel %vm557, %v3500, 0.0
        %v3577 = vrot.slane %v3576, 4
        %v3578 = vadd.f32 %v3576, %v3577
        %v3579 = vrot.slane %v3578, 2
        %v3580 = vadd.f32 %v3578, %v3579
        %v3581 = vrot.slane %v3580, 1
        %v3582 = vadd.f32 %v3580, %v3581
        %v3583 = vsel %vm557, %v3501, 0.0
        %v3584 = vrot.slane %v3583, 4
        %v3585 = vadd.f32 %v3583, %v3584
        %v3586 = vrot.slane %v3585, 2
        %v3587 = vadd.f32 %v3585, %v3586
        %v3588 = vrot.slane %v3587, 1
        %v3589 = vadd.f32 %v3587, %v3588
        %v3590 = vsel %vm557, %v3502, 0.0
        %v3591 = vrot.slane %v3590, 4
        %v3592 = vadd.f32 %v3590, %v3591
        %v3593 = vrot.slane %v3592, 2
        %v3594 = vadd.f32 %v3592, %v3593
        %v3595 = vrot.slane %v3594, 1
        %v3596 = vadd.f32 %v3594, %v3595
        %v3597 = vsel %vm557, %v3503, 0.0
        %v3598 = vrot.slane %v3597, 4
        %v3599 = vadd.f32 %v3597, %v3598
        %v3600 = vrot.slane %v3599, 2
        %v3601 = vadd.f32 %v3599, %v3600
        %v3602 = vrot.slane %v3601, 1
        %v3603 = vadd.f32 %v3601, %v3602
        %v3604 = vsel %vm557, %v3504, 0.0
        %v3605 = vrot.slane %v3604, 4
        %v3606 = vadd.f32 %v3604, %v3605
        %v3607 = vrot.slane %v3606, 2
        %v3608 = vadd.f32 %v3606, %v3607
        %v3609 = vrot.slane %v3608, 1
        %v3610 = vadd.f32 %v3608, %v3609
        %v3611 = vsel %vm557, %v3505, 0.0
        %v3612 = vrot.slane %v3611, 4
        %v3613 = vadd.f32 %v3611, %v3612
        %v3614 = vrot.slane %v3613, 2
        %v3615 = vadd.f32 %v3613, %v3614
        %v3616 = vrot.slane %v3615, 1
        %v3617 = vadd.f32 %v3615, %v3616
        %v3618 = vrcp.pop 8.0
        %v3619 = vmul.f32 8.0, %v3618
        %v3620 = vsub.f32 1.0, %v3619
        %v3621 = vmul.f32 %v3618, %v3620
        %v3622 = vadd.f32 %v3618, %v3621
        %vm3623 = vweird.f32 %v3618
        %v3624 = vsel %vm3623, %v3618, %v3622
        %v3625 = vmul.f32 %v3512, %v3624
        %v3626 = vmul.f32 %v3519, %v3624
        %v3627 = vmul.f32 %v3526, %v3624
        %v3628 = vmul.f32 %v3533, %v3624
        %v3629 = vmul.f32 %v3540, %v3624
        %v3630 = vmul.f32 %v3547, %v3624
        %v3631 = vmul.f32 %v3554, %v3624
        %v3632 = vmul.f32 %v3561, %v3624
        %v3633 = vmul.f32 %v3568, %v3624
        %v3634 = vmul.f32 %v3575, %v3624
        %v3635 = vmul.f32 %v3582, %v3624
        %v3636 = vmul.f32 %v3589, %v3624
        %v3637 = vmul.f32 %v3596, %v3624
        %v3638 = vmul.f32 %v3603, %v3624
        %v3639 = vmul.f32 %v3610, %v3624
        %v3640 = vmul.f32 %v3617, %v3624
        %v3641 = vsel %vm557, %v3490, -inf
        %v3642 = vrot.slane %v3641, 4
        %v3643 = vmax.f32 %v3641, %v3642
        %v3644 = vrot.slane %v3643, 2
        %v3645 = vmax.f32 %v3643, %v3644
        %v3646 = vrot.slane %v3645, 1
        %v3647 = vmax.f32 %v3645, %v3646
        %v3648 = vsel %vm557, %v3491, -inf
        %v3649 = vrot.slane %v3648, 4
        %v3650 = vmax.f32 %v3648, %v3649
        %v3651 = vrot.slane %v3650, 2
        %v3652 = vmax.f32 %v3650, %v3651
        %v3653 = vrot.slane %v3652, 1
        %v3654 = vmax.f32 %v3652, %v3653
        %v3655 = vsel %vm557, %v3492, -inf
        %v3656 = vrot.slane %v3655, 4
        %v3657 = vmax.f32 %v3655, %v3656
        %v3658 = vrot.slane %v3657, 2
        %v3659 = vmax.f32 %v3657, %v3658
        %v3660 = vrot.slane %v3659, 1
        %v3661 = vmax.f32 %v3659, %v3660
        %v3662 = vsel %vm557, %v3493, -inf
        %v3663 = vrot.slane %v3662, 4
        %v3664 = vmax.f32 %v3662, %v3663
        %v3665 = vrot.slane %v3664, 2
        %v3666 = vmax.f32 %v3664, %v3665
        %v3667 = vrot.slane %v3666, 1
        %v3668 = vmax.f32 %v3666, %v3667
        %v3669 = vsel %vm557, %v3494, -inf
        %v3670 = vrot.slane %v3669, 4
        %v3671 = vmax.f32 %v3669, %v3670
        %v3672 = vrot.slane %v3671, 2
        %v3673 = vmax.f32 %v3671, %v3672
        %v3674 = vrot.slane %v3673, 1
        %v3675 = vmax.f32 %v3673, %v3674
        %v3676 = vsel %vm557, %v3495, -inf
        %v3677 = vrot.slane %v3676, 4
        %v3678 = vmax.f32 %v3676, %v3677
        %v3679 = vrot.slane %v3678, 2
        %v3680 = vmax.f32 %v3678, %v3679
        %v3681 = vrot.slane %v3680, 1
        %v3682 = vmax.f32 %v3680, %v3681
        %v3683 = vsel %vm557, %v3496, -inf
        %v3684 = vrot.slane %v3683, 4
        %v3685 = vmax.f32 %v3683, %v3684
        %v3686 = vrot.slane %v3685, 2
        %v3687 = vmax.f32 %v3685, %v3686
        %v3688 = vrot.slane %v3687, 1
        %v3689 = vmax.f32 %v3687, %v3688
        %v3690 = vsel %vm557, %v3497, -inf
        %v3691 = vrot.slane %v3690, 4
        %v3692 = vmax.f32 %v3690, %v3691
        %v3693 = vrot.slane %v3692, 2
        %v3694 = vmax.f32 %v3692, %v3693
        %v3695 = vrot.slane %v3694, 1
        %v3696 = vmax.f32 %v3694, %v3695
        %v3697 = vsel %vm557, %v3498, -inf
        %v3698 = vrot.slane %v3697, 4
        %v3699 = vmax.f32 %v3697, %v3698
        %v3700 = vrot.slane %v3699, 2
        %v3701 = vmax.f32 %v3699, %v3700
        %v3702 = vrot.slane %v3701, 1
        %v3703 = vmax.f32 %v3701, %v3702
        %v3704 = vsel %vm557, %v3499, -inf
        %v3705 = vrot.slane %v3704, 4
        %v3706 = vmax.f32 %v3704, %v3705
        %v3707 = vrot.slane %v3706, 2
        %v3708 = vmax.f32 %v3706, %v3707
        %v3709 = vrot.slane %v3708, 1
        %v3710 = vmax.f32 %v3708, %v3709
        %v3711 = vsel %vm557, %v3500, -inf
        %v3712 = vrot.slane %v3711, 4
        %v3713 = vmax.f32 %v3711, %v3712
        %v3714 = vrot.slane %v3713, 2
        %v3715 = vmax.f32 %v3713, %v3714
        %v3716 = vrot.slane %v3715, 1
        %v3717 = vmax.f32 %v3715, %v3716
        %v3718 = vsel %vm557, %v3501, -inf
        %v3719 = vrot.slane %v3718, 4
        %v3720 = vmax.f32 %v3718, %v3719
        %v3721 = vrot.slane %v3720, 2
        %v3722 = vmax.f32 %v3720, %v3721
        %v3723 = vrot.slane %v3722, 1
        %v3724 = vmax.f32 %v3722, %v3723
        %v3725 = vsel %vm557, %v3502, -inf
        %v3726 = vrot.slane %v3725, 4
        %v3727 = vmax.f32 %v3725, %v3726
        %v3728 = vrot.slane %v3727, 2
        %v3729 = vmax.f32 %v3727, %v3728
        %v3730 = vrot.slane %v3729, 1
        %v3731 = vmax.f32 %v3729, %v3730
        %v3732 = vsel %vm557, %v3503, -inf
        %v3733 = vrot.slane %v3732, 4
        %v3734 = vmax.f32 %v3732, %v3733
        %v3735 = vrot.slane %v3734, 2
        %v3736 = vmax.f32 %v3734, %v3735
        %v3737 = vrot.slane %v3736, 1
        %v3738 = vmax.f32 %v3736, %v3737
        %v3739 = vsel %vm557, %v3504, -inf
        %v3740 = vrot.slane %v3739, 4
        %v3741 = vmax.f32 %v3739, %v3740
        %v3742 = vrot.slane %v3741, 2
        %v3743 = vmax.f32 %v3741, %v3742
        %v3744 = vrot.slane %v3743, 1
        %v3745 = vmax.f32 %v3743, %v3744
        %v3746 = vsel %vm557, %v3505, -inf
        %v3747 = vrot.slane %v3746, 4
        %v3748 = vmax.f32 %v3746, %v3747
        %v3749 = vrot.slane %v3748, 2
        %v3750 = vmax.f32 %v3748, %v3749
        %v3751 = vrot.slane %v3750, 1
        %v3752 = vmax.f32 %v3750, %v3751
        %vm3769 = vcmask 1041409
        %v3770 = vsel %vm3769, %v3626, %v3625
        %vm3771 = vcmask 1042434
        %v3772 = vsel %vm3771, %v3627, %v3770
        %vm3773 = vcmask 1043459
        %v3774 = vsel %vm3773, %v3628, %v3772
        %vm3775 = vcmask 1044484
        %v3776 = vsel %vm3775, %v3629, %v3774
        %vm3777 = vcmask 1045509
        %v3778 = vsel %vm3777, %v3630, %v3776
        %vm3779 = vcmask 1046534
        %v3780 = vsel %vm3779, %v3631, %v3778
        %vm3781 = vcmask 1047559
        %v3782 = vsel %vm3781, %v3632, %v3780
        %v3783 = vsel %vm3769, %v3634, %v3633
        %v3784 = vsel %vm3771, %v3635, %v3783
        %v3785 = vsel %vm3773, %v3636, %v3784
        %v3786 = vsel %vm3775, %v3637, %v3785
        %v3787 = vsel %vm3777, %v3638, %v3786
        %v3788 = vsel %vm3779, %v3639, %v3787
        %v3789 = vsel %vm3781, %v3640, %v3788
        %v3792 = vsel %vm557, %v3782, 0.0
        %3793 = vadd.xlane.f32.xlu0 %v3792
        %v3794 = vpop.xlane.xlu0 %3793
        %v3795 = vsel %vm557, %v3789, 0.0
        %3796 = vadd.xlane.f32.xlu0 %v3795
        %v3797 = vpop.xlane.xlu0 %3796
        %v3814 = vsel %vm3769, %v3654, %v3647
        %v3815 = vsel %vm3771, %v3661, %v3814
        %v3816 = vsel %vm3773, %v3668, %v3815
        %v3817 = vsel %vm3775, %v3675, %v3816
        %v3818 = vsel %vm3777, %v3682, %v3817
        %v3819 = vsel %vm3779, %v3689, %v3818
        %v3820 = vsel %vm3781, %v3696, %v3819
        %v3821 = vsel %vm3769, %v3710, %v3703
        %v3822 = vsel %vm3771, %v3717, %v3821
        %v3823 = vsel %vm3773, %v3724, %v3822
        %v3824 = vsel %vm3775, %v3731, %v3823
        %v3825 = vsel %vm3777, %v3738, %v3824
        %v3826 = vsel %vm3779, %v3745, %v3825
        %v3827 = vsel %vm3781, %v3752, %v3826
        %v3830 = vsel %vm557, %v3820, 0.0
        %3831 = vadd.xlane.f32.xlu0 %v3830
        %v3832 = vpop.xlane.xlu0 %3831
        %v3833 = vsel %vm557, %v3827, 0.0
        %3834 = vadd.xlane.f32.xlu0 %v3833
        %v3835 = vpop.xlane.xlu0 %3834
        %v3836 = vadd.f32 %v3794, %v3832
        %v3837 = vadd.f32 %v3797, %v3835
        %v3838 = vrcp.pop 64.0
        %v3839 = vmul.f32 64.0, %v3838
        %v3840 = vsub.f32 1.0, %v3839
        %v3841 = vmul.f32 %v3838, %v3840
        %v3842 = vadd.f32 %v3838, %v3841
        %vm3843 = vweird.f32 %v3838
        %v3844 = vsel %vm3843, %v3838, %v3842
        %v3845 = vmul.f32 %v3836, %v3844
        %v3846 = vmul.f32 %v3837, %v3844
        %v3849 = vrot.slane %v3845, 1
        %v3850 = vrot.slane %v3845, 2
        %v3851 = vrot.slane %v3845, 3
        %v3852 = vrot.slane %v3845, 4
        %v3853 = vrot.slane %v3845, 5
        %v3854 = vrot.slane %v3845, 6
        %v3855 = vrot.slane %v3845, 7
        %v3856 = vrot.slane %v3846, 1
        %v3857 = vrot.slane %v3846, 2
        %v3858 = vrot.slane %v3846, 3
        %v3859 = vrot.slane %v3846, 4
        %v3860 = vrot.slane %v3846, 5
        %v3861 = vrot.slane %v3846, 6
        %v3862 = vrot.slane %v3846, 7
        %v3879 = vsub.f32 %v3625, %v3845
        %v3880 = vsub.f32 %v3626, %v3849
        %v3881 = vsub.f32 %v3627, %v3850
        %v3882 = vsub.f32 %v3628, %v3851
        %v3883 = vsub.f32 %v3629, %v3852
        %v3884 = vsub.f32 %v3630, %v3853
        %v3885 = vsub.f32 %v3631, %v3854
        %v3886 = vsub.f32 %v3632, %v3855
        %v3887 = vsub.f32 %v3633, %v3846
        %v3888 = vsub.f32 %v3634, %v3856
        %v3889 = vsub.f32 %v3635, %v3857
        %v3890 = vsub.f32 %v3636, %v3858
        %v3891 = vsub.f32 %v3637, %v3859
        %v3892 = vsub.f32 %v3638, %v3860
        %v3893 = vsub.f32 %v3639, %v3861
        %v3894 = vsub.f32 %v3640, %v3862
        %v3895 = vmul.f32 %v3879, %v3879
        %v3896 = vmul.f32 %v3880, %v3880
        %v3897 = vmul.f32 %v3881, %v3881
        %v3898 = vmul.f32 %v3882, %v3882
        %v3899 = vmul.f32 %v3883, %v3883
        %v3900 = vmul.f32 %v3884, %v3884
        %v3901 = vmul.f32 %v3885, %v3885
        %v3902 = vmul.f32 %v3886, %v3886
        %v3903 = vmul.f32 %v3887, %v3887
        %v3904 = vmul.f32 %v3888, %v3888
        %v3905 = vmul.f32 %v3889, %v3889
        %v3906 = vmul.f32 %v3890, %v3890
        %v3907 = vmul.f32 %v3891, %v3891
        %v3908 = vmul.f32 %v3892, %v3892
        %v3909 = vmul.f32 %v3893, %v3893
        %v3910 = vmul.f32 %v3894, %v3894
        %v3927 = vrot.slane %v3896, 7
        %v3928 = vsel %vm3769, %v3927, %v3895
        %v3929 = vrot.slane %v3897, 6
        %v3930 = vsel %vm3771, %v3929, %v3928
        %v3931 = vrot.slane %v3898, 5
        %v3932 = vsel %vm3773, %v3931, %v3930
        %v3933 = vrot.slane %v3899, 4
        %v3934 = vsel %vm3775, %v3933, %v3932
        %v3935 = vrot.slane %v3900, 3
        %v3936 = vsel %vm3777, %v3935, %v3934
        %v3937 = vrot.slane %v3901, 2
        %v3938 = vsel %vm3779, %v3937, %v3936
        %v3939 = vrot.slane %v3902, 1
        %v3940 = vsel %vm3781, %v3939, %v3938
        %v3941 = vrot.slane %v3904, 7
        %v3942 = vsel %vm3769, %v3941, %v3903
        %v3943 = vrot.slane %v3905, 6
        %v3944 = vsel %vm3771, %v3943, %v3942
        %v3945 = vrot.slane %v3906, 5
        %v3946 = vsel %vm3773, %v3945, %v3944
        %v3947 = vrot.slane %v3907, 4
        %v3948 = vsel %vm3775, %v3947, %v3946
        %v3949 = vrot.slane %v3908, 3
        %v3950 = vsel %vm3777, %v3949, %v3948
        %v3951 = vrot.slane %v3909, 2
        %v3952 = vsel %vm3779, %v3951, %v3950
        %v3953 = vrot.slane %v3910, 1
        %v3954 = vsel %vm3781, %v3953, %v3952
        %v3957 = vsel %vm557, %v3940, 0.0
        %3958 = vadd.xlane.f32.xlu0 %v3957
        %v3959 = vpop.xlane.xlu0 %3958
        %v3960 = vsel %vm557, %v3954, 0.0
        %3961 = vadd.xlane.f32.xlu0 %v3960
        %v3962 = vpop.xlane.xlu0 %3961
        %v3963 = vsub.f32 %v3647, %v3845
        %v3964 = vsub.f32 %v3654, %v3849
        %v3965 = vsub.f32 %v3661, %v3850
        %v3966 = vsub.f32 %v3668, %v3851
        %v3967 = vsub.f32 %v3675, %v3852
        %v3968 = vsub.f32 %v3682, %v3853
        %v3969 = vsub.f32 %v3689, %v3854
        %v3970 = vsub.f32 %v3696, %v3855
        %v3971 = vsub.f32 %v3703, %v3846
        %v3972 = vsub.f32 %v3710, %v3856
        %v3973 = vsub.f32 %v3717, %v3857
        %v3974 = vsub.f32 %v3724, %v3858
        %v3975 = vsub.f32 %v3731, %v3859
        %v3976 = vsub.f32 %v3738, %v3860
        %v3977 = vsub.f32 %v3745, %v3861
        %v3978 = vsub.f32 %v3752, %v3862
        %v3979 = vmul.f32 %v3963, %v3963
        %v3980 = vmul.f32 %v3964, %v3964
        %v3981 = vmul.f32 %v3965, %v3965
        %v3982 = vmul.f32 %v3966, %v3966
        %v3983 = vmul.f32 %v3967, %v3967
        %v3984 = vmul.f32 %v3968, %v3968
        %v3985 = vmul.f32 %v3969, %v3969
        %v3986 = vmul.f32 %v3970, %v3970
        %v3987 = vmul.f32 %v3971, %v3971
        %v3988 = vmul.f32 %v3972, %v3972
        %v3989 = vmul.f32 %v3973, %v3973
        %v3990 = vmul.f32 %v3974, %v3974
        %v3991 = vmul.f32 %v3975, %v3975
        %v3992 = vmul.f32 %v3976, %v3976
        %v3993 = vmul.f32 %v3977, %v3977
        %v3994 = vmul.f32 %v3978, %v3978
        %v4011 = vrot.slane %v3980, 7
        %v4012 = vsel %vm3769, %v4011, %v3979
        %v4013 = vrot.slane %v3981, 6
        %v4014 = vsel %vm3771, %v4013, %v4012
        %v4015 = vrot.slane %v3982, 5
        %v4016 = vsel %vm3773, %v4015, %v4014
        %v4017 = vrot.slane %v3983, 4
        %v4018 = vsel %vm3775, %v4017, %v4016
        %v4019 = vrot.slane %v3984, 3
        %v4020 = vsel %vm3777, %v4019, %v4018
        %v4021 = vrot.slane %v3985, 2
        %v4022 = vsel %vm3779, %v4021, %v4020
        %v4023 = vrot.slane %v3986, 1
        %v4024 = vsel %vm3781, %v4023, %v4022
        %v4025 = vrot.slane %v3988, 7
        %v4026 = vsel %vm3769, %v4025, %v3987
        %v4027 = vrot.slane %v3989, 6
        %v4028 = vsel %vm3771, %v4027, %v4026
        %v4029 = vrot.slane %v3990, 5
        %v4030 = vsel %vm3773, %v4029, %v4028
        %v4031 = vrot.slane %v3991, 4
        %v4032 = vsel %vm3775, %v4031, %v4030
        %v4033 = vrot.slane %v3992, 3
        %v4034 = vsel %vm3777, %v4033, %v4032
        %v4035 = vrot.slane %v3993, 2
        %v4036 = vsel %vm3779, %v4035, %v4034
        %v4037 = vrot.slane %v3994, 1
        %v4038 = vsel %vm3781, %v4037, %v4036
        %v4041 = vsel %vm557, %v4024, 0.0
        %4042 = vadd.xlane.f32.xlu0 %v4041
        %v4043 = vpop.xlane.xlu0 %4042
        %v4044 = vsel %vm557, %v4038, 0.0
        %4045 = vadd.xlane.f32.xlu0 %v4044
        %v4046 = vpop.xlane.xlu0 %4045
        %v4047 = vadd.f32 %v3959, %v4043
        %v4048 = vadd.f32 %v3962, %v4046
        %v4049 = vmul.f32 %v4047, %v3844
        %v4050 = vmul.f32 %v4048, %v3844
        %v4051 = vadd.f32 %v4049, 1e-05
        %v4052 = vadd.f32 %v4050, 1e-05
        %v4053 = vrsqrt.pop %v4051
        %v4054 = vmul.f32 %v4053, %v4051
        %v4055 = vmul.f32 %v4054, %v4053
        %v4056 = vmul.f32 0.5, %v4055
        %v4057 = vsub.f32 1.5, %v4056
        %v4058 = vmul.f32 %v4053, %v4057
        %vm4059 = vweird.f32 %v4051
        %vm4060 = vweird.f32 %v4053
        %vm4061 = vmor %vm4059, %vm4060
        %v4062 = vsel %vm4061, %v4053, %v4058
        %v4063 = vrsqrt.pop %v4052
        %v4064 = vmul.f32 %v4063, %v4052
        %v4065 = vmul.f32 %v4064, %v4063
        %v4066 = vmul.f32 0.5, %v4065
        %v4067 = vsub.f32 1.5, %v4066
        %v4068 = vmul.f32 %v4063, %v4067
        %vm4069 = vweird.f32 %v4052
        %vm4070 = vweird.f32 %v4063
        %vm4071 = vmor %vm4069, %vm4070
        %v4072 = vsel %vm4071, %v4063, %v4068
        %v4075 = vrot.slane %v4062, 1
        %v4076 = vrot.slane %v4062, 2
        %v4077 = vrot.slane %v4062, 3
        %v4078 = vrot.slane %v4062, 4
        %v4079 = vrot.slane %v4062, 5
        %v4080 = vrot.slane %v4062, 6
        %v4081 = vrot.slane %v4062, 7
        %v4082 = vrot.slane %v4072, 1
        %v4083 = vrot.slane %v4072, 2
        %v4084 = vrot.slane %v4072, 3
        %v4085 = vrot.slane %v4072, 4
        %v4086 = vrot.slane %v4072, 5
        %v4087 = vrot.slane %v4072, 6
        %v4088 = vrot.slane %v4072, 7
        %v4105 = vmul.f32 %v3879, %v4062
        %v4106 = vmul.f32 %v3880, %v4075
        %v4107 = vmul.f32 %v3881, %v4076
        %v4108 = vmul.f32 %v3882, %v4077
        %v4109 = vmul.f32 %v3883, %v4078
        %v4110 = vmul.f32 %v3884, %v4079
        %v4111 = vmul.f32 %v3885, %v4080
        %v4112 = vmul.f32 %v3886, %v4081
        %v4113 = vmul.f32 %v3887, %v4072
        %v4114 = vmul.f32 %v3888, %v4082
        %v4115 = vmul.f32 %v3889, %v4083
        %v4116 = vmul.f32 %v3890, %v4084
        %v4117 = vmul.f32 %v3891, %v4085
        %v4118 = vmul.f32 %v3892, %v4086
        %v4119 = vmul.f32 %v3893, %v4087
        %v4120 = vmul.f32 %v3894, %v4088
        %4122 = vrot.lane.b32.xlu0 %v3473, 96
        %v4123 = vpop.permute.xlu0 %4122
        %v4125 = vmul.f32 %v4105, %v4123
        %v4126 = vmul.f32 %v4106, %v4123
        %v4127 = vmul.f32 %v4107, %v4123
        %v4128 = vmul.f32 %v4108, %v4123
        %v4129 = vmul.f32 %v4109, %v4123
        %v4130 = vmul.f32 %v4110, %v4123
        %v4131 = vmul.f32 %v4111, %v4123
        %v4132 = vmul.f32 %v4112, %v4123
        %v4133 = vmul.f32 %v4113, %v4123
        %v4134 = vmul.f32 %v4114, %v4123
        %v4135 = vmul.f32 %v4115, %v4123
        %v4136 = vmul.f32 %v4116, %v4123
        %v4137 = vmul.f32 %v4117, %v4123
        %v4138 = vmul.f32 %v4118, %v4123
        %v4139 = vmul.f32 %v4119, %v4123
        %v4140 = vmul.f32 %v4120, %v4123
        %v4141 = vld [vmem:[%s3 + $0xce] sm:$0x1]
        %v4142 = vperm.slane %v4141, 0
        %v4143 = vadd.f32 %v4125, %v4142
        %v4144 = vadd.f32 %v4126, %v4142
        %v4145 = vadd.f32 %v4127, %v4142
        %v4146 = vadd.f32 %v4128, %v4142
        %v4147 = vadd.f32 %v4129, %v4142
        %v4148 = vadd.f32 %v4130, %v4142
        %v4149 = vadd.f32 %v4131, %v4142
        %v4150 = vadd.f32 %v4132, %v4142
        %v4151 = vadd.f32 %v4133, %v4142
        %v4152 = vadd.f32 %v4134, %v4142
        %v4153 = vadd.f32 %v4135, %v4142
        %v4154 = vadd.f32 %v4136, %v4142
        %v4155 = vadd.f32 %v4137, %v4142
        %v4156 = vadd.f32 %v4138, %v4142
        %v4157 = vadd.f32 %v4139, %v4142
        %v4158 = vadd.f32 %v4140, %v4142
        %v4159 = vmul.f32 %v3963, %v4062
        %v4160 = vmul.f32 %v3964, %v4075
        %v4161 = vmul.f32 %v3965, %v4076
        %v4162 = vmul.f32 %v3966, %v4077
        %v4163 = vmul.f32 %v3967, %v4078
        %v4164 = vmul.f32 %v3968, %v4079
        %v4165 = vmul.f32 %v3969, %v4080
        %v4166 = vmul.f32 %v3970, %v4081
        %v4167 = vmul.f32 %v3971, %v4072
        %v4168 = vmul.f32 %v3972, %v4082
        %v4169 = vmul.f32 %v3973, %v4083
        %v4170 = vmul.f32 %v3974, %v4084
        %v4171 = vmul.f32 %v3975, %v4085
        %v4172 = vmul.f32 %v3976, %v4086
        %v4173 = vmul.f32 %v3977, %v4087
        %v4174 = vmul.f32 %v3978, %v4088
        %4175 = vrot.lane.b32.xlu0 %v3473, 64
        %v4176 = vpop.permute.xlu0 %4175
        %v4178 = vmul.f32 %v4159, %v4176
        %v4179 = vmul.f32 %v4160, %v4176
        %v4180 = vmul.f32 %v4161, %v4176
        %v4181 = vmul.f32 %v4162, %v4176
        %v4182 = vmul.f32 %v4163, %v4176
        %v4183 = vmul.f32 %v4164, %v4176
        %v4184 = vmul.f32 %v4165, %v4176
        %v4185 = vmul.f32 %v4166, %v4176
        %v4186 = vmul.f32 %v4167, %v4176
        %v4187 = vmul.f32 %v4168, %v4176
        %v4188 = vmul.f32 %v4169, %v4176
        %v4189 = vmul.f32 %v4170, %v4176
        %v4190 = vmul.f32 %v4171, %v4176
        %v4191 = vmul.f32 %v4172, %v4176
        %v4192 = vmul.f32 %v4173, %v4176
        %v4193 = vmul.f32 %v4174, %v4176
        %4195 = vrot.lane.b32.xlu0 %v4142, 96
        %v4196 = vpop.permute.xlu0 %4195
        %v4198 = vadd.f32 %v4178, %v4196
        %v4199 = vadd.f32 %v4179, %v4196
        %v4200 = vadd.f32 %v4180, %v4196
        %v4201 = vadd.f32 %v4181, %v4196
        %v4202 = vadd.f32 %v4182, %v4196
        %v4203 = vadd.f32 %v4183, %v4196
        %v4204 = vadd.f32 %v4184, %v4196
        %v4205 = vadd.f32 %v4185, %v4196
        %v4206 = vadd.f32 %v4186, %v4196
        %v4207 = vadd.f32 %v4187, %v4196
        %v4208 = vadd.f32 %v4188, %v4196
        %v4209 = vadd.f32 %v4189, %v4196
        %v4210 = vadd.f32 %v4190, %v4196
        %v4211 = vadd.f32 %v4191, %v4196
        %v4212 = vadd.f32 %v4192, %v4196
        %v4213 = vadd.f32 %v4193, %v4196
        %v4214 = vld [vmem:[%s242] sm:$0xff]
        %v4215 = vld [vmem:[%s242 + $0x8] sm:$0xff]
        %4217 = vrot.lane.b32.xlu0 %v339, 96
        %v4218 = vpop.permute.xlu0 %4217
        %4220 = vrot.lane.b32.xlu0 %v341, 96
        %v4221 = vpop.permute.xlu0 %4220
        %v4224 = vsel %vm342, %v4214, 0
        %v4227 = vsel %vm342, %v4215, 0
        %4229 = vmatpush.msra.mxu0 0.0
        %4230 = vmatpush.msra.mxu0 0.0
        %4231 = vmatpush.msra.mxu0 0.0
        %4232 = vmatpush.msra.mxu0 0.0
        %4233 = vmatpush.msra.mxu0 0.0
        %4234 = vmatpush.msra.mxu0 0.0
        %4235 = vmatpush.msra.mxu0 0.0
        %4236 = vmatpush.msra.mxu0 0.0
        %4237 = vmatpush.msra.mxu0 0.0
        %4238 = vmatpush.msra.mxu0 0.0
        %4239 = vmatpush.msra.mxu0 0.0
        %4240 = vmatpush.msra.mxu0 0.0
        %4241 = vmatpush.msra.mxu0 0.0
        %4242 = vmatpush.msra.mxu0 0.0
        %4243 = vmatpush.msra.mxu0 0.0
        %4244 = vmatpush.msra.mxu0 %v4218
        %4245 = vmatmul.f32.gmra.mxu0 %v4224
        %v4246 = vpop.f32.mrf.mxu0
        %v4247 = vadd.f32 %v4221, %v4246
        %4248 = vmatmul.f32.gmra.mxu0 %v4227
        %v4249 = vpop.f32.mrf.mxu0
        %v4250 = vadd.f32 %v4221, %v4249
        %4251 = vdwg.mxu0
        %v4252 = vmax.f32 %v4247, 0.0
        %v4253 = vmax.f32 %v4250, 0.0
        %v4254 = vsel %vm557, %v4252, 0.0
        %4255 = vadd.xlane.f32.xlu0 %v4254
        %v4256 = vpop.xlane.xlu0 %4255
        %v4257 = vsel %vm557, %v4253, 0.0
        %4258 = vadd.xlane.f32.xlu0 %v4257
        %v4259 = vpop.xlane.xlu0 %4258
        %v4260 = vrcp.pop 32.0
        %v4261 = vmul.f32 32.0, %v4260
        %v4262 = vsub.f32 1.0, %v4261
        %v4263 = vmul.f32 %v4260, %v4262
        %v4264 = vadd.f32 %v4260, %v4263
        %vm4265 = vweird.f32 %v4260
        %v4266 = vsel %vm4265, %v4260, %v4264
        %v4267 = vmul.f32 %v4256, %v4266
        %v4268 = vmul.f32 %v4259, %v4266
        %v4269 = vsub.f32 %v4252, %v4267
        %v4270 = vsub.f32 %v4253, %v4268
        %v4271 = vmul.f32 %v4269, %v4269
        %v4272 = vmul.f32 %v4270, %v4270
        %v4273 = vsel %vm557, %v4271, 0.0
        %4274 = vadd.xlane.f32.xlu0 %v4273
        %v4275 = vpop.xlane.xlu0 %4274
        %v4276 = vsel %vm557, %v4272, 0.0
        %4277 = vadd.xlane.f32.xlu0 %v4276
        %v4278 = vpop.xlane.xlu0 %4277
        %v4279 = vmul.f32 %v4275, %v4266
        %v4280 = vmul.f32 %v4278, %v4266
        %v4281 = vadd.f32 %v4279, 1e-05
        %v4282 = vadd.f32 %v4280, 1e-05
        %v4283 = vrsqrt.pop %v4281
        %v4284 = vmul.f32 %v4283, %v4281
        %v4285 = vmul.f32 %v4284, %v4283
        %v4286 = vmul.f32 0.5, %v4285
        %v4287 = vsub.f32 1.5, %v4286
        %v4288 = vmul.f32 %v4283, %v4287
        %vm4289 = vweird.f32 %v4281
        %vm4290 = vweird.f32 %v4283
        %vm4291 = vmor %vm4289, %vm4290
        %v4292 = vsel %vm4291, %v4283, %v4288
        %v4293 = vrsqrt.pop %v4282
        %v4294 = vmul.f32 %v4293, %v4282
        %v4295 = vmul.f32 %v4294, %v4293
        %v4296 = vmul.f32 0.5, %v4295
        %v4297 = vsub.f32 1.5, %v4296
        %v4298 = vmul.f32 %v4293, %v4297
        %vm4299 = vweird.f32 %v4282
        %vm4300 = vweird.f32 %v4293
        %vm4301 = vmor %vm4299, %vm4300
        %v4302 = vsel %vm4301, %v4293, %v4298
        %v4303 = vmul.f32 %v4269, %v4292
        %v4304 = vmul.f32 %v4270, %v4302
        %4305 = vrot.lane.b32.xlu0 %v3473, 32
        %v4306 = vpop.permute.xlu0 %4305
        %v4308 = vmul.f32 %v4303, %v4306
        %v4309 = vmul.f32 %v4304, %v4306
        %4310 = vrot.lane.b32.xlu0 %v4142, 64
        %v4311 = vpop.permute.xlu0 %4310
        %v4313 = vadd.f32 %v4308, %v4311
        %v4314 = vadd.f32 %v4309, %v4311
        %v4315 = vld [vmem:[%s3 + $0x68] sm:$0xff]
        %v4316 = vld [vmem:[%s3 + $0x70] sm:$0xff]
        %v4317 = vld [vmem:[%s3 + $0x78] sm:$0xff]
        %v4318 = vld [vmem:[%s3 + $0x80] sm:$0xff]
        %v4319 = vld [vmem:[%s3 + $0x88] sm:$0xff]
        %v4320 = vld [vmem:[%s3 + $0x90] sm:$0xff]
        %v4321 = vld [vmem:[%s3 + $0x98] sm:$0xff]
        %v4322 = vld [vmem:[%s3 + $0xa0] sm:$0xff]
        %v4339 = vrot.slane %v4199, 7
        %v4340 = vsel %vm3769, %v4339, %v4198
        %v4341 = vrot.slane %v4200, 6
        %v4342 = vsel %vm3771, %v4341, %v4340
        %v4343 = vrot.slane %v4201, 5
        %v4344 = vsel %vm3773, %v4343, %v4342
        %v4345 = vrot.slane %v4202, 4
        %v4346 = vsel %vm3775, %v4345, %v4344
        %v4347 = vrot.slane %v4203, 3
        %v4348 = vsel %vm3777, %v4347, %v4346
        %v4349 = vrot.slane %v4204, 2
        %v4350 = vsel %vm3779, %v4349, %v4348
        %v4351 = vrot.slane %v4205, 1
        %v4352 = vsel %vm3781, %v4351, %v4350
        %v4353 = vrot.slane %v4207, 7
        %v4354 = vsel %vm3769, %v4353, %v4206
        %v4355 = vrot.slane %v4208, 6
        %v4356 = vsel %vm3771, %v4355, %v4354
        %v4357 = vrot.slane %v4209, 5
        %v4358 = vsel %vm3773, %v4357, %v4356
        %v4359 = vrot.slane %v4210, 4
        %v4360 = vsel %vm3775, %v4359, %v4358
        %v4361 = vrot.slane %v4211, 3
        %v4362 = vsel %vm3777, %v4361, %v4360
        %v4363 = vrot.slane %v4212, 2
        %v4364 = vsel %vm3779, %v4363, %v4362
        %v4365 = vrot.slane %v4213, 1
        %v4366 = vsel %vm3781, %v4365, %v4364
        %v4367 = vsel %vm557, %v4352, 0
        %v4369 = vsel %vm557, %v4366, 0
        %4371 = vmatpush.msra.mxu0 0.0
        %4372 = vmatpush.msra.mxu0 0.0
        %4373 = vmatpush.msra.mxu0 0.0
        %4374 = vmatpush.msra.mxu0 0.0
        %4375 = vmatpush.msra.mxu0 0.0
        %4376 = vmatpush.msra.mxu0 0.0
        %4377 = vmatpush.msra.mxu0 0.0
        %4378 = vmatpush.msra.mxu0 0.0
        %4379 = vmatpush.msra.mxu0 0.0
        %4380 = vmatpush.msra.mxu0 0.0
        %4381 = vmatpush.msra.mxu0 0.0
        %4382 = vmatpush.msra.mxu0 0.0
        %4383 = vmatpush.msra.mxu0 %v4322
        %4384 = vmatpush.msra.mxu0 %v4321
        %4385 = vmatpush.msra.mxu0 %v4320
        %4386 = vmatpush.msra.mxu0 %v4319
        %4387 = vmatmul.f32.gmra.mxu0 %v4367
        %v4388 = vpop.f32.mrf.mxu0
        %v4389 = vadd.f32 0.0, %v4388
        %4390 = vmatmul.f32.gmra.mxu0 %v4369
        %v4391 = vpop.f32.mrf.mxu0
        %v4392 = vadd.f32 0.0, %v4391
        %4393 = vdwg.mxu0
        %v4410 = vrot.slane %v4144, 7
        %v4411 = vsel %vm3769, %v4410, %v4143
        %v4412 = vrot.slane %v4145, 6
        %v4413 = vsel %vm3771, %v4412, %v4411
        %v4414 = vrot.slane %v4146, 5
        %v4415 = vsel %vm3773, %v4414, %v4413
        %v4416 = vrot.slane %v4147, 4
        %v4417 = vsel %vm3775, %v4416, %v4415
        %v4418 = vrot.slane %v4148, 3
        %v4419 = vsel %vm3777, %v4418, %v4417
        %v4420 = vrot.slane %v4149, 2
        %v4421 = vsel %vm3779, %v4420, %v4419
        %v4422 = vrot.slane %v4150, 1
        %v4423 = vsel %vm3781, %v4422, %v4421
        %v4424 = vrot.slane %v4152, 7
        %v4425 = vsel %vm3769, %v4424, %v4151
        %v4426 = vrot.slane %v4153, 6
        %v4427 = vsel %vm3771, %v4426, %v4425
        %v4428 = vrot.slane %v4154, 5
        %v4429 = vsel %vm3773, %v4428, %v4427
        %v4430 = vrot.slane %v4155, 4
        %v4431 = vsel %vm3775, %v4430, %v4429
        %v4432 = vrot.slane %v4156, 3
        %v4433 = vsel %vm3777, %v4432, %v4431
        %v4434 = vrot.slane %v4157, 2
        %v4435 = vsel %vm3779, %v4434, %v4433
        %v4436 = vrot.slane %v4158, 1
        %v4437 = vsel %vm3781, %v4436, %v4435
        %v4438 = vsel %vm557, %v4423, 0
        %v4440 = vsel %vm557, %v4437, 0
        %4442 = vmatpush.msra.mxu0 0.0
        %4443 = vmatpush.msra.mxu0 0.0
        %4444 = vmatpush.msra.mxu0 0.0
        %4445 = vmatpush.msra.mxu0 0.0
        %4446 = vmatpush.msra.mxu0 0.0
        %4447 = vmatpush.msra.mxu0 0.0
        %4448 = vmatpush.msra.mxu0 0.0
        %4449 = vmatpush.msra.mxu0 0.0
        %4450 = vmatpush.msra.mxu0 0.0
        %4451 = vmatpush.msra.mxu0 0.0
        %4452 = vmatpush.msra.mxu0 0.0
        %4453 = vmatpush.msra.mxu0 0.0
        %4454 = vmatpush.msra.mxu0 %v4318
        %4455 = vmatpush.msra.mxu0 %v4317
        %4456 = vmatpush.msra.mxu0 %v4316
        %4457 = vmatpush.msra.mxu0 %v4315
        %4458 = vmatmul.f32.gmra.mxu0 %v4438
        %v4459 = vpop.f32.mrf.mxu0
        %v4460 = vadd.f32 %v4389, %v4459
        %4461 = vmatmul.f32.gmra.mxu0 %v4440
        %v4462 = vpop.f32.mrf.mxu0
        %v4463 = vadd.f32 %v4392, %v4462
        %4464 = vdwg.mxu0
        %v4465 = vld [vmem:[%s3 + $0xa8] sm:$0xff]
        %v4466 = vld [vmem:[%s3 + $0xb0] sm:$0xff]
        %v4467 = vld [vmem:[%s3 + $0xb8] sm:$0xff]
        %v4468 = vld [vmem:[%s3 + $0xc0] sm:$0xff]
        %v4470 = vsel %vm557, %v4313, 0
        %v4473 = vsel %vm557, %v4314, 0
        %4475 = vmatpush.msra.mxu0 0.0
        %4476 = vmatpush.msra.mxu0 0.0
        %4477 = vmatpush.msra.mxu0 0.0
        %4478 = vmatpush.msra.mxu0 0.0
        %4479 = vmatpush.msra.mxu0 0.0
        %4480 = vmatpush.msra.mxu0 0.0
        %4481 = vmatpush.msra.mxu0 0.0
        %4482 = vmatpush.msra.mxu0 0.0
        %4483 = vmatpush.msra.mxu0 0.0
        %4484 = vmatpush.msra.mxu0 0.0
        %4485 = vmatpush.msra.mxu0 0.0
        %4486 = vmatpush.msra.mxu0 0.0
        %4487 = vmatpush.msra.mxu0 %v4468
        %4488 = vmatpush.msra.mxu0 %v4467
        %4489 = vmatpush.msra.mxu0 %v4466
        %4490 = vmatpush.msra.mxu0 %v4465
        %4491 = vmatmul.f32.gmra.mxu0 %v4470
        %v4492 = vpop.f32.mrf.mxu0
        %v4493 = vadd.f32 0.0, %v4492
        %4494 = vmatmul.f32.gmra.mxu0 %v4473
        %v4495 = vpop.f32.mrf.mxu0
        %v4496 = vadd.f32 0.0, %v4495
        %4497 = vdwg.mxu0
        %v4498 = vadd.f32 %v4460, %v4493
        %v4499 = vadd.f32 %v4463, %v4496
        %v4500 = vld [vmem:[%s3 + $0xcf] sm:$0x1]
        %v4501 = vperm.slane %v4500, 0
        %v4502 = vadd.f32 %v4498, %v4501
        %v4503 = vadd.f32 %v4499, %v4501
        %v4504 = vxor.u32 %v4502, 2147483648
        %v4505 = vxor.u32 %v4503, 2147483648
        %v4506 = vmul.f32 %v4504, 1.442695
        %v4507 = vpow.pop %v4506
        %v4508 = vmul.f32 %v4505, 1.442695
        %v4509 = vpow.pop %v4508
        %v4510 = vadd.f32 %v4507, 1.0
        %v4511 = vadd.f32 %v4509, 1.0
        %v4512 = vrcp.pop %v4510
        %v4513 = vmul.f32 %v4510, %v4512
        %v4514 = vsub.f32 1.0, %v4513
        %v4515 = vmul.f32 %v4512, %v4514
        %v4516 = vadd.f32 %v4512, %v4515
        %vm4517 = vweird.f32 %v4510
        %vm4518 = vweird.f32 %v4512
        %vm4519 = vmor %vm4517, %vm4518
        %v4520 = vsel %vm4519, %v4512, %v4516
        %v4521 = vand.u32 2147483647, %v4510
        %vm4522 = vcmp.eq.f32.partialorder %v4521, 8.507059e+37
        %v4523 = vand.u32 %v4510, 2147483648
        %v4524 = vor.u32 1.1754944e-38, %v4523
        %v4525 = vsel %vm4522, %v4524, %v4520
        %v4526 = vmul.f32 1.0, %v4525
        %v4527 = vrcp.pop %v4511
        %v4528 = vmul.f32 %v4511, %v4527
        %v4529 = vsub.f32 1.0, %v4528
        %v4530 = vmul.f32 %v4527, %v4529
        %v4531 = vadd.f32 %v4527, %v4530
        %vm4532 = vweird.f32 %v4511
        %vm4533 = vweird.f32 %v4527
        %vm4534 = vmor %vm4532, %vm4533
        %v4535 = vsel %vm4534, %v4527, %v4531
        %v4536 = vand.u32 2147483647, %v4511
        %vm4537 = vcmp.eq.f32.partialorder %v4536, 8.507059e+37
        %v4538 = vand.u32 %v4511, 2147483648
        %v4539 = vor.u32 1.1754944e-38, %v4538
        %v4540 = vsel %vm4537, %v4539, %v4535
        %v4541 = vmul.f32 1.0, %v4540
        %4542 = vst [vmem:[%s229] sm:$0xff] %v4526
        %4543 = vst [vmem:[%s229 + $0x8] sm:$0xff] %v4541
        %s4544 = scalar_lea.vmem %s235, 128
        %v4545 = vld [vmem:[%s4544] sm:$0xff]
        %v4546 = vld [vmem:[%s4544 + $0x8] sm:$0xff]
        %v4547 = vld [vmem:[%s4544 + $0x10] sm:$0xff]
        %v4548 = vld [vmem:[%s4544 + $0x18] sm:$0xff]
        %v4549 = vld [vmem:[%s4544 + $0x20] sm:$0xff]
        %v4550 = vld [vmem:[%s4544 + $0x28] sm:$0xff]
        %v4551 = vld [vmem:[%s4544 + $0x30] sm:$0xff]
        %v4552 = vld [vmem:[%s4544 + $0x38] sm:$0xff]
        %v4553 = vld [vmem:[%s4544 + $0x40] sm:$0xff]
        %v4554 = vld [vmem:[%s4544 + $0x48] sm:$0xff]
        %v4555 = vld [vmem:[%s4544 + $0x50] sm:$0xff]
        %v4556 = vld [vmem:[%s4544 + $0x58] sm:$0xff]
        %v4557 = vld [vmem:[%s4544 + $0x60] sm:$0xff]
        %v4558 = vld [vmem:[%s4544 + $0x68] sm:$0xff]
        %v4559 = vld [vmem:[%s4544 + $0x70] sm:$0xff]
        %v4560 = vld [vmem:[%s4544 + $0x78] sm:$0xff]
        %s4561 = scalar_lea.vmem %s249, 32
        %v4562 = vld [vmem:[%s4561] sm:$0xff]
        %v4563 = vld [vmem:[%s4561 + $0x8] sm:$0xff]
        %v4564 = vld [vmem:[%s4561 + $0x10] sm:$0xff]
        %v4565 = vld [vmem:[%s4561 + $0x18] sm:$0xff]
        %v4566 = vunpack.c.0.s8 %v4562
        %v4567 = vunpack.c.1.s8 %v4562
        %v4568 = vunpack.c.2.s8 %v4562
        %v4569 = vunpack.c.3.s8 %v4562
        %v4570 = vunpack.c.0.s8 %v4563
        %v4571 = vunpack.c.1.s8 %v4563
        %v4572 = vunpack.c.2.s8 %v4563
        %v4573 = vunpack.c.3.s8 %v4563
        %v4574 = vunpack.c.0.s8 %v4564
        %v4575 = vunpack.c.1.s8 %v4564
        %v4576 = vunpack.c.2.s8 %v4564
        %v4577 = vunpack.c.3.s8 %v4564
        %v4578 = vunpack.c.0.s8 %v4565
        %v4579 = vunpack.c.1.s8 %v4565
        %v4580 = vunpack.c.2.s8 %v4565
        %v4581 = vunpack.c.3.s8 %v4565
        %v4582 = vcvt.s32.f32 %v4566
        %v4583 = vcvt.s32.f32 %v4567
        %v4584 = vcvt.s32.f32 %v4568
        %v4585 = vcvt.s32.f32 %v4569
        %v4586 = vcvt.s32.f32 %v4570
        %v4587 = vcvt.s32.f32 %v4571
        %v4588 = vcvt.s32.f32 %v4572
        %v4589 = vcvt.s32.f32 %v4573
        %v4590 = vcvt.s32.f32 %v4574
        %v4591 = vcvt.s32.f32 %v4575
        %v4592 = vcvt.s32.f32 %v4576
        %v4593 = vcvt.s32.f32 %v4577
        %v4594 = vcvt.s32.f32 %v4578
        %v4595 = vcvt.s32.f32 %v4579
        %v4596 = vcvt.s32.f32 %v4580
        %v4597 = vcvt.s32.f32 %v4581
        %v4598 = vld [vmem:[%s3 + $0x40] sm:$0xff]
        %v4599 = vld [vmem:[%s3 + $0xcc] sm:$0x1]
        %v4600 = vperm.slane %v4599, 0
        %v4602 = vsel %vm342, %v4545, 0
        %v4605 = vsel %vm342, %v4546, 0
        %v4608 = vsel %vm342, %v4547, 0
        %v4611 = vsel %vm342, %v4548, 0
        %v4614 = vsel %vm342, %v4549, 0
        %v4617 = vsel %vm342, %v4550, 0
        %v4620 = vsel %vm342, %v4551, 0
        %v4623 = vsel %vm342, %v4552, 0
        %v4626 = vsel %vm342, %v4553, 0
        %v4629 = vsel %vm342, %v4554, 0
        %v4632 = vsel %vm342, %v4555, 0
        %v4635 = vsel %vm342, %v4556, 0
        %v4638 = vsel %vm342, %v4557, 0
        %v4641 = vsel %vm342, %v4558, 0
        %v4644 = vsel %vm342, %v4559, 0
        %v4647 = vsel %vm342, %v4560, 0
        %4649 = vmatpush.msra.mxu0 0.0
        %4650 = vmatpush.msra.mxu0 0.0
        %4651 = vmatpush.msra.mxu0 0.0
        %4652 = vmatpush.msra.mxu0 0.0
        %4653 = vmatpush.msra.mxu0 0.0
        %4654 = vmatpush.msra.mxu0 0.0
        %4655 = vmatpush.msra.mxu0 0.0
        %4656 = vmatpush.msra.mxu0 0.0
        %4657 = vmatpush.msra.mxu0 0.0
        %4658 = vmatpush.msra.mxu0 0.0
        %4659 = vmatpush.msra.mxu0 0.0
        %4660 = vmatpush.msra.mxu0 0.0
        %4661 = vmatpush.msra.mxu0 0.0
        %4662 = vmatpush.msra.mxu0 0.0
        %4663 = vmatpush.msra.mxu0 0.0
        %4664 = vmatpush.msra.mxu0 %v4598
        %4665 = vmatmul.f32.gmra.mxu0 %v4602
        %v4666 = vpop.f32.mrf.mxu0
        %v4667 = vadd.f32 %v4600, %v4666
        %4668 = vmatmul.f32.gmra.mxu0 %v4605
        %v4669 = vpop.f32.mrf.mxu0
        %v4670 = vadd.f32 %v4600, %v4669
        %4671 = vmatmul.f32.gmra.mxu0 %v4608
        %v4672 = vpop.f32.mrf.mxu0
        %v4673 = vadd.f32 %v4600, %v4672
        %4674 = vmatmul.f32.gmra.mxu0 %v4611
        %v4675 = vpop.f32.mrf.mxu0
        %v4676 = vadd.f32 %v4600, %v4675
        %4677 = vmatmul.f32.gmra.mxu0 %v4614
        %v4678 = vpop.f32.mrf.mxu0
        %v4679 = vadd.f32 %v4600, %v4678
        %4680 = vmatmul.f32.gmra.mxu0 %v4617
        %v4681 = vpop.f32.mrf.mxu0
        %v4682 = vadd.f32 %v4600, %v4681
        %4683 = vmatmul.f32.gmra.mxu0 %v4620
        %v4684 = vpop.f32.mrf.mxu0
        %v4685 = vadd.f32 %v4600, %v4684
        %4686 = vmatmul.f32.gmra.mxu0 %v4623
        %v4687 = vpop.f32.mrf.mxu0
        %v4688 = vadd.f32 %v4600, %v4687
        %4689 = vmatmul.f32.gmra.mxu0 %v4626
        %v4690 = vpop.f32.mrf.mxu0
        %v4691 = vadd.f32 %v4600, %v4690
        %4692 = vmatmul.f32.gmra.mxu0 %v4629
        %v4693 = vpop.f32.mrf.mxu0
        %v4694 = vadd.f32 %v4600, %v4693
        %4695 = vmatmul.f32.gmra.mxu0 %v4632
        %v4696 = vpop.f32.mrf.mxu0
        %v4697 = vadd.f32 %v4600, %v4696
        %4698 = vmatmul.f32.gmra.mxu0 %v4635
        %v4699 = vpop.f32.mrf.mxu0
        %v4700 = vadd.f32 %v4600, %v4699
        %4701 = vmatmul.f32.gmra.mxu0 %v4638
        %v4702 = vpop.f32.mrf.mxu0
        %v4703 = vadd.f32 %v4600, %v4702
        %4704 = vmatmul.f32.gmra.mxu0 %v4641
        %v4705 = vpop.f32.mrf.mxu0
        %v4706 = vadd.f32 %v4600, %v4705
        %4707 = vmatmul.f32.gmra.mxu0 %v4644
        %v4708 = vpop.f32.mrf.mxu0
        %v4709 = vadd.f32 %v4600, %v4708
        %4710 = vmatmul.f32.gmra.mxu0 %v4647
        %v4711 = vpop.f32.mrf.mxu0
        %v4712 = vadd.f32 %v4600, %v4711
        %4713 = vdwg.mxu0
        %v4714 = vmax.f32 %v4667, 0.0
        %v4715 = vmax.f32 %v4670, 0.0
        %v4716 = vmax.f32 %v4673, 0.0
        %v4717 = vmax.f32 %v4676, 0.0
        %v4718 = vmax.f32 %v4679, 0.0
        %v4719 = vmax.f32 %v4682, 0.0
        %v4720 = vmax.f32 %v4685, 0.0
        %v4721 = vmax.f32 %v4688, 0.0
        %v4722 = vmax.f32 %v4691, 0.0
        %v4723 = vmax.f32 %v4694, 0.0
        %v4724 = vmax.f32 %v4697, 0.0
        %v4725 = vmax.f32 %v4700, 0.0
        %v4726 = vmax.f32 %v4703, 0.0
        %v4727 = vmax.f32 %v4706, 0.0
        %v4728 = vmax.f32 %v4709, 0.0
        %v4729 = vmax.f32 %v4712, 0.0
        %4730 = vmatpush.msra.mxu0 %v4729
        %4731 = vmatpush.msra.mxu0 %v4728
        %4732 = vmatpush.msra.mxu0 %v4727
        %4733 = vmatpush.msra.mxu0 %v4726
        %4734 = vmatpush.msra.mxu0 %v4725
        %4735 = vmatpush.msra.mxu0 %v4724
        %4736 = vmatpush.msra.mxu0 %v4723
        %4737 = vmatpush.msra.mxu0 %v4722
        %4738 = vmatpush.msra.mxu0 %v4721
        %4739 = vmatpush.msra.mxu0 %v4720
        %4740 = vmatpush.msra.mxu0 %v4719
        %4741 = vmatpush.msra.mxu0 %v4718
        %4742 = vmatpush.msra.mxu0 %v4717
        %4743 = vmatpush.msra.mxu0 %v4716
        %4744 = vmatpush.msra.mxu0 %v4715
        %4745 = vmatpush.msra.mxu0 %v4714
        %4746 = vmatmul.f32.gmra.mxu0 %v4582
        %v4747 = vpop.f32.mrf.mxu0
        %v4748 = vadd.f32 0.0, %v4747
        %4749 = vmatmul.f32.gmra.mxu0 %v4583
        %v4750 = vpop.f32.mrf.mxu0
        %v4751 = vadd.f32 0.0, %v4750
        %4752 = vmatmul.f32.gmra.mxu0 %v4584
        %v4753 = vpop.f32.mrf.mxu0
        %v4754 = vadd.f32 0.0, %v4753
        %4755 = vmatmul.f32.gmra.mxu0 %v4585
        %v4756 = vpop.f32.mrf.mxu0
        %v4757 = vadd.f32 0.0, %v4756
        %4758 = vmatmul.f32.gmra.mxu0 %v4586
        %v4759 = vpop.f32.mrf.mxu0
        %v4760 = vadd.f32 0.0, %v4759
        %4761 = vmatmul.f32.gmra.mxu0 %v4587
        %v4762 = vpop.f32.mrf.mxu0
        %v4763 = vadd.f32 0.0, %v4762
        %4764 = vmatmul.f32.gmra.mxu0 %v4588
        %v4765 = vpop.f32.mrf.mxu0
        %v4766 = vadd.f32 0.0, %v4765
        %4767 = vmatmul.f32.gmra.mxu0 %v4589
        %v4768 = vpop.f32.mrf.mxu0
        %v4769 = vadd.f32 0.0, %v4768
        %4770 = vmatmul.f32.gmra.mxu0 %v4590
        %v4771 = vpop.f32.mrf.mxu0
        %v4772 = vadd.f32 0.0, %v4771
        %4773 = vmatmul.f32.gmra.mxu0 %v4591
        %v4774 = vpop.f32.mrf.mxu0
        %v4775 = vadd.f32 0.0, %v4774
        %4776 = vmatmul.f32.gmra.mxu0 %v4592
        %v4777 = vpop.f32.mrf.mxu0
        %v4778 = vadd.f32 0.0, %v4777
        %4779 = vmatmul.f32.gmra.mxu0 %v4593
        %v4780 = vpop.f32.mrf.mxu0
        %v4781 = vadd.f32 0.0, %v4780
        %4782 = vmatmul.f32.gmra.mxu0 %v4594
        %v4783 = vpop.f32.mrf.mxu0
        %v4784 = vadd.f32 0.0, %v4783
        %4785 = vmatmul.f32.gmra.mxu0 %v4595
        %v4786 = vpop.f32.mrf.mxu0
        %v4787 = vadd.f32 0.0, %v4786
        %4788 = vmatmul.f32.gmra.mxu0 %v4596
        %v4789 = vpop.f32.mrf.mxu0
        %v4790 = vadd.f32 0.0, %v4789
        %4791 = vmatmul.f32.gmra.mxu0 %v4597
        %v4792 = vpop.f32.mrf.mxu0
        %v4793 = vadd.f32 0.0, %v4792
        %4794 = vdwg.mxu0
        %v4795 = vld [vmem:[%s3 + $0x20] sm:$0xff]
        %v4796 = vld [vmem:[%s3 + $0x28] sm:$0xff]
        %v4797 = vld [vmem:[%s3 + $0x30] sm:$0xff]
        %v4798 = vld [vmem:[%s3 + $0x38] sm:$0xff]
        %4803 = vrot.lane.b32.xlu0 %v4795, 96
        %v4804 = vpop.permute.xlu0 %4803
        %4805 = vrot.lane.b32.xlu0 %v4796, 96
        %v4806 = vpop.permute.xlu0 %4805
        %4807 = vrot.lane.b32.xlu0 %v4797, 96
        %v4808 = vpop.permute.xlu0 %4807
        %4809 = vrot.lane.b32.xlu0 %v4798, 96
        %v4810 = vpop.permute.xlu0 %4809
        %v4816 = vsel %vm557, %v4714, 0
        %v4819 = vsel %vm557, %v4715, 0
        %v4822 = vsel %vm557, %v4716, 0
        %v4825 = vsel %vm557, %v4717, 0
        %v4828 = vsel %vm557, %v4718, 0
        %v4831 = vsel %vm557, %v4719, 0
        %v4834 = vsel %vm557, %v4720, 0
        %v4837 = vsel %vm557, %v4721, 0
        %v4840 = vsel %vm557, %v4722, 0
        %v4843 = vsel %vm557, %v4723, 0
        %v4846 = vsel %vm557, %v4724, 0
        %v4849 = vsel %vm557, %v4725, 0
        %v4852 = vsel %vm557, %v4726, 0
        %v4855 = vsel %vm557, %v4727, 0
        %v4858 = vsel %vm557, %v4728, 0
        %v4861 = vsel %vm557, %v4729, 0
        %4863 = vmatpush.msra.mxu0 0.0
        %4864 = vmatpush.msra.mxu0 0.0
        %4865 = vmatpush.msra.mxu0 0.0
        %4866 = vmatpush.msra.mxu0 0.0
        %4867 = vmatpush.msra.mxu0 0.0
        %4868 = vmatpush.msra.mxu0 0.0
        %4869 = vmatpush.msra.mxu0 0.0
        %4870 = vmatpush.msra.mxu0 0.0
        %4871 = vmatpush.msra.mxu0 0.0
        %4872 = vmatpush.msra.mxu0 0.0
        %4873 = vmatpush.msra.mxu0 0.0
        %4874 = vmatpush.msra.mxu0 0.0
        %4875 = vmatpush.msra.mxu0 %v4810
        %4876 = vmatpush.msra.mxu0 %v4808
        %4877 = vmatpush.msra.mxu0 %v4806
        %4878 = vmatpush.msra.mxu0 %v4804
        %4879 = vmatmul.f32.gmra.mxu0 %v4816
        %v4880 = vpop.f32.mrf.mxu0
        %v4881 = vadd.f32 0.0, %v4880
        %4882 = vmatmul.f32.gmra.mxu0 %v4819
        %v4883 = vpop.f32.mrf.mxu0
        %v4884 = vadd.f32 0.0, %v4883
        %4885 = vmatmul.f32.gmra.mxu0 %v4822
        %v4886 = vpop.f32.mrf.mxu0
        %v4887 = vadd.f32 0.0, %v4886
        %4888 = vmatmul.f32.gmra.mxu0 %v4825
        %v4889 = vpop.f32.mrf.mxu0
        %v4890 = vadd.f32 0.0, %v4889
        %4891 = vmatmul.f32.gmra.mxu0 %v4828
        %v4892 = vpop.f32.mrf.mxu0
        %v4893 = vadd.f32 0.0, %v4892
        %4894 = vmatmul.f32.gmra.mxu0 %v4831
        %v4895 = vpop.f32.mrf.mxu0
        %v4896 = vadd.f32 0.0, %v4895
        %4897 = vmatmul.f32.gmra.mxu0 %v4834
        %v4898 = vpop.f32.mrf.mxu0
        %v4899 = vadd.f32 0.0, %v4898
        %4900 = vmatmul.f32.gmra.mxu0 %v4837
        %v4901 = vpop.f32.mrf.mxu0
        %v4902 = vadd.f32 0.0, %v4901
        %4903 = vmatmul.f32.gmra.mxu0 %v4840
        %v4904 = vpop.f32.mrf.mxu0
        %v4905 = vadd.f32 0.0, %v4904
        %4906 = vmatmul.f32.gmra.mxu0 %v4843
        %v4907 = vpop.f32.mrf.mxu0
        %v4908 = vadd.f32 0.0, %v4907
        %4909 = vmatmul.f32.gmra.mxu0 %v4846
        %v4910 = vpop.f32.mrf.mxu0
        %v4911 = vadd.f32 0.0, %v4910
        %4912 = vmatmul.f32.gmra.mxu0 %v4849
        %v4913 = vpop.f32.mrf.mxu0
        %v4914 = vadd.f32 0.0, %v4913
        %4915 = vmatmul.f32.gmra.mxu0 %v4852
        %v4916 = vpop.f32.mrf.mxu0
        %v4917 = vadd.f32 0.0, %v4916
        %4918 = vmatmul.f32.gmra.mxu0 %v4855
        %v4919 = vpop.f32.mrf.mxu0
        %v4920 = vadd.f32 0.0, %v4919
        %4921 = vmatmul.f32.gmra.mxu0 %v4858
        %v4922 = vpop.f32.mrf.mxu0
        %v4923 = vadd.f32 0.0, %v4922
        %4924 = vmatmul.f32.gmra.mxu0 %v4861
        %v4925 = vpop.f32.mrf.mxu0
        %v4926 = vadd.f32 0.0, %v4925
        %4927 = vdwg.mxu0
        %v4929 = vsel %vm557, %v4748, 0
        %v4932 = vsel %vm557, %v4751, 0
        %v4935 = vsel %vm557, %v4754, 0
        %v4938 = vsel %vm557, %v4757, 0
        %v4941 = vsel %vm557, %v4760, 0
        %v4944 = vsel %vm557, %v4763, 0
        %v4947 = vsel %vm557, %v4766, 0
        %v4950 = vsel %vm557, %v4769, 0
        %v4953 = vsel %vm557, %v4772, 0
        %v4956 = vsel %vm557, %v4775, 0
        %v4959 = vsel %vm557, %v4778, 0
        %v4962 = vsel %vm557, %v4781, 0
        %v4965 = vsel %vm557, %v4784, 0
        %v4968 = vsel %vm557, %v4787, 0
        %v4971 = vsel %vm557, %v4790, 0
        %v4974 = vsel %vm557, %v4793, 0
        %4976 = vmatpush.msra.mxu0 0.0
        %4977 = vmatpush.msra.mxu0 0.0
        %4978 = vmatpush.msra.mxu0 0.0
        %4979 = vmatpush.msra.mxu0 0.0
        %4980 = vmatpush.msra.mxu0 0.0
        %4981 = vmatpush.msra.mxu0 0.0
        %4982 = vmatpush.msra.mxu0 0.0
        %4983 = vmatpush.msra.mxu0 0.0
        %4984 = vmatpush.msra.mxu0 0.0
        %4985 = vmatpush.msra.mxu0 0.0
        %4986 = vmatpush.msra.mxu0 0.0
        %4987 = vmatpush.msra.mxu0 0.0
        %4988 = vmatpush.msra.mxu0 %v4798
        %4989 = vmatpush.msra.mxu0 %v4797
        %4990 = vmatpush.msra.mxu0 %v4796
        %4991 = vmatpush.msra.mxu0 %v4795
        %4992 = vmatmul.f32.gmra.mxu0 %v4929
        %v4993 = vpop.f32.mrf.mxu0
        %v4994 = vadd.f32 %v4881, %v4993
        %4995 = vmatmul.f32.gmra.mxu0 %v4932
        %v4996 = vpop.f32.mrf.mxu0
        %v4997 = vadd.f32 %v4884, %v4996
        %4998 = vmatmul.f32.gmra.mxu0 %v4935
        %v4999 = vpop.f32.mrf.mxu0
        %v5000 = vadd.f32 %v4887, %v4999
        %5001 = vmatmul.f32.gmra.mxu0 %v4938
        %v5002 = vpop.f32.mrf.mxu0
        %v5003 = vadd.f32 %v4890, %v5002
        %5004 = vmatmul.f32.gmra.mxu0 %v4941
        %v5005 = vpop.f32.mrf.mxu0
        %v5006 = vadd.f32 %v4893, %v5005
        %5007 = vmatmul.f32.gmra.mxu0 %v4944
        %v5008 = vpop.f32.mrf.mxu0
        %v5009 = vadd.f32 %v4896, %v5008
        %5010 = vmatmul.f32.gmra.mxu0 %v4947
        %v5011 = vpop.f32.mrf.mxu0
        %v5012 = vadd.f32 %v4899, %v5011
        %5013 = vmatmul.f32.gmra.mxu0 %v4950
        %v5014 = vpop.f32.mrf.mxu0
        %v5015 = vadd.f32 %v4902, %v5014
        %5016 = vmatmul.f32.gmra.mxu0 %v4953
        %v5017 = vpop.f32.mrf.mxu0
        %v5018 = vadd.f32 %v4905, %v5017
        %5019 = vmatmul.f32.gmra.mxu0 %v4956
        %v5020 = vpop.f32.mrf.mxu0
        %v5021 = vadd.f32 %v4908, %v5020
        %5022 = vmatmul.f32.gmra.mxu0 %v4959
        %v5023 = vpop.f32.mrf.mxu0
        %v5024 = vadd.f32 %v4911, %v5023
        %5025 = vmatmul.f32.gmra.mxu0 %v4962
        %v5026 = vpop.f32.mrf.mxu0
        %v5027 = vadd.f32 %v4914, %v5026
        %5028 = vmatmul.f32.gmra.mxu0 %v4965
        %v5029 = vpop.f32.mrf.mxu0
        %v5030 = vadd.f32 %v4917, %v5029
        %5031 = vmatmul.f32.gmra.mxu0 %v4968
        %v5032 = vpop.f32.mrf.mxu0
        %v5033 = vadd.f32 %v4920, %v5032
        %5034 = vmatmul.f32.gmra.mxu0 %v4971
        %v5035 = vpop.f32.mrf.mxu0
        %v5036 = vadd.f32 %v4923, %v5035
        %5037 = vmatmul.f32.gmra.mxu0 %v4974
        %v5038 = vpop.f32.mrf.mxu0
        %v5039 = vadd.f32 %v4926, %v5038
        %5040 = vdwg.mxu0
        %5042 = vrot.lane.b32.xlu0 %v4600, 64
        %v5043 = vpop.permute.xlu0 %5042
        %v5045 = vadd.f32 %v4994, %v5043
        %v5046 = vadd.f32 %v4997, %v5043
        %v5047 = vadd.f32 %v5000, %v5043
        %v5048 = vadd.f32 %v5003, %v5043
        %v5049 = vadd.f32 %v5006, %v5043
        %v5050 = vadd.f32 %v5009, %v5043
        %v5051 = vadd.f32 %v5012, %v5043
        %v5052 = vadd.f32 %v5015, %v5043
        %v5053 = vadd.f32 %v5018, %v5043
        %v5054 = vadd.f32 %v5021, %v5043
        %v5055 = vadd.f32 %v5024, %v5043
        %v5056 = vadd.f32 %v5027, %v5043
        %v5057 = vadd.f32 %v5030, %v5043
        %v5058 = vadd.f32 %v5033, %v5043
        %v5059 = vadd.f32 %v5036, %v5043
        %v5060 = vadd.f32 %v5039, %v5043
        %v5061 = vmax.f32 %v5045, 0.0
        %v5062 = vmax.f32 %v5046, 0.0
        %v5063 = vmax.f32 %v5047, 0.0
        %v5064 = vmax.f32 %v5048, 0.0
        %v5065 = vmax.f32 %v5049, 0.0
        %v5066 = vmax.f32 %v5050, 0.0
        %v5067 = vmax.f32 %v5051, 0.0
        %v5068 = vmax.f32 %v5052, 0.0
        %v5069 = vmax.f32 %v5053, 0.0
        %v5070 = vmax.f32 %v5054, 0.0
        %v5071 = vmax.f32 %v5055, 0.0
        %v5072 = vmax.f32 %v5056, 0.0
        %v5073 = vmax.f32 %v5057, 0.0
        %v5074 = vmax.f32 %v5058, 0.0
        %v5075 = vmax.f32 %v5059, 0.0
        %v5076 = vmax.f32 %v5060, 0.0
        %vm5077 = vcmp.gt.f32.partialorder %v4582, 0.0
        %vm5078 = vcmp.gt.f32.partialorder %v4583, 0.0
        %vm5079 = vcmp.gt.f32.partialorder %v4584, 0.0
        %vm5080 = vcmp.gt.f32.partialorder %v4585, 0.0
        %vm5081 = vcmp.gt.f32.partialorder %v4586, 0.0
        %vm5082 = vcmp.gt.f32.partialorder %v4587, 0.0
        %vm5083 = vcmp.gt.f32.partialorder %v4588, 0.0
        %vm5084 = vcmp.gt.f32.partialorder %v4589, 0.0
        %vm5085 = vcmp.gt.f32.partialorder %v4590, 0.0
        %vm5086 = vcmp.gt.f32.partialorder %v4591, 0.0
        %vm5087 = vcmp.gt.f32.partialorder %v4592, 0.0
        %vm5088 = vcmp.gt.f32.partialorder %v4593, 0.0
        %vm5089 = vcmp.gt.f32.partialorder %v4594, 0.0
        %vm5090 = vcmp.gt.f32.partialorder %v4595, 0.0
        %vm5091 = vcmp.gt.f32.partialorder %v4596, 0.0
        %vm5092 = vcmp.gt.f32.partialorder %v4597, 0.0
        %vm5093 = vmor %vm5077, %vm271
        %vm5094 = vmor %vm5078, %vm272
        %vm5095 = vmor %vm5079, %vm273
        %vm5096 = vmor %vm5080, %vm274
        %vm5097 = vmor %vm5081, %vm275
        %vm5098 = vmor %vm5082, %vm276
        %vm5099 = vmor %vm5083, %vm277
        %vm5100 = vmor %vm5084, %vm278
        %vm5101 = vmor %vm5085, %vm279
        %vm5102 = vmor %vm5086, %vm280
        %vm5103 = vmor %vm5087, %vm281
        %vm5104 = vmor %vm5088, %vm282
        %vm5105 = vmor %vm5089, %vm283
        %vm5106 = vmor %vm5090, %vm284
        %vm5107 = vmor %vm5091, %vm285
        %vm5108 = vmor %vm5092, %vm286
        %v5109 = vsel %vm5093, 0.0, -1e+30
        %v5110 = vsel %vm5094, 0.0, -1e+30
        %v5111 = vsel %vm5095, 0.0, -1e+30
        %v5112 = vsel %vm5096, 0.0, -1e+30
        %v5113 = vsel %vm5097, 0.0, -1e+30
        %v5114 = vsel %vm5098, 0.0, -1e+30
        %v5115 = vsel %vm5099, 0.0, -1e+30
        %v5116 = vsel %vm5100, 0.0, -1e+30
        %v5117 = vsel %vm5101, 0.0, -1e+30
        %v5118 = vsel %vm5102, 0.0, -1e+30
        %v5119 = vsel %vm5103, 0.0, -1e+30
        %v5120 = vsel %vm5104, 0.0, -1e+30
        %v5121 = vsel %vm5105, 0.0, -1e+30
        %v5122 = vsel %vm5106, 0.0, -1e+30
        %v5123 = vsel %vm5107, 0.0, -1e+30
        %v5124 = vsel %vm5108, 0.0, -1e+30
        %v5125 = vld [vmem:[%s3] sm:$0xff]
        %v5126 = vld [vmem:[%s3 + $0x8] sm:$0xff]
        %v5127 = vld [vmem:[%s3 + $0x10] sm:$0xff]
        %v5128 = vld [vmem:[%s3 + $0x18] sm:$0xff]
        %v5130 = vsel %vm557, %v5061, 0
        %v5133 = vsel %vm557, %v5062, 0
        %v5136 = vsel %vm557, %v5063, 0
        %v5139 = vsel %vm557, %v5064, 0
        %v5142 = vsel %vm557, %v5065, 0
        %v5145 = vsel %vm557, %v5066, 0
        %v5148 = vsel %vm557, %v5067, 0
        %v5151 = vsel %vm557, %v5068, 0
        %v5154 = vsel %vm557, %v5069, 0
        %v5157 = vsel %vm557, %v5070, 0
        %v5160 = vsel %vm557, %v5071, 0
        %v5163 = vsel %vm557, %v5072, 0
        %v5166 = vsel %vm557, %v5073, 0
        %v5169 = vsel %vm557, %v5074, 0
        %v5172 = vsel %vm557, %v5075, 0
        %v5175 = vsel %vm557, %v5076, 0
        %5177 = vmatpush.msra.mxu0 0.0
        %5178 = vmatpush.msra.mxu0 0.0
        %5179 = vmatpush.msra.mxu0 0.0
        %5180 = vmatpush.msra.mxu0 0.0
        %5181 = vmatpush.msra.mxu0 0.0
        %5182 = vmatpush.msra.mxu0 0.0
        %5183 = vmatpush.msra.mxu0 0.0
        %5184 = vmatpush.msra.mxu0 0.0
        %5185 = vmatpush.msra.mxu0 0.0
        %5186 = vmatpush.msra.mxu0 0.0
        %5187 = vmatpush.msra.mxu0 0.0
        %5188 = vmatpush.msra.mxu0 0.0
        %5189 = vmatpush.msra.mxu0 %v5128
        %5190 = vmatpush.msra.mxu0 %v5127
        %5191 = vmatpush.msra.mxu0 %v5126
        %5192 = vmatpush.msra.mxu0 %v5125
        %5193 = vmatmul.f32.gmra.mxu0 %v5130
        %v5194 = vpop.f32.mrf.mxu0
        %v5195 = vadd.f32 0.0, %v5194
        %5196 = vmatmul.f32.gmra.mxu0 %v5133
        %v5197 = vpop.f32.mrf.mxu0
        %v5198 = vadd.f32 0.0, %v5197
        %5199 = vmatmul.f32.gmra.mxu0 %v5136
        %v5200 = vpop.f32.mrf.mxu0
        %v5201 = vadd.f32 0.0, %v5200
        %5202 = vmatmul.f32.gmra.mxu0 %v5139
        %v5203 = vpop.f32.mrf.mxu0
        %v5204 = vadd.f32 0.0, %v5203
        %5205 = vmatmul.f32.gmra.mxu0 %v5142
        %v5206 = vpop.f32.mrf.mxu0
        %v5207 = vadd.f32 0.0, %v5206
        %5208 = vmatmul.f32.gmra.mxu0 %v5145
        %v5209 = vpop.f32.mrf.mxu0
        %v5210 = vadd.f32 0.0, %v5209
        %5211 = vmatmul.f32.gmra.mxu0 %v5148
        %v5212 = vpop.f32.mrf.mxu0
        %v5213 = vadd.f32 0.0, %v5212
        %5214 = vmatmul.f32.gmra.mxu0 %v5151
        %v5215 = vpop.f32.mrf.mxu0
        %v5216 = vadd.f32 0.0, %v5215
        %5217 = vmatmul.f32.gmra.mxu0 %v5154
        %v5218 = vpop.f32.mrf.mxu0
        %v5219 = vadd.f32 0.0, %v5218
        %5220 = vmatmul.f32.gmra.mxu0 %v5157
        %v5221 = vpop.f32.mrf.mxu0
        %v5222 = vadd.f32 0.0, %v5221
        %5223 = vmatmul.f32.gmra.mxu0 %v5160
        %v5224 = vpop.f32.mrf.mxu0
        %v5225 = vadd.f32 0.0, %v5224
        %5226 = vmatmul.f32.gmra.mxu0 %v5163
        %v5227 = vpop.f32.mrf.mxu0
        %v5228 = vadd.f32 0.0, %v5227
        %5229 = vmatmul.f32.gmra.mxu0 %v5166
        %v5230 = vpop.f32.mrf.mxu0
        %v5231 = vadd.f32 0.0, %v5230
        %5232 = vmatmul.f32.gmra.mxu0 %v5169
        %v5233 = vpop.f32.mrf.mxu0
        %v5234 = vadd.f32 0.0, %v5233
        %5235 = vmatmul.f32.gmra.mxu0 %v5172
        %v5236 = vpop.f32.mrf.mxu0
        %v5237 = vadd.f32 0.0, %v5236
        %5238 = vmatmul.f32.gmra.mxu0 %v5175
        %v5239 = vpop.f32.mrf.mxu0
        %v5240 = vadd.f32 0.0, %v5239
        %5241 = vdwg.mxu0
        %v5242 = vld [vmem:[%s3 + $0x48] sm:$0xff]
        %v5243 = vld [vmem:[%s3 + $0x50] sm:$0xff]
        %v5244 = vld [vmem:[%s3 + $0x58] sm:$0xff]
        %v5245 = vld [vmem:[%s3 + $0x60] sm:$0xff]
        %5246 = vmatpush.msra.mxu0 0.0
        %5247 = vmatpush.msra.mxu0 0.0
        %5248 = vmatpush.msra.mxu0 0.0
        %5249 = vmatpush.msra.mxu0 0.0
        %5250 = vmatpush.msra.mxu0 0.0
        %5251 = vmatpush.msra.mxu0 0.0
        %5252 = vmatpush.msra.mxu0 0.0
        %5253 = vmatpush.msra.mxu0 0.0
        %5254 = vmatpush.msra.mxu0 0.0
        %5255 = vmatpush.msra.mxu0 0.0
        %5256 = vmatpush.msra.mxu0 0.0
        %5257 = vmatpush.msra.mxu0 0.0
        %5258 = vmatpush.msra.mxu0 %v5245
        %5259 = vmatpush.msra.mxu0 %v5244
        %5260 = vmatpush.msra.mxu0 %v5243
        %5261 = vmatpush.msra.mxu0 %v5242
        %5262 = vmatmul.f32.gmra.mxu0 %v5130
        %v5263 = vpop.f32.mrf.mxu0
        %v5264 = vadd.f32 0.0, %v5263
        %5265 = vmatmul.f32.gmra.mxu0 %v5133
        %v5266 = vpop.f32.mrf.mxu0
        %v5267 = vadd.f32 0.0, %v5266
        %5268 = vmatmul.f32.gmra.mxu0 %v5136
        %v5269 = vpop.f32.mrf.mxu0
        %v5270 = vadd.f32 0.0, %v5269
        %5271 = vmatmul.f32.gmra.mxu0 %v5139
        %v5272 = vpop.f32.mrf.mxu0
        %v5273 = vadd.f32 0.0, %v5272
        %5274 = vmatmul.f32.gmra.mxu0 %v5142
        %v5275 = vpop.f32.mrf.mxu0
        %v5276 = vadd.f32 0.0, %v5275
        %5277 = vmatmul.f32.gmra.mxu0 %v5145
        %v5278 = vpop.f32.mrf.mxu0
        %v5279 = vadd.f32 0.0, %v5278
        %5280 = vmatmul.f32.gmra.mxu0 %v5148
        %v5281 = vpop.f32.mrf.mxu0
        %v5282 = vadd.f32 0.0, %v5281
        %5283 = vmatmul.f32.gmra.mxu0 %v5151
        %v5284 = vpop.f32.mrf.mxu0
        %v5285 = vadd.f32 0.0, %v5284
        %5286 = vmatmul.f32.gmra.mxu0 %v5154
        %v5287 = vpop.f32.mrf.mxu0
        %v5288 = vadd.f32 0.0, %v5287
        %5289 = vmatmul.f32.gmra.mxu0 %v5157
        %v5290 = vpop.f32.mrf.mxu0
        %v5291 = vadd.f32 0.0, %v5290
        %5292 = vmatmul.f32.gmra.mxu0 %v5160
        %v5293 = vpop.f32.mrf.mxu0
        %v5294 = vadd.f32 0.0, %v5293
        %5295 = vmatmul.f32.gmra.mxu0 %v5163
        %v5296 = vpop.f32.mrf.mxu0
        %v5297 = vadd.f32 0.0, %v5296
        %5298 = vmatmul.f32.gmra.mxu0 %v5166
        %v5299 = vpop.f32.mrf.mxu0
        %v5300 = vadd.f32 0.0, %v5299
        %5301 = vmatmul.f32.gmra.mxu0 %v5169
        %v5302 = vpop.f32.mrf.mxu0
        %v5303 = vadd.f32 0.0, %v5302
        %5304 = vmatmul.f32.gmra.mxu0 %v5172
        %v5305 = vpop.f32.mrf.mxu0
        %v5306 = vadd.f32 0.0, %v5305
        %5307 = vmatmul.f32.gmra.mxu0 %v5175
        %v5308 = vpop.f32.mrf.mxu0
        %v5309 = vadd.f32 0.0, %v5308
        %5310 = vdwg.mxu0
        %v5311 = vld [vmem:[%s3 + $0xc8] sm:$0xf]
        %v5313 = vsel %vm557, %v5311, 0
        %5315 = vmatpush.xpose.msra.mxu0 %v5175
        %5316 = vmatpush.xpose.msra.mxu0 %v5172
        %5317 = vmatpush.xpose.msra.mxu0 %v5169
        %5318 = vmatpush.xpose.msra.mxu0 %v5166
        %5319 = vmatpush.xpose.msra.mxu0 %v5163
        %5320 = vmatpush.xpose.msra.mxu0 %v5160
        %5321 = vmatpush.xpose.msra.mxu0 %v5157
        %5322 = vmatpush.xpose.msra.mxu0 %v5154
        %5323 = vmatpush.xpose.msra.mxu0 %v5151
        %5324 = vmatpush.xpose.msra.mxu0 %v5148
        %5325 = vmatpush.xpose.msra.mxu0 %v5145
        %5326 = vmatpush.xpose.msra.mxu0 %v5142
        %5327 = vmatpush.xpose.msra.mxu0 %v5139
        %5328 = vmatpush.xpose.msra.mxu0 %v5136
        %5329 = vmatpush.xpose.msra.mxu0 %v5133
        %5330 = vmatpush.xpose.msra.mxu0 %v5130
        %5331 = vmatmul.f32.gmra.mxu0 %v5313
        %v5332 = vpop.f32.mrf.mxu0
        %v5333 = vadd.f32 0.0, %v5332
        %5334 = vdwg.mxu0
        %5336 = vset.pattern.permute.xlu0 0
        %5337 = vperm.xlu0 %5336, %v5264
        %v5338 = vpop.permute.xlu0 %5337
        %5341 = vset.pattern.permute.xlu0 0
        %5342 = vperm.xlu0 %5341, %v5267
        %v5343 = vpop.permute.xlu0 %5342
        %5346 = vset.pattern.permute.xlu0 0
        %5347 = vperm.xlu0 %5346, %v5270
        %v5348 = vpop.permute.xlu0 %5347
        %5351 = vset.pattern.permute.xlu0 0
        %5352 = vperm.xlu0 %5351, %v5273
        %v5353 = vpop.permute.xlu0 %5352
        %5356 = vset.pattern.permute.xlu0 0
        %5357 = vperm.xlu0 %5356, %v5276
        %v5358 = vpop.permute.xlu0 %5357
        %5361 = vset.pattern.permute.xlu0 0
        %5362 = vperm.xlu0 %5361, %v5279
        %v5363 = vpop.permute.xlu0 %5362
        %5366 = vset.pattern.permute.xlu0 0
        %5367 = vperm.xlu0 %5366, %v5282
        %v5368 = vpop.permute.xlu0 %5367
        %5371 = vset.pattern.permute.xlu0 0
        %5372 = vperm.xlu0 %5371, %v5285
        %v5373 = vpop.permute.xlu0 %5372
        %5376 = vset.pattern.permute.xlu0 0
        %5377 = vperm.xlu0 %5376, %v5288
        %v5378 = vpop.permute.xlu0 %5377
        %5381 = vset.pattern.permute.xlu0 0
        %5382 = vperm.xlu0 %5381, %v5291
        %v5383 = vpop.permute.xlu0 %5382
        %5386 = vset.pattern.permute.xlu0 0
        %5387 = vperm.xlu0 %5386, %v5294
        %v5388 = vpop.permute.xlu0 %5387
        %5391 = vset.pattern.permute.xlu0 0
        %5392 = vperm.xlu0 %5391, %v5297
        %v5393 = vpop.permute.xlu0 %5392
        %5396 = vset.pattern.permute.xlu0 0
        %5397 = vperm.xlu0 %5396, %v5300
        %v5398 = vpop.permute.xlu0 %5397
        %5401 = vset.pattern.permute.xlu0 0
        %5402 = vperm.xlu0 %5401, %v5303
        %v5403 = vpop.permute.xlu0 %5402
        %5406 = vset.pattern.permute.xlu0 0
        %5407 = vperm.xlu0 %5406, %v5306
        %v5408 = vpop.permute.xlu0 %5407
        %5411 = vset.pattern.permute.xlu0 0
        %5412 = vperm.xlu0 %5411, %v5309
        %v5413 = vpop.permute.xlu0 %5412
        %v5415 = vperm.slane %v5333, 0
        %v5416 = vadd.f32 %v5338, %v5415
        %v5417 = vadd.f32 %v5343, %v5415
        %v5418 = vadd.f32 %v5348, %v5415
        %v5419 = vadd.f32 %v5353, %v5415
        %v5420 = vadd.f32 %v5358, %v5415
        %v5421 = vadd.f32 %v5363, %v5415
        %v5422 = vadd.f32 %v5368, %v5415
        %v5423 = vadd.f32 %v5373, %v5415
        %v5424 = vadd.f32 %v5378, %v5415
        %v5425 = vadd.f32 %v5383, %v5415
        %v5426 = vadd.f32 %v5388, %v5415
        %v5427 = vadd.f32 %v5393, %v5415
        %v5428 = vadd.f32 %v5398, %v5415
        %v5429 = vadd.f32 %v5403, %v5415
        %v5430 = vadd.f32 %v5408, %v5415
        %v5431 = vadd.f32 %v5413, %v5415
        %v5432 = vmul.f32 %v5416, 0.2
        %v5433 = vmul.f32 %v5417, 0.2
        %v5434 = vmul.f32 %v5418, 0.2
        %v5435 = vmul.f32 %v5419, 0.2
        %v5436 = vmul.f32 %v5420, 0.2
        %v5437 = vmul.f32 %v5421, 0.2
        %v5438 = vmul.f32 %v5422, 0.2
        %v5439 = vmul.f32 %v5423, 0.2
        %v5440 = vmul.f32 %v5424, 0.2
        %v5441 = vmul.f32 %v5425, 0.2
        %v5442 = vmul.f32 %v5426, 0.2
        %v5443 = vmul.f32 %v5427, 0.2
        %v5444 = vmul.f32 %v5428, 0.2
        %v5445 = vmul.f32 %v5429, 0.2
        %v5446 = vmul.f32 %v5430, 0.2
        %v5447 = vmul.f32 %v5431, 0.2
        %v5448 = vmax.f32 %v5416, %v5432
        %v5449 = vmax.f32 %v5417, %v5433
        %v5450 = vmax.f32 %v5418, %v5434
        %v5451 = vmax.f32 %v5419, %v5435
        %v5452 = vmax.f32 %v5420, %v5436
        %v5453 = vmax.f32 %v5421, %v5437
        %v5454 = vmax.f32 %v5422, %v5438
        %v5455 = vmax.f32 %v5423, %v5439
        %v5456 = vmax.f32 %v5424, %v5440
        %v5457 = vmax.f32 %v5425, %v5441
        %v5458 = vmax.f32 %v5426, %v5442
        %v5459 = vmax.f32 %v5427, %v5443
        %v5460 = vmax.f32 %v5428, %v5444
        %v5461 = vmax.f32 %v5429, %v5445
        %v5462 = vmax.f32 %v5430, %v5446
        %v5463 = vmax.f32 %v5431, %v5447
        %v5464 = vadd.f32 %v5448, %v5109
        %v5465 = vadd.f32 %v5449, %v5110
        %v5466 = vadd.f32 %v5450, %v5111
        %v5467 = vadd.f32 %v5451, %v5112
        %v5468 = vadd.f32 %v5452, %v5113
        %v5469 = vadd.f32 %v5453, %v5114
        %v5470 = vadd.f32 %v5454, %v5115
        %v5471 = vadd.f32 %v5455, %v5116
        %v5472 = vadd.f32 %v5456, %v5117
        %v5473 = vadd.f32 %v5457, %v5118
        %v5474 = vadd.f32 %v5458, %v5119
        %v5475 = vadd.f32 %v5459, %v5120
        %v5476 = vadd.f32 %v5460, %v5121
        %v5477 = vadd.f32 %v5461, %v5122
        %v5478 = vadd.f32 %v5462, %v5123
        %v5479 = vadd.f32 %v5463, %v5124
        %5480 = vmax.xlane.f32.xlu0 %v5464
        %v5481 = vpop.xlane.xlu0 %5480
        %5482 = vmax.xlane.f32.xlu0 %v5465
        %v5483 = vpop.xlane.xlu0 %5482
        %5484 = vmax.xlane.f32.xlu0 %v5466
        %v5485 = vpop.xlane.xlu0 %5484
        %5486 = vmax.xlane.f32.xlu0 %v5467
        %v5487 = vpop.xlane.xlu0 %5486
        %5488 = vmax.xlane.f32.xlu0 %v5468
        %v5489 = vpop.xlane.xlu0 %5488
        %5490 = vmax.xlane.f32.xlu0 %v5469
        %v5491 = vpop.xlane.xlu0 %5490
        %5492 = vmax.xlane.f32.xlu0 %v5470
        %v5493 = vpop.xlane.xlu0 %5492
        %5494 = vmax.xlane.f32.xlu0 %v5471
        %v5495 = vpop.xlane.xlu0 %5494
        %5496 = vmax.xlane.f32.xlu0 %v5472
        %v5497 = vpop.xlane.xlu0 %5496
        %5498 = vmax.xlane.f32.xlu0 %v5473
        %v5499 = vpop.xlane.xlu0 %5498
        %5500 = vmax.xlane.f32.xlu0 %v5474
        %v5501 = vpop.xlane.xlu0 %5500
        %5502 = vmax.xlane.f32.xlu0 %v5475
        %v5503 = vpop.xlane.xlu0 %5502
        %5504 = vmax.xlane.f32.xlu0 %v5476
        %v5505 = vpop.xlane.xlu0 %5504
        %5506 = vmax.xlane.f32.xlu0 %v5477
        %v5507 = vpop.xlane.xlu0 %5506
        %5508 = vmax.xlane.f32.xlu0 %v5478
        %v5509 = vpop.xlane.xlu0 %5508
        %5510 = vmax.xlane.f32.xlu0 %v5479
        %v5511 = vpop.xlane.xlu0 %5510
        %v5512 = vsub.f32 %v5464, %v5481
        %v5513 = vsub.f32 %v5465, %v5483
        %v5514 = vsub.f32 %v5466, %v5485
        %v5515 = vsub.f32 %v5467, %v5487
        %v5516 = vsub.f32 %v5468, %v5489
        %v5517 = vsub.f32 %v5469, %v5491
        %v5518 = vsub.f32 %v5470, %v5493
        %v5519 = vsub.f32 %v5471, %v5495
        %v5520 = vsub.f32 %v5472, %v5497
        %v5521 = vsub.f32 %v5473, %v5499
        %v5522 = vsub.f32 %v5474, %v5501
        %v5523 = vsub.f32 %v5475, %v5503
        %v5524 = vsub.f32 %v5476, %v5505
        %v5525 = vsub.f32 %v5477, %v5507
        %v5526 = vsub.f32 %v5478, %v5509
        %v5527 = vsub.f32 %v5479, %v5511
        %v5528 = vmul.f32 %v5512, 1.442695
        %v5529 = vpow.pop %v5528
        %v5530 = vmul.f32 %v5513, 1.442695
        %v5531 = vpow.pop %v5530
        %v5532 = vmul.f32 %v5514, 1.442695
        %v5533 = vpow.pop %v5532
        %v5534 = vmul.f32 %v5515, 1.442695
        %v5535 = vpow.pop %v5534
        %v5536 = vmul.f32 %v5516, 1.442695
        %v5537 = vpow.pop %v5536
        %v5538 = vmul.f32 %v5517, 1.442695
        %v5539 = vpow.pop %v5538
        %v5540 = vmul.f32 %v5518, 1.442695
        %v5541 = vpow.pop %v5540
        %v5542 = vmul.f32 %v5519, 1.442695
        %v5543 = vpow.pop %v5542
        %v5544 = vmul.f32 %v5520, 1.442695
        %v5545 = vpow.pop %v5544
        %v5546 = vmul.f32 %v5521, 1.442695
        %v5547 = vpow.pop %v5546
        %v5548 = vmul.f32 %v5522, 1.442695
        %v5549 = vpow.pop %v5548
        %v5550 = vmul.f32 %v5523, 1.442695
        %v5551 = vpow.pop %v5550
        %v5552 = vmul.f32 %v5524, 1.442695
        %v5553 = vpow.pop %v5552
        %v5554 = vmul.f32 %v5525, 1.442695
        %v5555 = vpow.pop %v5554
        %v5556 = vmul.f32 %v5526, 1.442695
        %v5557 = vpow.pop %v5556
        %v5558 = vmul.f32 %v5527, 1.442695
        %v5559 = vpow.pop %v5558
        %5560 = vmatpush.msra.mxu0 1.0
        %5561 = vmatpush.msra.mxu0 1.0
        %5562 = vmatpush.msra.mxu0 1.0
        %5563 = vmatpush.msra.mxu0 1.0
        %5564 = vmatpush.msra.mxu0 1.0
        %5565 = vmatpush.msra.mxu0 1.0
        %5566 = vmatpush.msra.mxu0 1.0
        %5567 = vmatpush.msra.mxu0 1.0
        %5568 = vmatpush.msra.mxu0 1.0
        %5569 = vmatpush.msra.mxu0 1.0
        %5570 = vmatpush.msra.mxu0 1.0
        %5571 = vmatpush.msra.mxu0 1.0
        %5572 = vmatpush.msra.mxu0 1.0
        %5573 = vmatpush.msra.mxu0 1.0
        %5574 = vmatpush.msra.mxu0 1.0
        %5575 = vmatpush.msra.mxu0 1.0
        %5576 = vmatmul.f32.gmra.mxu0 %v5529
        %v5577 = vpop.f32.mrf.mxu0
        %v5578 = vadd.f32 0.0, %v5577
        %5579 = vmatmul.f32.gmra.mxu0 %v5531
        %v5580 = vpop.f32.mrf.mxu0
        %v5581 = vadd.f32 0.0, %v5580
        %5582 = vmatmul.f32.gmra.mxu0 %v5533
        %v5583 = vpop.f32.mrf.mxu0
        %v5584 = vadd.f32 0.0, %v5583
        %5585 = vmatmul.f32.gmra.mxu0 %v5535
        %v5586 = vpop.f32.mrf.mxu0
        %v5587 = vadd.f32 0.0, %v5586
        %5588 = vmatmul.f32.gmra.mxu0 %v5537
        %v5589 = vpop.f32.mrf.mxu0
        %v5590 = vadd.f32 0.0, %v5589
        %5591 = vmatmul.f32.gmra.mxu0 %v5539
        %v5592 = vpop.f32.mrf.mxu0
        %v5593 = vadd.f32 0.0, %v5592
        %5594 = vmatmul.f32.gmra.mxu0 %v5541
        %v5595 = vpop.f32.mrf.mxu0
        %v5596 = vadd.f32 0.0, %v5595
        %5597 = vmatmul.f32.gmra.mxu0 %v5543
        %v5598 = vpop.f32.mrf.mxu0
        %v5599 = vadd.f32 0.0, %v5598
        %5600 = vmatmul.f32.gmra.mxu0 %v5545
        %v5601 = vpop.f32.mrf.mxu0
        %v5602 = vadd.f32 0.0, %v5601
        %5603 = vmatmul.f32.gmra.mxu0 %v5547
        %v5604 = vpop.f32.mrf.mxu0
        %v5605 = vadd.f32 0.0, %v5604
        %5606 = vmatmul.f32.gmra.mxu0 %v5549
        %v5607 = vpop.f32.mrf.mxu0
        %v5608 = vadd.f32 0.0, %v5607
        %5609 = vmatmul.f32.gmra.mxu0 %v5551
        %v5610 = vpop.f32.mrf.mxu0
        %v5611 = vadd.f32 0.0, %v5610
        %5612 = vmatmul.f32.gmra.mxu0 %v5553
        %v5613 = vpop.f32.mrf.mxu0
        %v5614 = vadd.f32 0.0, %v5613
        %5615 = vmatmul.f32.gmra.mxu0 %v5555
        %v5616 = vpop.f32.mrf.mxu0
        %v5617 = vadd.f32 0.0, %v5616
        %5618 = vmatmul.f32.gmra.mxu0 %v5557
        %v5619 = vpop.f32.mrf.mxu0
        %v5620 = vadd.f32 0.0, %v5619
        %5621 = vmatmul.f32.gmra.mxu0 %v5559
        %v5622 = vpop.f32.mrf.mxu0
        %v5623 = vadd.f32 0.0, %v5622
        %5624 = vdwg.mxu0
        %v5625 = vrcp.pop %v5578
        %v5626 = vrcp.pop %v5581
        %v5627 = vrcp.pop %v5584
        %v5628 = vrcp.pop %v5587
        %v5629 = vrcp.pop %v5590
        %v5630 = vrcp.pop %v5593
        %v5631 = vrcp.pop %v5596
        %v5632 = vrcp.pop %v5599
        %v5633 = vrcp.pop %v5602
        %v5634 = vrcp.pop %v5605
        %v5635 = vrcp.pop %v5608
        %v5636 = vrcp.pop %v5611
        %v5637 = vrcp.pop %v5614
        %v5638 = vrcp.pop %v5617
        %v5639 = vrcp.pop %v5620
        %v5640 = vrcp.pop %v5623
        %5641 = vmatpush.msra.mxu0 %v5240
        %5642 = vmatpush.msra.mxu0 %v5237
        %5643 = vmatpush.msra.mxu0 %v5234
        %5644 = vmatpush.msra.mxu0 %v5231
        %5645 = vmatpush.msra.mxu0 %v5228
        %5646 = vmatpush.msra.mxu0 %v5225
        %5647 = vmatpush.msra.mxu0 %v5222
        %5648 = vmatpush.msra.mxu0 %v5219
        %5649 = vmatpush.msra.mxu0 %v5216
        %5650 = vmatpush.msra.mxu0 %v5213
        %5651 = vmatpush.msra.mxu0 %v5210
        %5652 = vmatpush.msra.mxu0 %v5207
        %5653 = vmatpush.msra.mxu0 %v5204
        %5654 = vmatpush.msra.mxu0 %v5201
        %5655 = vmatpush.msra.mxu0 %v5198
        %5656 = vmatpush.msra.mxu0 %v5195
        %5657 = vmatmul.f32.gmra.mxu0 %v5529
        %v5658 = vpop.f32.mrf.mxu0
        %v5659 = vadd.f32 0.0, %v5658
        %5660 = vmatmul.f32.gmra.mxu0 %v5531
        %v5661 = vpop.f32.mrf.mxu0
        %v5662 = vadd.f32 0.0, %v5661
        %5663 = vmatmul.f32.gmra.mxu0 %v5533
        %v5664 = vpop.f32.mrf.mxu0
        %v5665 = vadd.f32 0.0, %v5664
        %5666 = vmatmul.f32.gmra.mxu0 %v5535
        %v5667 = vpop.f32.mrf.mxu0
        %v5668 = vadd.f32 0.0, %v5667
        %5669 = vmatmul.f32.gmra.mxu0 %v5537
        %v5670 = vpop.f32.mrf.mxu0
        %v5671 = vadd.f32 0.0, %v5670
        %5672 = vmatmul.f32.gmra.mxu0 %v5539
        %v5673 = vpop.f32.mrf.mxu0
        %v5674 = vadd.f32 0.0, %v5673
        %5675 = vmatmul.f32.gmra.mxu0 %v5541
        %v5676 = vpop.f32.mrf.mxu0
        %v5677 = vadd.f32 0.0, %v5676
        %5678 = vmatmul.f32.gmra.mxu0 %v5543
        %v5679 = vpop.f32.mrf.mxu0
        %v5680 = vadd.f32 0.0, %v5679
        %5681 = vmatmul.f32.gmra.mxu0 %v5545
        %v5682 = vpop.f32.mrf.mxu0
        %v5683 = vadd.f32 0.0, %v5682
        %5684 = vmatmul.f32.gmra.mxu0 %v5547
        %v5685 = vpop.f32.mrf.mxu0
        %v5686 = vadd.f32 0.0, %v5685
        %5687 = vmatmul.f32.gmra.mxu0 %v5549
        %v5688 = vpop.f32.mrf.mxu0
        %v5689 = vadd.f32 0.0, %v5688
        %5690 = vmatmul.f32.gmra.mxu0 %v5551
        %v5691 = vpop.f32.mrf.mxu0
        %v5692 = vadd.f32 0.0, %v5691
        %5693 = vmatmul.f32.gmra.mxu0 %v5553
        %v5694 = vpop.f32.mrf.mxu0
        %v5695 = vadd.f32 0.0, %v5694
        %5696 = vmatmul.f32.gmra.mxu0 %v5555
        %v5697 = vpop.f32.mrf.mxu0
        %v5698 = vadd.f32 0.0, %v5697
        %5699 = vmatmul.f32.gmra.mxu0 %v5557
        %v5700 = vpop.f32.mrf.mxu0
        %v5701 = vadd.f32 0.0, %v5700
        %5702 = vmatmul.f32.gmra.mxu0 %v5559
        %v5703 = vpop.f32.mrf.mxu0
        %v5704 = vadd.f32 0.0, %v5703
        %5705 = vdwg.mxu0
        %5707 = vset.pattern.permute.xlu0 0
        %5708 = vperm.xlu0 %5707, %v5625
        %v5709 = vpop.permute.xlu0 %5708
        %5712 = vset.pattern.permute.xlu0 0
        %5713 = vperm.xlu0 %5712, %v5626
        %v5714 = vpop.permute.xlu0 %5713
        %5717 = vset.pattern.permute.xlu0 0
        %5718 = vperm.xlu0 %5717, %v5627
        %v5719 = vpop.permute.xlu0 %5718
        %5722 = vset.pattern.permute.xlu0 0
        %5723 = vperm.xlu0 %5722, %v5628
        %v5724 = vpop.permute.xlu0 %5723
        %5727 = vset.pattern.permute.xlu0 0
        %5728 = vperm.xlu0 %5727, %v5629
        %v5729 = vpop.permute.xlu0 %5728
        %5732 = vset.pattern.permute.xlu0 0
        %5733 = vperm.xlu0 %5732, %v5630
        %v5734 = vpop.permute.xlu0 %5733
        %5737 = vset.pattern.permute.xlu0 0
        %5738 = vperm.xlu0 %5737, %v5631
        %v5739 = vpop.permute.xlu0 %5738
        %5742 = vset.pattern.permute.xlu0 0
        %5743 = vperm.xlu0 %5742, %v5632
        %v5744 = vpop.permute.xlu0 %5743
        %5747 = vset.pattern.permute.xlu0 0
        %5748 = vperm.xlu0 %5747, %v5633
        %v5749 = vpop.permute.xlu0 %5748
        %5752 = vset.pattern.permute.xlu0 0
        %5753 = vperm.xlu0 %5752, %v5634
        %v5754 = vpop.permute.xlu0 %5753
        %5757 = vset.pattern.permute.xlu0 0
        %5758 = vperm.xlu0 %5757, %v5635
        %v5759 = vpop.permute.xlu0 %5758
        %5762 = vset.pattern.permute.xlu0 0
        %5763 = vperm.xlu0 %5762, %v5636
        %v5764 = vpop.permute.xlu0 %5763
        %5767 = vset.pattern.permute.xlu0 0
        %5768 = vperm.xlu0 %5767, %v5637
        %v5769 = vpop.permute.xlu0 %5768
        %5772 = vset.pattern.permute.xlu0 0
        %5773 = vperm.xlu0 %5772, %v5638
        %v5774 = vpop.permute.xlu0 %5773
        %5777 = vset.pattern.permute.xlu0 0
        %5778 = vperm.xlu0 %5777, %v5639
        %v5779 = vpop.permute.xlu0 %5778
        %5782 = vset.pattern.permute.xlu0 0
        %5783 = vperm.xlu0 %5782, %v5640
        %v5784 = vpop.permute.xlu0 %5783
        %v5786 = vmul.f32 %v5659, %v5709
        %v5787 = vmul.f32 %v5662, %v5714
        %v5788 = vmul.f32 %v5665, %v5719
        %v5789 = vmul.f32 %v5668, %v5724
        %v5790 = vmul.f32 %v5671, %v5729
        %v5791 = vmul.f32 %v5674, %v5734
        %v5792 = vmul.f32 %v5677, %v5739
        %v5793 = vmul.f32 %v5680, %v5744
        %v5794 = vmul.f32 %v5683, %v5749
        %v5795 = vmul.f32 %v5686, %v5754
        %v5796 = vmul.f32 %v5689, %v5759
        %v5797 = vmul.f32 %v5692, %v5764
        %v5798 = vmul.f32 %v5695, %v5769
        %v5799 = vmul.f32 %v5698, %v5774
        %v5800 = vmul.f32 %v5701, %v5779
        %v5801 = vmul.f32 %v5704, %v5784
        %v5802 = vadd.f32 %v5786, 0.0
        %v5803 = vadd.f32 %v5787, 0.0
        %v5804 = vadd.f32 %v5788, 0.0
        %v5805 = vadd.f32 %v5789, 0.0
        %v5806 = vadd.f32 %v5790, 0.0
        %v5807 = vadd.f32 %v5791, 0.0
        %v5808 = vadd.f32 %v5792, 0.0
        %v5809 = vadd.f32 %v5793, 0.0
        %v5810 = vadd.f32 %v5794, 0.0
        %v5811 = vadd.f32 %v5795, 0.0
        %v5812 = vadd.f32 %v5796, 0.0
        %v5813 = vadd.f32 %v5797, 0.0
        %v5814 = vadd.f32 %v5798, 0.0
        %v5815 = vadd.f32 %v5799, 0.0
        %v5816 = vadd.f32 %v5800, 0.0
        %v5817 = vadd.f32 %v5801, 0.0
        %5818 = vset.pattern.permute.xlu0 1
        %5819 = vperm.xlu0 %5818, %v5264
        %v5820 = vpop.permute.xlu0 %5819
        %5822 = vset.pattern.permute.xlu0 1
        %5823 = vperm.xlu0 %5822, %v5267
        %v5824 = vpop.permute.xlu0 %5823
        %5826 = vset.pattern.permute.xlu0 1
        %5827 = vperm.xlu0 %5826, %v5270
        %v5828 = vpop.permute.xlu0 %5827
        %5830 = vset.pattern.permute.xlu0 1
        %5831 = vperm.xlu0 %5830, %v5273
        %v5832 = vpop.permute.xlu0 %5831
        %5834 = vset.pattern.permute.xlu0 1
        %5835 = vperm.xlu0 %5834, %v5276
        %v5836 = vpop.permute.xlu0 %5835
        %5838 = vset.pattern.permute.xlu0 1
        %5839 = vperm.xlu0 %5838, %v5279
        %v5840 = vpop.permute.xlu0 %5839
        %5842 = vset.pattern.permute.xlu0 1
        %5843 = vperm.xlu0 %5842, %v5282
        %v5844 = vpop.permute.xlu0 %5843
        %5846 = vset.pattern.permute.xlu0 1
        %5847 = vperm.xlu0 %5846, %v5285
        %v5848 = vpop.permute.xlu0 %5847
        %5850 = vset.pattern.permute.xlu0 1
        %5851 = vperm.xlu0 %5850, %v5288
        %v5852 = vpop.permute.xlu0 %5851
        %5854 = vset.pattern.permute.xlu0 1
        %5855 = vperm.xlu0 %5854, %v5291
        %v5856 = vpop.permute.xlu0 %5855
        %5858 = vset.pattern.permute.xlu0 1
        %5859 = vperm.xlu0 %5858, %v5294
        %v5860 = vpop.permute.xlu0 %5859
        %5862 = vset.pattern.permute.xlu0 1
        %5863 = vperm.xlu0 %5862, %v5297
        %v5864 = vpop.permute.xlu0 %5863
        %5866 = vset.pattern.permute.xlu0 1
        %5867 = vperm.xlu0 %5866, %v5300
        %v5868 = vpop.permute.xlu0 %5867
        %5870 = vset.pattern.permute.xlu0 1
        %5871 = vperm.xlu0 %5870, %v5303
        %v5872 = vpop.permute.xlu0 %5871
        %5874 = vset.pattern.permute.xlu0 1
        %5875 = vperm.xlu0 %5874, %v5306
        %v5876 = vpop.permute.xlu0 %5875
        %5878 = vset.pattern.permute.xlu0 1
        %5879 = vperm.xlu0 %5878, %v5309
        %v5880 = vpop.permute.xlu0 %5879
        %v5882 = vperm.slane %v5333, 1
        %v5883 = vadd.f32 %v5820, %v5882
        %v5884 = vadd.f32 %v5824, %v5882
        %v5885 = vadd.f32 %v5828, %v5882
        %v5886 = vadd.f32 %v5832, %v5882
        %v5887 = vadd.f32 %v5836, %v5882
        %v5888 = vadd.f32 %v5840, %v5882
        %v5889 = vadd.f32 %v5844, %v5882
        %v5890 = vadd.f32 %v5848, %v5882
        %v5891 = vadd.f32 %v5852, %v5882
        %v5892 = vadd.f32 %v5856, %v5882
        %v5893 = vadd.f32 %v5860, %v5882
        %v5894 = vadd.f32 %v5864, %v5882
        %v5895 = vadd.f32 %v5868, %v5882
        %v5896 = vadd.f32 %v5872, %v5882
        %v5897 = vadd.f32 %v5876, %v5882
        %v5898 = vadd.f32 %v5880, %v5882
        %v5899 = vmul.f32 %v5883, 0.2
        %v5900 = vmul.f32 %v5884, 0.2
        %v5901 = vmul.f32 %v5885, 0.2
        %v5902 = vmul.f32 %v5886, 0.2
        %v5903 = vmul.f32 %v5887, 0.2
        %v5904 = vmul.f32 %v5888, 0.2
        %v5905 = vmul.f32 %v5889, 0.2
        %v5906 = vmul.f32 %v5890, 0.2
        %v5907 = vmul.f32 %v5891, 0.2
        %v5908 = vmul.f32 %v5892, 0.2
        %v5909 = vmul.f32 %v5893, 0.2
        %v5910 = vmul.f32 %v5894, 0.2
        %v5911 = vmul.f32 %v5895, 0.2
        %v5912 = vmul.f32 %v5896, 0.2
        %v5913 = vmul.f32 %v5897, 0.2
        %v5914 = vmul.f32 %v5898, 0.2
        %v5915 = vmax.f32 %v5883, %v5899
        %v5916 = vmax.f32 %v5884, %v5900
        %v5917 = vmax.f32 %v5885, %v5901
        %v5918 = vmax.f32 %v5886, %v5902
        %v5919 = vmax.f32 %v5887, %v5903
        %v5920 = vmax.f32 %v5888, %v5904
        %v5921 = vmax.f32 %v5889, %v5905
        %v5922 = vmax.f32 %v5890, %v5906
        %v5923 = vmax.f32 %v5891, %v5907
        %v5924 = vmax.f32 %v5892, %v5908
        %v5925 = vmax.f32 %v5893, %v5909
        %v5926 = vmax.f32 %v5894, %v5910
        %v5927 = vmax.f32 %v5895, %v5911
        %v5928 = vmax.f32 %v5896, %v5912
        %v5929 = vmax.f32 %v5897, %v5913
        %v5930 = vmax.f32 %v5898, %v5914
        %v5931 = vadd.f32 %v5915, %v5109
        %v5932 = vadd.f32 %v5916, %v5110
        %v5933 = vadd.f32 %v5917, %v5111
        %v5934 = vadd.f32 %v5918, %v5112
        %v5935 = vadd.f32 %v5919, %v5113
        %v5936 = vadd.f32 %v5920, %v5114
        %v5937 = vadd.f32 %v5921, %v5115
        %v5938 = vadd.f32 %v5922, %v5116
        %v5939 = vadd.f32 %v5923, %v5117
        %v5940 = vadd.f32 %v5924, %v5118
        %v5941 = vadd.f32 %v5925, %v5119
        %v5942 = vadd.f32 %v5926, %v5120
        %v5943 = vadd.f32 %v5927, %v5121
        %v5944 = vadd.f32 %v5928, %v5122
        %v5945 = vadd.f32 %v5929, %v5123
        %v5946 = vadd.f32 %v5930, %v5124
        %5947 = vmax.xlane.f32.xlu0 %v5931
        %v5948 = vpop.xlane.xlu0 %5947
        %5949 = vmax.xlane.f32.xlu0 %v5932
        %v5950 = vpop.xlane.xlu0 %5949
        %5951 = vmax.xlane.f32.xlu0 %v5933
        %v5952 = vpop.xlane.xlu0 %5951
        %5953 = vmax.xlane.f32.xlu0 %v5934
        %v5954 = vpop.xlane.xlu0 %5953
        %5955 = vmax.xlane.f32.xlu0 %v5935
        %v5956 = vpop.xlane.xlu0 %5955
        %5957 = vmax.xlane.f32.xlu0 %v5936
        %v5958 = vpop.xlane.xlu0 %5957
        %5959 = vmax.xlane.f32.xlu0 %v5937
        %v5960 = vpop.xlane.xlu0 %5959
        %5961 = vmax.xlane.f32.xlu0 %v5938
        %v5962 = vpop.xlane.xlu0 %5961
        %5963 = vmax.xlane.f32.xlu0 %v5939
        %v5964 = vpop.xlane.xlu0 %5963
        %5965 = vmax.xlane.f32.xlu0 %v5940
        %v5966 = vpop.xlane.xlu0 %5965
        %5967 = vmax.xlane.f32.xlu0 %v5941
        %v5968 = vpop.xlane.xlu0 %5967
        %5969 = vmax.xlane.f32.xlu0 %v5942
        %v5970 = vpop.xlane.xlu0 %5969
        %5971 = vmax.xlane.f32.xlu0 %v5943
        %v5972 = vpop.xlane.xlu0 %5971
        %5973 = vmax.xlane.f32.xlu0 %v5944
        %v5974 = vpop.xlane.xlu0 %5973
        %5975 = vmax.xlane.f32.xlu0 %v5945
        %v5976 = vpop.xlane.xlu0 %5975
        %5977 = vmax.xlane.f32.xlu0 %v5946
        %v5978 = vpop.xlane.xlu0 %5977
        %v5979 = vsub.f32 %v5931, %v5948
        %v5980 = vsub.f32 %v5932, %v5950
        %v5981 = vsub.f32 %v5933, %v5952
        %v5982 = vsub.f32 %v5934, %v5954
        %v5983 = vsub.f32 %v5935, %v5956
        %v5984 = vsub.f32 %v5936, %v5958
        %v5985 = vsub.f32 %v5937, %v5960
        %v5986 = vsub.f32 %v5938, %v5962
        %v5987 = vsub.f32 %v5939, %v5964
        %v5988 = vsub.f32 %v5940, %v5966
        %v5989 = vsub.f32 %v5941, %v5968
        %v5990 = vsub.f32 %v5942, %v5970
        %v5991 = vsub.f32 %v5943, %v5972
        %v5992 = vsub.f32 %v5944, %v5974
        %v5993 = vsub.f32 %v5945, %v5976
        %v5994 = vsub.f32 %v5946, %v5978
        %v5995 = vmul.f32 %v5979, 1.442695
        %v5996 = vpow.pop %v5995
        %v5997 = vmul.f32 %v5980, 1.442695
        %v5998 = vpow.pop %v5997
        %v5999 = vmul.f32 %v5981, 1.442695
        %v6000 = vpow.pop %v5999
        %v6001 = vmul.f32 %v5982, 1.442695
        %v6002 = vpow.pop %v6001
        %v6003 = vmul.f32 %v5983, 1.442695
        %v6004 = vpow.pop %v6003
        %v6005 = vmul.f32 %v5984, 1.442695
        %v6006 = vpow.pop %v6005
        %v6007 = vmul.f32 %v5985, 1.442695
        %v6008 = vpow.pop %v6007
        %v6009 = vmul.f32 %v5986, 1.442695
        %v6010 = vpow.pop %v6009
        %v6011 = vmul.f32 %v5987, 1.442695
        %v6012 = vpow.pop %v6011
        %v6013 = vmul.f32 %v5988, 1.442695
        %v6014 = vpow.pop %v6013
        %v6015 = vmul.f32 %v5989, 1.442695
        %v6016 = vpow.pop %v6015
        %v6017 = vmul.f32 %v5990, 1.442695
        %v6018 = vpow.pop %v6017
        %v6019 = vmul.f32 %v5991, 1.442695
        %v6020 = vpow.pop %v6019
        %v6021 = vmul.f32 %v5992, 1.442695
        %v6022 = vpow.pop %v6021
        %v6023 = vmul.f32 %v5993, 1.442695
        %v6024 = vpow.pop %v6023
        %v6025 = vmul.f32 %v5994, 1.442695
        %v6026 = vpow.pop %v6025
        %6027 = vmatpush.msra.mxu0 1.0
        %6028 = vmatpush.msra.mxu0 1.0
        %6029 = vmatpush.msra.mxu0 1.0
        %6030 = vmatpush.msra.mxu0 1.0
        %6031 = vmatpush.msra.mxu0 1.0
        %6032 = vmatpush.msra.mxu0 1.0
        %6033 = vmatpush.msra.mxu0 1.0
        %6034 = vmatpush.msra.mxu0 1.0
        %6035 = vmatpush.msra.mxu0 1.0
        %6036 = vmatpush.msra.mxu0 1.0
        %6037 = vmatpush.msra.mxu0 1.0
        %6038 = vmatpush.msra.mxu0 1.0
        %6039 = vmatpush.msra.mxu0 1.0
        %6040 = vmatpush.msra.mxu0 1.0
        %6041 = vmatpush.msra.mxu0 1.0
        %6042 = vmatpush.msra.mxu0 1.0
        %6043 = vmatmul.f32.gmra.mxu0 %v5996
        %v6044 = vpop.f32.mrf.mxu0
        %v6045 = vadd.f32 0.0, %v6044
        %6046 = vmatmul.f32.gmra.mxu0 %v5998
        %v6047 = vpop.f32.mrf.mxu0
        %v6048 = vadd.f32 0.0, %v6047
        %6049 = vmatmul.f32.gmra.mxu0 %v6000
        %v6050 = vpop.f32.mrf.mxu0
        %v6051 = vadd.f32 0.0, %v6050
        %6052 = vmatmul.f32.gmra.mxu0 %v6002
        %v6053 = vpop.f32.mrf.mxu0
        %v6054 = vadd.f32 0.0, %v6053
        %6055 = vmatmul.f32.gmra.mxu0 %v6004
        %v6056 = vpop.f32.mrf.mxu0
        %v6057 = vadd.f32 0.0, %v6056
        %6058 = vmatmul.f32.gmra.mxu0 %v6006
        %v6059 = vpop.f32.mrf.mxu0
        %v6060 = vadd.f32 0.0, %v6059
        %6061 = vmatmul.f32.gmra.mxu0 %v6008
        %v6062 = vpop.f32.mrf.mxu0
        %v6063 = vadd.f32 0.0, %v6062
        %6064 = vmatmul.f32.gmra.mxu0 %v6010
        %v6065 = vpop.f32.mrf.mxu0
        %v6066 = vadd.f32 0.0, %v6065
        %6067 = vmatmul.f32.gmra.mxu0 %v6012
        %v6068 = vpop.f32.mrf.mxu0
        %v6069 = vadd.f32 0.0, %v6068
        %6070 = vmatmul.f32.gmra.mxu0 %v6014
        %v6071 = vpop.f32.mrf.mxu0
        %v6072 = vadd.f32 0.0, %v6071
        %6073 = vmatmul.f32.gmra.mxu0 %v6016
        %v6074 = vpop.f32.mrf.mxu0
        %v6075 = vadd.f32 0.0, %v6074
        %6076 = vmatmul.f32.gmra.mxu0 %v6018
        %v6077 = vpop.f32.mrf.mxu0
        %v6078 = vadd.f32 0.0, %v6077
        %6079 = vmatmul.f32.gmra.mxu0 %v6020
        %v6080 = vpop.f32.mrf.mxu0
        %v6081 = vadd.f32 0.0, %v6080
        %6082 = vmatmul.f32.gmra.mxu0 %v6022
        %v6083 = vpop.f32.mrf.mxu0
        %v6084 = vadd.f32 0.0, %v6083
        %6085 = vmatmul.f32.gmra.mxu0 %v6024
        %v6086 = vpop.f32.mrf.mxu0
        %v6087 = vadd.f32 0.0, %v6086
        %6088 = vmatmul.f32.gmra.mxu0 %v6026
        %v6089 = vpop.f32.mrf.mxu0
        %v6090 = vadd.f32 0.0, %v6089
        %6091 = vdwg.mxu0
        %v6092 = vrcp.pop %v6045
        %v6093 = vrcp.pop %v6048
        %v6094 = vrcp.pop %v6051
        %v6095 = vrcp.pop %v6054
        %v6096 = vrcp.pop %v6057
        %v6097 = vrcp.pop %v6060
        %v6098 = vrcp.pop %v6063
        %v6099 = vrcp.pop %v6066
        %v6100 = vrcp.pop %v6069
        %v6101 = vrcp.pop %v6072
        %v6102 = vrcp.pop %v6075
        %v6103 = vrcp.pop %v6078
        %v6104 = vrcp.pop %v6081
        %v6105 = vrcp.pop %v6084
        %v6106 = vrcp.pop %v6087
        %v6107 = vrcp.pop %v6090
        %6124 = vrot.lane.b32.xlu0 %v5195, 96
        %v6125 = vpop.permute.xlu0 %6124
        %6126 = vrot.lane.b32.xlu0 %v5198, 96
        %v6127 = vpop.permute.xlu0 %6126
        %6128 = vrot.lane.b32.xlu0 %v5201, 96
        %v6129 = vpop.permute.xlu0 %6128
        %6130 = vrot.lane.b32.xlu0 %v5204, 96
        %v6131 = vpop.permute.xlu0 %6130
        %6132 = vrot.lane.b32.xlu0 %v5207, 96
        %v6133 = vpop.permute.xlu0 %6132
        %6134 = vrot.lane.b32.xlu0 %v5210, 96
        %v6135 = vpop.permute.xlu0 %6134
        %6136 = vrot.lane.b32.xlu0 %v5213, 96
        %v6137 = vpop.permute.xlu0 %6136
        %6138 = vrot.lane.b32.xlu0 %v5216, 96
        %v6139 = vpop.permute.xlu0 %6138
        %6140 = vrot.lane.b32.xlu0 %v5219, 96
        %v6141 = vpop.permute.xlu0 %6140
        %6142 = vrot.lane.b32.xlu0 %v5222, 96
        %v6143 = vpop.permute.xlu0 %6142
        %6144 = vrot.lane.b32.xlu0 %v5225, 96
        %v6145 = vpop.permute.xlu0 %6144
        %6146 = vrot.lane.b32.xlu0 %v5228, 96
        %v6147 = vpop.permute.xlu0 %6146
        %6148 = vrot.lane.b32.xlu0 %v5231, 96
        %v6149 = vpop.permute.xlu0 %6148
        %6150 = vrot.lane.b32.xlu0 %v5234, 96
        %v6151 = vpop.permute.xlu0 %6150
        %6152 = vrot.lane.b32.xlu0 %v5237, 96
        %v6153 = vpop.permute.xlu0 %6152
        %6154 = vrot.lane.b32.xlu0 %v5240, 96
        %v6155 = vpop.permute.xlu0 %6154
        %6172 = vmatpush.msra.mxu0 %v6155
        %6173 = vmatpush.msra.mxu0 %v6153
        %6174 = vmatpush.msra.mxu0 %v6151
        %6175 = vmatpush.msra.mxu0 %v6149
        %6176 = vmatpush.msra.mxu0 %v6147
        %6177 = vmatpush.msra.mxu0 %v6145
        %6178 = vmatpush.msra.mxu0 %v6143
        %6179 = vmatpush.msra.mxu0 %v6141
        %6180 = vmatpush.msra.mxu0 %v6139
        %6181 = vmatpush.msra.mxu0 %v6137
        %6182 = vmatpush.msra.mxu0 %v6135
        %6183 = vmatpush.msra.mxu0 %v6133
        %6184 = vmatpush.msra.mxu0 %v6131
        %6185 = vmatpush.msra.mxu0 %v6129
        %6186 = vmatpush.msra.mxu0 %v6127
        %6187 = vmatpush.msra.mxu0 %v6125
        %6188 = vmatmul.f32.gmra.mxu0 %v5996
        %v6189 = vpop.f32.mrf.mxu0
        %v6190 = vadd.f32 0.0, %v6189
        %6191 = vmatmul.f32.gmra.mxu0 %v5998
        %v6192 = vpop.f32.mrf.mxu0
        %v6193 = vadd.f32 0.0, %v6192
        %6194 = vmatmul.f32.gmra.mxu0 %v6000
        %v6195 = vpop.f32.mrf.mxu0
        %v6196 = vadd.f32 0.0, %v6195
        %6197 = vmatmul.f32.gmra.mxu0 %v6002
        %v6198 = vpop.f32.mrf.mxu0
        %v6199 = vadd.f32 0.0, %v6198
        %6200 = vmatmul.f32.gmra.mxu0 %v6004
        %v6201 = vpop.f32.mrf.mxu0
        %v6202 = vadd.f32 0.0, %v6201
        %6203 = vmatmul.f32.gmra.mxu0 %v6006
        %v6204 = vpop.f32.mrf.mxu0
        %v6205 = vadd.f32 0.0, %v6204
        %6206 = vmatmul.f32.gmra.mxu0 %v6008
        %v6207 = vpop.f32.mrf.mxu0
        %v6208 = vadd.f32 0.0, %v6207
        %6209 = vmatmul.f32.gmra.mxu0 %v6010
        %v6210 = vpop.f32.mrf.mxu0
        %v6211 = vadd.f32 0.0, %v6210
        %6212 = vmatmul.f32.gmra.mxu0 %v6012
        %v6213 = vpop.f32.mrf.mxu0
        %v6214 = vadd.f32 0.0, %v6213
        %6215 = vmatmul.f32.gmra.mxu0 %v6014
        %v6216 = vpop.f32.mrf.mxu0
        %v6217 = vadd.f32 0.0, %v6216
        %6218 = vmatmul.f32.gmra.mxu0 %v6016
        %v6219 = vpop.f32.mrf.mxu0
        %v6220 = vadd.f32 0.0, %v6219
        %6221 = vmatmul.f32.gmra.mxu0 %v6018
        %v6222 = vpop.f32.mrf.mxu0
        %v6223 = vadd.f32 0.0, %v6222
        %6224 = vmatmul.f32.gmra.mxu0 %v6020
        %v6225 = vpop.f32.mrf.mxu0
        %v6226 = vadd.f32 0.0, %v6225
        %6227 = vmatmul.f32.gmra.mxu0 %v6022
        %v6228 = vpop.f32.mrf.mxu0
        %v6229 = vadd.f32 0.0, %v6228
        %6230 = vmatmul.f32.gmra.mxu0 %v6024
        %v6231 = vpop.f32.mrf.mxu0
        %v6232 = vadd.f32 0.0, %v6231
        %6233 = vmatmul.f32.gmra.mxu0 %v6026
        %v6234 = vpop.f32.mrf.mxu0
        %v6235 = vadd.f32 0.0, %v6234
        %6236 = vdwg.mxu0
        %6238 = vset.pattern.permute.xlu0 0
        %6239 = vperm.xlu0 %6238, %v6092
        %v6240 = vpop.permute.xlu0 %6239
        %6243 = vset.pattern.permute.xlu0 0
        %6244 = vperm.xlu0 %6243, %v6093
        %v6245 = vpop.permute.xlu0 %6244
        %6248 = vset.pattern.permute.xlu0 0
        %6249 = vperm.xlu0 %6248, %v6094
        %v6250 = vpop.permute.xlu0 %6249
        %6253 = vset.pattern.permute.xlu0 0
        %6254 = vperm.xlu0 %6253, %v6095
        %v6255 = vpop.permute.xlu0 %6254
        %6258 = vset.pattern.permute.xlu0 0
        %6259 = vperm.xlu0 %6258, %v6096
        %v6260 = vpop.permute.xlu0 %6259
        %6263 = vset.pattern.permute.xlu0 0
        %6264 = vperm.xlu0 %6263, %v6097
        %v6265 = vpop.permute.xlu0 %6264
        %6268 = vset.pattern.permute.xlu0 0
        %6269 = vperm.xlu0 %6268, %v6098
        %v6270 = vpop.permute.xlu0 %6269
        %6273 = vset.pattern.permute.xlu0 0
        %6274 = vperm.xlu0 %6273, %v6099
        %v6275 = vpop.permute.xlu0 %6274
        %6278 = vset.pattern.permute.xlu0 0
        %6279 = vperm.xlu0 %6278, %v6100
        %v6280 = vpop.permute.xlu0 %6279
        %6283 = vset.pattern.permute.xlu0 0
        %6284 = vperm.xlu0 %6283, %v6101
        %v6285 = vpop.permute.xlu0 %6284
        %6288 = vset.pattern.permute.xlu0 0
        %6289 = vperm.xlu0 %6288, %v6102
        %v6290 = vpop.permute.xlu0 %6289
        %6293 = vset.pattern.permute.xlu0 0
        %6294 = vperm.xlu0 %6293, %v6103
        %v6295 = vpop.permute.xlu0 %6294
        %6298 = vset.pattern.permute.xlu0 0
        %6299 = vperm.xlu0 %6298, %v6104
        %v6300 = vpop.permute.xlu0 %6299
        %6303 = vset.pattern.permute.xlu0 0
        %6304 = vperm.xlu0 %6303, %v6105
        %v6305 = vpop.permute.xlu0 %6304
        %6308 = vset.pattern.permute.xlu0 0
        %6309 = vperm.xlu0 %6308, %v6106
        %v6310 = vpop.permute.xlu0 %6309
        %6313 = vset.pattern.permute.xlu0 0
        %6314 = vperm.xlu0 %6313, %v6107
        %v6315 = vpop.permute.xlu0 %6314
        %v6317 = vmul.f32 %v6190, %v6240
        %v6318 = vmul.f32 %v6193, %v6245
        %v6319 = vmul.f32 %v6196, %v6250
        %v6320 = vmul.f32 %v6199, %v6255
        %v6321 = vmul.f32 %v6202, %v6260
        %v6322 = vmul.f32 %v6205, %v6265
        %v6323 = vmul.f32 %v6208, %v6270
        %v6324 = vmul.f32 %v6211, %v6275
        %v6325 = vmul.f32 %v6214, %v6280
        %v6326 = vmul.f32 %v6217, %v6285
        %v6327 = vmul.f32 %v6220, %v6290
        %v6328 = vmul.f32 %v6223, %v6295
        %v6329 = vmul.f32 %v6226, %v6300
        %v6330 = vmul.f32 %v6229, %v6305
        %v6331 = vmul.f32 %v6232, %v6310
        %v6332 = vmul.f32 %v6235, %v6315
        %v6333 = vadd.f32 %v5802, %v6317
        %v6334 = vadd.f32 %v5803, %v6318
        %v6335 = vadd.f32 %v5804, %v6319
        %v6336 = vadd.f32 %v5805, %v6320
        %v6337 = vadd.f32 %v5806, %v6321
        %v6338 = vadd.f32 %v5807, %v6322
        %v6339 = vadd.f32 %v5808, %v6323
        %v6340 = vadd.f32 %v5809, %v6324
        %v6341 = vadd.f32 %v5810, %v6325
        %v6342 = vadd.f32 %v5811, %v6326
        %v6343 = vadd.f32 %v5812, %v6327
        %v6344 = vadd.f32 %v5813, %v6328
        %v6345 = vadd.f32 %v5814, %v6329
        %v6346 = vadd.f32 %v5815, %v6330
        %v6347 = vadd.f32 %v5816, %v6331
        %v6348 = vadd.f32 %v5817, %v6332
        %6349 = vset.pattern.permute.xlu0 2
        %6350 = vperm.xlu0 %6349, %v5264
        %v6351 = vpop.permute.xlu0 %6350
        %6353 = vset.pattern.permute.xlu0 2
        %6354 = vperm.xlu0 %6353, %v5267
        %v6355 = vpop.permute.xlu0 %6354
        %6357 = vset.pattern.permute.xlu0 2
        %6358 = vperm.xlu0 %6357, %v5270
        %v6359 = vpop.permute.xlu0 %6358
        %6361 = vset.pattern.permute.xlu0 2
        %6362 = vperm.xlu0 %6361, %v5273
        %v6363 = vpop.permute.xlu0 %6362
        %6365 = vset.pattern.permute.xlu0 2
        %6366 = vperm.xlu0 %6365, %v5276
        %v6367 = vpop.permute.xlu0 %6366
        %6369 = vset.pattern.permute.xlu0 2
        %6370 = vperm.xlu0 %6369, %v5279
        %v6371 = vpop.permute.xlu0 %6370
        %6373 = vset.pattern.permute.xlu0 2
        %6374 = vperm.xlu0 %6373, %v5282
        %v6375 = vpop.permute.xlu0 %6374
        %6377 = vset.pattern.permute.xlu0 2
        %6378 = vperm.xlu0 %6377, %v5285
        %v6379 = vpop.permute.xlu0 %6378
        %6381 = vset.pattern.permute.xlu0 2
        %6382 = vperm.xlu0 %6381, %v5288
        %v6383 = vpop.permute.xlu0 %6382
        %6385 = vset.pattern.permute.xlu0 2
        %6386 = vperm.xlu0 %6385, %v5291
        %v6387 = vpop.permute.xlu0 %6386
        %6389 = vset.pattern.permute.xlu0 2
        %6390 = vperm.xlu0 %6389, %v5294
        %v6391 = vpop.permute.xlu0 %6390
        %6393 = vset.pattern.permute.xlu0 2
        %6394 = vperm.xlu0 %6393, %v5297
        %v6395 = vpop.permute.xlu0 %6394
        %6397 = vset.pattern.permute.xlu0 2
        %6398 = vperm.xlu0 %6397, %v5300
        %v6399 = vpop.permute.xlu0 %6398
        %6401 = vset.pattern.permute.xlu0 2
        %6402 = vperm.xlu0 %6401, %v5303
        %v6403 = vpop.permute.xlu0 %6402
        %6405 = vset.pattern.permute.xlu0 2
        %6406 = vperm.xlu0 %6405, %v5306
        %v6407 = vpop.permute.xlu0 %6406
        %6409 = vset.pattern.permute.xlu0 2
        %6410 = vperm.xlu0 %6409, %v5309
        %v6411 = vpop.permute.xlu0 %6410
        %v6413 = vperm.slane %v5333, 2
        %v6414 = vadd.f32 %v6351, %v6413
        %v6415 = vadd.f32 %v6355, %v6413
        %v6416 = vadd.f32 %v6359, %v6413
        %v6417 = vadd.f32 %v6363, %v6413
        %v6418 = vadd.f32 %v6367, %v6413
        %v6419 = vadd.f32 %v6371, %v6413
        %v6420 = vadd.f32 %v6375, %v6413
        %v6421 = vadd.f32 %v6379, %v6413
        %v6422 = vadd.f32 %v6383, %v6413
        %v6423 = vadd.f32 %v6387, %v6413
        %v6424 = vadd.f32 %v6391, %v6413
        %v6425 = vadd.f32 %v6395, %v6413
        %v6426 = vadd.f32 %v6399, %v6413
        %v6427 = vadd.f32 %v6403, %v6413
        %v6428 = vadd.f32 %v6407, %v6413
        %v6429 = vadd.f32 %v6411, %v6413
        %v6430 = vmul.f32 %v6414, 0.2
        %v6431 = vmul.f32 %v6415, 0.2
        %v6432 = vmul.f32 %v6416, 0.2
        %v6433 = vmul.f32 %v6417, 0.2
        %v6434 = vmul.f32 %v6418, 0.2
        %v6435 = vmul.f32 %v6419, 0.2
        %v6436 = vmul.f32 %v6420, 0.2
        %v6437 = vmul.f32 %v6421, 0.2
        %v6438 = vmul.f32 %v6422, 0.2
        %v6439 = vmul.f32 %v6423, 0.2
        %v6440 = vmul.f32 %v6424, 0.2
        %v6441 = vmul.f32 %v6425, 0.2
        %v6442 = vmul.f32 %v6426, 0.2
        %v6443 = vmul.f32 %v6427, 0.2
        %v6444 = vmul.f32 %v6428, 0.2
        %v6445 = vmul.f32 %v6429, 0.2
        %v6446 = vmax.f32 %v6414, %v6430
        %v6447 = vmax.f32 %v6415, %v6431
        %v6448 = vmax.f32 %v6416, %v6432
        %v6449 = vmax.f32 %v6417, %v6433
        %v6450 = vmax.f32 %v6418, %v6434
        %v6451 = vmax.f32 %v6419, %v6435
        %v6452 = vmax.f32 %v6420, %v6436
        %v6453 = vmax.f32 %v6421, %v6437
        %v6454 = vmax.f32 %v6422, %v6438
        %v6455 = vmax.f32 %v6423, %v6439
        %v6456 = vmax.f32 %v6424, %v6440
        %v6457 = vmax.f32 %v6425, %v6441
        %v6458 = vmax.f32 %v6426, %v6442
        %v6459 = vmax.f32 %v6427, %v6443
        %v6460 = vmax.f32 %v6428, %v6444
        %v6461 = vmax.f32 %v6429, %v6445
        %v6462 = vadd.f32 %v6446, %v5109
        %v6463 = vadd.f32 %v6447, %v5110
        %v6464 = vadd.f32 %v6448, %v5111
        %v6465 = vadd.f32 %v6449, %v5112
        %v6466 = vadd.f32 %v6450, %v5113
        %v6467 = vadd.f32 %v6451, %v5114
        %v6468 = vadd.f32 %v6452, %v5115
        %v6469 = vadd.f32 %v6453, %v5116
        %v6470 = vadd.f32 %v6454, %v5117
        %v6471 = vadd.f32 %v6455, %v5118
        %v6472 = vadd.f32 %v6456, %v5119
        %v6473 = vadd.f32 %v6457, %v5120
        %v6474 = vadd.f32 %v6458, %v5121
        %v6475 = vadd.f32 %v6459, %v5122
        %v6476 = vadd.f32 %v6460, %v5123
        %v6477 = vadd.f32 %v6461, %v5124
        %6478 = vmax.xlane.f32.xlu0 %v6462
        %v6479 = vpop.xlane.xlu0 %6478
        %6480 = vmax.xlane.f32.xlu0 %v6463
        %v6481 = vpop.xlane.xlu0 %6480
        %6482 = vmax.xlane.f32.xlu0 %v6464
        %v6483 = vpop.xlane.xlu0 %6482
        %6484 = vmax.xlane.f32.xlu0 %v6465
        %v6485 = vpop.xlane.xlu0 %6484
        %6486 = vmax.xlane.f32.xlu0 %v6466
        %v6487 = vpop.xlane.xlu0 %6486
        %6488 = vmax.xlane.f32.xlu0 %v6467
        %v6489 = vpop.xlane.xlu0 %6488
        %6490 = vmax.xlane.f32.xlu0 %v6468
        %v6491 = vpop.xlane.xlu0 %6490
        %6492 = vmax.xlane.f32.xlu0 %v6469
        %v6493 = vpop.xlane.xlu0 %6492
        %6494 = vmax.xlane.f32.xlu0 %v6470
        %v6495 = vpop.xlane.xlu0 %6494
        %6496 = vmax.xlane.f32.xlu0 %v6471
        %v6497 = vpop.xlane.xlu0 %6496
        %6498 = vmax.xlane.f32.xlu0 %v6472
        %v6499 = vpop.xlane.xlu0 %6498
        %6500 = vmax.xlane.f32.xlu0 %v6473
        %v6501 = vpop.xlane.xlu0 %6500
        %6502 = vmax.xlane.f32.xlu0 %v6474
        %v6503 = vpop.xlane.xlu0 %6502
        %6504 = vmax.xlane.f32.xlu0 %v6475
        %v6505 = vpop.xlane.xlu0 %6504
        %6506 = vmax.xlane.f32.xlu0 %v6476
        %v6507 = vpop.xlane.xlu0 %6506
        %6508 = vmax.xlane.f32.xlu0 %v6477
        %v6509 = vpop.xlane.xlu0 %6508
        %v6510 = vsub.f32 %v6462, %v6479
        %v6511 = vsub.f32 %v6463, %v6481
        %v6512 = vsub.f32 %v6464, %v6483
        %v6513 = vsub.f32 %v6465, %v6485
        %v6514 = vsub.f32 %v6466, %v6487
        %v6515 = vsub.f32 %v6467, %v6489
        %v6516 = vsub.f32 %v6468, %v6491
        %v6517 = vsub.f32 %v6469, %v6493
        %v6518 = vsub.f32 %v6470, %v6495
        %v6519 = vsub.f32 %v6471, %v6497
        %v6520 = vsub.f32 %v6472, %v6499
        %v6521 = vsub.f32 %v6473, %v6501
        %v6522 = vsub.f32 %v6474, %v6503
        %v6523 = vsub.f32 %v6475, %v6505
        %v6524 = vsub.f32 %v6476, %v6507
        %v6525 = vsub.f32 %v6477, %v6509
        %v6526 = vmul.f32 %v6510, 1.442695
        %v6527 = vpow.pop %v6526
        %v6528 = vmul.f32 %v6511, 1.442695
        %v6529 = vpow.pop %v6528
        %v6530 = vmul.f32 %v6512, 1.442695
        %v6531 = vpow.pop %v6530
        %v6532 = vmul.f32 %v6513, 1.442695
        %v6533 = vpow.pop %v6532
        %v6534 = vmul.f32 %v6514, 1.442695
        %v6535 = vpow.pop %v6534
        %v6536 = vmul.f32 %v6515, 1.442695
        %v6537 = vpow.pop %v6536
        %v6538 = vmul.f32 %v6516, 1.442695
        %v6539 = vpow.pop %v6538
        %v6540 = vmul.f32 %v6517, 1.442695
        %v6541 = vpow.pop %v6540
        %v6542 = vmul.f32 %v6518, 1.442695
        %v6543 = vpow.pop %v6542
        %v6544 = vmul.f32 %v6519, 1.442695
        %v6545 = vpow.pop %v6544
        %v6546 = vmul.f32 %v6520, 1.442695
        %v6547 = vpow.pop %v6546
        %v6548 = vmul.f32 %v6521, 1.442695
        %v6549 = vpow.pop %v6548
        %v6550 = vmul.f32 %v6522, 1.442695
        %v6551 = vpow.pop %v6550
        %v6552 = vmul.f32 %v6523, 1.442695
        %v6553 = vpow.pop %v6552
        %v6554 = vmul.f32 %v6524, 1.442695
        %v6555 = vpow.pop %v6554
        %v6556 = vmul.f32 %v6525, 1.442695
        %v6557 = vpow.pop %v6556
        %6558 = vmatpush.msra.mxu0 1.0
        %6559 = vmatpush.msra.mxu0 1.0
        %6560 = vmatpush.msra.mxu0 1.0
        %6561 = vmatpush.msra.mxu0 1.0
        %6562 = vmatpush.msra.mxu0 1.0
        %6563 = vmatpush.msra.mxu0 1.0
        %6564 = vmatpush.msra.mxu0 1.0
        %6565 = vmatpush.msra.mxu0 1.0
        %6566 = vmatpush.msra.mxu0 1.0
        %6567 = vmatpush.msra.mxu0 1.0
        %6568 = vmatpush.msra.mxu0 1.0
        %6569 = vmatpush.msra.mxu0 1.0
        %6570 = vmatpush.msra.mxu0 1.0
        %6571 = vmatpush.msra.mxu0 1.0
        %6572 = vmatpush.msra.mxu0 1.0
        %6573 = vmatpush.msra.mxu0 1.0
        %6574 = vmatmul.f32.gmra.mxu0 %v6527
        %v6575 = vpop.f32.mrf.mxu0
        %v6576 = vadd.f32 0.0, %v6575
        %6577 = vmatmul.f32.gmra.mxu0 %v6529
        %v6578 = vpop.f32.mrf.mxu0
        %v6579 = vadd.f32 0.0, %v6578
        %6580 = vmatmul.f32.gmra.mxu0 %v6531
        %v6581 = vpop.f32.mrf.mxu0
        %v6582 = vadd.f32 0.0, %v6581
        %6583 = vmatmul.f32.gmra.mxu0 %v6533
        %v6584 = vpop.f32.mrf.mxu0
        %v6585 = vadd.f32 0.0, %v6584
        %6586 = vmatmul.f32.gmra.mxu0 %v6535
        %v6587 = vpop.f32.mrf.mxu0
        %v6588 = vadd.f32 0.0, %v6587
        %6589 = vmatmul.f32.gmra.mxu0 %v6537
        %v6590 = vpop.f32.mrf.mxu0
        %v6591 = vadd.f32 0.0, %v6590
        %6592 = vmatmul.f32.gmra.mxu0 %v6539
        %v6593 = vpop.f32.mrf.mxu0
        %v6594 = vadd.f32 0.0, %v6593
        %6595 = vmatmul.f32.gmra.mxu0 %v6541
        %v6596 = vpop.f32.mrf.mxu0
        %v6597 = vadd.f32 0.0, %v6596
        %6598 = vmatmul.f32.gmra.mxu0 %v6543
        %v6599 = vpop.f32.mrf.mxu0
        %v6600 = vadd.f32 0.0, %v6599
        %6601 = vmatmul.f32.gmra.mxu0 %v6545
        %v6602 = vpop.f32.mrf.mxu0
        %v6603 = vadd.f32 0.0, %v6602
        %6604 = vmatmul.f32.gmra.mxu0 %v6547
        %v6605 = vpop.f32.mrf.mxu0
        %v6606 = vadd.f32 0.0, %v6605
        %6607 = vmatmul.f32.gmra.mxu0 %v6549
        %v6608 = vpop.f32.mrf.mxu0
        %v6609 = vadd.f32 0.0, %v6608
        %6610 = vmatmul.f32.gmra.mxu0 %v6551
        %v6611 = vpop.f32.mrf.mxu0
        %v6612 = vadd.f32 0.0, %v6611
        %6613 = vmatmul.f32.gmra.mxu0 %v6553
        %v6614 = vpop.f32.mrf.mxu0
        %v6615 = vadd.f32 0.0, %v6614
        %6616 = vmatmul.f32.gmra.mxu0 %v6555
        %v6617 = vpop.f32.mrf.mxu0
        %v6618 = vadd.f32 0.0, %v6617
        %6619 = vmatmul.f32.gmra.mxu0 %v6557
        %v6620 = vpop.f32.mrf.mxu0
        %v6621 = vadd.f32 0.0, %v6620
        %6622 = vdwg.mxu0
        %v6623 = vrcp.pop %v6576
        %v6624 = vrcp.pop %v6579
        %v6625 = vrcp.pop %v6582
        %v6626 = vrcp.pop %v6585
        %v6627 = vrcp.pop %v6588
        %v6628 = vrcp.pop %v6591
        %v6629 = vrcp.pop %v6594
        %v6630 = vrcp.pop %v6597
        %v6631 = vrcp.pop %v6600
        %v6632 = vrcp.pop %v6603
        %v6633 = vrcp.pop %v6606
        %v6634 = vrcp.pop %v6609
        %v6635 = vrcp.pop %v6612
        %v6636 = vrcp.pop %v6615
        %v6637 = vrcp.pop %v6618
        %v6638 = vrcp.pop %v6621
        %6639 = vrot.lane.b32.xlu0 %v5195, 64
        %v6640 = vpop.permute.xlu0 %6639
        %6641 = vrot.lane.b32.xlu0 %v5198, 64
        %v6642 = vpop.permute.xlu0 %6641
        %6643 = vrot.lane.b32.xlu0 %v5201, 64
        %v6644 = vpop.permute.xlu0 %6643
        %6645 = vrot.lane.b32.xlu0 %v5204, 64
        %v6646 = vpop.permute.xlu0 %6645
        %6647 = vrot.lane.b32.xlu0 %v5207, 64
        %v6648 = vpop.permute.xlu0 %6647
        %6649 = vrot.lane.b32.xlu0 %v5210, 64
        %v6650 = vpop.permute.xlu0 %6649
        %6651 = vrot.lane.b32.xlu0 %v5213, 64
        %v6652 = vpop.permute.xlu0 %6651
        %6653 = vrot.lane.b32.xlu0 %v5216, 64
        %v6654 = vpop.permute.xlu0 %6653
        %6655 = vrot.lane.b32.xlu0 %v5219, 64
        %v6656 = vpop.permute.xlu0 %6655
        %6657 = vrot.lane.b32.xlu0 %v5222, 64
        %v6658 = vpop.permute.xlu0 %6657
        %6659 = vrot.lane.b32.xlu0 %v5225, 64
        %v6660 = vpop.permute.xlu0 %6659
        %6661 = vrot.lane.b32.xlu0 %v5228, 64
        %v6662 = vpop.permute.xlu0 %6661
        %6663 = vrot.lane.b32.xlu0 %v5231, 64
        %v6664 = vpop.permute.xlu0 %6663
        %6665 = vrot.lane.b32.xlu0 %v5234, 64
        %v6666 = vpop.permute.xlu0 %6665
        %6667 = vrot.lane.b32.xlu0 %v5237, 64
        %v6668 = vpop.permute.xlu0 %6667
        %6669 = vrot.lane.b32.xlu0 %v5240, 64
        %v6670 = vpop.permute.xlu0 %6669
        %6687 = vmatpush.msra.mxu0 %v6670
        %6688 = vmatpush.msra.mxu0 %v6668
        %6689 = vmatpush.msra.mxu0 %v6666
        %6690 = vmatpush.msra.mxu0 %v6664
        %6691 = vmatpush.msra.mxu0 %v6662
        %6692 = vmatpush.msra.mxu0 %v6660
        %6693 = vmatpush.msra.mxu0 %v6658
        %6694 = vmatpush.msra.mxu0 %v6656
        %6695 = vmatpush.msra.mxu0 %v6654
        %6696 = vmatpush.msra.mxu0 %v6652
        %6697 = vmatpush.msra.mxu0 %v6650
        %6698 = vmatpush.msra.mxu0 %v6648
        %6699 = vmatpush.msra.mxu0 %v6646
        %6700 = vmatpush.msra.mxu0 %v6644
        %6701 = vmatpush.msra.mxu0 %v6642
        %6702 = vmatpush.msra.mxu0 %v6640
        %6703 = vmatmul.f32.gmra.mxu0 %v6527
        %v6704 = vpop.f32.mrf.mxu0
        %v6705 = vadd.f32 0.0, %v6704
        %6706 = vmatmul.f32.gmra.mxu0 %v6529
        %v6707 = vpop.f32.mrf.mxu0
        %v6708 = vadd.f32 0.0, %v6707
        %6709 = vmatmul.f32.gmra.mxu0 %v6531
        %v6710 = vpop.f32.mrf.mxu0
        %v6711 = vadd.f32 0.0, %v6710
        %6712 = vmatmul.f32.gmra.mxu0 %v6533
        %v6713 = vpop.f32.mrf.mxu0
        %v6714 = vadd.f32 0.0, %v6713
        %6715 = vmatmul.f32.gmra.mxu0 %v6535
        %v6716 = vpop.f32.mrf.mxu0
        %v6717 = vadd.f32 0.0, %v6716
        %6718 = vmatmul.f32.gmra.mxu0 %v6537
        %v6719 = vpop.f32.mrf.mxu0
        %v6720 = vadd.f32 0.0, %v6719
        %6721 = vmatmul.f32.gmra.mxu0 %v6539
        %v6722 = vpop.f32.mrf.mxu0
        %v6723 = vadd.f32 0.0, %v6722
        %6724 = vmatmul.f32.gmra.mxu0 %v6541
        %v6725 = vpop.f32.mrf.mxu0
        %v6726 = vadd.f32 0.0, %v6725
        %6727 = vmatmul.f32.gmra.mxu0 %v6543
        %v6728 = vpop.f32.mrf.mxu0
        %v6729 = vadd.f32 0.0, %v6728
        %6730 = vmatmul.f32.gmra.mxu0 %v6545
        %v6731 = vpop.f32.mrf.mxu0
        %v6732 = vadd.f32 0.0, %v6731
        %6733 = vmatmul.f32.gmra.mxu0 %v6547
        %v6734 = vpop.f32.mrf.mxu0
        %v6735 = vadd.f32 0.0, %v6734
        %6736 = vmatmul.f32.gmra.mxu0 %v6549
        %v6737 = vpop.f32.mrf.mxu0
        %v6738 = vadd.f32 0.0, %v6737
        %6739 = vmatmul.f32.gmra.mxu0 %v6551
        %v6740 = vpop.f32.mrf.mxu0
        %v6741 = vadd.f32 0.0, %v6740
        %6742 = vmatmul.f32.gmra.mxu0 %v6553
        %v6743 = vpop.f32.mrf.mxu0
        %v6744 = vadd.f32 0.0, %v6743
        %6745 = vmatmul.f32.gmra.mxu0 %v6555
        %v6746 = vpop.f32.mrf.mxu0
        %v6747 = vadd.f32 0.0, %v6746
        %6748 = vmatmul.f32.gmra.mxu0 %v6557
        %v6749 = vpop.f32.mrf.mxu0
        %v6750 = vadd.f32 0.0, %v6749
        %6751 = vdwg.mxu0
        %6753 = vset.pattern.permute.xlu0 0
        %6754 = vperm.xlu0 %6753, %v6623
        %v6755 = vpop.permute.xlu0 %6754
        %6758 = vset.pattern.permute.xlu0 0
        %6759 = vperm.xlu0 %6758, %v6624
        %v6760 = vpop.permute.xlu0 %6759
        %6763 = vset.pattern.permute.xlu0 0
        %6764 = vperm.xlu0 %6763, %v6625
        %v6765 = vpop.permute.xlu0 %6764
        %6768 = vset.pattern.permute.xlu0 0
        %6769 = vperm.xlu0 %6768, %v6626
        %v6770 = vpop.permute.xlu0 %6769
        %6773 = vset.pattern.permute.xlu0 0
        %6774 = vperm.xlu0 %6773, %v6627
        %v6775 = vpop.permute.xlu0 %6774
        %6778 = vset.pattern.permute.xlu0 0
        %6779 = vperm.xlu0 %6778, %v6628
        %v6780 = vpop.permute.xlu0 %6779
        %6783 = vset.pattern.permute.xlu0 0
        %6784 = vperm.xlu0 %6783, %v6629
        %v6785 = vpop.permute.xlu0 %6784
        %6788 = vset.pattern.permute.xlu0 0
        %6789 = vperm.xlu0 %6788, %v6630
        %v6790 = vpop.permute.xlu0 %6789
        %6793 = vset.pattern.permute.xlu0 0
        %6794 = vperm.xlu0 %6793, %v6631
        %v6795 = vpop.permute.xlu0 %6794
        %6798 = vset.pattern.permute.xlu0 0
        %6799 = vperm.xlu0 %6798, %v6632
        %v6800 = vpop.permute.xlu0 %6799
        %6803 = vset.pattern.permute.xlu0 0
        %6804 = vperm.xlu0 %6803, %v6633
        %v6805 = vpop.permute.xlu0 %6804
        %6808 = vset.pattern.permute.xlu0 0
        %6809 = vperm.xlu0 %6808, %v6634
        %v6810 = vpop.permute.xlu0 %6809
        %6813 = vset.pattern.permute.xlu0 0
        %6814 = vperm.xlu0 %6813, %v6635
        %v6815 = vpop.permute.xlu0 %6814
        %6818 = vset.pattern.permute.xlu0 0
        %6819 = vperm.xlu0 %6818, %v6636
        %v6820 = vpop.permute.xlu0 %6819
        %6823 = vset.pattern.permute.xlu0 0
        %6824 = vperm.xlu0 %6823, %v6637
        %v6825 = vpop.permute.xlu0 %6824
        %6828 = vset.pattern.permute.xlu0 0
        %6829 = vperm.xlu0 %6828, %v6638
        %v6830 = vpop.permute.xlu0 %6829
        %v6832 = vmul.f32 %v6705, %v6755
        %v6833 = vmul.f32 %v6708, %v6760
        %v6834 = vmul.f32 %v6711, %v6765
        %v6835 = vmul.f32 %v6714, %v6770
        %v6836 = vmul.f32 %v6717, %v6775
        %v6837 = vmul.f32 %v6720, %v6780
        %v6838 = vmul.f32 %v6723, %v6785
        %v6839 = vmul.f32 %v6726, %v6790
        %v6840 = vmul.f32 %v6729, %v6795
        %v6841 = vmul.f32 %v6732, %v6800
        %v6842 = vmul.f32 %v6735, %v6805
        %v6843 = vmul.f32 %v6738, %v6810
        %v6844 = vmul.f32 %v6741, %v6815
        %v6845 = vmul.f32 %v6744, %v6820
        %v6846 = vmul.f32 %v6747, %v6825
        %v6847 = vmul.f32 %v6750, %v6830
        %v6848 = vadd.f32 %v6333, %v6832
        %v6849 = vadd.f32 %v6334, %v6833
        %v6850 = vadd.f32 %v6335, %v6834
        %v6851 = vadd.f32 %v6336, %v6835
        %v6852 = vadd.f32 %v6337, %v6836
        %v6853 = vadd.f32 %v6338, %v6837
        %v6854 = vadd.f32 %v6339, %v6838
        %v6855 = vadd.f32 %v6340, %v6839
        %v6856 = vadd.f32 %v6341, %v6840
        %v6857 = vadd.f32 %v6342, %v6841
        %v6858 = vadd.f32 %v6343, %v6842
        %v6859 = vadd.f32 %v6344, %v6843
        %v6860 = vadd.f32 %v6345, %v6844
        %v6861 = vadd.f32 %v6346, %v6845
        %v6862 = vadd.f32 %v6347, %v6846
        %v6863 = vadd.f32 %v6348, %v6847
        %6864 = vset.pattern.permute.xlu0 3
        %6865 = vperm.xlu0 %6864, %v5264
        %v6866 = vpop.permute.xlu0 %6865
        %6868 = vset.pattern.permute.xlu0 3
        %6869 = vperm.xlu0 %6868, %v5267
        %v6870 = vpop.permute.xlu0 %6869
        %6872 = vset.pattern.permute.xlu0 3
        %6873 = vperm.xlu0 %6872, %v5270
        %v6874 = vpop.permute.xlu0 %6873
        %6876 = vset.pattern.permute.xlu0 3
        %6877 = vperm.xlu0 %6876, %v5273
        %v6878 = vpop.permute.xlu0 %6877
        %6880 = vset.pattern.permute.xlu0 3
        %6881 = vperm.xlu0 %6880, %v5276
        %v6882 = vpop.permute.xlu0 %6881
        %6884 = vset.pattern.permute.xlu0 3
        %6885 = vperm.xlu0 %6884, %v5279
        %v6886 = vpop.permute.xlu0 %6885
        %6888 = vset.pattern.permute.xlu0 3
        %6889 = vperm.xlu0 %6888, %v5282
        %v6890 = vpop.permute.xlu0 %6889
        %6892 = vset.pattern.permute.xlu0 3
        %6893 = vperm.xlu0 %6892, %v5285
        %v6894 = vpop.permute.xlu0 %6893
        %6896 = vset.pattern.permute.xlu0 3
        %6897 = vperm.xlu0 %6896, %v5288
        %v6898 = vpop.permute.xlu0 %6897
        %6900 = vset.pattern.permute.xlu0 3
        %6901 = vperm.xlu0 %6900, %v5291
        %v6902 = vpop.permute.xlu0 %6901
        %6904 = vset.pattern.permute.xlu0 3
        %6905 = vperm.xlu0 %6904, %v5294
        %v6906 = vpop.permute.xlu0 %6905
        %6908 = vset.pattern.permute.xlu0 3
        %6909 = vperm.xlu0 %6908, %v5297
        %v6910 = vpop.permute.xlu0 %6909
        %6912 = vset.pattern.permute.xlu0 3
        %6913 = vperm.xlu0 %6912, %v5300
        %v6914 = vpop.permute.xlu0 %6913
        %6916 = vset.pattern.permute.xlu0 3
        %6917 = vperm.xlu0 %6916, %v5303
        %v6918 = vpop.permute.xlu0 %6917
        %6920 = vset.pattern.permute.xlu0 3
        %6921 = vperm.xlu0 %6920, %v5306
        %v6922 = vpop.permute.xlu0 %6921
        %6924 = vset.pattern.permute.xlu0 3
        %6925 = vperm.xlu0 %6924, %v5309
        %v6926 = vpop.permute.xlu0 %6925
        %v6928 = vperm.slane %v5333, 3
        %v6929 = vadd.f32 %v6866, %v6928
        %v6930 = vadd.f32 %v6870, %v6928
        %v6931 = vadd.f32 %v6874, %v6928
        %v6932 = vadd.f32 %v6878, %v6928
        %v6933 = vadd.f32 %v6882, %v6928
        %v6934 = vadd.f32 %v6886, %v6928
        %v6935 = vadd.f32 %v6890, %v6928
        %v6936 = vadd.f32 %v6894, %v6928
        %v6937 = vadd.f32 %v6898, %v6928
        %v6938 = vadd.f32 %v6902, %v6928
        %v6939 = vadd.f32 %v6906, %v6928
        %v6940 = vadd.f32 %v6910, %v6928
        %v6941 = vadd.f32 %v6914, %v6928
        %v6942 = vadd.f32 %v6918, %v6928
        %v6943 = vadd.f32 %v6922, %v6928
        %v6944 = vadd.f32 %v6926, %v6928
        %v6945 = vmul.f32 %v6929, 0.2
        %v6946 = vmul.f32 %v6930, 0.2
        %v6947 = vmul.f32 %v6931, 0.2
        %v6948 = vmul.f32 %v6932, 0.2
        %v6949 = vmul.f32 %v6933, 0.2
        %v6950 = vmul.f32 %v6934, 0.2
        %v6951 = vmul.f32 %v6935, 0.2
        %v6952 = vmul.f32 %v6936, 0.2
        %v6953 = vmul.f32 %v6937, 0.2
        %v6954 = vmul.f32 %v6938, 0.2
        %v6955 = vmul.f32 %v6939, 0.2
        %v6956 = vmul.f32 %v6940, 0.2
        %v6957 = vmul.f32 %v6941, 0.2
        %v6958 = vmul.f32 %v6942, 0.2
        %v6959 = vmul.f32 %v6943, 0.2
        %v6960 = vmul.f32 %v6944, 0.2
        %v6961 = vmax.f32 %v6929, %v6945
        %v6962 = vmax.f32 %v6930, %v6946
        %v6963 = vmax.f32 %v6931, %v6947
        %v6964 = vmax.f32 %v6932, %v6948
        %v6965 = vmax.f32 %v6933, %v6949
        %v6966 = vmax.f32 %v6934, %v6950
        %v6967 = vmax.f32 %v6935, %v6951
        %v6968 = vmax.f32 %v6936, %v6952
        %v6969 = vmax.f32 %v6937, %v6953
        %v6970 = vmax.f32 %v6938, %v6954
        %v6971 = vmax.f32 %v6939, %v6955
        %v6972 = vmax.f32 %v6940, %v6956
        %v6973 = vmax.f32 %v6941, %v6957
        %v6974 = vmax.f32 %v6942, %v6958
        %v6975 = vmax.f32 %v6943, %v6959
        %v6976 = vmax.f32 %v6944, %v6960
        %v6977 = vadd.f32 %v6961, %v5109
        %v6978 = vadd.f32 %v6962, %v5110
        %v6979 = vadd.f32 %v6963, %v5111
        %v6980 = vadd.f32 %v6964, %v5112
        %v6981 = vadd.f32 %v6965, %v5113
        %v6982 = vadd.f32 %v6966, %v5114
        %v6983 = vadd.f32 %v6967, %v5115
        %v6984 = vadd.f32 %v6968, %v5116
        %v6985 = vadd.f32 %v6969, %v5117
        %v6986 = vadd.f32 %v6970, %v5118
        %v6987 = vadd.f32 %v6971, %v5119
        %v6988 = vadd.f32 %v6972, %v5120
        %v6989 = vadd.f32 %v6973, %v5121
        %v6990 = vadd.f32 %v6974, %v5122
        %v6991 = vadd.f32 %v6975, %v5123
        %v6992 = vadd.f32 %v6976, %v5124
        %6993 = vmax.xlane.f32.xlu0 %v6977
        %v6994 = vpop.xlane.xlu0 %6993
        %6995 = vmax.xlane.f32.xlu0 %v6978
        %v6996 = vpop.xlane.xlu0 %6995
        %6997 = vmax.xlane.f32.xlu0 %v6979
        %v6998 = vpop.xlane.xlu0 %6997
        %6999 = vmax.xlane.f32.xlu0 %v6980
        %v7000 = vpop.xlane.xlu0 %6999
        %7001 = vmax.xlane.f32.xlu0 %v6981
        %v7002 = vpop.xlane.xlu0 %7001
        %7003 = vmax.xlane.f32.xlu0 %v6982
        %v7004 = vpop.xlane.xlu0 %7003
        %7005 = vmax.xlane.f32.xlu0 %v6983
        %v7006 = vpop.xlane.xlu0 %7005
        %7007 = vmax.xlane.f32.xlu0 %v6984
        %v7008 = vpop.xlane.xlu0 %7007
        %7009 = vmax.xlane.f32.xlu0 %v6985
        %v7010 = vpop.xlane.xlu0 %7009
        %7011 = vmax.xlane.f32.xlu0 %v6986
        %v7012 = vpop.xlane.xlu0 %7011
        %7013 = vmax.xlane.f32.xlu0 %v6987
        %v7014 = vpop.xlane.xlu0 %7013
        %7015 = vmax.xlane.f32.xlu0 %v6988
        %v7016 = vpop.xlane.xlu0 %7015
        %7017 = vmax.xlane.f32.xlu0 %v6989
        %v7018 = vpop.xlane.xlu0 %7017
        %7019 = vmax.xlane.f32.xlu0 %v6990
        %v7020 = vpop.xlane.xlu0 %7019
        %7021 = vmax.xlane.f32.xlu0 %v6991
        %v7022 = vpop.xlane.xlu0 %7021
        %7023 = vmax.xlane.f32.xlu0 %v6992
        %v7024 = vpop.xlane.xlu0 %7023
        %v7025 = vsub.f32 %v6977, %v6994
        %v7026 = vsub.f32 %v6978, %v6996
        %v7027 = vsub.f32 %v6979, %v6998
        %v7028 = vsub.f32 %v6980, %v7000
        %v7029 = vsub.f32 %v6981, %v7002
        %v7030 = vsub.f32 %v6982, %v7004
        %v7031 = vsub.f32 %v6983, %v7006
        %v7032 = vsub.f32 %v6984, %v7008
        %v7033 = vsub.f32 %v6985, %v7010
        %v7034 = vsub.f32 %v6986, %v7012
        %v7035 = vsub.f32 %v6987, %v7014
        %v7036 = vsub.f32 %v6988, %v7016
        %v7037 = vsub.f32 %v6989, %v7018
        %v7038 = vsub.f32 %v6990, %v7020
        %v7039 = vsub.f32 %v6991, %v7022
        %v7040 = vsub.f32 %v6992, %v7024
        %v7041 = vmul.f32 %v7025, 1.442695
        %v7042 = vpow.pop %v7041
        %v7043 = vmul.f32 %v7026, 1.442695
        %v7044 = vpow.pop %v7043
        %v7045 = vmul.f32 %v7027, 1.442695
        %v7046 = vpow.pop %v7045
        %v7047 = vmul.f32 %v7028, 1.442695
        %v7048 = vpow.pop %v7047
        %v7049 = vmul.f32 %v7029, 1.442695
        %v7050 = vpow.pop %v7049
        %v7051 = vmul.f32 %v7030, 1.442695
        %v7052 = vpow.pop %v7051
        %v7053 = vmul.f32 %v7031, 1.442695
        %v7054 = vpow.pop %v7053
        %v7055 = vmul.f32 %v7032, 1.442695
        %v7056 = vpow.pop %v7055
        %v7057 = vmul.f32 %v7033, 1.442695
        %v7058 = vpow.pop %v7057
        %v7059 = vmul.f32 %v7034, 1.442695
        %v7060 = vpow.pop %v7059
        %v7061 = vmul.f32 %v7035, 1.442695
        %v7062 = vpow.pop %v7061
        %v7063 = vmul.f32 %v7036, 1.442695
        %v7064 = vpow.pop %v7063
        %v7065 = vmul.f32 %v7037, 1.442695
        %v7066 = vpow.pop %v7065
        %v7067 = vmul.f32 %v7038, 1.442695
        %v7068 = vpow.pop %v7067
        %v7069 = vmul.f32 %v7039, 1.442695
        %v7070 = vpow.pop %v7069
        %v7071 = vmul.f32 %v7040, 1.442695
        %v7072 = vpow.pop %v7071
        %7073 = vmatpush.msra.mxu0 1.0
        %7074 = vmatpush.msra.mxu0 1.0
        %7075 = vmatpush.msra.mxu0 1.0
        %7076 = vmatpush.msra.mxu0 1.0
        %7077 = vmatpush.msra.mxu0 1.0
        %7078 = vmatpush.msra.mxu0 1.0
        %7079 = vmatpush.msra.mxu0 1.0
        %7080 = vmatpush.msra.mxu0 1.0
        %7081 = vmatpush.msra.mxu0 1.0
        %7082 = vmatpush.msra.mxu0 1.0
        %7083 = vmatpush.msra.mxu0 1.0
        %7084 = vmatpush.msra.mxu0 1.0
        %7085 = vmatpush.msra.mxu0 1.0
        %7086 = vmatpush.msra.mxu0 1.0
        %7087 = vmatpush.msra.mxu0 1.0
        %7088 = vmatpush.msra.mxu0 1.0
        %7089 = vmatmul.f32.gmra.mxu0 %v7042
        %v7090 = vpop.f32.mrf.mxu0
        %v7091 = vadd.f32 0.0, %v7090
        %7092 = vmatmul.f32.gmra.mxu0 %v7044
        %v7093 = vpop.f32.mrf.mxu0
        %v7094 = vadd.f32 0.0, %v7093
        %7095 = vmatmul.f32.gmra.mxu0 %v7046
        %v7096 = vpop.f32.mrf.mxu0
        %v7097 = vadd.f32 0.0, %v7096
        %7098 = vmatmul.f32.gmra.mxu0 %v7048
        %v7099 = vpop.f32.mrf.mxu0
        %v7100 = vadd.f32 0.0, %v7099
        %7101 = vmatmul.f32.gmra.mxu0 %v7050
        %v7102 = vpop.f32.mrf.mxu0
        %v7103 = vadd.f32 0.0, %v7102
        %7104 = vmatmul.f32.gmra.mxu0 %v7052
        %v7105 = vpop.f32.mrf.mxu0
        %v7106 = vadd.f32 0.0, %v7105
        %7107 = vmatmul.f32.gmra.mxu0 %v7054
        %v7108 = vpop.f32.mrf.mxu0
        %v7109 = vadd.f32 0.0, %v7108
        %7110 = vmatmul.f32.gmra.mxu0 %v7056
        %v7111 = vpop.f32.mrf.mxu0
        %v7112 = vadd.f32 0.0, %v7111
        %7113 = vmatmul.f32.gmra.mxu0 %v7058
        %v7114 = vpop.f32.mrf.mxu0
        %v7115 = vadd.f32 0.0, %v7114
        %7116 = vmatmul.f32.gmra.mxu0 %v7060
        %v7117 = vpop.f32.mrf.mxu0
        %v7118 = vadd.f32 0.0, %v7117
        %7119 = vmatmul.f32.gmra.mxu0 %v7062
        %v7120 = vpop.f32.mrf.mxu0
        %v7121 = vadd.f32 0.0, %v7120
        %7122 = vmatmul.f32.gmra.mxu0 %v7064
        %v7123 = vpop.f32.mrf.mxu0
        %v7124 = vadd.f32 0.0, %v7123
        %7125 = vmatmul.f32.gmra.mxu0 %v7066
        %v7126 = vpop.f32.mrf.mxu0
        %v7127 = vadd.f32 0.0, %v7126
        %7128 = vmatmul.f32.gmra.mxu0 %v7068
        %v7129 = vpop.f32.mrf.mxu0
        %v7130 = vadd.f32 0.0, %v7129
        %7131 = vmatmul.f32.gmra.mxu0 %v7070
        %v7132 = vpop.f32.mrf.mxu0
        %v7133 = vadd.f32 0.0, %v7132
        %7134 = vmatmul.f32.gmra.mxu0 %v7072
        %v7135 = vpop.f32.mrf.mxu0
        %v7136 = vadd.f32 0.0, %v7135
        %7137 = vdwg.mxu0
        %v7138 = vrcp.pop %v7091
        %v7139 = vrcp.pop %v7094
        %v7140 = vrcp.pop %v7097
        %v7141 = vrcp.pop %v7100
        %v7142 = vrcp.pop %v7103
        %v7143 = vrcp.pop %v7106
        %v7144 = vrcp.pop %v7109
        %v7145 = vrcp.pop %v7112
        %v7146 = vrcp.pop %v7115
        %v7147 = vrcp.pop %v7118
        %v7148 = vrcp.pop %v7121
        %v7149 = vrcp.pop %v7124
        %v7150 = vrcp.pop %v7127
        %v7151 = vrcp.pop %v7130
        %v7152 = vrcp.pop %v7133
        %v7153 = vrcp.pop %v7136
        %7154 = vrot.lane.b32.xlu0 %v5195, 32
        %v7155 = vpop.permute.xlu0 %7154
        %7156 = vrot.lane.b32.xlu0 %v5198, 32
        %v7157 = vpop.permute.xlu0 %7156
        %7158 = vrot.lane.b32.xlu0 %v5201, 32
        %v7159 = vpop.permute.xlu0 %7158
        %7160 = vrot.lane.b32.xlu0 %v5204, 32
        %v7161 = vpop.permute.xlu0 %7160
        %7162 = vrot.lane.b32.xlu0 %v5207, 32
        %v7163 = vpop.permute.xlu0 %7162
        %7164 = vrot.lane.b32.xlu0 %v5210, 32
        %v7165 = vpop.permute.xlu0 %7164
        %7166 = vrot.lane.b32.xlu0 %v5213, 32
        %v7167 = vpop.permute.xlu0 %7166
        %7168 = vrot.lane.b32.xlu0 %v5216, 32
        %v7169 = vpop.permute.xlu0 %7168
        %7170 = vrot.lane.b32.xlu0 %v5219, 32
        %v7171 = vpop.permute.xlu0 %7170
        %7172 = vrot.lane.b32.xlu0 %v5222, 32
        %v7173 = vpop.permute.xlu0 %7172
        %7174 = vrot.lane.b32.xlu0 %v5225, 32
        %v7175 = vpop.permute.xlu0 %7174
        %7176 = vrot.lane.b32.xlu0 %v5228, 32
        %v7177 = vpop.permute.xlu0 %7176
        %7178 = vrot.lane.b32.xlu0 %v5231, 32
        %v7179 = vpop.permute.xlu0 %7178
        %7180 = vrot.lane.b32.xlu0 %v5234, 32
        %v7181 = vpop.permute.xlu0 %7180
        %7182 = vrot.lane.b32.xlu0 %v5237, 32
        %v7183 = vpop.permute.xlu0 %7182
        %7184 = vrot.lane.b32.xlu0 %v5240, 32
        %v7185 = vpop.permute.xlu0 %7184
        %7202 = vmatpush.msra.mxu0 %v7185
        %7203 = vmatpush.msra.mxu0 %v7183
        %7204 = vmatpush.msra.mxu0 %v7181
        %7205 = vmatpush.msra.mxu0 %v7179
        %7206 = vmatpush.msra.mxu0 %v7177
        %7207 = vmatpush.msra.mxu0 %v7175
        %7208 = vmatpush.msra.mxu0 %v7173
        %7209 = vmatpush.msra.mxu0 %v7171
        %7210 = vmatpush.msra.mxu0 %v7169
        %7211 = vmatpush.msra.mxu0 %v7167
        %7212 = vmatpush.msra.mxu0 %v7165
        %7213 = vmatpush.msra.mxu0 %v7163
        %7214 = vmatpush.msra.mxu0 %v7161
        %7215 = vmatpush.msra.mxu0 %v7159
        %7216 = vmatpush.msra.mxu0 %v7157
        %7217 = vmatpush.msra.mxu0 %v7155
        %7218 = vmatmul.f32.gmra.mxu0 %v7042
        %v7219 = vpop.f32.mrf.mxu0
        %v7220 = vadd.f32 0.0, %v7219
        %7221 = vmatmul.f32.gmra.mxu0 %v7044
        %v7222 = vpop.f32.mrf.mxu0
        %v7223 = vadd.f32 0.0, %v7222
        %7224 = vmatmul.f32.gmra.mxu0 %v7046
        %v7225 = vpop.f32.mrf.mxu0
        %v7226 = vadd.f32 0.0, %v7225
        %7227 = vmatmul.f32.gmra.mxu0 %v7048
        %v7228 = vpop.f32.mrf.mxu0
        %v7229 = vadd.f32 0.0, %v7228
        %7230 = vmatmul.f32.gmra.mxu0 %v7050
        %v7231 = vpop.f32.mrf.mxu0
        %v7232 = vadd.f32 0.0, %v7231
        %7233 = vmatmul.f32.gmra.mxu0 %v7052
        %v7234 = vpop.f32.mrf.mxu0
        %v7235 = vadd.f32 0.0, %v7234
        %7236 = vmatmul.f32.gmra.mxu0 %v7054
        %v7237 = vpop.f32.mrf.mxu0
        %v7238 = vadd.f32 0.0, %v7237
        %7239 = vmatmul.f32.gmra.mxu0 %v7056
        %v7240 = vpop.f32.mrf.mxu0
        %v7241 = vadd.f32 0.0, %v7240
        %7242 = vmatmul.f32.gmra.mxu0 %v7058
        %v7243 = vpop.f32.mrf.mxu0
        %v7244 = vadd.f32 0.0, %v7243
        %7245 = vmatmul.f32.gmra.mxu0 %v7060
        %v7246 = vpop.f32.mrf.mxu0
        %v7247 = vadd.f32 0.0, %v7246
        %7248 = vmatmul.f32.gmra.mxu0 %v7062
        %v7249 = vpop.f32.mrf.mxu0
        %v7250 = vadd.f32 0.0, %v7249
        %7251 = vmatmul.f32.gmra.mxu0 %v7064
        %v7252 = vpop.f32.mrf.mxu0
        %v7253 = vadd.f32 0.0, %v7252
        %7254 = vmatmul.f32.gmra.mxu0 %v7066
        %v7255 = vpop.f32.mrf.mxu0
        %v7256 = vadd.f32 0.0, %v7255
        %7257 = vmatmul.f32.gmra.mxu0 %v7068
        %v7258 = vpop.f32.mrf.mxu0
        %v7259 = vadd.f32 0.0, %v7258
        %7260 = vmatmul.f32.gmra.mxu0 %v7070
        %v7261 = vpop.f32.mrf.mxu0
        %v7262 = vadd.f32 0.0, %v7261
        %7263 = vmatmul.f32.gmra.mxu0 %v7072
        %v7264 = vpop.f32.mrf.mxu0
        %v7265 = vadd.f32 0.0, %v7264
        %7266 = vdwg.mxu0
        %7268 = vset.pattern.permute.xlu0 0
        %7269 = vperm.xlu0 %7268, %v7138
        %v7270 = vpop.permute.xlu0 %7269
        %7273 = vset.pattern.permute.xlu0 0
        %7274 = vperm.xlu0 %7273, %v7139
        %v7275 = vpop.permute.xlu0 %7274
        %7278 = vset.pattern.permute.xlu0 0
        %7279 = vperm.xlu0 %7278, %v7140
        %v7280 = vpop.permute.xlu0 %7279
        %7283 = vset.pattern.permute.xlu0 0
        %7284 = vperm.xlu0 %7283, %v7141
        %v7285 = vpop.permute.xlu0 %7284
        %7288 = vset.pattern.permute.xlu0 0
        %7289 = vperm.xlu0 %7288, %v7142
        %v7290 = vpop.permute.xlu0 %7289
        %7293 = vset.pattern.permute.xlu0 0
        %7294 = vperm.xlu0 %7293, %v7143
        %v7295 = vpop.permute.xlu0 %7294
        %7298 = vset.pattern.permute.xlu0 0
        %7299 = vperm.xlu0 %7298, %v7144
        %v7300 = vpop.permute.xlu0 %7299
        %7303 = vset.pattern.permute.xlu0 0
        %7304 = vperm.xlu0 %7303, %v7145
        %v7305 = vpop.permute.xlu0 %7304
        %7308 = vset.pattern.permute.xlu0 0
        %7309 = vperm.xlu0 %7308, %v7146
        %v7310 = vpop.permute.xlu0 %7309
        %7313 = vset.pattern.permute.xlu0 0
        %7314 = vperm.xlu0 %7313, %v7147
        %v7315 = vpop.permute.xlu0 %7314
        %7318 = vset.pattern.permute.xlu0 0
        %7319 = vperm.xlu0 %7318, %v7148
        %v7320 = vpop.permute.xlu0 %7319
        %7323 = vset.pattern.permute.xlu0 0
        %7324 = vperm.xlu0 %7323, %v7149
        %v7325 = vpop.permute.xlu0 %7324
        %7328 = vset.pattern.permute.xlu0 0
        %7329 = vperm.xlu0 %7328, %v7150
        %v7330 = vpop.permute.xlu0 %7329
        %7333 = vset.pattern.permute.xlu0 0
        %7334 = vperm.xlu0 %7333, %v7151
        %v7335 = vpop.permute.xlu0 %7334
        %7338 = vset.pattern.permute.xlu0 0
        %7339 = vperm.xlu0 %7338, %v7152
        %v7340 = vpop.permute.xlu0 %7339
        %7343 = vset.pattern.permute.xlu0 0
        %7344 = vperm.xlu0 %7343, %v7153
        %v7345 = vpop.permute.xlu0 %7344
        %v7347 = vmul.f32 %v7220, %v7270
        %v7348 = vmul.f32 %v7223, %v7275
        %v7349 = vmul.f32 %v7226, %v7280
        %v7350 = vmul.f32 %v7229, %v7285
        %v7351 = vmul.f32 %v7232, %v7290
        %v7352 = vmul.f32 %v7235, %v7295
        %v7353 = vmul.f32 %v7238, %v7300
        %v7354 = vmul.f32 %v7241, %v7305
        %v7355 = vmul.f32 %v7244, %v7310
        %v7356 = vmul.f32 %v7247, %v7315
        %v7357 = vmul.f32 %v7250, %v7320
        %v7358 = vmul.f32 %v7253, %v7325
        %v7359 = vmul.f32 %v7256, %v7330
        %v7360 = vmul.f32 %v7259, %v7335
        %v7361 = vmul.f32 %v7262, %v7340
        %v7362 = vmul.f32 %v7265, %v7345
        %v7363 = vadd.f32 %v6848, %v7347
        %v7364 = vadd.f32 %v6849, %v7348
        %v7365 = vadd.f32 %v6850, %v7349
        %v7366 = vadd.f32 %v6851, %v7350
        %v7367 = vadd.f32 %v6852, %v7351
        %v7368 = vadd.f32 %v6853, %v7352
        %v7369 = vadd.f32 %v6854, %v7353
        %v7370 = vadd.f32 %v6855, %v7354
        %v7371 = vadd.f32 %v6856, %v7355
        %v7372 = vadd.f32 %v6857, %v7356
        %v7373 = vadd.f32 %v6858, %v7357
        %v7374 = vadd.f32 %v6859, %v7358
        %v7375 = vadd.f32 %v6860, %v7359
        %v7376 = vadd.f32 %v6861, %v7360
        %v7377 = vadd.f32 %v6862, %v7361
        %v7378 = vadd.f32 %v6863, %v7362
        %7379 = vrot.lane.b32.xlu0 %v4600, 32
        %v7380 = vpop.permute.xlu0 %7379
        %v7382 = vadd.f32 %v7363, %v7380
        %v7383 = vadd.f32 %v7364, %v7380
        %v7384 = vadd.f32 %v7365, %v7380
        %v7385 = vadd.f32 %v7366, %v7380
        %v7386 = vadd.f32 %v7367, %v7380
        %v7387 = vadd.f32 %v7368, %v7380
        %v7388 = vadd.f32 %v7369, %v7380
        %v7389 = vadd.f32 %v7370, %v7380
        %v7390 = vadd.f32 %v7371, %v7380
        %v7391 = vadd.f32 %v7372, %v7380
        %v7392 = vadd.f32 %v7373, %v7380
        %v7393 = vadd.f32 %v7374, %v7380
        %v7394 = vadd.f32 %v7375, %v7380
        %v7395 = vadd.f32 %v7376, %v7380
        %v7396 = vadd.f32 %v7377, %v7380
        %v7397 = vadd.f32 %v7378, %v7380
        %v7398 = vmax.f32 %v7382, 0.0
        %v7399 = vmax.f32 %v7383, 0.0
        %v7400 = vmax.f32 %v7384, 0.0
        %v7401 = vmax.f32 %v7385, 0.0
        %v7402 = vmax.f32 %v7386, 0.0
        %v7403 = vmax.f32 %v7387, 0.0
        %v7404 = vmax.f32 %v7388, 0.0
        %v7405 = vmax.f32 %v7389, 0.0
        %v7406 = vmax.f32 %v7390, 0.0
        %v7407 = vmax.f32 %v7391, 0.0
        %v7408 = vmax.f32 %v7392, 0.0
        %v7409 = vmax.f32 %v7393, 0.0
        %v7410 = vmax.f32 %v7394, 0.0
        %v7411 = vmax.f32 %v7395, 0.0
        %v7412 = vmax.f32 %v7396, 0.0
        %v7413 = vmax.f32 %v7397, 0.0
        %7414 = vmatpush.msra.mxu0 %v7413
        %7415 = vmatpush.msra.mxu0 %v7412
        %7416 = vmatpush.msra.mxu0 %v7411
        %7417 = vmatpush.msra.mxu0 %v7410
        %7418 = vmatpush.msra.mxu0 %v7409
        %7419 = vmatpush.msra.mxu0 %v7408
        %7420 = vmatpush.msra.mxu0 %v7407
        %7421 = vmatpush.msra.mxu0 %v7406
        %7422 = vmatpush.msra.mxu0 %v7405
        %7423 = vmatpush.msra.mxu0 %v7404
        %7424 = vmatpush.msra.mxu0 %v7403
        %7425 = vmatpush.msra.mxu0 %v7402
        %7426 = vmatpush.msra.mxu0 %v7401
        %7427 = vmatpush.msra.mxu0 %v7400
        %7428 = vmatpush.msra.mxu0 %v7399
        %7429 = vmatpush.msra.mxu0 %v7398
        %7430 = vmatmul.f32.gmra.mxu0 %v4582
        %v7431 = vpop.f32.mrf.mxu0
        %v7432 = vadd.f32 0.0, %v7431
        %7433 = vmatmul.f32.gmra.mxu0 %v4583
        %v7434 = vpop.f32.mrf.mxu0
        %v7435 = vadd.f32 0.0, %v7434
        %7436 = vmatmul.f32.gmra.mxu0 %v4584
        %v7437 = vpop.f32.mrf.mxu0
        %v7438 = vadd.f32 0.0, %v7437
        %7439 = vmatmul.f32.gmra.mxu0 %v4585
        %v7440 = vpop.f32.mrf.mxu0
        %v7441 = vadd.f32 0.0, %v7440
        %7442 = vmatmul.f32.gmra.mxu0 %v4586
        %v7443 = vpop.f32.mrf.mxu0
        %v7444 = vadd.f32 0.0, %v7443
        %7445 = vmatmul.f32.gmra.mxu0 %v4587
        %v7446 = vpop.f32.mrf.mxu0
        %v7447 = vadd.f32 0.0, %v7446
        %7448 = vmatmul.f32.gmra.mxu0 %v4588
        %v7449 = vpop.f32.mrf.mxu0
        %v7450 = vadd.f32 0.0, %v7449
        %7451 = vmatmul.f32.gmra.mxu0 %v4589
        %v7452 = vpop.f32.mrf.mxu0
        %v7453 = vadd.f32 0.0, %v7452
        %7454 = vmatmul.f32.gmra.mxu0 %v4590
        %v7455 = vpop.f32.mrf.mxu0
        %v7456 = vadd.f32 0.0, %v7455
        %7457 = vmatmul.f32.gmra.mxu0 %v4591
        %v7458 = vpop.f32.mrf.mxu0
        %v7459 = vadd.f32 0.0, %v7458
        %7460 = vmatmul.f32.gmra.mxu0 %v4592
        %v7461 = vpop.f32.mrf.mxu0
        %v7462 = vadd.f32 0.0, %v7461
        %7463 = vmatmul.f32.gmra.mxu0 %v4593
        %v7464 = vpop.f32.mrf.mxu0
        %v7465 = vadd.f32 0.0, %v7464
        %7466 = vmatmul.f32.gmra.mxu0 %v4594
        %v7467 = vpop.f32.mrf.mxu0
        %v7468 = vadd.f32 0.0, %v7467
        %7469 = vmatmul.f32.gmra.mxu0 %v4595
        %v7470 = vpop.f32.mrf.mxu0
        %v7471 = vadd.f32 0.0, %v7470
        %7472 = vmatmul.f32.gmra.mxu0 %v4596
        %v7473 = vpop.f32.mrf.mxu0
        %v7474 = vadd.f32 0.0, %v7473
        %7475 = vmatmul.f32.gmra.mxu0 %v4597
        %v7476 = vpop.f32.mrf.mxu0
        %v7477 = vadd.f32 0.0, %v7476
        %7478 = vdwg.mxu0
        %7479 = vrot.lane.b32.xlu0 %v4795, 32
        %v7480 = vpop.permute.xlu0 %7479
        %7481 = vrot.lane.b32.xlu0 %v4796, 32
        %v7482 = vpop.permute.xlu0 %7481
        %7483 = vrot.lane.b32.xlu0 %v4797, 32
        %v7484 = vpop.permute.xlu0 %7483
        %7485 = vrot.lane.b32.xlu0 %v4798, 32
        %v7486 = vpop.permute.xlu0 %7485
        %v7492 = vsel %vm557, %v7398, 0
        %v7495 = vsel %vm557, %v7399, 0
        %v7498 = vsel %vm557, %v7400, 0
        %v7501 = vsel %vm557, %v7401, 0
        %v7504 = vsel %vm557, %v7402, 0
        %v7507 = vsel %vm557, %v7403, 0
        %v7510 = vsel %vm557, %v7404, 0
        %v7513 = vsel %vm557, %v7405, 0
        %v7516 = vsel %vm557, %v7406, 0
        %v7519 = vsel %vm557, %v7407, 0
        %v7522 = vsel %vm557, %v7408, 0
        %v7525 = vsel %vm557, %v7409, 0
        %v7528 = vsel %vm557, %v7410, 0
        %v7531 = vsel %vm557, %v7411, 0
        %v7534 = vsel %vm557, %v7412, 0
        %v7537 = vsel %vm557, %v7413, 0
        %7539 = vmatpush.msra.mxu0 0.0
        %7540 = vmatpush.msra.mxu0 0.0
        %7541 = vmatpush.msra.mxu0 0.0
        %7542 = vmatpush.msra.mxu0 0.0
        %7543 = vmatpush.msra.mxu0 0.0
        %7544 = vmatpush.msra.mxu0 0.0
        %7545 = vmatpush.msra.mxu0 0.0
        %7546 = vmatpush.msra.mxu0 0.0
        %7547 = vmatpush.msra.mxu0 0.0
        %7548 = vmatpush.msra.mxu0 0.0
        %7549 = vmatpush.msra.mxu0 0.0
        %7550 = vmatpush.msra.mxu0 0.0
        %7551 = vmatpush.msra.mxu0 %v7486
        %7552 = vmatpush.msra.mxu0 %v7484
        %7553 = vmatpush.msra.mxu0 %v7482
        %7554 = vmatpush.msra.mxu0 %v7480
        %7555 = vmatmul.f32.gmra.mxu0 %v7492
        %v7556 = vpop.f32.mrf.mxu0
        %v7557 = vadd.f32 0.0, %v7556
        %7558 = vmatmul.f32.gmra.mxu0 %v7495
        %v7559 = vpop.f32.mrf.mxu0
        %v7560 = vadd.f32 0.0, %v7559
        %7561 = vmatmul.f32.gmra.mxu0 %v7498
        %v7562 = vpop.f32.mrf.mxu0
        %v7563 = vadd.f32 0.0, %v7562
        %7564 = vmatmul.f32.gmra.mxu0 %v7501
        %v7565 = vpop.f32.mrf.mxu0
        %v7566 = vadd.f32 0.0, %v7565
        %7567 = vmatmul.f32.gmra.mxu0 %v7504
        %v7568 = vpop.f32.mrf.mxu0
        %v7569 = vadd.f32 0.0, %v7568
        %7570 = vmatmul.f32.gmra.mxu0 %v7507
        %v7571 = vpop.f32.mrf.mxu0
        %v7572 = vadd.f32 0.0, %v7571
        %7573 = vmatmul.f32.gmra.mxu0 %v7510
        %v7574 = vpop.f32.mrf.mxu0
        %v7575 = vadd.f32 0.0, %v7574
        %7576 = vmatmul.f32.gmra.mxu0 %v7513
        %v7577 = vpop.f32.mrf.mxu0
        %v7578 = vadd.f32 0.0, %v7577
        %7579 = vmatmul.f32.gmra.mxu0 %v7516
        %v7580 = vpop.f32.mrf.mxu0
        %v7581 = vadd.f32 0.0, %v7580
        %7582 = vmatmul.f32.gmra.mxu0 %v7519
        %v7583 = vpop.f32.mrf.mxu0
        %v7584 = vadd.f32 0.0, %v7583
        %7585 = vmatmul.f32.gmra.mxu0 %v7522
        %v7586 = vpop.f32.mrf.mxu0
        %v7587 = vadd.f32 0.0, %v7586
        %7588 = vmatmul.f32.gmra.mxu0 %v7525
        %v7589 = vpop.f32.mrf.mxu0
        %v7590 = vadd.f32 0.0, %v7589
        %7591 = vmatmul.f32.gmra.mxu0 %v7528
        %v7592 = vpop.f32.mrf.mxu0
        %v7593 = vadd.f32 0.0, %v7592
        %7594 = vmatmul.f32.gmra.mxu0 %v7531
        %v7595 = vpop.f32.mrf.mxu0
        %v7596 = vadd.f32 0.0, %v7595
        %7597 = vmatmul.f32.gmra.mxu0 %v7534
        %v7598 = vpop.f32.mrf.mxu0
        %v7599 = vadd.f32 0.0, %v7598
        %7600 = vmatmul.f32.gmra.mxu0 %v7537
        %v7601 = vpop.f32.mrf.mxu0
        %v7602 = vadd.f32 0.0, %v7601
        %7603 = vdwg.mxu0
        %7604 = vrot.lane.b32.xlu0 %v4795, 64
        %v7605 = vpop.permute.xlu0 %7604
        %7606 = vrot.lane.b32.xlu0 %v4796, 64
        %v7607 = vpop.permute.xlu0 %7606
        %7608 = vrot.lane.b32.xlu0 %v4797, 64
        %v7609 = vpop.permute.xlu0 %7608
        %7610 = vrot.lane.b32.xlu0 %v4798, 64
        %v7611 = vpop.permute.xlu0 %7610
        %v7617 = vsel %vm557, %v7432, 0
        %v7620 = vsel %vm557, %v7435, 0
        %v7623 = vsel %vm557, %v7438, 0
        %v7626 = vsel %vm557, %v7441, 0
        %v7629 = vsel %vm557, %v7444, 0
        %v7632 = vsel %vm557, %v7447, 0
        %v7635 = vsel %vm557, %v7450, 0
        %v7638 = vsel %vm557, %v7453, 0
        %v7641 = vsel %vm557, %v7456, 0
        %v7644 = vsel %vm557, %v7459, 0
        %v7647 = vsel %vm557, %v7462, 0
        %v7650 = vsel %vm557, %v7465, 0
        %v7653 = vsel %vm557, %v7468, 0
        %v7656 = vsel %vm557, %v7471, 0
        %v7659 = vsel %vm557, %v7474, 0
        %v7662 = vsel %vm557, %v7477, 0
        %7664 = vmatpush.msra.mxu0 0.0
        %7665 = vmatpush.msra.mxu0 0.0
        %7666 = vmatpush.msra.mxu0 0.0
        %7667 = vmatpush.msra.mxu0 0.0
        %7668 = vmatpush.msra.mxu0 0.0
        %7669 = vmatpush.msra.mxu0 0.0
        %7670 = vmatpush.msra.mxu0 0.0
        %7671 = vmatpush.msra.mxu0 0.0
        %7672 = vmatpush.msra.mxu0 0.0
        %7673 = vmatpush.msra.mxu0 0.0
        %7674 = vmatpush.msra.mxu0 0.0
        %7675 = vmatpush.msra.mxu0 0.0
        %7676 = vmatpush.msra.mxu0 %v7611
        %7677 = vmatpush.msra.mxu0 %v7609
        %7678 = vmatpush.msra.mxu0 %v7607
        %7679 = vmatpush.msra.mxu0 %v7605
        %7680 = vmatmul.f32.gmra.mxu0 %v7617
        %v7681 = vpop.f32.mrf.mxu0
        %v7682 = vadd.f32 %v7557, %v7681
        %7683 = vmatmul.f32.gmra.mxu0 %v7620
        %v7684 = vpop.f32.mrf.mxu0
        %v7685 = vadd.f32 %v7560, %v7684
        %7686 = vmatmul.f32.gmra.mxu0 %v7623
        %v7687 = vpop.f32.mrf.mxu0
        %v7688 = vadd.f32 %v7563, %v7687
        %7689 = vmatmul.f32.gmra.mxu0 %v7626
        %v7690 = vpop.f32.mrf.mxu0
        %v7691 = vadd.f32 %v7566, %v7690
        %7692 = vmatmul.f32.gmra.mxu0 %v7629
        %v7693 = vpop.f32.mrf.mxu0
        %v7694 = vadd.f32 %v7569, %v7693
        %7695 = vmatmul.f32.gmra.mxu0 %v7632
        %v7696 = vpop.f32.mrf.mxu0
        %v7697 = vadd.f32 %v7572, %v7696
        %7698 = vmatmul.f32.gmra.mxu0 %v7635
        %v7699 = vpop.f32.mrf.mxu0
        %v7700 = vadd.f32 %v7575, %v7699
        %7701 = vmatmul.f32.gmra.mxu0 %v7638
        %v7702 = vpop.f32.mrf.mxu0
        %v7703 = vadd.f32 %v7578, %v7702
        %7704 = vmatmul.f32.gmra.mxu0 %v7641
        %v7705 = vpop.f32.mrf.mxu0
        %v7706 = vadd.f32 %v7581, %v7705
        %7707 = vmatmul.f32.gmra.mxu0 %v7644
        %v7708 = vpop.f32.mrf.mxu0
        %v7709 = vadd.f32 %v7584, %v7708
        %7710 = vmatmul.f32.gmra.mxu0 %v7647
        %v7711 = vpop.f32.mrf.mxu0
        %v7712 = vadd.f32 %v7587, %v7711
        %7713 = vmatmul.f32.gmra.mxu0 %v7650
        %v7714 = vpop.f32.mrf.mxu0
        %v7715 = vadd.f32 %v7590, %v7714
        %7716 = vmatmul.f32.gmra.mxu0 %v7653
        %v7717 = vpop.f32.mrf.mxu0
        %v7718 = vadd.f32 %v7593, %v7717
        %7719 = vmatmul.f32.gmra.mxu0 %v7656
        %v7720 = vpop.f32.mrf.mxu0
        %v7721 = vadd.f32 %v7596, %v7720
        %7722 = vmatmul.f32.gmra.mxu0 %v7659
        %v7723 = vpop.f32.mrf.mxu0
        %v7724 = vadd.f32 %v7599, %v7723
        %7725 = vmatmul.f32.gmra.mxu0 %v7662
        %v7726 = vpop.f32.mrf.mxu0
        %v7727 = vadd.f32 %v7602, %v7726
        %7728 = vdwg.mxu0
        %v7729 = vld [vmem:[%s3 + $0xcd] sm:$0x1]
        %v7730 = vperm.slane %v7729, 0
        %v7731 = vadd.f32 %v7682, %v7730
        %v7732 = vadd.f32 %v7685, %v7730
        %v7733 = vadd.f32 %v7688, %v7730
        %v7734 = vadd.f32 %v7691, %v7730
        %v7735 = vadd.f32 %v7694, %v7730
        %v7736 = vadd.f32 %v7697, %v7730
        %v7737 = vadd.f32 %v7700, %v7730
        %v7738 = vadd.f32 %v7703, %v7730
        %v7739 = vadd.f32 %v7706, %v7730
        %v7740 = vadd.f32 %v7709, %v7730
        %v7741 = vadd.f32 %v7712, %v7730
        %v7742 = vadd.f32 %v7715, %v7730
        %v7743 = vadd.f32 %v7718, %v7730
        %v7744 = vadd.f32 %v7721, %v7730
        %v7745 = vadd.f32 %v7724, %v7730
        %v7746 = vadd.f32 %v7727, %v7730
        %v7747 = vmax.f32 %v7731, 0.0
        %v7748 = vmax.f32 %v7732, 0.0
        %v7749 = vmax.f32 %v7733, 0.0
        %v7750 = vmax.f32 %v7734, 0.0
        %v7751 = vmax.f32 %v7735, 0.0
        %v7752 = vmax.f32 %v7736, 0.0
        %v7753 = vmax.f32 %v7737, 0.0
        %v7754 = vmax.f32 %v7738, 0.0
        %v7755 = vmax.f32 %v7739, 0.0
        %v7756 = vmax.f32 %v7740, 0.0
        %v7757 = vmax.f32 %v7741, 0.0
        %v7758 = vmax.f32 %v7742, 0.0
        %v7759 = vmax.f32 %v7743, 0.0
        %v7760 = vmax.f32 %v7744, 0.0
        %v7761 = vmax.f32 %v7745, 0.0
        %v7762 = vmax.f32 %v7746, 0.0
        %v7763 = vsel %vm557, %v7747, 0.0
        %v7764 = vrot.slane %v7763, 4
        %v7765 = vadd.f32 %v7763, %v7764
        %v7766 = vrot.slane %v7765, 2
        %v7767 = vadd.f32 %v7765, %v7766
        %v7768 = vrot.slane %v7767, 1
        %v7769 = vadd.f32 %v7767, %v7768
        %v7770 = vsel %vm557, %v7748, 0.0
        %v7771 = vrot.slane %v7770, 4
        %v7772 = vadd.f32 %v7770, %v7771
        %v7773 = vrot.slane %v7772, 2
        %v7774 = vadd.f32 %v7772, %v7773
        %v7775 = vrot.slane %v7774, 1
        %v7776 = vadd.f32 %v7774, %v7775
        %v7777 = vsel %vm557, %v7749, 0.0
        %v7778 = vrot.slane %v7777, 4
        %v7779 = vadd.f32 %v7777, %v7778
        %v7780 = vrot.slane %v7779, 2
        %v7781 = vadd.f32 %v7779, %v7780
        %v7782 = vrot.slane %v7781, 1
        %v7783 = vadd.f32 %v7781, %v7782
        %v7784 = vsel %vm557, %v7750, 0.0
        %v7785 = vrot.slane %v7784, 4
        %v7786 = vadd.f32 %v7784, %v7785
        %v7787 = vrot.slane %v7786, 2
        %v7788 = vadd.f32 %v7786, %v7787
        %v7789 = vrot.slane %v7788, 1
        %v7790 = vadd.f32 %v7788, %v7789
        %v7791 = vsel %vm557, %v7751, 0.0
        %v7792 = vrot.slane %v7791, 4
        %v7793 = vadd.f32 %v7791, %v7792
        %v7794 = vrot.slane %v7793, 2
        %v7795 = vadd.f32 %v7793, %v7794
        %v7796 = vrot.slane %v7795, 1
        %v7797 = vadd.f32 %v7795, %v7796
        %v7798 = vsel %vm557, %v7752, 0.0
        %v7799 = vrot.slane %v7798, 4
        %v7800 = vadd.f32 %v7798, %v7799
        %v7801 = vrot.slane %v7800, 2
        %v7802 = vadd.f32 %v7800, %v7801
        %v7803 = vrot.slane %v7802, 1
        %v7804 = vadd.f32 %v7802, %v7803
        %v7805 = vsel %vm557, %v7753, 0.0
        %v7806 = vrot.slane %v7805, 4
        %v7807 = vadd.f32 %v7805, %v7806
        %v7808 = vrot.slane %v7807, 2
        %v7809 = vadd.f32 %v7807, %v7808
        %v7810 = vrot.slane %v7809, 1
        %v7811 = vadd.f32 %v7809, %v7810
        %v7812 = vsel %vm557, %v7754, 0.0
        %v7813 = vrot.slane %v7812, 4
        %v7814 = vadd.f32 %v7812, %v7813
        %v7815 = vrot.slane %v7814, 2
        %v7816 = vadd.f32 %v7814, %v7815
        %v7817 = vrot.slane %v7816, 1
        %v7818 = vadd.f32 %v7816, %v7817
        %v7819 = vsel %vm557, %v7755, 0.0
        %v7820 = vrot.slane %v7819, 4
        %v7821 = vadd.f32 %v7819, %v7820
        %v7822 = vrot.slane %v7821, 2
        %v7823 = vadd.f32 %v7821, %v7822
        %v7824 = vrot.slane %v7823, 1
        %v7825 = vadd.f32 %v7823, %v7824
        %v7826 = vsel %vm557, %v7756, 0.0
        %v7827 = vrot.slane %v7826, 4
        %v7828 = vadd.f32 %v7826, %v7827
        %v7829 = vrot.slane %v7828, 2
        %v7830 = vadd.f32 %v7828, %v7829
        %v7831 = vrot.slane %v7830, 1
        %v7832 = vadd.f32 %v7830, %v7831
        %v7833 = vsel %vm557, %v7757, 0.0
        %v7834 = vrot.slane %v7833, 4
        %v7835 = vadd.f32 %v7833, %v7834
        %v7836 = vrot.slane %v7835, 2
        %v7837 = vadd.f32 %v7835, %v7836
        %v7838 = vrot.slane %v7837, 1
        %v7839 = vadd.f32 %v7837, %v7838
        %v7840 = vsel %vm557, %v7758, 0.0
        %v7841 = vrot.slane %v7840, 4
        %v7842 = vadd.f32 %v7840, %v7841
        %v7843 = vrot.slane %v7842, 2
        %v7844 = vadd.f32 %v7842, %v7843
        %v7845 = vrot.slane %v7844, 1
        %v7846 = vadd.f32 %v7844, %v7845
        %v7847 = vsel %vm557, %v7759, 0.0
        %v7848 = vrot.slane %v7847, 4
        %v7849 = vadd.f32 %v7847, %v7848
        %v7850 = vrot.slane %v7849, 2
        %v7851 = vadd.f32 %v7849, %v7850
        %v7852 = vrot.slane %v7851, 1
        %v7853 = vadd.f32 %v7851, %v7852
        %v7854 = vsel %vm557, %v7760, 0.0
        %v7855 = vrot.slane %v7854, 4
        %v7856 = vadd.f32 %v7854, %v7855
        %v7857 = vrot.slane %v7856, 2
        %v7858 = vadd.f32 %v7856, %v7857
        %v7859 = vrot.slane %v7858, 1
        %v7860 = vadd.f32 %v7858, %v7859
        %v7861 = vsel %vm557, %v7761, 0.0
        %v7862 = vrot.slane %v7861, 4
        %v7863 = vadd.f32 %v7861, %v7862
        %v7864 = vrot.slane %v7863, 2
        %v7865 = vadd.f32 %v7863, %v7864
        %v7866 = vrot.slane %v7865, 1
        %v7867 = vadd.f32 %v7865, %v7866
        %v7868 = vsel %vm557, %v7762, 0.0
        %v7869 = vrot.slane %v7868, 4
        %v7870 = vadd.f32 %v7868, %v7869
        %v7871 = vrot.slane %v7870, 2
        %v7872 = vadd.f32 %v7870, %v7871
        %v7873 = vrot.slane %v7872, 1
        %v7874 = vadd.f32 %v7872, %v7873
        %v7875 = vmul.f32 %v7769, %v3624
        %v7876 = vmul.f32 %v7776, %v3624
        %v7877 = vmul.f32 %v7783, %v3624
        %v7878 = vmul.f32 %v7790, %v3624
        %v7879 = vmul.f32 %v7797, %v3624
        %v7880 = vmul.f32 %v7804, %v3624
        %v7881 = vmul.f32 %v7811, %v3624
        %v7882 = vmul.f32 %v7818, %v3624
        %v7883 = vmul.f32 %v7825, %v3624
        %v7884 = vmul.f32 %v7832, %v3624
        %v7885 = vmul.f32 %v7839, %v3624
        %v7886 = vmul.f32 %v7846, %v3624
        %v7887 = vmul.f32 %v7853, %v3624
        %v7888 = vmul.f32 %v7860, %v3624
        %v7889 = vmul.f32 %v7867, %v3624
        %v7890 = vmul.f32 %v7874, %v3624
        %v7891 = vsel %vm557, %v7747, -inf
        %v7892 = vrot.slane %v7891, 4
        %v7893 = vmax.f32 %v7891, %v7892
        %v7894 = vrot.slane %v7893, 2
        %v7895 = vmax.f32 %v7893, %v7894
        %v7896 = vrot.slane %v7895, 1
        %v7897 = vmax.f32 %v7895, %v7896
        %v7898 = vsel %vm557, %v7748, -inf
        %v7899 = vrot.slane %v7898, 4
        %v7900 = vmax.f32 %v7898, %v7899
        %v7901 = vrot.slane %v7900, 2
        %v7902 = vmax.f32 %v7900, %v7901
        %v7903 = vrot.slane %v7902, 1
        %v7904 = vmax.f32 %v7902, %v7903
        %v7905 = vsel %vm557, %v7749, -inf
        %v7906 = vrot.slane %v7905, 4
        %v7907 = vmax.f32 %v7905, %v7906
        %v7908 = vrot.slane %v7907, 2
        %v7909 = vmax.f32 %v7907, %v7908
        %v7910 = vrot.slane %v7909, 1
        %v7911 = vmax.f32 %v7909, %v7910
        %v7912 = vsel %vm557, %v7750, -inf
        %v7913 = vrot.slane %v7912, 4
        %v7914 = vmax.f32 %v7912, %v7913
        %v7915 = vrot.slane %v7914, 2
        %v7916 = vmax.f32 %v7914, %v7915
        %v7917 = vrot.slane %v7916, 1
        %v7918 = vmax.f32 %v7916, %v7917
        %v7919 = vsel %vm557, %v7751, -inf
        %v7920 = vrot.slane %v7919, 4
        %v7921 = vmax.f32 %v7919, %v7920
        %v7922 = vrot.slane %v7921, 2
        %v7923 = vmax.f32 %v7921, %v7922
        %v7924 = vrot.slane %v7923, 1
        %v7925 = vmax.f32 %v7923, %v7924
        %v7926 = vsel %vm557, %v7752, -inf
        %v7927 = vrot.slane %v7926, 4
        %v7928 = vmax.f32 %v7926, %v7927
        %v7929 = vrot.slane %v7928, 2
        %v7930 = vmax.f32 %v7928, %v7929
        %v7931 = vrot.slane %v7930, 1
        %v7932 = vmax.f32 %v7930, %v7931
        %v7933 = vsel %vm557, %v7753, -inf
        %v7934 = vrot.slane %v7933, 4
        %v7935 = vmax.f32 %v7933, %v7934
        %v7936 = vrot.slane %v7935, 2
        %v7937 = vmax.f32 %v7935, %v7936
        %v7938 = vrot.slane %v7937, 1
        %v7939 = vmax.f32 %v7937, %v7938
        %v7940 = vsel %vm557, %v7754, -inf
        %v7941 = vrot.slane %v7940, 4
        %v7942 = vmax.f32 %v7940, %v7941
        %v7943 = vrot.slane %v7942, 2
        %v7944 = vmax.f32 %v7942, %v7943
        %v7945 = vrot.slane %v7944, 1
        %v7946 = vmax.f32 %v7944, %v7945
        %v7947 = vsel %vm557, %v7755, -inf
        %v7948 = vrot.slane %v7947, 4
        %v7949 = vmax.f32 %v7947, %v7948
        %v7950 = vrot.slane %v7949, 2
        %v7951 = vmax.f32 %v7949, %v7950
        %v7952 = vrot.slane %v7951, 1
        %v7953 = vmax.f32 %v7951, %v7952
        %v7954 = vsel %vm557, %v7756, -inf
        %v7955 = vrot.slane %v7954, 4
        %v7956 = vmax.f32 %v7954, %v7955
        %v7957 = vrot.slane %v7956, 2
        %v7958 = vmax.f32 %v7956, %v7957
        %v7959 = vrot.slane %v7958, 1
        %v7960 = vmax.f32 %v7958, %v7959
        %v7961 = vsel %vm557, %v7757, -inf
        %v7962 = vrot.slane %v7961, 4
        %v7963 = vmax.f32 %v7961, %v7962
        %v7964 = vrot.slane %v7963, 2
        %v7965 = vmax.f32 %v7963, %v7964
        %v7966 = vrot.slane %v7965, 1
        %v7967 = vmax.f32 %v7965, %v7966
        %v7968 = vsel %vm557, %v7758, -inf
        %v7969 = vrot.slane %v7968, 4
        %v7970 = vmax.f32 %v7968, %v7969
        %v7971 = vrot.slane %v7970, 2
        %v7972 = vmax.f32 %v7970, %v7971
        %v7973 = vrot.slane %v7972, 1
        %v7974 = vmax.f32 %v7972, %v7973
        %v7975 = vsel %vm557, %v7759, -inf
        %v7976 = vrot.slane %v7975, 4
        %v7977 = vmax.f32 %v7975, %v7976
        %v7978 = vrot.slane %v7977, 2
        %v7979 = vmax.f32 %v7977, %v7978
        %v7980 = vrot.slane %v7979, 1
        %v7981 = vmax.f32 %v7979, %v7980
        %v7982 = vsel %vm557, %v7760, -inf
        %v7983 = vrot.slane %v7982, 4
        %v7984 = vmax.f32 %v7982, %v7983
        %v7985 = vrot.slane %v7984, 2
        %v7986 = vmax.f32 %v7984, %v7985
        %v7987 = vrot.slane %v7986, 1
        %v7988 = vmax.f32 %v7986, %v7987
        %v7989 = vsel %vm557, %v7761, -inf
        %v7990 = vrot.slane %v7989, 4
        %v7991 = vmax.f32 %v7989, %v7990
        %v7992 = vrot.slane %v7991, 2
        %v7993 = vmax.f32 %v7991, %v7992
        %v7994 = vrot.slane %v7993, 1
        %v7995 = vmax.f32 %v7993, %v7994
        %v7996 = vsel %vm557, %v7762, -inf
        %v7997 = vrot.slane %v7996, 4
        %v7998 = vmax.f32 %v7996, %v7997
        %v7999 = vrot.slane %v7998, 2
        %v8000 = vmax.f32 %v7998, %v7999
        %v8001 = vrot.slane %v8000, 1
        %v8002 = vmax.f32 %v8000, %v8001
        %v8019 = vsel %vm3769, %v7876, %v7875
        %v8020 = vsel %vm3771, %v7877, %v8019
        %v8021 = vsel %vm3773, %v7878, %v8020
        %v8022 = vsel %vm3775, %v7879, %v8021
        %v8023 = vsel %vm3777, %v7880, %v8022
        %v8024 = vsel %vm3779, %v7881, %v8023
        %v8025 = vsel %vm3781, %v7882, %v8024
        %v8026 = vsel %vm3769, %v7884, %v7883
        %v8027 = vsel %vm3771, %v7885, %v8026
        %v8028 = vsel %vm3773, %v7886, %v8027
        %v8029 = vsel %vm3775, %v7887, %v8028
        %v8030 = vsel %vm3777, %v7888, %v8029
        %v8031 = vsel %vm3779, %v7889, %v8030
        %v8032 = vsel %vm3781, %v7890, %v8031
        %v8035 = vsel %vm557, %v8025, 0.0
        %8036 = vadd.xlane.f32.xlu0 %v8035
        %v8037 = vpop.xlane.xlu0 %8036
        %v8038 = vsel %vm557, %v8032, 0.0
        %8039 = vadd.xlane.f32.xlu0 %v8038
        %v8040 = vpop.xlane.xlu0 %8039
        %v8057 = vsel %vm3769, %v7904, %v7897
        %v8058 = vsel %vm3771, %v7911, %v8057
        %v8059 = vsel %vm3773, %v7918, %v8058
        %v8060 = vsel %vm3775, %v7925, %v8059
        %v8061 = vsel %vm3777, %v7932, %v8060
        %v8062 = vsel %vm3779, %v7939, %v8061
        %v8063 = vsel %vm3781, %v7946, %v8062
        %v8064 = vsel %vm3769, %v7960, %v7953
        %v8065 = vsel %vm3771, %v7967, %v8064
        %v8066 = vsel %vm3773, %v7974, %v8065
        %v8067 = vsel %vm3775, %v7981, %v8066
        %v8068 = vsel %vm3777, %v7988, %v8067
        %v8069 = vsel %vm3779, %v7995, %v8068
        %v8070 = vsel %vm3781, %v8002, %v8069
        %v8073 = vsel %vm557, %v8063, 0.0
        %8074 = vadd.xlane.f32.xlu0 %v8073
        %v8075 = vpop.xlane.xlu0 %8074
        %v8076 = vsel %vm557, %v8070, 0.0
        %8077 = vadd.xlane.f32.xlu0 %v8076
        %v8078 = vpop.xlane.xlu0 %8077
        %v8079 = vadd.f32 %v8037, %v8075
        %v8080 = vadd.f32 %v8040, %v8078
        %v8081 = vmul.f32 %v8079, %v3844
        %v8082 = vmul.f32 %v8080, %v3844
        %v8085 = vrot.slane %v8081, 1
        %v8086 = vrot.slane %v8081, 2
        %v8087 = vrot.slane %v8081, 3
        %v8088 = vrot.slane %v8081, 4
        %v8089 = vrot.slane %v8081, 5
        %v8090 = vrot.slane %v8081, 6
        %v8091 = vrot.slane %v8081, 7
        %v8092 = vrot.slane %v8082, 1
        %v8093 = vrot.slane %v8082, 2
        %v8094 = vrot.slane %v8082, 3
        %v8095 = vrot.slane %v8082, 4
        %v8096 = vrot.slane %v8082, 5
        %v8097 = vrot.slane %v8082, 6
        %v8098 = vrot.slane %v8082, 7
        %v8115 = vsub.f32 %v7875, %v8081
        %v8116 = vsub.f32 %v7876, %v8085
        %v8117 = vsub.f32 %v7877, %v8086
        %v8118 = vsub.f32 %v7878, %v8087
        %v8119 = vsub.f32 %v7879, %v8088
        %v8120 = vsub.f32 %v7880, %v8089
        %v8121 = vsub.f32 %v7881, %v8090
        %v8122 = vsub.f32 %v7882, %v8091
        %v8123 = vsub.f32 %v7883, %v8082
        %v8124 = vsub.f32 %v7884, %v8092
        %v8125 = vsub.f32 %v7885, %v8093
        %v8126 = vsub.f32 %v7886, %v8094
        %v8127 = vsub.f32 %v7887, %v8095
        %v8128 = vsub.f32 %v7888, %v8096
        %v8129 = vsub.f32 %v7889, %v8097
        %v8130 = vsub.f32 %v7890, %v8098
        %v8131 = vmul.f32 %v8115, %v8115
        %v8132 = vmul.f32 %v8116, %v8116
        %v8133 = vmul.f32 %v8117, %v8117
        %v8134 = vmul.f32 %v8118, %v8118
        %v8135 = vmul.f32 %v8119, %v8119
        %v8136 = vmul.f32 %v8120, %v8120
        %v8137 = vmul.f32 %v8121, %v8121
        %v8138 = vmul.f32 %v8122, %v8122
        %v8139 = vmul.f32 %v8123, %v8123
        %v8140 = vmul.f32 %v8124, %v8124
        %v8141 = vmul.f32 %v8125, %v8125
        %v8142 = vmul.f32 %v8126, %v8126
        %v8143 = vmul.f32 %v8127, %v8127
        %v8144 = vmul.f32 %v8128, %v8128
        %v8145 = vmul.f32 %v8129, %v8129
        %v8146 = vmul.f32 %v8130, %v8130
        %v8163 = vrot.slane %v8132, 7
        %v8164 = vsel %vm3769, %v8163, %v8131
        %v8165 = vrot.slane %v8133, 6
        %v8166 = vsel %vm3771, %v8165, %v8164
        %v8167 = vrot.slane %v8134, 5
        %v8168 = vsel %vm3773, %v8167, %v8166
        %v8169 = vrot.slane %v8135, 4
        %v8170 = vsel %vm3775, %v8169, %v8168
        %v8171 = vrot.slane %v8136, 3
        %v8172 = vsel %vm3777, %v8171, %v8170
        %v8173 = vrot.slane %v8137, 2
        %v8174 = vsel %vm3779, %v8173, %v8172
        %v8175 = vrot.slane %v8138, 1
        %v8176 = vsel %vm3781, %v8175, %v8174
        %v8177 = vrot.slane %v8140, 7
        %v8178 = vsel %vm3769, %v8177, %v8139
        %v8179 = vrot.slane %v8141, 6
        %v8180 = vsel %vm3771, %v8179, %v8178
        %v8181 = vrot.slane %v8142, 5
        %v8182 = vsel %vm3773, %v8181, %v8180
        %v8183 = vrot.slane %v8143, 4
        %v8184 = vsel %vm3775, %v8183, %v8182
        %v8185 = vrot.slane %v8144, 3
        %v8186 = vsel %vm3777, %v8185, %v8184
        %v8187 = vrot.slane %v8145, 2
        %v8188 = vsel %vm3779, %v8187, %v8186
        %v8189 = vrot.slane %v8146, 1
        %v8190 = vsel %vm3781, %v8189, %v8188
        %v8193 = vsel %vm557, %v8176, 0.0
        %8194 = vadd.xlane.f32.xlu0 %v8193
        %v8195 = vpop.xlane.xlu0 %8194
        %v8196 = vsel %vm557, %v8190, 0.0
        %8197 = vadd.xlane.f32.xlu0 %v8196
        %v8198 = vpop.xlane.xlu0 %8197
        %v8199 = vsub.f32 %v7897, %v8081
        %v8200 = vsub.f32 %v7904, %v8085
        %v8201 = vsub.f32 %v7911, %v8086
        %v8202 = vsub.f32 %v7918, %v8087
        %v8203 = vsub.f32 %v7925, %v8088
        %v8204 = vsub.f32 %v7932, %v8089
        %v8205 = vsub.f32 %v7939, %v8090
        %v8206 = vsub.f32 %v7946, %v8091
        %v8207 = vsub.f32 %v7953, %v8082
        %v8208 = vsub.f32 %v7960, %v8092
        %v8209 = vsub.f32 %v7967, %v8093
        %v8210 = vsub.f32 %v7974, %v8094
        %v8211 = vsub.f32 %v7981, %v8095
        %v8212 = vsub.f32 %v7988, %v8096
        %v8213 = vsub.f32 %v7995, %v8097
        %v8214 = vsub.f32 %v8002, %v8098
        %v8215 = vmul.f32 %v8199, %v8199
        %v8216 = vmul.f32 %v8200, %v8200
        %v8217 = vmul.f32 %v8201, %v8201
        %v8218 = vmul.f32 %v8202, %v8202
        %v8219 = vmul.f32 %v8203, %v8203
        %v8220 = vmul.f32 %v8204, %v8204
        %v8221 = vmul.f32 %v8205, %v8205
        %v8222 = vmul.f32 %v8206, %v8206
        %v8223 = vmul.f32 %v8207, %v8207
        %v8224 = vmul.f32 %v8208, %v8208
        %v8225 = vmul.f32 %v8209, %v8209
        %v8226 = vmul.f32 %v8210, %v8210
        %v8227 = vmul.f32 %v8211, %v8211
        %v8228 = vmul.f32 %v8212, %v8212
        %v8229 = vmul.f32 %v8213, %v8213
        %v8230 = vmul.f32 %v8214, %v8214
        %v8247 = vrot.slane %v8216, 7
        %v8248 = vsel %vm3769, %v8247, %v8215
        %v8249 = vrot.slane %v8217, 6
        %v8250 = vsel %vm3771, %v8249, %v8248
        %v8251 = vrot.slane %v8218, 5
        %v8252 = vsel %vm3773, %v8251, %v8250
        %v8253 = vrot.slane %v8219, 4
        %v8254 = vsel %vm3775, %v8253, %v8252
        %v8255 = vrot.slane %v8220, 3
        %v8256 = vsel %vm3777, %v8255, %v8254
        %v8257 = vrot.slane %v8221, 2
        %v8258 = vsel %vm3779, %v8257, %v8256
        %v8259 = vrot.slane %v8222, 1
        %v8260 = vsel %vm3781, %v8259, %v8258
        %v8261 = vrot.slane %v8224, 7
        %v8262 = vsel %vm3769, %v8261, %v8223
        %v8263 = vrot.slane %v8225, 6
        %v8264 = vsel %vm3771, %v8263, %v8262
        %v8265 = vrot.slane %v8226, 5
        %v8266 = vsel %vm3773, %v8265, %v8264
        %v8267 = vrot.slane %v8227, 4
        %v8268 = vsel %vm3775, %v8267, %v8266
        %v8269 = vrot.slane %v8228, 3
        %v8270 = vsel %vm3777, %v8269, %v8268
        %v8271 = vrot.slane %v8229, 2
        %v8272 = vsel %vm3779, %v8271, %v8270
        %v8273 = vrot.slane %v8230, 1
        %v8274 = vsel %vm3781, %v8273, %v8272
        %v8277 = vsel %vm557, %v8260, 0.0
        %8278 = vadd.xlane.f32.xlu0 %v8277
        %v8279 = vpop.xlane.xlu0 %8278
        %v8280 = vsel %vm557, %v8274, 0.0
        %8281 = vadd.xlane.f32.xlu0 %v8280
        %v8282 = vpop.xlane.xlu0 %8281
        %v8283 = vadd.f32 %v8195, %v8279
        %v8284 = vadd.f32 %v8198, %v8282
        %v8285 = vmul.f32 %v8283, %v3844
        %v8286 = vmul.f32 %v8284, %v3844
        %v8287 = vadd.f32 %v8285, 1e-05
        %v8288 = vadd.f32 %v8286, 1e-05
        %v8289 = vrsqrt.pop %v8287
        %v8290 = vmul.f32 %v8289, %v8287
        %v8291 = vmul.f32 %v8290, %v8289
        %v8292 = vmul.f32 0.5, %v8291
        %v8293 = vsub.f32 1.5, %v8292
        %v8294 = vmul.f32 %v8289, %v8293
        %vm8295 = vweird.f32 %v8287
        %vm8296 = vweird.f32 %v8289
        %vm8297 = vmor %vm8295, %vm8296
        %v8298 = vsel %vm8297, %v8289, %v8294
        %v8299 = vrsqrt.pop %v8288
        %v8300 = vmul.f32 %v8299, %v8288
        %v8301 = vmul.f32 %v8300, %v8299
        %v8302 = vmul.f32 0.5, %v8301
        %v8303 = vsub.f32 1.5, %v8302
        %v8304 = vmul.f32 %v8299, %v8303
        %vm8305 = vweird.f32 %v8288
        %vm8306 = vweird.f32 %v8299
        %vm8307 = vmor %vm8305, %vm8306
        %v8308 = vsel %vm8307, %v8299, %v8304
        %v8311 = vrot.slane %v8298, 1
        %v8312 = vrot.slane %v8298, 2
        %v8313 = vrot.slane %v8298, 3
        %v8314 = vrot.slane %v8298, 4
        %v8315 = vrot.slane %v8298, 5
        %v8316 = vrot.slane %v8298, 6
        %v8317 = vrot.slane %v8298, 7
        %v8318 = vrot.slane %v8308, 1
        %v8319 = vrot.slane %v8308, 2
        %v8320 = vrot.slane %v8308, 3
        %v8321 = vrot.slane %v8308, 4
        %v8322 = vrot.slane %v8308, 5
        %v8323 = vrot.slane %v8308, 6
        %v8324 = vrot.slane %v8308, 7
        %v8341 = vmul.f32 %v8115, %v8298
        %v8342 = vmul.f32 %v8116, %v8311
        %v8343 = vmul.f32 %v8117, %v8312
        %v8344 = vmul.f32 %v8118, %v8313
        %v8345 = vmul.f32 %v8119, %v8314
        %v8346 = vmul.f32 %v8120, %v8315
        %v8347 = vmul.f32 %v8121, %v8316
        %v8348 = vmul.f32 %v8122, %v8317
        %v8349 = vmul.f32 %v8123, %v8308
        %v8350 = vmul.f32 %v8124, %v8318
        %v8351 = vmul.f32 %v8125, %v8319
        %v8352 = vmul.f32 %v8126, %v8320
        %v8353 = vmul.f32 %v8127, %v8321
        %v8354 = vmul.f32 %v8128, %v8322
        %v8355 = vmul.f32 %v8129, %v8323
        %v8356 = vmul.f32 %v8130, %v8324
        %8358 = vrot.lane.b32.xlu0 %v7730, 96
        %v8359 = vpop.permute.xlu0 %8358
        %v8361 = vmul.f32 %v8341, %v8359
        %v8362 = vmul.f32 %v8342, %v8359
        %v8363 = vmul.f32 %v8343, %v8359
        %v8364 = vmul.f32 %v8344, %v8359
        %v8365 = vmul.f32 %v8345, %v8359
        %v8366 = vmul.f32 %v8346, %v8359
        %v8367 = vmul.f32 %v8347, %v8359
        %v8368 = vmul.f32 %v8348, %v8359
        %v8369 = vmul.f32 %v8349, %v8359
        %v8370 = vmul.f32 %v8350, %v8359
        %v8371 = vmul.f32 %v8351, %v8359
        %v8372 = vmul.f32 %v8352, %v8359
        %v8373 = vmul.f32 %v8353, %v8359
        %v8374 = vmul.f32 %v8354, %v8359
        %v8375 = vmul.f32 %v8355, %v8359
        %v8376 = vmul.f32 %v8356, %v8359
        %v8377 = vld [vmem:[%s3 + $0xce] sm:$0x1]
        %v8378 = vperm.slane %v8377, 0
        %v8379 = vadd.f32 %v8361, %v8378
        %v8380 = vadd.f32 %v8362, %v8378
        %v8381 = vadd.f32 %v8363, %v8378
        %v8382 = vadd.f32 %v8364, %v8378
        %v8383 = vadd.f32 %v8365, %v8378
        %v8384 = vadd.f32 %v8366, %v8378
        %v8385 = vadd.f32 %v8367, %v8378
        %v8386 = vadd.f32 %v8368, %v8378
        %v8387 = vadd.f32 %v8369, %v8378
        %v8388 = vadd.f32 %v8370, %v8378
        %v8389 = vadd.f32 %v8371, %v8378
        %v8390 = vadd.f32 %v8372, %v8378
        %v8391 = vadd.f32 %v8373, %v8378
        %v8392 = vadd.f32 %v8374, %v8378
        %v8393 = vadd.f32 %v8375, %v8378
        %v8394 = vadd.f32 %v8376, %v8378
        %v8395 = vmul.f32 %v8199, %v8298
        %v8396 = vmul.f32 %v8200, %v8311
        %v8397 = vmul.f32 %v8201, %v8312
        %v8398 = vmul.f32 %v8202, %v8313
        %v8399 = vmul.f32 %v8203, %v8314
        %v8400 = vmul.f32 %v8204, %v8315
        %v8401 = vmul.f32 %v8205, %v8316
        %v8402 = vmul.f32 %v8206, %v8317
        %v8403 = vmul.f32 %v8207, %v8308
        %v8404 = vmul.f32 %v8208, %v8318
        %v8405 = vmul.f32 %v8209, %v8319
        %v8406 = vmul.f32 %v8210, %v8320
        %v8407 = vmul.f32 %v8211, %v8321
        %v8408 = vmul.f32 %v8212, %v8322
        %v8409 = vmul.f32 %v8213, %v8323
        %v8410 = vmul.f32 %v8214, %v8324
        %8411 = vrot.lane.b32.xlu0 %v7730, 64
        %v8412 = vpop.permute.xlu0 %8411
        %v8414 = vmul.f32 %v8395, %v8412
        %v8415 = vmul.f32 %v8396, %v8412
        %v8416 = vmul.f32 %v8397, %v8412
        %v8417 = vmul.f32 %v8398, %v8412
        %v8418 = vmul.f32 %v8399, %v8412
        %v8419 = vmul.f32 %v8400, %v8412
        %v8420 = vmul.f32 %v8401, %v8412
        %v8421 = vmul.f32 %v8402, %v8412
        %v8422 = vmul.f32 %v8403, %v8412
        %v8423 = vmul.f32 %v8404, %v8412
        %v8424 = vmul.f32 %v8405, %v8412
        %v8425 = vmul.f32 %v8406, %v8412
        %v8426 = vmul.f32 %v8407, %v8412
        %v8427 = vmul.f32 %v8408, %v8412
        %v8428 = vmul.f32 %v8409, %v8412
        %v8429 = vmul.f32 %v8410, %v8412
        %8431 = vrot.lane.b32.xlu0 %v8378, 96
        %v8432 = vpop.permute.xlu0 %8431
        %v8434 = vadd.f32 %v8414, %v8432
        %v8435 = vadd.f32 %v8415, %v8432
        %v8436 = vadd.f32 %v8416, %v8432
        %v8437 = vadd.f32 %v8417, %v8432
        %v8438 = vadd.f32 %v8418, %v8432
        %v8439 = vadd.f32 %v8419, %v8432
        %v8440 = vadd.f32 %v8420, %v8432
        %v8441 = vadd.f32 %v8421, %v8432
        %v8442 = vadd.f32 %v8422, %v8432
        %v8443 = vadd.f32 %v8423, %v8432
        %v8444 = vadd.f32 %v8424, %v8432
        %v8445 = vadd.f32 %v8425, %v8432
        %v8446 = vadd.f32 %v8426, %v8432
        %v8447 = vadd.f32 %v8427, %v8432
        %v8448 = vadd.f32 %v8428, %v8432
        %v8449 = vadd.f32 %v8429, %v8432
        %s8450 = scalar_lea.vmem %s242, 16
        %v8451 = vld [vmem:[%s8450] sm:$0xff]
        %v8452 = vld [vmem:[%s8450 + $0x8] sm:$0xff]
        %8454 = vrot.lane.b32.xlu0 %v4598, 96
        %v8455 = vpop.permute.xlu0 %8454
        %8457 = vrot.lane.b32.xlu0 %v4600, 96
        %v8458 = vpop.permute.xlu0 %8457
        %v8461 = vsel %vm342, %v8451, 0
        %v8464 = vsel %vm342, %v8452, 0
        %8466 = vmatpush.msra.mxu0 0.0
        %8467 = vmatpush.msra.mxu0 0.0
        %8468 = vmatpush.msra.mxu0 0.0
        %8469 = vmatpush.msra.mxu0 0.0
        %8470 = vmatpush.msra.mxu0 0.0
        %8471 = vmatpush.msra.mxu0 0.0
        %8472 = vmatpush.msra.mxu0 0.0
        %8473 = vmatpush.msra.mxu0 0.0
        %8474 = vmatpush.msra.mxu0 0.0
        %8475 = vmatpush.msra.mxu0 0.0
        %8476 = vmatpush.msra.mxu0 0.0
        %8477 = vmatpush.msra.mxu0 0.0
        %8478 = vmatpush.msra.mxu0 0.0
        %8479 = vmatpush.msra.mxu0 0.0
        %8480 = vmatpush.msra.mxu0 0.0
        %8481 = vmatpush.msra.mxu0 %v8455
        %8482 = vmatmul.f32.gmra.mxu0 %v8461
        %v8483 = vpop.f32.mrf.mxu0
        %v8484 = vadd.f32 %v8458, %v8483
        %8485 = vmatmul.f32.gmra.mxu0 %v8464
        %v8486 = vpop.f32.mrf.mxu0
        %v8487 = vadd.f32 %v8458, %v8486
        %8488 = vdwg.mxu0
        %v8489 = vmax.f32 %v8484, 0.0
        %v8490 = vmax.f32 %v8487, 0.0
        %v8491 = vsel %vm557, %v8489, 0.0
        %8492 = vadd.xlane.f32.xlu0 %v8491
        %v8493 = vpop.xlane.xlu0 %8492
        %v8494 = vsel %vm557, %v8490, 0.0
        %8495 = vadd.xlane.f32.xlu0 %v8494
        %v8496 = vpop.xlane.xlu0 %8495
        %v8497 = vmul.f32 %v8493, %v4266
        %v8498 = vmul.f32 %v8496, %v4266
        %v8499 = vsub.f32 %v8489, %v8497
        %v8500 = vsub.f32 %v8490, %v8498
        %v8501 = vmul.f32 %v8499, %v8499
        %v8502 = vmul.f32 %v8500, %v8500
        %v8503 = vsel %vm557, %v8501, 0.0
        %8504 = vadd.xlane.f32.xlu0 %v8503
        %v8505 = vpop.xlane.xlu0 %8504
        %v8506 = vsel %vm557, %v8502, 0.0
        %8507 = vadd.xlane.f32.xlu0 %v8506
        %v8508 = vpop.xlane.xlu0 %8507
        %v8509 = vmul.f32 %v8505, %v4266
        %v8510 = vmul.f32 %v8508, %v4266
        %v8511 = vadd.f32 %v8509, 1e-05
        %v8512 = vadd.f32 %v8510, 1e-05
        %v8513 = vrsqrt.pop %v8511
        %v8514 = vmul.f32 %v8513, %v8511
        %v8515 = vmul.f32 %v8514, %v8513
        %v8516 = vmul.f32 0.5, %v8515
        %v8517 = vsub.f32 1.5, %v8516
        %v8518 = vmul.f32 %v8513, %v8517
        %vm8519 = vweird.f32 %v8511
        %vm8520 = vweird.f32 %v8513
        %vm8521 = vmor %vm8519, %vm8520
        %v8522 = vsel %vm8521, %v8513, %v8518
        %v8523 = vrsqrt.pop %v8512
        %v8524 = vmul.f32 %v8523, %v8512
        %v8525 = vmul.f32 %v8524, %v8523
        %v8526 = vmul.f32 0.5, %v8525
        %v8527 = vsub.f32 1.5, %v8526
        %v8528 = vmul.f32 %v8523, %v8527
        %vm8529 = vweird.f32 %v8512
        %vm8530 = vweird.f32 %v8523
        %vm8531 = vmor %vm8529, %vm8530
        %v8532 = vsel %vm8531, %v8523, %v8528
        %v8533 = vmul.f32 %v8499, %v8522
        %v8534 = vmul.f32 %v8500, %v8532
        %8535 = vrot.lane.b32.xlu0 %v7730, 32
        %v8536 = vpop.permute.xlu0 %8535
        %v8538 = vmul.f32 %v8533, %v8536
        %v8539 = vmul.f32 %v8534, %v8536
        %8540 = vrot.lane.b32.xlu0 %v8378, 64
        %v8541 = vpop.permute.xlu0 %8540
        %v8543 = vadd.f32 %v8538, %v8541
        %v8544 = vadd.f32 %v8539, %v8541
        %v8545 = vld [vmem:[%s3 + $0x68] sm:$0xff]
        %v8546 = vld [vmem:[%s3 + $0x70] sm:$0xff]
        %v8547 = vld [vmem:[%s3 + $0x78] sm:$0xff]
        %v8548 = vld [vmem:[%s3 + $0x80] sm:$0xff]
        %v8549 = vld [vmem:[%s3 + $0x88] sm:$0xff]
        %v8550 = vld [vmem:[%s3 + $0x90] sm:$0xff]
        %v8551 = vld [vmem:[%s3 + $0x98] sm:$0xff]
        %v8552 = vld [vmem:[%s3 + $0xa0] sm:$0xff]
        %v8569 = vrot.slane %v8435, 7
        %v8570 = vsel %vm3769, %v8569, %v8434
        %v8571 = vrot.slane %v8436, 6
        %v8572 = vsel %vm3771, %v8571, %v8570
        %v8573 = vrot.slane %v8437, 5
        %v8574 = vsel %vm3773, %v8573, %v8572
        %v8575 = vrot.slane %v8438, 4
        %v8576 = vsel %vm3775, %v8575, %v8574
        %v8577 = vrot.slane %v8439, 3
        %v8578 = vsel %vm3777, %v8577, %v8576
        %v8579 = vrot.slane %v8440, 2
        %v8580 = vsel %vm3779, %v8579, %v8578
        %v8581 = vrot.slane %v8441, 1
        %v8582 = vsel %vm3781, %v8581, %v8580
        %v8583 = vrot.slane %v8443, 7
        %v8584 = vsel %vm3769, %v8583, %v8442
        %v8585 = vrot.slane %v8444, 6
        %v8586 = vsel %vm3771, %v8585, %v8584
        %v8587 = vrot.slane %v8445, 5
        %v8588 = vsel %vm3773, %v8587, %v8586
        %v8589 = vrot.slane %v8446, 4
        %v8590 = vsel %vm3775, %v8589, %v8588
        %v8591 = vrot.slane %v8447, 3
        %v8592 = vsel %vm3777, %v8591, %v8590
        %v8593 = vrot.slane %v8448, 2
        %v8594 = vsel %vm3779, %v8593, %v8592
        %v8595 = vrot.slane %v8449, 1
        %v8596 = vsel %vm3781, %v8595, %v8594
        %v8597 = vsel %vm557, %v8582, 0
        %v8599 = vsel %vm557, %v8596, 0
        %8601 = vmatpush.msra.mxu0 0.0
        %8602 = vmatpush.msra.mxu0 0.0
        %8603 = vmatpush.msra.mxu0 0.0
        %8604 = vmatpush.msra.mxu0 0.0
        %8605 = vmatpush.msra.mxu0 0.0
        %8606 = vmatpush.msra.mxu0 0.0
        %8607 = vmatpush.msra.mxu0 0.0
        %8608 = vmatpush.msra.mxu0 0.0
        %8609 = vmatpush.msra.mxu0 0.0
        %8610 = vmatpush.msra.mxu0 0.0
        %8611 = vmatpush.msra.mxu0 0.0
        %8612 = vmatpush.msra.mxu0 0.0
        %8613 = vmatpush.msra.mxu0 %v8552
        %8614 = vmatpush.msra.mxu0 %v8551
        %8615 = vmatpush.msra.mxu0 %v8550
        %8616 = vmatpush.msra.mxu0 %v8549
        %8617 = vmatmul.f32.gmra.mxu0 %v8597
        %v8618 = vpop.f32.mrf.mxu0
        %v8619 = vadd.f32 0.0, %v8618
        %8620 = vmatmul.f32.gmra.mxu0 %v8599
        %v8621 = vpop.f32.mrf.mxu0
        %v8622 = vadd.f32 0.0, %v8621
        %8623 = vdwg.mxu0
        %v8640 = vrot.slane %v8380, 7
        %v8641 = vsel %vm3769, %v8640, %v8379
        %v8642 = vrot.slane %v8381, 6
        %v8643 = vsel %vm3771, %v8642, %v8641
        %v8644 = vrot.slane %v8382, 5
        %v8645 = vsel %vm3773, %v8644, %v8643
        %v8646 = vrot.slane %v8383, 4
        %v8647 = vsel %vm3775, %v8646, %v8645
        %v8648 = vrot.slane %v8384, 3
        %v8649 = vsel %vm3777, %v8648, %v8647
        %v8650 = vrot.slane %v8385, 2
        %v8651 = vsel %vm3779, %v8650, %v8649
        %v8652 = vrot.slane %v8386, 1
        %v8653 = vsel %vm3781, %v8652, %v8651
        %v8654 = vrot.slane %v8388, 7
        %v8655 = vsel %vm3769, %v8654, %v8387
        %v8656 = vrot.slane %v8389, 6
        %v8657 = vsel %vm3771, %v8656, %v8655
        %v8658 = vrot.slane %v8390, 5
        %v8659 = vsel %vm3773, %v8658, %v8657
        %v8660 = vrot.slane %v8391, 4
        %v8661 = vsel %vm3775, %v8660, %v8659
        %v8662 = vrot.slane %v8392, 3
        %v8663 = vsel %vm3777, %v8662, %v8661
        %v8664 = vrot.slane %v8393, 2
        %v8665 = vsel %vm3779, %v8664, %v8663
        %v8666 = vrot.slane %v8394, 1
        %v8667 = vsel %vm3781, %v8666, %v8665
        %v8668 = vsel %vm557, %v8653, 0
        %v8670 = vsel %vm557, %v8667, 0
        %8672 = vmatpush.msra.mxu0 0.0
        %8673 = vmatpush.msra.mxu0 0.0
        %8674 = vmatpush.msra.mxu0 0.0
        %8675 = vmatpush.msra.mxu0 0.0
        %8676 = vmatpush.msra.mxu0 0.0
        %8677 = vmatpush.msra.mxu0 0.0
        %8678 = vmatpush.msra.mxu0 0.0
        %8679 = vmatpush.msra.mxu0 0.0
        %8680 = vmatpush.msra.mxu0 0.0
        %8681 = vmatpush.msra.mxu0 0.0
        %8682 = vmatpush.msra.mxu0 0.0
        %8683 = vmatpush.msra.mxu0 0.0
        %8684 = vmatpush.msra.mxu0 %v8548
        %8685 = vmatpush.msra.mxu0 %v8547
        %8686 = vmatpush.msra.mxu0 %v8546
        %8687 = vmatpush.msra.mxu0 %v8545
        %8688 = vmatmul.f32.gmra.mxu0 %v8668
        %v8689 = vpop.f32.mrf.mxu0
        %v8690 = vadd.f32 %v8619, %v8689
        %8691 = vmatmul.f32.gmra.mxu0 %v8670
        %v8692 = vpop.f32.mrf.mxu0
        %v8693 = vadd.f32 %v8622, %v8692
        %8694 = vdwg.mxu0
        %v8695 = vld [vmem:[%s3 + $0xa8] sm:$0xff]
        %v8696 = vld [vmem:[%s3 + $0xb0] sm:$0xff]
        %v8697 = vld [vmem:[%s3 + $0xb8] sm:$0xff]
        %v8698 = vld [vmem:[%s3 + $0xc0] sm:$0xff]
        %v8700 = vsel %vm557, %v8543, 0
        %v8703 = vsel %vm557, %v8544, 0
        %8705 = vmatpush.msra.mxu0 0.0
        %8706 = vmatpush.msra.mxu0 0.0
        %8707 = vmatpush.msra.mxu0 0.0
        %8708 = vmatpush.msra.mxu0 0.0
        %8709 = vmatpush.msra.mxu0 0.0
        %8710 = vmatpush.msra.mxu0 0.0
        %8711 = vmatpush.msra.mxu0 0.0
        %8712 = vmatpush.msra.mxu0 0.0
        %8713 = vmatpush.msra.mxu0 0.0
        %8714 = vmatpush.msra.mxu0 0.0
        %8715 = vmatpush.msra.mxu0 0.0
        %8716 = vmatpush.msra.mxu0 0.0
        %8717 = vmatpush.msra.mxu0 %v8698
        %8718 = vmatpush.msra.mxu0 %v8697
        %8719 = vmatpush.msra.mxu0 %v8696
        %8720 = vmatpush.msra.mxu0 %v8695
        %8721 = vmatmul.f32.gmra.mxu0 %v8700
        %v8722 = vpop.f32.mrf.mxu0
        %v8723 = vadd.f32 0.0, %v8722
        %8724 = vmatmul.f32.gmra.mxu0 %v8703
        %v8725 = vpop.f32.mrf.mxu0
        %v8726 = vadd.f32 0.0, %v8725
        %8727 = vdwg.mxu0
        %v8728 = vadd.f32 %v8690, %v8723
        %v8729 = vadd.f32 %v8693, %v8726
        %v8730 = vld [vmem:[%s3 + $0xcf] sm:$0x1]
        %v8731 = vperm.slane %v8730, 0
        %v8732 = vadd.f32 %v8728, %v8731
        %v8733 = vadd.f32 %v8729, %v8731
        %v8734 = vxor.u32 %v8732, 2147483648
        %v8735 = vxor.u32 %v8733, 2147483648
        %v8736 = vmul.f32 %v8734, 1.442695
        %v8737 = vpow.pop %v8736
        %v8738 = vmul.f32 %v8735, 1.442695
        %v8739 = vpow.pop %v8738
        %v8740 = vadd.f32 %v8737, 1.0
        %v8741 = vadd.f32 %v8739, 1.0
        %v8742 = vrcp.pop %v8740
        %v8743 = vmul.f32 %v8740, %v8742
        %v8744 = vsub.f32 1.0, %v8743
        %v8745 = vmul.f32 %v8742, %v8744
        %v8746 = vadd.f32 %v8742, %v8745
        %vm8747 = vweird.f32 %v8740
        %vm8748 = vweird.f32 %v8742
        %vm8749 = vmor %vm8747, %vm8748
        %v8750 = vsel %vm8749, %v8742, %v8746
        %v8751 = vand.u32 2147483647, %v8740
        %vm8752 = vcmp.eq.f32.partialorder %v8751, 8.507059e+37
        %v8753 = vand.u32 %v8740, 2147483648
        %v8754 = vor.u32 1.1754944e-38, %v8753
        %v8755 = vsel %vm8752, %v8754, %v8750
        %v8756 = vmul.f32 1.0, %v8755
        %v8757 = vrcp.pop %v8741
        %v8758 = vmul.f32 %v8741, %v8757
        %v8759 = vsub.f32 1.0, %v8758
        %v8760 = vmul.f32 %v8757, %v8759
        %v8761 = vadd.f32 %v8757, %v8760
        %vm8762 = vweird.f32 %v8741
        %vm8763 = vweird.f32 %v8757
        %vm8764 = vmor %vm8762, %vm8763
        %v8765 = vsel %vm8764, %v8757, %v8761
        %v8766 = vand.u32 2147483647, %v8741
        %vm8767 = vcmp.eq.f32.partialorder %v8766, 8.507059e+37
        %v8768 = vand.u32 %v8741, 2147483648
        %v8769 = vor.u32 1.1754944e-38, %v8768
        %v8770 = vsel %vm8767, %v8769, %v8765
        %v8771 = vmul.f32 1.0, %v8770
        %s8772 = scalar_lea.vmem %s229, 16 [#allocation2]
        %8773 = vst [vmem:[%s8772] sm:$0xff] %v8756
        %8774 = vst [vmem:[%s8772 + $0x8] sm:$0xff] %v8771
        %s8775 = sand.u32 %s125, 1
        %s8776 = scalar_lea.sflag [#allocation3], %s8775
        %s8777 = sand.u32 %s125, 1
        %s8778 = smul.addr %s8777, 32
        %s8779 = scalar_lea.vmem [#allocation2], %s8778
        // Predicated region
        $region37: #{tpu_custom_call.1} parent=35 // pred_check
          %p8780 = pneg %p135
        $region38: #{tpu_custom_call.1} parent=35 // pred_check_branch
          %8782 = sbr.rel (%p8780) target = $region40
        $region39: #{tpu_custom_call.1} parent=35 // pred_region
          %s8783 = smul.u32 2, %s18
          %8785 = vsyncadd %s8776, 0
          %s8786 = smul.addr %s8783, 2
          %s8787 = smul.addr %s8786, 8
          %s8788 = scalar_lea.hbm %s4, %s8787
          %s8789 = sshll.u32 %s8779, 4
          %s8790 = int_to_ptr.vmem [resolvable:$true] %s8789
          %s8791 = sshll.u32 %s8788, 4
          %s8792 = int_to_ptr.hbm [resolvable:$true] %s8791
          %8797 = dma.vmem_to_hbm [thread:$0]  %s8790, 512, %s8792, %s8776, 128, 128, 8
        $region40: #{tpu_custom_call.1} parent=35 // pred_fallthru
          _
      $region36: #{tpu_custom_call.1} parent=5 // pred_fallthru
        _
      %p8798 = scmp.le.s32.totalorder 2, %s13
      // Predicated region
      $region41: #{tpu_custom_call.1} parent=5 // pred_check
        %p8799 = pneg %p8798
      $region42: #{tpu_custom_call.1} parent=5 // pred_check_branch
        %8801 = sbr.rel (%p8799) target = $region44
      $region43: #{tpu_custom_call.1} parent=5 // pred_region
        %s8802 = ssub.s32 %s13, 2
        // Predicated region
        $region45: #{tpu_custom_call.1} parent=43 // pred_check
          %p8803 = pneg %p141
        $region46: #{tpu_custom_call.1} parent=43 // pred_check_branch
          %8805 = sbr.rel (%p8803) target = $region48
        $region47: #{tpu_custom_call.1} parent=43 // pred_region
          %s8806 = sand.u32 %s126, 1
          %s8807 = scalar_lea.sflag [#allocation3], %s8806
          %s8808 = sand.u32 %s126, 1
          %s8809 = smul.addr %s8808, 32
          %s8810 = scalar_lea.vmem [#allocation2], %s8809
          %8812 = dma.done %s8807, 512
        $region48: #{tpu_custom_call.1} parent=43 // pred_fallthru
          _
      $region44: #{tpu_custom_call.1} parent=5 // pred_fallthru
        _
    $region6: #{tpu_custom_call.1} parent=1 // loop_footer
      %s17 = sadd.s32 1, %s13
    $region7: #{tpu_custom_call.1} parent=1 // loop_footer_branch
      %12 = sbr.rel target = $region3
    $region8: #{tpu_custom_call.1} parent=1 // loop_exit
      _
    %8813 = vsyncpa [#allocation3], 1
    %s8814 = scalar_lea.sflag [#allocation3], 1
    %8815 = vsyncpa %s8814, 1

</llo_original>
